<compile_context>
chip_gen: v7x
topology: tpu7x:2x2x1
jax: 0.10.0
libtpu: 0.0.40
codegen_flags: <defaults>
</compile_context>

<pallas_src>
import functools

import jax
import jax.numpy as jnp
from jax.experimental import pallas as pl
from jax.experimental.pallas import tpu as pltpu


def _round_up(x, m):
    return ((x + m - 1) // m) * m


# ----------------------------------------------------------------------------
# Pallas kernel: generic k-tap 1-D conv on a channel-major slab (per batch).
#   out[co, l] = act( sum_t W[t] @ xpad[:, l + t] + bias )
# xpad = input copied into a zero-initialized VMEM scratch at lane offset
# pad_left, so conv padding never touches HBM.
# ----------------------------------------------------------------------------
def _tap_conv_kernel(x_ref, w_ref, b_ref, o_ref, xpad_ref, *,
                     k, pad_left, lin, act):
    lout_p = o_ref.shape[2]
    xpad_ref[...] = jnp.zeros_like(xpad_ref)
    xpad_ref[:, pad_left:pad_left + lin] = x_ref[0, :, :lin]
    acc = jnp.dot(w_ref[0, :, :], xpad_ref[:, 0:lout_p],
                  preferred_element_type=jnp.float32)
    for t in range(1, k):                                  # static unroll over taps
        acc = acc + jnp.dot(w_ref[t, :, :], xpad_ref[:, t:t + lout_p],
                            preferred_element_type=jnp.float32)
    y = acc + b_ref[...]                                   # (R_p, L_p) + (R_p, 1)
    if act == "relu":
        y = jnp.maximum(y, 0.0)
    elif act == "leaky_relu":
        y = jnp.where(y >= 0.0, y, 0.2 * y)                # LeakyReLU(0.2), per model
    elif act == "tanh":
        y = jnp.tanh(y)
    o_ref[0, :, :] = y.astype(o_ref.dtype)                 # full-width lane-dense store


def _tap_conv(x_slab, w, b, *, k, pad_left, lin, lout, act):
    """x_slab: (N, Cin_p, Lin_p) bf16; w: (k, R_p, Cin_p) bf16; b: (R_p, 1) f32.
    Returns (N, R_p, round_up(lout, 128)) bf16; padded rows/lanes never read."""
    n, cin_p, lin_p = x_slab.shape
    k_w, r_p, cin_p_w = w.shape
    assert k_w == k and cin_p_w == cin_p, (w.shape, k, cin_p)
    assert lin <= lin_p
    lout_p = _round_up(lout, 128)
    scratch_w = _round_up(max(pad_left + lin, k - 1 + lout_p), 128)
    kernel = functools.partial(_tap_conv_kernel, k=k, pad_left=pad_left,
                               lin=lin, act=act)
    return pl.pallas_call(
        kernel,
        grid=(n,),
        in_specs=[
            pl.BlockSpec((1, cin_p, lin_p), lambda i: (i, 0, 0)),  # per-batch input
            pl.BlockSpec((k, r_p, cin_p), lambda i: (0, 0, 0)),    # taps (resident)
            pl.BlockSpec((r_p, 1), lambda i: (0, 0)),              # bias
        ],
        out_specs=pl.BlockSpec((1, r_p, lout_p), lambda i: (i, 0, 0)),
        out_shape=jax.ShapeDtypeStruct((n, r_p, lout_p), jnp.bfloat16),
        scratch_shapes=[pltpu.VMEM((cin_p, scratch_w), jnp.bfloat16)],
        compiler_params=pltpu.CompilerParams(
            dimension_semantics=("parallel",)),            # batch -> both v7x TCs
    )(x_slab, w, b)


# ----------------------------------------------------------------------------
# Weight preparation: fold eval-mode BN scale, build per-tap (R_p, Cin_p) bf16.
# ----------------------------------------------------------------------------
def _pad_taps(taps, r, c):
    r_p = _round_up(max(r, 1), 16)
    c_p = _round_up(max(c, 1), 16)
    w = jnp.zeros((len(taps), r_p, c_p), jnp.float32)
    for t, wt in enumerate(taps):
        w = w.at[t, :r, :c].set(wt)
    return w.astype(jnp.bfloat16), r_p


def _pad_bias(bias, r_p):
    return jnp.zeros((r_p, 1), jnp.float32).at[:bias.shape[0], 0].set(bias)


def _prep_conv_s1(w, scale, bias):
    """Conv1d weight (Cout, Cin, k), stride 1: one tap per kernel position."""
    cout, cin, k = w.shape
    ws = w * scale[:, None, None]
    wk, r_p = _pad_taps([ws[:, :, t] for t in range(k)], cout, cin)
    return wk, _pad_bias(bias, r_p)


def _prep_conv_s2(w, scale, bias):
    """Conv1d k=4,s=2,p=1 -> 3 taps over a phase-split input (2*Cin channels):
       out[l] = [0|W0] P[l-1] + [W1|W2] P[l] + [W3|0] P[l+1],
       P rows [0:Cin] = x[2l] (even), rows [Cin:2Cin] = x[2l+1] (odd)."""
    cout, cin, _ = w.shape
    ws = w * scale[:, None, None]
    z = jnp.zeros((cout, cin), jnp.float32)
    taps = [jnp.concatenate([z, ws[:, :, 0]], axis=1),
            jnp.concatenate([ws[:, :, 1], ws[:, :, 2]], axis=1),
            jnp.concatenate([ws[:, :, 3], z], axis=1)]
    wk, r_p = _pad_taps(taps, cout, 2 * cin)
    return wk, _pad_bias(bias, r_p)


def _prep_convT_s1(w_t, scale, bias):
    """ConvTranspose1d (Cin, Cout, k), s=1, p=0 == conv with flipped kernel,
       pad_left = k-1."""
    cin, cout, k = w_t.shape
    ws = jnp.transpose(w_t, (1, 0, 2)) * scale[:, None, None]    # (Cout, Cin, k)
    wk, r_p = _pad_taps([ws[:, :, k - 1 - t] for t in range(k)], cout, cin)
    return wk, _pad_bias(bias, r_p)


def _prep_convT_s2(w_t, scale, bias):
    """ConvTranspose1d k=4,s=2,p=1 -> 3 taps producing stacked [even; odd] phases:
       y[2l]   = W1' x[l]   + W3' x[l-1]   (rows [0:Cout])
       y[2l+1] = W0' x[l+1] + W2' x[l]     (rows [Cout:2Cout])"""
    cin, cout, _ = w_t.shape
    ws = jnp.transpose(w_t, (1, 0, 2)) * scale[:, None, None]    # (Cout, Cin, 4)
    z = jnp.zeros((cout, cin), jnp.float32)
    taps = [jnp.concatenate([ws[:, :, 3], z], axis=0),
            jnp.concatenate([ws[:, :, 1], ws[:, :, 2]], axis=0),
            jnp.concatenate([z, ws[:, :, 0]], axis=0)]
    wk, r_p = _pad_taps(taps, 2 * cout, cin)
    return wk, _pad_bias(jnp.concatenate([bias, bias], axis=0), r_p)


# ----------------------------------------------------------------------------
# Parameter init (PyTorch-layer-faithful raw params) + kernel-side preparation.
# ----------------------------------------------------------------------------
def init_raw_params(key, nc, ndf, ngf, nz):
    cfg = [
        # (kind, cin, cout, k, stride, pad, has_bn, act)
        ("conv", nc, ndf, 4, 2, 1, False, "leaky_relu"),
        ("conv", ndf, ndf * 2, 4, 2, 1, True, "leaky_relu"),
        ("conv", ndf * 2, ndf * 4, 4, 2, 1, True, "leaky_relu"),
        ("conv", ndf * 4, ndf * 8, 4, 2, 1, True, "leaky_relu"),
        ("conv", ndf * 8, ndf * 16, 4, 2, 1, True, "leaky_relu"),
        ("conv", ndf * 16, nz, 10, 1, 0, False, "none"),
        ("convT", nz, ngf * 16, 10, 1, 0, True, "relu"),
        ("convT", ngf * 16, ngf * 8, 4, 2, 1, True, "relu"),
        ("convT", ngf * 8, ngf * 4, 4, 2, 1, True, "relu"),
        ("convT", ngf * 4, ngf * 2, 4, 2, 1, True, "relu"),
        ("convT", ngf * 2, ngf, 4, 2, 1, True, "relu"),
        ("convT", ngf, nc, 4, 2, 1, False, "tanh"),
    ]
    keys = iter(jax.random.split(key, 4 * len(cfg)))
    layers = []
    for kind, cin, cout, k, s, p, has_bn, act in cfg:
        std = (2.0 / (cin * k)) ** 0.5
        shape = (cout, cin, k) if kind == "conv" else (cin, cout, k)
        w = std * jax.random.normal(next(keys), shape, jnp.float32)
        if has_bn:  # eval-mode BatchNorm1d folded to per-channel scale/shift
            gamma = 1.0 + 0.05 * jax.random.normal(next(keys), (cout,), jnp.float32)
            beta = 0.05 * jax.random.normal(next(keys), (cout,), jnp.float32)
            mean = jnp.zeros((cout,), jnp.float32)
            var = jnp.ones((cout,), jnp.float32)
            scale = gamma / jnp.sqrt(var + 1e-5)
            bias = beta - mean * scale
        else:
            scale = jnp.ones((cout,), jnp.float32)
            bias = jnp.zeros((cout,), jnp.float32)
        layers.append(dict(kind=kind, w=w, scale=scale, bias=bias,
                           stride=s, pad=p, act=act))
    return layers


def prepare_kernel_params(raw_layers):
    """-> (static python config closed over by jit, array-only pytree)."""
    static_cfg, arrays = [], []
    for lyr in raw_layers:
        kind, w, s, b = lyr["kind"], lyr["w"], lyr["scale"], lyr["bias"]
        stride, pad, act = lyr["stride"], lyr["pad"], lyr["act"]
        if kind == "conv":
            cout, cin, k = w.shape
            if stride == 2:
                assert k == 4 and pad == 1
                wk, bk = _prep_conv_s2(w, s, b)
                static_cfg.append(("conv_s2", cin, cout, act))
            else:
                wk, bk = _prep_conv_s1(w, s, b)
                static_cfg.append(("conv_s1", cin, cout, k, pad, act))
        else:
            cin, cout, k = w.shape
            if stride == 2:
                assert k == 4 and pad == 1
                wk, bk = _prep_convT_s2(w, s, b)
                static_cfg.append(("convT_s2", cin, cout, act))
            else:
                assert stride == 1
                wk, bk = _prep_convT_s1(w, s, b)
                static_cfg.append(("conv_s1", cin, cout, k, k - 1 - pad, act))
        arrays.append({"w": wk, "b": bk})
    return tuple(static_cfg), arrays


def _pad_channels(x, c_pad):
    n, c, l = x.shape
    if c == c_pad:
        return x
    return jnp.pad(x, ((0, 0), (0, c_pad - c), (0, 0)))


# ----------------------------------------------------------------------------
# Forward pass: ECG_Reconstructor(x) = decoder(encoder(x))
# ----------------------------------------------------------------------------
def ecg_reconstructor_forward(static_cfg, arrays, temporal_x):
    n, c, l = temporal_x.shape
    slab = temporal_x.astype(jnp.bfloat16)                 # channel-major bf16 slab
    for spec, arr in zip(static_cfg, arrays):
        w, b = arr["w"], arr["b"]
        kind = spec[0]
        if kind == "conv_s2":
            _, cin, cout, act = spec
            assert l % 2 == 0
            x = slab[:, :cin, :l]
            # even/odd phase split (one small XLA pass): rows [0:cin]=x[2m], [cin:2cin]=x[2m+1]
            phases = jnp.concatenate([x[:, :, 0::2], x[:, :, 1::2]], axis=1)
            slab = _tap_conv(_pad_channels(phases, w.shape[2]), w, b,
                             k=3, pad_left=1, lin=l // 2, lout=l // 2, act=act)
            c, l = cout, l // 2
        elif kind == "conv_s1":
            _, cin, cout, k, pad, act = spec
            if slab.shape[1] != w.shape[2]:
                slab = _pad_channels(slab[:, :c, :], w.shape[2])
            lout = l + 2 * pad - k + 1
            slab = _tap_conv(slab, w, b, k=k, pad_left=pad, lin=l, lout=lout, act=act)
            c, l = cout, lout
        else:  # "convT_s2"
            _, cin, cout, act = spec
            if slab.shape[1] != w.shape[2]:
                slab = _pad_channels(slab[:, :c, :], w.shape[2])
            out = _tap_conv(slab, w, b, k=3, pad_left=1, lin=l, lout=l, act=act)
            # interleave even/odd output phases along L (one small XLA pass)
            ph = out[:, :2 * cout, :l]
            slab = (ph.reshape(n, 2, cout, l).transpose(0, 2, 3, 1)
                      .reshape(n, cout, 2 * l))
            c, l = cout, 2 * l
    return slab[:, :c, :l].astype(jnp.float32)


# ----------------------------------------------------------------------------
# Pure-JAX f32 reference (mirrors the PyTorch module, eval-mode BN).
# ----------------------------------------------------------------------------
def _ref_conv1d(x, w, stride, pad):
    n, cin, l = x.shape
    cout, _, k = w.shape
    xp = jnp.pad(x, ((0, 0), (0, 0), (pad, pad)))
    lout = (l + 2 * pad - k) // stride + 1
    idx = jnp.arange(lout)[:, None] * stride + jnp.arange(k)[None, :]
    patches = xp[:, :, idx]                                 # (N, Cin, Lout, k)
    return jnp.einsum("nclk,ock->nol", patches, w)


def _ref_convT1d(x, w, stride, pad):
    n, cin, l = x.shape
    _, cout, k = w.shape
    ld = (l - 1) * stride + 1
    xd = jnp.zeros((n, cin, ld), x.dtype).at[:, :, ::stride].set(x)
    wf = jnp.flip(jnp.transpose(w, (1, 0, 2)), axis=2)      # (Cout, Cin, k)
    return _ref_conv1d(xd, wf, 1, k - 1 - pad)


def reference_forward(raw_layers, x):
    y = x
    for lyr in raw_layers:
        if lyr["kind"] == "conv":
            y = _ref_conv1d(y, lyr["w"], lyr["stride"], lyr["pad"])
        else:
            y = _ref_convT1d(y, lyr["w"], lyr["stride"], lyr["pad"])
        y = y * lyr["scale"][None, :, None] + lyr["bias"][None, :, None]
        act = lyr["act"]
        if act == "relu":
            y = jnp.maximum(y, 0.0)
        elif act == "leaky_relu":
            y = jnp.where(y >= 0.0, y, 0.2 * y)
        elif act == "tanh":
            y = jnp.tanh(y)
    return y


if __name__ == "__main__":
    # 5 stride-2 convs + a k=10 valid conv need L >= 320 (L=320 -> z length 1).
    N, NC, L = 2, 2, 320
    NDF = NGF = 4
    NZ = 8

    key = jax.random.PRNGKey(0)
    pkey, xkey = jax.random.split(key)
    raw_layers = init_raw_params(pkey, nc=NC, ndf=NDF, ngf=NGF, nz=NZ)
    static_cfg, params = prepare_kernel_params(raw_layers)
    temporal_x = jax.random.normal(xkey, (N, NC, L), jnp.float32)

    fwd = jax.jit(functools.partial(ecg_reconstructor_forward, static_cfg))
    x_rec = jax.block_until_ready(fwd(params, temporal_x))

    assert x_rec.shape == (N, NC, L), x_rec.shape
    assert bool(jnp.all(jnp.isfinite(x_rec)))
    assert bool(jnp.all(jnp.abs(x_rec) <= 1.0 + 1e-3))      # tanh output range

    # Correctness vs. pure-JAX f32 reference (bf16 kernel path => loose tol).
    ref = reference_forward(raw_layers, temporal_x)
    max_ref = float(jnp.max(jnp.abs(ref)))
    max_err = float(jnp.max(jnp.abs(x_rec - ref)))
    assert max_err <= 0.15 * max_ref + 1e-5, (max_err, max_ref)

    print("KERNEL_OK")
</pallas_src>

<mosaic_0001>
module attributes {stable_mosaic.version = 11 : i64} {
  func.func @_tap_conv_kernel(%arg0: i32, %arg1: memref<1x16x160xbf16, #tpu.memory_space<vmem>>, %arg2: memref<3x16x16xbf16, #tpu.memory_space<vmem>>, %arg3: memref<16x1xf32, #tpu.memory_space<vmem>>, %arg4: memref<1x16x256xbf16, #tpu.memory_space<vmem>>, %arg5: memref<16x384xbf16, #tpu.memory_space<vmem>>) attributes {dimension_semantics = [#tpu.dimension_semantics<parallel>], iteration_bounds = array<i64: 2>, scalar_prefetch = 0 : i64, scratch_operands = 1 : i64, tpu.core_type = #tpu.core_type<tc>, window_params = [{transform_indices = @transform_0, window_bounds = array<i64: 1, 16, 160>}, {pipeline_mode = #tpu.pipeline_mode<synchronous>, transform_indices = @transform_1, window_bounds = array<i64: 3, 16, 16>}, {pipeline_mode = #tpu.pipeline_mode<synchronous>, transform_indices = @transform_2, window_bounds = array<i64: 16, 1>}, {transform_indices = @transform_3, window_bounds = array<i64: 1, 16, 256>}]} {
    %cst = arith.constant 0.000000e+00 : bf16
    %0 = vector.broadcast %cst : bf16 to vector<16x384xbf16>
    %c0 = arith.constant 0 : index
    %c0_0 = arith.constant 0 : index
    %1 = vector.load %arg5[%c0, %c0_0] : memref<16x384xbf16, #tpu.memory_space<vmem>>, vector<16x384xbf16>
    tpu.vector_store %arg5[%c0, %c0_0], %0 {strides = array<i32>} : memref<16x384xbf16, #tpu.memory_space<vmem>>, vector<16x384xbf16>,
    %c0_1 = arith.constant 0 : index
    %c0_2 = arith.constant 0 : index
    %c0_3 = arith.constant 0 : index
    %2 = vector.load %arg1[%c0_1, %c0_2, %c0_3] : memref<1x16x160xbf16, #tpu.memory_space<vmem>>, vector<1x16x160xbf16>
    %3 = vector.shape_cast %2 : vector<1x16x160xbf16> to vector<16x160xbf16>
    %c0_4 = arith.constant 0 : index
    %c1 = arith.constant 1 : index
    %4 = vector.load %arg5[%c0_4, %c1] : memref<16x384xbf16, #tpu.memory_space<vmem>>, vector<16x160xbf16>
    tpu.vector_store %arg5[%c0_4, %c1], %3 {strides = array<i32>} : memref<16x384xbf16, #tpu.memory_space<vmem>>, vector<16x160xbf16>,
    %c0_5 = arith.constant 0 : index
    %c0_6 = arith.constant 0 : index
    %c0_7 = arith.constant 0 : index
    %5 = vector.load %arg2[%c0_5, %c0_6, %c0_7] : memref<3x16x16xbf16, #tpu.memory_space<vmem>>, vector<1x16x16xbf16>
    %6 = vector.shape_cast %5 : vector<1x16x16xbf16> to vector<16x16xbf16>
    %c0_8 = arith.constant 0 : index
    %c0_9 = arith.constant 0 : index
    %7 = vector.load %arg5[%c0_8, %c0_9] : memref<16x384xbf16, #tpu.memory_space<vmem>>, vector<16x256xbf16>
    %cst_10 = arith.constant dense<0.000000e+00> : vector<16x256xf32>
    %8 = tpu.matmul %6, %7, %cst_10 {dimension_numbers = #tpu.dot_dimension_numbers<[1], [0], [0], [1], [0, 0, 1, 1], [], []>} : vector<16x16xbf16>, vector<16x256xbf16>, vector<16x256xf32> -> vector<16x256xf32>
    %c1_11 = arith.constant 1 : index
    %c0_12 = arith.constant 0 : index
    %c0_13 = arith.constant 0 : index
    %9 = vector.load %arg2[%c1_11, %c0_12, %c0_13] : memref<3x16x16xbf16, #tpu.memory_space<vmem>>, vector<1x16x16xbf16>
    %10 = vector.shape_cast %9 : vector<1x16x16xbf16> to vector<16x16xbf16>
    %c0_14 = arith.constant 0 : index
    %c1_15 = arith.constant 1 : index
    %11 = vector.load %arg5[%c0_14, %c1_15] : memref<16x384xbf16, #tpu.memory_space<vmem>>, vector<16x256xbf16>
    %cst_16 = arith.constant dense<0.000000e+00> : vector<16x256xf32>
    %12 = tpu.matmul %10, %11, %cst_16 {dimension_numbers = #tpu.dot_dimension_numbers<[1], [0], [0], [1], [0, 0, 1, 1], [], []>} : vector<16x16xbf16>, vector<16x256xbf16>, vector<16x256xf32> -> vector<16x256xf32>
    %13 = arith.addf %8, %12 : vector<16x256xf32>
    %c2 = arith.constant 2 : index
    %c0_17 = arith.constant 0 : index
    %c0_18 = arith.constant 0 : index
    %14 = vector.load %arg2[%c2, %c0_17, %c0_18] : memref<3x16x16xbf16, #tpu.memory_space<vmem>>, vector<1x16x16xbf16>
    %15 = vector.shape_cast %14 : vector<1x16x16xbf16> to vector<16x16xbf16>
    %c0_19 = arith.constant 0 : index
    %c2_20 = arith.constant 2 : index
    %16 = vector.load %arg5[%c0_19, %c2_20] : memref<16x384xbf16, #tpu.memory_space<vmem>>, vector<16x256xbf16>
    %cst_21 = arith.constant dense<0.000000e+00> : vector<16x256xf32>
    %17 = tpu.matmul %15, %16, %cst_21 {dimension_numbers = #tpu.dot_dimension_numbers<[1], [0], [0], [1], [0, 0, 1, 1], [], []>} : vector<16x16xbf16>, vector<16x256xbf16>, vector<16x256xf32> -> vector<16x256xf32>
    %18 = arith.addf %13, %17 : vector<16x256xf32>
    %c0_22 = arith.constant 0 : index
    %c0_23 = arith.constant 0 : index
    %19 = vector.load %arg3[%c0_22, %c0_23] : memref<16x1xf32, #tpu.memory_space<vmem>>, vector<16x1xf32>
    %20 = vector.broadcast %19 : vector<16x1xf32> to vector<16x256xf32>
    %21 = arith.addf %18, %20 : vector<16x256xf32>
    %cst_24 = arith.constant 0.000000e+00 : f32
    %22 = vector.broadcast %cst_24 : f32 to vector<16x256xf32>
    %23 = arith.cmpf oge, %21, %22 : vector<16x256xf32>
    %cst_25 = arith.constant 2.000000e-01 : f32
    %24 = vector.broadcast %cst_25 : f32 to vector<16x256xf32>
    %25 = arith.mulf %24, %21 : vector<16x256xf32>
    %26 = arith.select %23, %21, %25 : vector<16x256xi1>, vector<16x256xf32>
    %27 = arith.truncf %26 : vector<16x256xf32> to vector<16x256xbf16>
    %c0_26 = arith.constant 0 : index
    %c0_27 = arith.constant 0 : index
    %c0_28 = arith.constant 0 : index
    %28 = vector.load %arg4[%c0_26, %c0_27, %c0_28] : memref<1x16x256xbf16, #tpu.memory_space<vmem>>, vector<1x16x256xbf16>
    %29 = vector.shape_cast %28 : vector<1x16x256xbf16> to vector<16x256xbf16>
    %30 = vector.shape_cast %27 : vector<16x256xbf16> to vector<1x16x256xbf16>
    tpu.vector_store %arg4[%c0_26, %c0_27, %c0_28], %30 {strides = array<i32>} : memref<1x16x256xbf16, #tpu.memory_space<vmem>>, vector<1x16x256xbf16>,
    return
  }
  func.func @transform_0(%arg0: i32) -> (i32, i32, i32) {
    %c0_i32 = arith.constant 0 : i32
    %c0_i32_0 = arith.constant 0 : i32
    %c0_i32_1 = arith.constant 0 : i32
    return %arg0, %c0_i32, %c0_i32_0 : i32, i32, i32
  }
  func.func @transform_1(%arg0: i32) -> (i32, i32, i32) {
    %c0_i32 = arith.constant 0 : i32
    %c0_i32_0 = arith.constant 0 : i32
    %c0_i32_1 = arith.constant 0 : i32
    %c0_i32_2 = arith.constant 0 : i32
    return %c0_i32, %c0_i32_0, %c0_i32_1 : i32, i32, i32
  }
  func.func @transform_2(%arg0: i32) -> (i32, i32) {
    %c0_i32 = arith.constant 0 : i32
    %c0_i32_0 = arith.constant 0 : i32
    %c0_i32_1 = arith.constant 0 : i32
    return %c0_i32, %c0_i32_0 : i32, i32
  }
  func.func @transform_3(%arg0: i32) -> (i32, i32, i32) {
    %c0_i32 = arith.constant 0 : i32
    %c0_i32_0 = arith.constant 0 : i32
    %c0_i32_1 = arith.constant 0 : i32
    return %arg0, %c0_i32, %c0_i32_0 : i32, i32, i32
  }
}

module attributes {stable_mosaic.version = 11 : i64} {
  func.func @_tap_conv_kernel(%arg0: i32, %arg1: memref<1x16x80xbf16, #tpu.memory_space<vmem>>, %arg2: memref<3x16x16xbf16, #tpu.memory_space<vmem>>, %arg3: memref<16x1xf32, #tpu.memory_space<vmem>>, %arg4: memref<1x16x128xbf16, #tpu.memory_space<vmem>>, %arg5: memref<16x256xbf16, #tpu.memory_space<vmem>>) attributes {dimension_semantics = [#tpu.dimension_semantics<parallel>], iteration_bounds = array<i64: 2>, scalar_prefetch = 0 : i64, scratch_operands = 1 : i64, tpu.core_type = #tpu.core_type<tc>, window_params = [{transform_indices = @transform_0, window_bounds = array<i64: 1, 16, 80>}, {pipeline_mode = #tpu.pipeline_mode<synchronous>, transform_indices = @transform_1, window_bounds = array<i64: 3, 16, 16>}, {pipeline_mode = #tpu.pipeline_mode<synchronous>, transform_indices = @transform_2, window_bounds = array<i64: 16, 1>}, {transform_indices = @transform_3, window_bounds = array<i64: 1, 16, 128>}]} {
    %cst = arith.constant 0.000000e+00 : bf16
    %0 = vector.broadcast %cst : bf16 to vector<16x256xbf16>
    %c0 = arith.constant 0 : index
    %c0_0 = arith.constant 0 : index
    %1 = vector.load %arg5[%c0, %c0_0] : memref<16x256xbf16, #tpu.memory_space<vmem>>, vector<16x256xbf16>
    tpu.vector_store %arg5[%c0, %c0_0], %0 {strides = array<i32>} : memref<16x256xbf16, #tpu.memory_space<vmem>>, vector<16x256xbf16>,
    %c0_1 = arith.constant 0 : index
    %c0_2 = arith.constant 0 : index
    %c0_3 = arith.constant 0 : index
    %2 = vector.load %arg1[%c0_1, %c0_2, %c0_3] : memref<1x16x80xbf16, #tpu.memory_space<vmem>>, vector<1x16x80xbf16>
    %3 = vector.shape_cast %2 : vector<1x16x80xbf16> to vector<16x80xbf16>
    %c0_4 = arith.constant 0 : index
    %c1 = arith.constant 1 : index
    %4 = vector.load %arg5[%c0_4, %c1] : memref<16x256xbf16, #tpu.memory_space<vmem>>, vector<16x80xbf16>
    tpu.vector_store %arg5[%c0_4, %c1], %3 {strides = array<i32>} : memref<16x256xbf16, #tpu.memory_space<vmem>>, vector<16x80xbf16>,
    %c0_5 = arith.constant 0 : index
    %c0_6 = arith.constant 0 : index
    %c0_7 = arith.constant 0 : index
    %5 = vector.load %arg2[%c0_5, %c0_6, %c0_7] : memref<3x16x16xbf16, #tpu.memory_space<vmem>>, vector<1x16x16xbf16>
    %6 = vector.shape_cast %5 : vector<1x16x16xbf16> to vector<16x16xbf16>
    %c0_8 = arith.constant 0 : index
    %c0_9 = arith.constant 0 : index
    %7 = vector.load %arg5[%c0_8, %c0_9] : memref<16x256xbf16, #tpu.memory_space<vmem>>, vector<16x128xbf16>
    %cst_10 = arith.constant dense<0.000000e+00> : vector<16x128xf32>
    %8 = tpu.matmul %6, %7, %cst_10 {dimension_numbers = #tpu.dot_dimension_numbers<[1], [0], [0], [1], [0, 0, 1, 1], [], []>} : vector<16x16xbf16>, vector<16x128xbf16>, vector<16x128xf32> -> vector<16x128xf32>
    %c1_11 = arith.constant 1 : index
    %c0_12 = arith.constant 0 : index
    %c0_13 = arith.constant 0 : index
    %9 = vector.load %arg2[%c1_11, %c0_12, %c0_13] : memref<3x16x16xbf16, #tpu.memory_space<vmem>>, vector<1x16x16xbf16>
    %10 = vector.shape_cast %9 : vector<1x16x16xbf16> to vector<16x16xbf16>
    %c0_14 = arith.constant 0 : index
    %c1_15 = arith.constant 1 : index
    %11 = vector.load %arg5[%c0_14, %c1_15] : memref<16x256xbf16, #tpu.memory_space<vmem>>, vector<16x128xbf16>
    %cst_16 = arith.constant dense<0.000000e+00> : vector<16x128xf32>
    %12 = tpu.matmul %10, %11, %cst_16 {dimension_numbers = #tpu.dot_dimension_numbers<[1], [0], [0], [1], [0, 0, 1, 1], [], []>} : vector<16x16xbf16>, vector<16x128xbf16>, vector<16x128xf32> -> vector<16x128xf32>
    %13 = arith.addf %8, %12 : vector<16x128xf32>
    %c2 = arith.constant 2 : index
    %c0_17 = arith.constant 0 : index
    %c0_18 = arith.constant 0 : index
    %14 = vector.load %arg2[%c2, %c0_17, %c0_18] : memref<3x16x16xbf16, #tpu.memory_space<vmem>>, vector<1x16x16xbf16>
    %15 = vector.shape_cast %14 : vector<1x16x16xbf16> to vector<16x16xbf16>
    %c0_19 = arith.constant 0 : index
    %c2_20 = arith.constant 2 : index
    %16 = vector.load %arg5[%c0_19, %c2_20] : memref<16x256xbf16, #tpu.memory_space<vmem>>, vector<16x128xbf16>
    %cst_21 = arith.constant dense<0.000000e+00> : vector<16x128xf32>
    %17 = tpu.matmul %15, %16, %cst_21 {dimension_numbers = #tpu.dot_dimension_numbers<[1], [0], [0], [1], [0, 0, 1, 1], [], []>} : vector<16x16xbf16>, vector<16x128xbf16>, vector<16x128xf32> -> vector<16x128xf32>
    %18 = arith.addf %13, %17 : vector<16x128xf32>
    %c0_22 = arith.constant 0 : index
    %c0_23 = arith.constant 0 : index
    %19 = vector.load %arg3[%c0_22, %c0_23] : memref<16x1xf32, #tpu.memory_space<vmem>>, vector<16x1xf32>
    %20 = vector.broadcast %19 : vector<16x1xf32> to vector<16x128xf32>
    %21 = arith.addf %18, %20 : vector<16x128xf32>
    %cst_24 = arith.constant 0.000000e+00 : f32
    %22 = vector.broadcast %cst_24 : f32 to vector<16x128xf32>
    %23 = arith.cmpf oge, %21, %22 : vector<16x128xf32>
    %cst_25 = arith.constant 2.000000e-01 : f32
    %24 = vector.broadcast %cst_25 : f32 to vector<16x128xf32>
    %25 = arith.mulf %24, %21 : vector<16x128xf32>
    %26 = arith.select %23, %21, %25 : vector<16x128xi1>, vector<16x128xf32>
    %27 = arith.truncf %26 : vector<16x128xf32> to vector<16x128xbf16>
    %c0_26 = arith.constant 0 : index
    %c0_27 = arith.constant 0 : index
    %c0_28 = arith.constant 0 : index
    %28 = vector.load %arg4[%c0_26, %c0_27, %c0_28] : memref<1x16x128xbf16, #tpu.memory_space<vmem>>, vector<1x16x128xbf16>
    %29 = vector.shape_cast %28 : vector<1x16x128xbf16> to vector<16x128xbf16>
    %30 = vector.shape_cast %27 : vector<16x128xbf16> to vector<1x16x128xbf16>
    tpu.vector_store %arg4[%c0_26, %c0_27, %c0_28], %30 {strides = array<i32>} : memref<1x16x128xbf16, #tpu.memory_space<vmem>>, vector<1x16x128xbf16>,
    return
  }
  func.func @transform_0(%arg0: i32) -> (i32, i32, i32) {
    %c0_i32 = arith.constant 0 : i32
    %c0_i32_0 = arith.constant 0 : i32
    %c0_i32_1 = arith.constant 0 : i32
    return %arg0, %c0_i32, %c0_i32_0 : i32, i32, i32
  }
  func.func @transform_1(%arg0: i32) -> (i32, i32, i32) {
    %c0_i32 = arith.constant 0 : i32
    %c0_i32_0 = arith.constant 0 : i32
    %c0_i32_1 = arith.constant 0 : i32
    %c0_i32_2 = arith.constant 0 : i32
    return %c0_i32, %c0_i32_0, %c0_i32_1 : i32, i32, i32
  }
  func.func @transform_2(%arg0: i32) -> (i32, i32) {
    %c0_i32 = arith.constant 0 : i32
    %c0_i32_0 = arith.constant 0 : i32
    %c0_i32_1 = arith.constant 0 : i32
    return %c0_i32, %c0_i32_0 : i32, i32
  }
  func.func @transform_3(%arg0: i32) -> (i32, i32, i32) {
    %c0_i32 = arith.constant 0 : i32
    %c0_i32_0 = arith.constant 0 : i32
    %c0_i32_1 = arith.constant 0 : i32
    return %arg0, %c0_i32, %c0_i32_0 : i32, i32, i32
  }
}

module attributes {stable_mosaic.version = 11 : i64} {
  func.func @_tap_conv_kernel(%arg0: i32, %arg1: memref<1x16x40xbf16, #tpu.memory_space<vmem>>, %arg2: memref<3x16x16xbf16, #tpu.memory_space<vmem>>, %arg3: memref<16x1xf32, #tpu.memory_space<vmem>>, %arg4: memref<1x16x128xbf16, #tpu.memory_space<vmem>>, %arg5: memref<16x256xbf16, #tpu.memory_space<vmem>>) attributes {dimension_semantics = [#tpu.dimension_semantics<parallel>], iteration_bounds = array<i64: 2>, scalar_prefetch = 0 : i64, scratch_operands = 1 : i64, tpu.core_type = #tpu.core_type<tc>, window_params = [{transform_indices = @transform_0, window_bounds = array<i64: 1, 16, 40>}, {pipeline_mode = #tpu.pipeline_mode<synchronous>, transform_indices = @transform_1, window_bounds = array<i64: 3, 16, 16>}, {pipeline_mode = #tpu.pipeline_mode<synchronous>, transform_indices = @transform_2, window_bounds = array<i64: 16, 1>}, {transform_indices = @transform_3, window_bounds = array<i64: 1, 16, 128>}]} {
    %cst = arith.constant 0.000000e+00 : bf16
    %0 = vector.broadcast %cst : bf16 to vector<16x256xbf16>
    %c0 = arith.constant 0 : index
    %c0_0 = arith.constant 0 : index
    %1 = vector.load %arg5[%c0, %c0_0] : memref<16x256xbf16, #tpu.memory_space<vmem>>, vector<16x256xbf16>
    tpu.vector_store %arg5[%c0, %c0_0], %0 {strides = array<i32>} : memref<16x256xbf16, #tpu.memory_space<vmem>>, vector<16x256xbf16>,
    %c0_1 = arith.constant 0 : index
    %c0_2 = arith.constant 0 : index
    %c0_3 = arith.constant 0 : index
    %2 = vector.load %arg1[%c0_1, %c0_2, %c0_3] : memref<1x16x40xbf16, #tpu.memory_space<vmem>>, vector<1x16x40xbf16>
    %3 = vector.shape_cast %2 : vector<1x16x40xbf16> to vector<16x40xbf16>
    %c0_4 = arith.constant 0 : index
    %c1 = arith.constant 1 : index
    %4 = vector.load %arg5[%c0_4, %c1] : memref<16x256xbf16, #tpu.memory_space<vmem>>, vector<16x40xbf16>
    tpu.vector_store %arg5[%c0_4, %c1], %3 {strides = array<i32>} : memref<16x256xbf16, #tpu.memory_space<vmem>>, vector<16x40xbf16>,
    %c0_5 = arith.constant 0 : index
    %c0_6 = arith.constant 0 : index
    %c0_7 = arith.constant 0 : index
    %5 = vector.load %arg2[%c0_5, %c0_6, %c0_7] : memref<3x16x16xbf16, #tpu.memory_space<vmem>>, vector<1x16x16xbf16>
    %6 = vector.shape_cast %5 : vector<1x16x16xbf16> to vector<16x16xbf16>
    %c0_8 = arith.constant 0 : index
    %c0_9 = arith.constant 0 : index
    %7 = vector.load %arg5[%c0_8, %c0_9] : memref<16x256xbf16, #tpu.memory_space<vmem>>, vector<16x128xbf16>
    %cst_10 = arith.constant dense<0.000000e+00> : vector<16x128xf32>
    %8 = tpu.matmul %6, %7, %cst_10 {dimension_numbers = #tpu.dot_dimension_numbers<[1], [0], [0], [1], [0, 0, 1, 1], [], []>} : vector<16x16xbf16>, vector<16x128xbf16>, vector<16x128xf32> -> vector<16x128xf32>
    %c1_11 = arith.constant 1 : index
    %c0_12 = arith.constant 0 : index
    %c0_13 = arith.constant 0 : index
    %9 = vector.load %arg2[%c1_11, %c0_12, %c0_13] : memref<3x16x16xbf16, #tpu.memory_space<vmem>>, vector<1x16x16xbf16>
    %10 = vector.shape_cast %9 : vector<1x16x16xbf16> to vector<16x16xbf16>
    %c0_14 = arith.constant 0 : index
    %c1_15 = arith.constant 1 : index
    %11 = vector.load %arg5[%c0_14, %c1_15] : memref<16x256xbf16, #tpu.memory_space<vmem>>, vector<16x128xbf16>
    %cst_16 = arith.constant dense<0.000000e+00> : vector<16x128xf32>
    %12 = tpu.matmul %10, %11, %cst_16 {dimension_numbers = #tpu.dot_dimension_numbers<[1], [0], [0], [1], [0, 0, 1, 1], [], []>} : vector<16x16xbf16>, vector<16x128xbf16>, vector<16x128xf32> -> vector<16x128xf32>
    %13 = arith.addf %8, %12 : vector<16x128xf32>
    %c2 = arith.constant 2 : index
    %c0_17 = arith.constant 0 : index
    %c0_18 = arith.constant 0 : index
    %14 = vector.load %arg2[%c2, %c0_17, %c0_18] : memref<3x16x16xbf16, #tpu.memory_space<vmem>>, vector<1x16x16xbf16>
    %15 = vector.shape_cast %14 : vector<1x16x16xbf16> to vector<16x16xbf16>
    %c0_19 = arith.constant 0 : index
    %c2_20 = arith.constant 2 : index
    %16 = vector.load %arg5[%c0_19, %c2_20] : memref<16x256xbf16, #tpu.memory_space<vmem>>, vector<16x128xbf16>
    %cst_21 = arith.constant dense<0.000000e+00> : vector<16x128xf32>
    %17 = tpu.matmul %15, %16, %cst_21 {dimension_numbers = #tpu.dot_dimension_numbers<[1], [0], [0], [1], [0, 0, 1, 1], [], []>} : vector<16x16xbf16>, vector<16x128xbf16>, vector<16x128xf32> -> vector<16x128xf32>
    %18 = arith.addf %13, %17 : vector<16x128xf32>
    %c0_22 = arith.constant 0 : index
    %c0_23 = arith.constant 0 : index
    %19 = vector.load %arg3[%c0_22, %c0_23] : memref<16x1xf32, #tpu.memory_space<vmem>>, vector<16x1xf32>
    %20 = vector.broadcast %19 : vector<16x1xf32> to vector<16x128xf32>
    %21 = arith.addf %18, %20 : vector<16x128xf32>
    %cst_24 = arith.constant 0.000000e+00 : f32
    %22 = vector.broadcast %cst_24 : f32 to vector<16x128xf32>
    %23 = arith.cmpf oge, %21, %22 : vector<16x128xf32>
    %cst_25 = arith.constant 2.000000e-01 : f32
    %24 = vector.broadcast %cst_25 : f32 to vector<16x128xf32>
    %25 = arith.mulf %24, %21 : vector<16x128xf32>
    %26 = arith.select %23, %21, %25 : vector<16x128xi1>, vector<16x128xf32>
    %27 = arith.truncf %26 : vector<16x128xf32> to vector<16x128xbf16>
    %c0_26 = arith.constant 0 : index
    %c0_27 = arith.constant 0 : index
    %c0_28 = arith.constant 0 : index
    %28 = vector.load %arg4[%c0_26, %c0_27, %c0_28] : memref<1x16x128xbf16, #tpu.memory_space<vmem>>, vector<1x16x128xbf16>
    %29 = vector.shape_cast %28 : vector<1x16x128xbf16> to vector<16x128xbf16>
    %30 = vector.shape_cast %27 : vector<16x128xbf16> to vector<1x16x128xbf16>
    tpu.vector_store %arg4[%c0_26, %c0_27, %c0_28], %30 {strides = array<i32>} : memref<1x16x128xbf16, #tpu.memory_space<vmem>>, vector<1x16x128xbf16>,
    return
  }
  func.func @transform_0(%arg0: i32) -> (i32, i32, i32) {
    %c0_i32 = arith.constant 0 : i32
    %c0_i32_0 = arith.constant 0 : i32
    %c0_i32_1 = arith.constant 0 : i32
    return %arg0, %c0_i32, %c0_i32_0 : i32, i32, i32
  }
  func.func @transform_1(%arg0: i32) -> (i32, i32, i32) {
    %c0_i32 = arith.constant 0 : i32
    %c0_i32_0 = arith.constant 0 : i32
    %c0_i32_1 = arith.constant 0 : i32
    %c0_i32_2 = arith.constant 0 : i32
    return %c0_i32, %c0_i32_0, %c0_i32_1 : i32, i32, i32
  }
  func.func @transform_2(%arg0: i32) -> (i32, i32) {
    %c0_i32 = arith.constant 0 : i32
    %c0_i32_0 = arith.constant 0 : i32
    %c0_i32_1 = arith.constant 0 : i32
    return %c0_i32, %c0_i32_0 : i32, i32
  }
  func.func @transform_3(%arg0: i32) -> (i32, i32, i32) {
    %c0_i32 = arith.constant 0 : i32
    %c0_i32_0 = arith.constant 0 : i32
    %c0_i32_1 = arith.constant 0 : i32
    return %arg0, %c0_i32, %c0_i32_0 : i32, i32, i32
  }
}

module attributes {stable_mosaic.version = 11 : i64} {
  func.func @_tap_conv_kernel(%arg0: i32, %arg1: memref<1x32x20xbf16, #tpu.memory_space<vmem>>, %arg2: memref<3x32x32xbf16, #tpu.memory_space<vmem>>, %arg3: memref<32x1xf32, #tpu.memory_space<vmem>>, %arg4: memref<1x32x128xbf16, #tpu.memory_space<vmem>>, %arg5: memref<32x256xbf16, #tpu.memory_space<vmem>>) attributes {dimension_semantics = [#tpu.dimension_semantics<parallel>], iteration_bounds = array<i64: 2>, scalar_prefetch = 0 : i64, scratch_operands = 1 : i64, tpu.core_type = #tpu.core_type<tc>, window_params = [{transform_indices = @transform_0, window_bounds = array<i64: 1, 32, 20>}, {pipeline_mode = #tpu.pipeline_mode<synchronous>, transform_indices = @transform_1, window_bounds = array<i64: 3, 32, 32>}, {pipeline_mode = #tpu.pipeline_mode<synchronous>, transform_indices = @transform_2, window_bounds = array<i64: 32, 1>}, {transform_indices = @transform_3, window_bounds = array<i64: 1, 32, 128>}]} {
    %cst = arith.constant 0.000000e+00 : bf16
    %0 = vector.broadcast %cst : bf16 to vector<32x256xbf16>
    %c0 = arith.constant 0 : index
    %c0_0 = arith.constant 0 : index
    %1 = vector.load %arg5[%c0, %c0_0] : memref<32x256xbf16, #tpu.memory_space<vmem>>, vector<32x256xbf16>
    tpu.vector_store %arg5[%c0, %c0_0], %0 {strides = array<i32>} : memref<32x256xbf16, #tpu.memory_space<vmem>>, vector<32x256xbf16>,
    %c0_1 = arith.constant 0 : index
    %c0_2 = arith.constant 0 : index
    %c0_3 = arith.constant 0 : index
    %2 = vector.load %arg1[%c0_1, %c0_2, %c0_3] : memref<1x32x20xbf16, #tpu.memory_space<vmem>>, vector<1x32x20xbf16>
    %3 = vector.shape_cast %2 : vector<1x32x20xbf16> to vector<32x20xbf16>
    %c0_4 = arith.constant 0 : index
    %c1 = arith.constant 1 : index
    %4 = vector.load %arg5[%c0_4, %c1] : memref<32x256xbf16, #tpu.memory_space<vmem>>, vector<32x20xbf16>
    tpu.vector_store %arg5[%c0_4, %c1], %3 {strides = array<i32>} : memref<32x256xbf16, #tpu.memory_space<vmem>>, vector<32x20xbf16>,
    %c0_5 = arith.constant 0 : index
    %c0_6 = arith.constant 0 : index
    %c0_7 = arith.constant 0 : index
    %5 = vector.load %arg2[%c0_5, %c0_6, %c0_7] : memref<3x32x32xbf16, #tpu.memory_space<vmem>>, vector<1x32x32xbf16>
    %6 = vector.shape_cast %5 : vector<1x32x32xbf16> to vector<32x32xbf16>
    %c0_8 = arith.constant 0 : index
    %c0_9 = arith.constant 0 : index
    %7 = vector.load %arg5[%c0_8, %c0_9] : memref<32x256xbf16, #tpu.memory_space<vmem>>, vector<32x128xbf16>
    %cst_10 = arith.constant dense<0.000000e+00> : vector<32x128xf32>
    %8 = tpu.matmul %6, %7, %cst_10 {dimension_numbers = #tpu.dot_dimension_numbers<[1], [0], [0], [1], [0, 0, 1, 1], [], []>} : vector<32x32xbf16>, vector<32x128xbf16>, vector<32x128xf32> -> vector<32x128xf32>
    %c1_11 = arith.constant 1 : index
    %c0_12 = arith.constant 0 : index
    %c0_13 = arith.constant 0 : index
    %9 = vector.load %arg2[%c1_11, %c0_12, %c0_13] : memref<3x32x32xbf16, #tpu.memory_space<vmem>>, vector<1x32x32xbf16>
    %10 = vector.shape_cast %9 : vector<1x32x32xbf16> to vector<32x32xbf16>
    %c0_14 = arith.constant 0 : index
    %c1_15 = arith.constant 1 : index
    %11 = vector.load %arg5[%c0_14, %c1_15] : memref<32x256xbf16, #tpu.memory_space<vmem>>, vector<32x128xbf16>
    %cst_16 = arith.constant dense<0.000000e+00> : vector<32x128xf32>
    %12 = tpu.matmul %10, %11, %cst_16 {dimension_numbers = #tpu.dot_dimension_numbers<[1], [0], [0], [1], [0, 0, 1, 1], [], []>} : vector<32x32xbf16>, vector<32x128xbf16>, vector<32x128xf32> -> vector<32x128xf32>
    %13 = arith.addf %8, %12 : vector<32x128xf32>
    %c2 = arith.constant 2 : index
    %c0_17 = arith.constant 0 : index
    %c0_18 = arith.constant 0 : index
    %14 = vector.load %arg2[%c2, %c0_17, %c0_18] : memref<3x32x32xbf16, #tpu.memory_space<vmem>>, vector<1x32x32xbf16>
    %15 = vector.shape_cast %14 : vector<1x32x32xbf16> to vector<32x32xbf16>
    %c0_19 = arith.constant 0 : index
    %c2_20 = arith.constant 2 : index
    %16 = vector.load %arg5[%c0_19, %c2_20] : memref<32x256xbf16, #tpu.memory_space<vmem>>, vector<32x128xbf16>
    %cst_21 = arith.constant dense<0.000000e+00> : vector<32x128xf32>
    %17 = tpu.matmul %15, %16, %cst_21 {dimension_numbers = #tpu.dot_dimension_numbers<[1], [0], [0], [1], [0, 0, 1, 1], [], []>} : vector<32x32xbf16>, vector<32x128xbf16>, vector<32x128xf32> -> vector<32x128xf32>
    %18 = arith.addf %13, %17 : vector<32x128xf32>
    %c0_22 = arith.constant 0 : index
    %c0_23 = arith.constant 0 : index
    %19 = vector.load %arg3[%c0_22, %c0_23] : memref<32x1xf32, #tpu.memory_space<vmem>>, vector<32x1xf32>
    %20 = vector.broadcast %19 : vector<32x1xf32> to vector<32x128xf32>
    %21 = arith.addf %18, %20 : vector<32x128xf32>
    %cst_24 = arith.constant 0.000000e+00 : f32
    %22 = vector.broadcast %cst_24 : f32 to vector<32x128xf32>
    %23 = arith.cmpf oge, %21, %22 : vector<32x128xf32>
    %cst_25 = arith.constant 2.000000e-01 : f32
    %24 = vector.broadcast %cst_25 : f32 to vector<32x128xf32>
    %25 = arith.mulf %24, %21 : vector<32x128xf32>
    %26 = arith.select %23, %21, %25 : vector<32x128xi1>, vector<32x128xf32>
    %27 = arith.truncf %26 : vector<32x128xf32> to vector<32x128xbf16>
    %c0_26 = arith.constant 0 : index
    %c0_27 = arith.constant 0 : index
    %c0_28 = arith.constant 0 : index
    %28 = vector.load %arg4[%c0_26, %c0_27, %c0_28] : memref<1x32x128xbf16, #tpu.memory_space<vmem>>, vector<1x32x128xbf16>
    %29 = vector.shape_cast %28 : vector<1x32x128xbf16> to vector<32x128xbf16>
    %30 = vector.shape_cast %27 : vector<32x128xbf16> to vector<1x32x128xbf16>
    tpu.vector_store %arg4[%c0_26, %c0_27, %c0_28], %30 {strides = array<i32>} : memref<1x32x128xbf16, #tpu.memory_space<vmem>>, vector<1x32x128xbf16>,
    return
  }
  func.func @transform_0(%arg0: i32) -> (i32, i32, i32) {
    %c0_i32 = arith.constant 0 : i32
    %c0_i32_0 = arith.constant 0 : i32
    %c0_i32_1 = arith.constant 0 : i32
    return %arg0, %c0_i32, %c0_i32_0 : i32, i32, i32
  }
  func.func @transform_1(%arg0: i32) -> (i32, i32, i32) {
    %c0_i32 = arith.constant 0 : i32
    %c0_i32_0 = arith.constant 0 : i32
    %c0_i32_1 = arith.constant 0 : i32
    %c0_i32_2 = arith.constant 0 : i32
    return %c0_i32, %c0_i32_0, %c0_i32_1 : i32, i32, i32
  }
  func.func @transform_2(%arg0: i32) -> (i32, i32) {
    %c0_i32 = arith.constant 0 : i32
    %c0_i32_0 = arith.constant 0 : i32
    %c0_i32_1 = arith.constant 0 : i32
    return %c0_i32, %c0_i32_0 : i32, i32
  }
  func.func @transform_3(%arg0: i32) -> (i32, i32, i32) {
    %c0_i32 = arith.constant 0 : i32
    %c0_i32_0 = arith.constant 0 : i32
    %c0_i32_1 = arith.constant 0 : i32
    return %arg0, %c0_i32, %c0_i32_0 : i32, i32, i32
  }
}

module attributes {stable_mosaic.version = 11 : i64} {
  func.func @_tap_conv_kernel(%arg0: i32, %arg1: memref<1x64x10xbf16, #tpu.memory_space<vmem>>, %arg2: memref<3x64x64xbf16, #tpu.memory_space<vmem>>, %arg3: memref<64x1xf32, #tpu.memory_space<vmem>>, %arg4: memref<1x64x128xbf16, #tpu.memory_space<vmem>>, %arg5: memref<64x256xbf16, #tpu.memory_space<vmem>>) attributes {dimension_semantics = [#tpu.dimension_semantics<parallel>], iteration_bounds = array<i64: 2>, scalar_prefetch = 0 : i64, scratch_operands = 1 : i64, tpu.core_type = #tpu.core_type<tc>, window_params = [{transform_indices = @transform_0, window_bounds = array<i64: 1, 64, 10>}, {pipeline_mode = #tpu.pipeline_mode<synchronous>, transform_indices = @transform_1, window_bounds = array<i64: 3, 64, 64>}, {pipeline_mode = #tpu.pipeline_mode<synchronous>, transform_indices = @transform_2, window_bounds = array<i64: 64, 1>}, {transform_indices = @transform_3, window_bounds = array<i64: 1, 64, 128>}]} {
    %cst = arith.constant 0.000000e+00 : bf16
    %0 = vector.broadcast %cst : bf16 to vector<64x256xbf16>
    %c0 = arith.constant 0 : index
    %c0_0 = arith.constant 0 : index
    %1 = vector.load %arg5[%c0, %c0_0] : memref<64x256xbf16, #tpu.memory_space<vmem>>, vector<64x256xbf16>
    tpu.vector_store %arg5[%c0, %c0_0], %0 {strides = array<i32>} : memref<64x256xbf16, #tpu.memory_space<vmem>>, vector<64x256xbf16>,
    %c0_1 = arith.constant 0 : index
    %c0_2 = arith.constant 0 : index
    %c0_3 = arith.constant 0 : index
    %2 = vector.load %arg1[%c0_1, %c0_2, %c0_3] : memref<1x64x10xbf16, #tpu.memory_space<vmem>>, vector<1x64x10xbf16>
    %3 = vector.shape_cast %2 : vector<1x64x10xbf16> to vector<64x10xbf16>
    %c0_4 = arith.constant 0 : index
    %c1 = arith.constant 1 : index
    %4 = vector.load %arg5[%c0_4, %c1] : memref<64x256xbf16, #tpu.memory_space<vmem>>, vector<64x10xbf16>
    tpu.vector_store %arg5[%c0_4, %c1], %3 {strides = array<i32>} : memref<64x256xbf16, #tpu.memory_space<vmem>>, vector<64x10xbf16>,
    %c0_5 = arith.constant 0 : index
    %c0_6 = arith.constant 0 : index
    %c0_7 = arith.constant 0 : index
    %5 = vector.load %arg2[%c0_5, %c0_6, %c0_7] : memref<3x64x64xbf16, #tpu.memory_space<vmem>>, vector<1x64x64xbf16>
    %6 = vector.shape_cast %5 : vector<1x64x64xbf16> to vector<64x64xbf16>
    %c0_8 = arith.constant 0 : index
    %c0_9 = arith.constant 0 : index
    %7 = vector.load %arg5[%c0_8, %c0_9] : memref<64x256xbf16, #tpu.memory_space<vmem>>, vector<64x128xbf16>
    %cst_10 = arith.constant dense<0.000000e+00> : vector<64x128xf32>
    %8 = tpu.matmul %6, %7, %cst_10 {dimension_numbers = #tpu.dot_dimension_numbers<[1], [0], [0], [1], [0, 0, 1, 1], [], []>} : vector<64x64xbf16>, vector<64x128xbf16>, vector<64x128xf32> -> vector<64x128xf32>
    %c1_11 = arith.constant 1 : index
    %c0_12 = arith.constant 0 : index
    %c0_13 = arith.constant 0 : index
    %9 = vector.load %arg2[%c1_11, %c0_12, %c0_13] : memref<3x64x64xbf16, #tpu.memory_space<vmem>>, vector<1x64x64xbf16>
    %10 = vector.shape_cast %9 : vector<1x64x64xbf16> to vector<64x64xbf16>
    %c0_14 = arith.constant 0 : index
    %c1_15 = arith.constant 1 : index
    %11 = vector.load %arg5[%c0_14, %c1_15] : memref<64x256xbf16, #tpu.memory_space<vmem>>, vector<64x128xbf16>
    %cst_16 = arith.constant dense<0.000000e+00> : vector<64x128xf32>
    %12 = tpu.matmul %10, %11, %cst_16 {dimension_numbers = #tpu.dot_dimension_numbers<[1], [0], [0], [1], [0, 0, 1, 1], [], []>} : vector<64x64xbf16>, vector<64x128xbf16>, vector<64x128xf32> -> vector<64x128xf32>
    %13 = arith.addf %8, %12 : vector<64x128xf32>
    %c2 = arith.constant 2 : index
    %c0_17 = arith.constant 0 : index
    %c0_18 = arith.constant 0 : index
    %14 = vector.load %arg2[%c2, %c0_17, %c0_18] : memref<3x64x64xbf16, #tpu.memory_space<vmem>>, vector<1x64x64xbf16>
    %15 = vector.shape_cast %14 : vector<1x64x64xbf16> to vector<64x64xbf16>
    %c0_19 = arith.constant 0 : index
    %c2_20 = arith.constant 2 : index
    %16 = vector.load %arg5[%c0_19, %c2_20] : memref<64x256xbf16, #tpu.memory_space<vmem>>, vector<64x128xbf16>
    %cst_21 = arith.constant dense<0.000000e+00> : vector<64x128xf32>
    %17 = tpu.matmul %15, %16, %cst_21 {dimension_numbers = #tpu.dot_dimension_numbers<[1], [0], [0], [1], [0, 0, 1, 1], [], []>} : vector<64x64xbf16>, vector<64x128xbf16>, vector<64x128xf32> -> vector<64x128xf32>
    %18 = arith.addf %13, %17 : vector<64x128xf32>
    %c0_22 = arith.constant 0 : index
    %c0_23 = arith.constant 0 : index
    %19 = vector.load %arg3[%c0_22, %c0_23] : memref<64x1xf32, #tpu.memory_space<vmem>>, vector<64x1xf32>
    %20 = vector.broadcast %19 : vector<64x1xf32> to vector<64x128xf32>
    %21 = arith.addf %18, %20 : vector<64x128xf32>
    %cst_24 = arith.constant 0.000000e+00 : f32
    %22 = vector.broadcast %cst_24 : f32 to vector<64x128xf32>
    %23 = arith.cmpf oge, %21, %22 : vector<64x128xf32>
    %cst_25 = arith.constant 2.000000e-01 : f32
    %24 = vector.broadcast %cst_25 : f32 to vector<64x128xf32>
    %25 = arith.mulf %24, %21 : vector<64x128xf32>
    %26 = arith.select %23, %21, %25 : vector<64x128xi1>, vector<64x128xf32>
    %27 = arith.truncf %26 : vector<64x128xf32> to vector<64x128xbf16>
    %c0_26 = arith.constant 0 : index
    %c0_27 = arith.constant 0 : index
    %c0_28 = arith.constant 0 : index
    %28 = vector.load %arg4[%c0_26, %c0_27, %c0_28] : memref<1x64x128xbf16, #tpu.memory_space<vmem>>, vector<1x64x128xbf16>
    %29 = vector.shape_cast %28 : vector<1x64x128xbf16> to vector<64x128xbf16>
    %30 = vector.shape_cast %27 : vector<64x128xbf16> to vector<1x64x128xbf16>
    tpu.vector_store %arg4[%c0_26, %c0_27, %c0_28], %30 {strides = array<i32>} : memref<1x64x128xbf16, #tpu.memory_space<vmem>>, vector<1x64x128xbf16>,
    return
  }
  func.func @transform_0(%arg0: i32) -> (i32, i32, i32) {
    %c0_i32 = arith.constant 0 : i32
    %c0_i32_0 = arith.constant 0 : i32
    %c0_i32_1 = arith.constant 0 : i32
    return %arg0, %c0_i32, %c0_i32_0 : i32, i32, i32
  }
  func.func @transform_1(%arg0: i32) -> (i32, i32, i32) {
    %c0_i32 = arith.constant 0 : i32
    %c0_i32_0 = arith.constant 0 : i32
    %c0_i32_1 = arith.constant 0 : i32
    %c0_i32_2 = arith.constant 0 : i32
    return %c0_i32, %c0_i32_0, %c0_i32_1 : i32, i32, i32
  }
  func.func @transform_2(%arg0: i32) -> (i32, i32) {
    %c0_i32 = arith.constant 0 : i32
    %c0_i32_0 = arith.constant 0 : i32
    %c0_i32_1 = arith.constant 0 : i32
    return %c0_i32, %c0_i32_0 : i32, i32
  }
  func.func @transform_3(%arg0: i32) -> (i32, i32, i32) {
    %c0_i32 = arith.constant 0 : i32
    %c0_i32_0 = arith.constant 0 : i32
    %c0_i32_1 = arith.constant 0 : i32
    return %arg0, %c0_i32, %c0_i32_0 : i32, i32, i32
  }
}

module attributes {stable_mosaic.version = 11 : i64} {
  func.func @_tap_conv_kernel(%arg0: i32, %arg1: memref<1x64x128xbf16, #tpu.memory_space<vmem>>, %arg2: memref<10x16x64xbf16, #tpu.memory_space<vmem>>, %arg3: memref<16x1xf32, #tpu.memory_space<vmem>>, %arg4: memref<1x16x128xbf16, #tpu.memory_space<vmem>>, %arg5: memref<64x256xbf16, #tpu.memory_space<vmem>>) attributes {dimension_semantics = [#tpu.dimension_semantics<parallel>], iteration_bounds = array<i64: 2>, scalar_prefetch = 0 : i64, scratch_operands = 1 : i64, tpu.core_type = #tpu.core_type<tc>, window_params = [{transform_indices = @transform_0, window_bounds = array<i64: 1, 64, 128>}, {pipeline_mode = #tpu.pipeline_mode<synchronous>, transform_indices = @transform_1, window_bounds = array<i64: 10, 16, 64>}, {pipeline_mode = #tpu.pipeline_mode<synchronous>, transform_indices = @transform_2, window_bounds = array<i64: 16, 1>}, {transform_indices = @transform_3, window_bounds = array<i64: 1, 16, 128>}]} {
    %cst = arith.constant 0.000000e+00 : bf16
    %0 = vector.broadcast %cst : bf16 to vector<64x256xbf16>
    %c0 = arith.constant 0 : index
    %c0_0 = arith.constant 0 : index
    %1 = vector.load %arg5[%c0, %c0_0] : memref<64x256xbf16, #tpu.memory_space<vmem>>, vector<64x256xbf16>
    tpu.vector_store %arg5[%c0, %c0_0], %0 {strides = array<i32>} : memref<64x256xbf16, #tpu.memory_space<vmem>>, vector<64x256xbf16>,
    %c0_1 = arith.constant 0 : index
    %c0_2 = arith.constant 0 : index
    %c0_3 = arith.constant 0 : index
    %2 = vector.load %arg1[%c0_1, %c0_2, %c0_3] : memref<1x64x128xbf16, #tpu.memory_space<vmem>>, vector<1x64x10xbf16>
    %3 = vector.shape_cast %2 : vector<1x64x10xbf16> to vector<64x10xbf16>
    %c0_4 = arith.constant 0 : index
    %c0_5 = arith.constant 0 : index
    %4 = vector.load %arg5[%c0_4, %c0_5] : memref<64x256xbf16, #tpu.memory_space<vmem>>, vector<64x10xbf16>
    tpu.vector_store %arg5[%c0_4, %c0_5], %3 {strides = array<i32>} : memref<64x256xbf16, #tpu.memory_space<vmem>>, vector<64x10xbf16>,
    %c0_6 = arith.constant 0 : index
    %c0_7 = arith.constant 0 : index
    %c0_8 = arith.constant 0 : index
    %5 = vector.load %arg2[%c0_6, %c0_7, %c0_8] : memref<10x16x64xbf16, #tpu.memory_space<vmem>>, vector<1x16x64xbf16>
    %6 = vector.shape_cast %5 : vector<1x16x64xbf16> to vector<16x64xbf16>
    %c0_9 = arith.constant 0 : index
    %c0_10 = arith.constant 0 : index
    %7 = vector.load %arg5[%c0_9, %c0_10] : memref<64x256xbf16, #tpu.memory_space<vmem>>, vector<64x128xbf16>
    %cst_11 = arith.constant dense<0.000000e+00> : vector<16x128xf32>
    %8 = tpu.matmul %6, %7, %cst_11 {dimension_numbers = #tpu.dot_dimension_numbers<[1], [0], [0], [1], [0, 0, 1, 1], [], []>} : vector<16x64xbf16>, vector<64x128xbf16>, vector<16x128xf32> -> vector<16x128xf32>
    %c1 = arith.constant 1 : index
    %c0_12 = arith.constant 0 : index
    %c0_13 = arith.constant 0 : index
    %9 = vector.load %arg2[%c1, %c0_12, %c0_13] : memref<10x16x64xbf16, #tpu.memory_space<vmem>>, vector<1x16x64xbf16>
    %10 = vector.shape_cast %9 : vector<1x16x64xbf16> to vector<16x64xbf16>
    %c0_14 = arith.constant 0 : index
    %c1_15 = arith.constant 1 : index
    %11 = vector.load %arg5[%c0_14, %c1_15] : memref<64x256xbf16, #tpu.memory_space<vmem>>, vector<64x128xbf16>
    %cst_16 = arith.constant dense<0.000000e+00> : vector<16x128xf32>
    %12 = tpu.matmul %10, %11, %cst_16 {dimension_numbers = #tpu.dot_dimension_numbers<[1], [0], [0], [1], [0, 0, 1, 1], [], []>} : vector<16x64xbf16>, vector<64x128xbf16>, vector<16x128xf32> -> vector<16x128xf32>
    %13 = arith.addf %8, %12 : vector<16x128xf32>
    %c2 = arith.constant 2 : index
    %c0_17 = arith.constant 0 : index
    %c0_18 = arith.constant 0 : index
    %14 = vector.load %arg2[%c2, %c0_17, %c0_18] : memref<10x16x64xbf16, #tpu.memory_space<vmem>>, vector<1x16x64xbf16>
    %15 = vector.shape_cast %14 : vector<1x16x64xbf16> to vector<16x64xbf16>
    %c0_19 = arith.constant 0 : index
    %c2_20 = arith.constant 2 : index
    %16 = vector.load %arg5[%c0_19, %c2_20] : memref<64x256xbf16, #tpu.memory_space<vmem>>, vector<64x128xbf16>
    %cst_21 = arith.constant dense<0.000000e+00> : vector<16x128xf32>
    %17 = tpu.matmul %15, %16, %cst_21 {dimension_numbers = #tpu.dot_dimension_numbers<[1], [0], [0], [1], [0, 0, 1, 1], [], []>} : vector<16x64xbf16>, vector<64x128xbf16>, vector<16x128xf32> -> vector<16x128xf32>
    %18 = arith.addf %13, %17 : vector<16x128xf32>
    %c3 = arith.constant 3 : index
    %c0_22 = arith.constant 0 : index
    %c0_23 = arith.constant 0 : index
    %19 = vector.load %arg2[%c3, %c0_22, %c0_23] : memref<10x16x64xbf16, #tpu.memory_space<vmem>>, vector<1x16x64xbf16>
    %20 = vector.shape_cast %19 : vector<1x16x64xbf16> to vector<16x64xbf16>
    %c0_24 = arith.constant 0 : index
    %c3_25 = arith.constant 3 : index
    %21 = vector.load %arg5[%c0_24, %c3_25] : memref<64x256xbf16, #tpu.memory_space<vmem>>, vector<64x128xbf16>
    %cst_26 = arith.constant dense<0.000000e+00> : vector<16x128xf32>
    %22 = tpu.matmul %20, %21, %cst_26 {dimension_numbers = #tpu.dot_dimension_numbers<[1], [0], [0], [1], [0, 0, 1, 1], [], []>} : vector<16x64xbf16>, vector<64x128xbf16>, vector<16x128xf32> -> vector<16x128xf32>
    %23 = arith.addf %18, %22 : vector<16x128xf32>
    %c4 = arith.constant 4 : index
    %c0_27 = arith.constant 0 : index
    %c0_28 = arith.constant 0 : index
    %24 = vector.load %arg2[%c4, %c0_27, %c0_28] : memref<10x16x64xbf16, #tpu.memory_space<vmem>>, vector<1x16x64xbf16>
    %25 = vector.shape_cast %24 : vector<1x16x64xbf16> to vector<16x64xbf16>
    %c0_29 = arith.constant 0 : index
    %c4_30 = arith.constant 4 : index
    %26 = vector.load %arg5[%c0_29, %c4_30] : memref<64x256xbf16, #tpu.memory_space<vmem>>, vector<64x128xbf16>
    %cst_31 = arith.constant dense<0.000000e+00> : vector<16x128xf32>
    %27 = tpu.matmul %25, %26, %cst_31 {dimension_numbers = #tpu.dot_dimension_numbers<[1], [0], [0], [1], [0, 0, 1, 1], [], []>} : vector<16x64xbf16>, vector<64x128xbf16>, vector<16x128xf32> -> vector<16x128xf32>
    %28 = arith.addf %23, %27 : vector<16x128xf32>
    %c5 = arith.constant 5 : index
    %c0_32 = arith.constant 0 : index
    %c0_33 = arith.constant 0 : index
    %29 = vector.load %arg2[%c5, %c0_32, %c0_33] : memref<10x16x64xbf16, #tpu.memory_space<vmem>>, vector<1x16x64xbf16>
    %30 = vector.shape_cast %29 : vector<1x16x64xbf16> to vector<16x64xbf16>
    %c0_34 = arith.constant 0 : index
    %c5_35 = arith.constant 5 : index
    %31 = vector.load %arg5[%c0_34, %c5_35] : memref<64x256xbf16, #tpu.memory_space<vmem>>, vector<64x128xbf16>
    %cst_36 = arith.constant dense<0.000000e+00> : vector<16x128xf32>
    %32 = tpu.matmul %30, %31, %cst_36 {dimension_numbers = #tpu.dot_dimension_numbers<[1], [0], [0], [1], [0, 0, 1, 1], [], []>} : vector<16x64xbf16>, vector<64x128xbf16>, vector<16x128xf32> -> vector<16x128xf32>
    %33 = arith.addf %28, %32 : vector<16x128xf32>
    %c6 = arith.constant 6 : index
    %c0_37 = arith.constant 0 : index
    %c0_38 = arith.constant 0 : index
    %34 = vector.load %arg2[%c6, %c0_37, %c0_38] : memref<10x16x64xbf16, #tpu.memory_space<vmem>>, vector<1x16x64xbf16>
    %35 = vector.shape_cast %34 : vector<1x16x64xbf16> to vector<16x64xbf16>
    %c0_39 = arith.constant 0 : index
    %c6_40 = arith.constant 6 : index
    %36 = vector.load %arg5[%c0_39, %c6_40] : memref<64x256xbf16, #tpu.memory_space<vmem>>, vector<64x128xbf16>
    %cst_41 = arith.constant dense<0.000000e+00> : vector<16x128xf32>
    %37 = tpu.matmul %35, %36, %cst_41 {dimension_numbers = #tpu.dot_dimension_numbers<[1], [0], [0], [1], [0, 0, 1, 1], [], []>} : vector<16x64xbf16>, vector<64x128xbf16>, vector<16x128xf32> -> vector<16x128xf32>
    %38 = arith.addf %33, %37 : vector<16x128xf32>
    %c7 = arith.constant 7 : index
    %c0_42 = arith.constant 0 : index
    %c0_43 = arith.constant 0 : index
    %39 = vector.load %arg2[%c7, %c0_42, %c0_43] : memref<10x16x64xbf16, #tpu.memory_space<vmem>>, vector<1x16x64xbf16>
    %40 = vector.shape_cast %39 : vector<1x16x64xbf16> to vector<16x64xbf16>
    %c0_44 = arith.constant 0 : index
    %c7_45 = arith.constant 7 : index
    %41 = vector.load %arg5[%c0_44, %c7_45] : memref<64x256xbf16, #tpu.memory_space<vmem>>, vector<64x128xbf16>
    %cst_46 = arith.constant dense<0.000000e+00> : vector<16x128xf32>
    %42 = tpu.matmul %40, %41, %cst_46 {dimension_numbers = #tpu.dot_dimension_numbers<[1], [0], [0], [1], [0, 0, 1, 1], [], []>} : vector<16x64xbf16>, vector<64x128xbf16>, vector<16x128xf32> -> vector<16x128xf32>
    %43 = arith.addf %38, %42 : vector<16x128xf32>
    %c8 = arith.constant 8 : index
    %c0_47 = arith.constant 0 : index
    %c0_48 = arith.constant 0 : index
    %44 = vector.load %arg2[%c8, %c0_47, %c0_48] : memref<10x16x64xbf16, #tpu.memory_space<vmem>>, vector<1x16x64xbf16>
    %45 = vector.shape_cast %44 : vector<1x16x64xbf16> to vector<16x64xbf16>
    %c0_49 = arith.constant 0 : index
    %c8_50 = arith.constant 8 : index
    %46 = vector.load %arg5[%c0_49, %c8_50] : memref<64x256xbf16, #tpu.memory_space<vmem>>, vector<64x128xbf16>
    %cst_51 = arith.constant dense<0.000000e+00> : vector<16x128xf32>
    %47 = tpu.matmul %45, %46, %cst_51 {dimension_numbers = #tpu.dot_dimension_numbers<[1], [0], [0], [1], [0, 0, 1, 1], [], []>} : vector<16x64xbf16>, vector<64x128xbf16>, vector<16x128xf32> -> vector<16x128xf32>
    %48 = arith.addf %43, %47 : vector<16x128xf32>
    %c9 = arith.constant 9 : index
    %c0_52 = arith.constant 0 : index
    %c0_53 = arith.constant 0 : index
    %49 = vector.load %arg2[%c9, %c0_52, %c0_53] : memref<10x16x64xbf16, #tpu.memory_space<vmem>>, vector<1x16x64xbf16>
    %50 = vector.shape_cast %49 : vector<1x16x64xbf16> to vector<16x64xbf16>
    %c0_54 = arith.constant 0 : index
    %c9_55 = arith.constant 9 : index
    %51 = vector.load %arg5[%c0_54, %c9_55] : memref<64x256xbf16, #tpu.memory_space<vmem>>, vector<64x128xbf16>
    %cst_56 = arith.constant dense<0.000000e+00> : vector<16x128xf32>
    %52 = tpu.matmul %50, %51, %cst_56 {dimension_numbers = #tpu.dot_dimension_numbers<[1], [0], [0], [1], [0, 0, 1, 1], [], []>} : vector<16x64xbf16>, vector<64x128xbf16>, vector<16x128xf32> -> vector<16x128xf32>
    %53 = arith.addf %48, %52 : vector<16x128xf32>
    %c0_57 = arith.constant 0 : index
    %c0_58 = arith.constant 0 : index
    %54 = vector.load %arg3[%c0_57, %c0_58] : memref<16x1xf32, #tpu.memory_space<vmem>>, vector<16x1xf32>
    %55 = vector.broadcast %54 : vector<16x1xf32> to vector<16x128xf32>
    %56 = arith.addf %53, %55 : vector<16x128xf32>
    %57 = arith.truncf %56 : vector<16x128xf32> to vector<16x128xbf16>
    %c0_59 = arith.constant 0 : index
    %c0_60 = arith.constant 0 : index
    %c0_61 = arith.constant 0 : index
    %58 = vector.load %arg4[%c0_59, %c0_60, %c0_61] : memref<1x16x128xbf16, #tpu.memory_space<vmem>>, vector<1x16x128xbf16>
    %59 = vector.shape_cast %58 : vector<1x16x128xbf16> to vector<16x128xbf16>
    %60 = vector.shape_cast %57 : vector<16x128xbf16> to vector<1x16x128xbf16>
    tpu.vector_store %arg4[%c0_59, %c0_60, %c0_61], %60 {strides = array<i32>} : memref<1x16x128xbf16, #tpu.memory_space<vmem>>, vector<1x16x128xbf16>,
    return
  }
  func.func @transform_0(%arg0: i32) -> (i32, i32, i32) {
    %c0_i32 = arith.constant 0 : i32
    %c0_i32_0 = arith.constant 0 : i32
    %c0_i32_1 = arith.constant 0 : i32
    return %arg0, %c0_i32, %c0_i32_0 : i32, i32, i32
  }
  func.func @transform_1(%arg0: i32) -> (i32, i32, i32) {
    %c0_i32 = arith.constant 0 : i32
    %c0_i32_0 = arith.constant 0 : i32
    %c0_i32_1 = arith.constant 0 : i32
    %c0_i32_2 = arith.constant 0 : i32
    return %c0_i32, %c0_i32_0, %c0_i32_1 : i32, i32, i32
  }
  func.func @transform_2(%arg0: i32) -> (i32, i32) {
    %c0_i32 = arith.constant 0 : i32
    %c0_i32_0 = arith.constant 0 : i32
    %c0_i32_1 = arith.constant 0 : i32
    return %c0_i32, %c0_i32_0 : i32, i32
  }
  func.func @transform_3(%arg0: i32) -> (i32, i32, i32) {
    %c0_i32 = arith.constant 0 : i32
    %c0_i32_0 = arith.constant 0 : i32
    %c0_i32_1 = arith.constant 0 : i32
    return %arg0, %c0_i32, %c0_i32_0 : i32, i32, i32
  }
}

module attributes {stable_mosaic.version = 11 : i64} {
  func.func @_tap_conv_kernel(%arg0: i32, %arg1: memref<1x16x128xbf16, #tpu.memory_space<vmem>>, %arg2: memref<10x64x16xbf16, #tpu.memory_space<vmem>>, %arg3: memref<64x1xf32, #tpu.memory_space<vmem>>, %arg4: memref<1x64x128xbf16, #tpu.memory_space<vmem>>, %arg5: memref<16x256xbf16, #tpu.memory_space<vmem>>) attributes {dimension_semantics = [#tpu.dimension_semantics<parallel>], iteration_bounds = array<i64: 2>, scalar_prefetch = 0 : i64, scratch_operands = 1 : i64, tpu.core_type = #tpu.core_type<tc>, window_params = [{transform_indices = @transform_0, window_bounds = array<i64: 1, 16, 128>}, {pipeline_mode = #tpu.pipeline_mode<synchronous>, transform_indices = @transform_1, window_bounds = array<i64: 10, 64, 16>}, {pipeline_mode = #tpu.pipeline_mode<synchronous>, transform_indices = @transform_2, window_bounds = array<i64: 64, 1>}, {transform_indices = @transform_3, window_bounds = array<i64: 1, 64, 128>}]} {
    %cst = arith.constant 0.000000e+00 : bf16
    %0 = vector.broadcast %cst : bf16 to vector<16x256xbf16>
    %c0 = arith.constant 0 : index
    %c0_0 = arith.constant 0 : index
    %1 = vector.load %arg5[%c0, %c0_0] : memref<16x256xbf16, #tpu.memory_space<vmem>>, vector<16x256xbf16>
    tpu.vector_store %arg5[%c0, %c0_0], %0 {strides = array<i32>} : memref<16x256xbf16, #tpu.memory_space<vmem>>, vector<16x256xbf16>,
    %c0_1 = arith.constant 0 : index
    %c0_2 = arith.constant 0 : index
    %c0_3 = arith.constant 0 : index
    %2 = vector.load %arg1[%c0_1, %c0_2, %c0_3] : memref<1x16x128xbf16, #tpu.memory_space<vmem>>, vector<1x16x1xbf16>
    %3 = vector.shape_cast %2 : vector<1x16x1xbf16> to vector<16x1xbf16>
    %c0_4 = arith.constant 0 : index
    %c9 = arith.constant 9 : index
    %4 = vector.load %arg5[%c0_4, %c9] : memref<16x256xbf16, #tpu.memory_space<vmem>>, vector<16x1xbf16>
    tpu.vector_store %arg5[%c0_4, %c9], %3 {strides = array<i32>} : memref<16x256xbf16, #tpu.memory_space<vmem>>, vector<16x1xbf16>,
    %c0_5 = arith.constant 0 : index
    %c0_6 = arith.constant 0 : index
    %c0_7 = arith.constant 0 : index
    %5 = vector.load %arg2[%c0_5, %c0_6, %c0_7] : memref<10x64x16xbf16, #tpu.memory_space<vmem>>, vector<1x64x16xbf16>
    %6 = vector.shape_cast %5 : vector<1x64x16xbf16> to vector<64x16xbf16>
    %c0_8 = arith.constant 0 : index
    %c0_9 = arith.constant 0 : index
    %7 = vector.load %arg5[%c0_8, %c0_9] : memref<16x256xbf16, #tpu.memory_space<vmem>>, vector<16x128xbf16>
    %cst_10 = arith.constant dense<0.000000e+00> : vector<64x128xf32>
    %8 = tpu.matmul %6, %7, %cst_10 {dimension_numbers = #tpu.dot_dimension_numbers<[1], [0], [0], [1], [0, 0, 1, 1], [], []>} : vector<64x16xbf16>, vector<16x128xbf16>, vector<64x128xf32> -> vector<64x128xf32>
    %c1 = arith.constant 1 : index
    %c0_11 = arith.constant 0 : index
    %c0_12 = arith.constant 0 : index
    %9 = vector.load %arg2[%c1, %c0_11, %c0_12] : memref<10x64x16xbf16, #tpu.memory_space<vmem>>, vector<1x64x16xbf16>
    %10 = vector.shape_cast %9 : vector<1x64x16xbf16> to vector<64x16xbf16>
    %c0_13 = arith.constant 0 : index
    %c1_14 = arith.constant 1 : index
    %11 = vector.load %arg5[%c0_13, %c1_14] : memref<16x256xbf16, #tpu.memory_space<vmem>>, vector<16x128xbf16>
    %cst_15 = arith.constant dense<0.000000e+00> : vector<64x128xf32>
    %12 = tpu.matmul %10, %11, %cst_15 {dimension_numbers = #tpu.dot_dimension_numbers<[1], [0], [0], [1], [0, 0, 1, 1], [], []>} : vector<64x16xbf16>, vector<16x128xbf16>, vector<64x128xf32> -> vector<64x128xf32>
    %13 = arith.addf %8, %12 : vector<64x128xf32>
    %c2 = arith.constant 2 : index
    %c0_16 = arith.constant 0 : index
    %c0_17 = arith.constant 0 : index
    %14 = vector.load %arg2[%c2, %c0_16, %c0_17] : memref<10x64x16xbf16, #tpu.memory_space<vmem>>, vector<1x64x16xbf16>
    %15 = vector.shape_cast %14 : vector<1x64x16xbf16> to vector<64x16xbf16>
    %c0_18 = arith.constant 0 : index
    %c2_19 = arith.constant 2 : index
    %16 = vector.load %arg5[%c0_18, %c2_19] : memref<16x256xbf16, #tpu.memory_space<vmem>>, vector<16x128xbf16>
    %cst_20 = arith.constant dense<0.000000e+00> : vector<64x128xf32>
    %17 = tpu.matmul %15, %16, %cst_20 {dimension_numbers = #tpu.dot_dimension_numbers<[1], [0], [0], [1], [0, 0, 1, 1], [], []>} : vector<64x16xbf16>, vector<16x128xbf16>, vector<64x128xf32> -> vector<64x128xf32>
    %18 = arith.addf %13, %17 : vector<64x128xf32>
    %c3 = arith.constant 3 : index
    %c0_21 = arith.constant 0 : index
    %c0_22 = arith.constant 0 : index
    %19 = vector.load %arg2[%c3, %c0_21, %c0_22] : memref<10x64x16xbf16, #tpu.memory_space<vmem>>, vector<1x64x16xbf16>
    %20 = vector.shape_cast %19 : vector<1x64x16xbf16> to vector<64x16xbf16>
    %c0_23 = arith.constant 0 : index
    %c3_24 = arith.constant 3 : index
    %21 = vector.load %arg5[%c0_23, %c3_24] : memref<16x256xbf16, #tpu.memory_space<vmem>>, vector<16x128xbf16>
    %cst_25 = arith.constant dense<0.000000e+00> : vector<64x128xf32>
    %22 = tpu.matmul %20, %21, %cst_25 {dimension_numbers = #tpu.dot_dimension_numbers<[1], [0], [0], [1], [0, 0, 1, 1], [], []>} : vector<64x16xbf16>, vector<16x128xbf16>, vector<64x128xf32> -> vector<64x128xf32>
    %23 = arith.addf %18, %22 : vector<64x128xf32>
    %c4 = arith.constant 4 : index
    %c0_26 = arith.constant 0 : index
    %c0_27 = arith.constant 0 : index
    %24 = vector.load %arg2[%c4, %c0_26, %c0_27] : memref<10x64x16xbf16, #tpu.memory_space<vmem>>, vector<1x64x16xbf16>
    %25 = vector.shape_cast %24 : vector<1x64x16xbf16> to vector<64x16xbf16>
    %c0_28 = arith.constant 0 : index
    %c4_29 = arith.constant 4 : index
    %26 = vector.load %arg5[%c0_28, %c4_29] : memref<16x256xbf16, #tpu.memory_space<vmem>>, vector<16x128xbf16>
    %cst_30 = arith.constant dense<0.000000e+00> : vector<64x128xf32>
    %27 = tpu.matmul %25, %26, %cst_30 {dimension_numbers = #tpu.dot_dimension_numbers<[1], [0], [0], [1], [0, 0, 1, 1], [], []>} : vector<64x16xbf16>, vector<16x128xbf16>, vector<64x128xf32> -> vector<64x128xf32>
    %28 = arith.addf %23, %27 : vector<64x128xf32>
    %c5 = arith.constant 5 : index
    %c0_31 = arith.constant 0 : index
    %c0_32 = arith.constant 0 : index
    %29 = vector.load %arg2[%c5, %c0_31, %c0_32] : memref<10x64x16xbf16, #tpu.memory_space<vmem>>, vector<1x64x16xbf16>
    %30 = vector.shape_cast %29 : vector<1x64x16xbf16> to vector<64x16xbf16>
    %c0_33 = arith.constant 0 : index
    %c5_34 = arith.constant 5 : index
    %31 = vector.load %arg5[%c0_33, %c5_34] : memref<16x256xbf16, #tpu.memory_space<vmem>>, vector<16x128xbf16>
    %cst_35 = arith.constant dense<0.000000e+00> : vector<64x128xf32>
    %32 = tpu.matmul %30, %31, %cst_35 {dimension_numbers = #tpu.dot_dimension_numbers<[1], [0], [0], [1], [0, 0, 1, 1], [], []>} : vector<64x16xbf16>, vector<16x128xbf16>, vector<64x128xf32> -> vector<64x128xf32>
    %33 = arith.addf %28, %32 : vector<64x128xf32>
    %c6 = arith.constant 6 : index
    %c0_36 = arith.constant 0 : index
    %c0_37 = arith.constant 0 : index
    %34 = vector.load %arg2[%c6, %c0_36, %c0_37] : memref<10x64x16xbf16, #tpu.memory_space<vmem>>, vector<1x64x16xbf16>
    %35 = vector.shape_cast %34 : vector<1x64x16xbf16> to vector<64x16xbf16>
    %c0_38 = arith.constant 0 : index
    %c6_39 = arith.constant 6 : index
    %36 = vector.load %arg5[%c0_38, %c6_39] : memref<16x256xbf16, #tpu.memory_space<vmem>>, vector<16x128xbf16>
    %cst_40 = arith.constant dense<0.000000e+00> : vector<64x128xf32>
    %37 = tpu.matmul %35, %36, %cst_40 {dimension_numbers = #tpu.dot_dimension_numbers<[1], [0], [0], [1], [0, 0, 1, 1], [], []>} : vector<64x16xbf16>, vector<16x128xbf16>, vector<64x128xf32> -> vector<64x128xf32>
    %38 = arith.addf %33, %37 : vector<64x128xf32>
    %c7 = arith.constant 7 : index
    %c0_41 = arith.constant 0 : index
    %c0_42 = arith.constant 0 : index
    %39 = vector.load %arg2[%c7, %c0_41, %c0_42] : memref<10x64x16xbf16, #tpu.memory_space<vmem>>, vector<1x64x16xbf16>
    %40 = vector.shape_cast %39 : vector<1x64x16xbf16> to vector<64x16xbf16>
    %c0_43 = arith.constant 0 : index
    %c7_44 = arith.constant 7 : index
    %41 = vector.load %arg5[%c0_43, %c7_44] : memref<16x256xbf16, #tpu.memory_space<vmem>>, vector<16x128xbf16>
    %cst_45 = arith.constant dense<0.000000e+00> : vector<64x128xf32>
    %42 = tpu.matmul %40, %41, %cst_45 {dimension_numbers = #tpu.dot_dimension_numbers<[1], [0], [0], [1], [0, 0, 1, 1], [], []>} : vector<64x16xbf16>, vector<16x128xbf16>, vector<64x128xf32> -> vector<64x128xf32>
    %43 = arith.addf %38, %42 : vector<64x128xf32>
    %c8 = arith.constant 8 : index
    %c0_46 = arith.constant 0 : index
    %c0_47 = arith.constant 0 : index
    %44 = vector.load %arg2[%c8, %c0_46, %c0_47] : memref<10x64x16xbf16, #tpu.memory_space<vmem>>, vector<1x64x16xbf16>
    %45 = vector.shape_cast %44 : vector<1x64x16xbf16> to vector<64x16xbf16>
    %c0_48 = arith.constant 0 : index
    %c8_49 = arith.constant 8 : index
    %46 = vector.load %arg5[%c0_48, %c8_49] : memref<16x256xbf16, #tpu.memory_space<vmem>>, vector<16x128xbf16>
    %cst_50 = arith.constant dense<0.000000e+00> : vector<64x128xf32>
    %47 = tpu.matmul %45, %46, %cst_50 {dimension_numbers = #tpu.dot_dimension_numbers<[1], [0], [0], [1], [0, 0, 1, 1], [], []>} : vector<64x16xbf16>, vector<16x128xbf16>, vector<64x128xf32> -> vector<64x128xf32>
    %48 = arith.addf %43, %47 : vector<64x128xf32>
    %c9_51 = arith.constant 9 : index
    %c0_52 = arith.constant 0 : index
    %c0_53 = arith.constant 0 : index
    %49 = vector.load %arg2[%c9_51, %c0_52, %c0_53] : memref<10x64x16xbf16, #tpu.memory_space<vmem>>, vector<1x64x16xbf16>
    %50 = vector.shape_cast %49 : vector<1x64x16xbf16> to vector<64x16xbf16>
    %c0_54 = arith.constant 0 : index
    %c9_55 = arith.constant 9 : index
    %51 = vector.load %arg5[%c0_54, %c9_55] : memref<16x256xbf16, #tpu.memory_space<vmem>>, vector<16x128xbf16>
    %cst_56 = arith.constant dense<0.000000e+00> : vector<64x128xf32>
    %52 = tpu.matmul %50, %51, %cst_56 {dimension_numbers = #tpu.dot_dimension_numbers<[1], [0], [0], [1], [0, 0, 1, 1], [], []>} : vector<64x16xbf16>, vector<16x128xbf16>, vector<64x128xf32> -> vector<64x128xf32>
    %53 = arith.addf %48, %52 : vector<64x128xf32>
    %c0_57 = arith.constant 0 : index
    %c0_58 = arith.constant 0 : index
    %54 = vector.load %arg3[%c0_57, %c0_58] : memref<64x1xf32, #tpu.memory_space<vmem>>, vector<64x1xf32>
    %55 = vector.broadcast %54 : vector<64x1xf32> to vector<64x128xf32>
    %56 = arith.addf %53, %55 : vector<64x128xf32>
    %cst_59 = arith.constant 0.000000e+00 : f32
    %57 = vector.broadcast %cst_59 : f32 to vector<64x128xf32>
    %58 = arith.maximumf %56, %57 : vector<64x128xf32>
    %59 = arith.truncf %58 : vector<64x128xf32> to vector<64x128xbf16>
    %c0_60 = arith.constant 0 : index
    %c0_61 = arith.constant 0 : index
    %c0_62 = arith.constant 0 : index
    %60 = vector.load %arg4[%c0_60, %c0_61, %c0_62] : memref<1x64x128xbf16, #tpu.memory_space<vmem>>, vector<1x64x128xbf16>
    %61 = vector.shape_cast %60 : vector<1x64x128xbf16> to vector<64x128xbf16>
    %62 = vector.shape_cast %59 : vector<64x128xbf16> to vector<1x64x128xbf16>
    tpu.vector_store %arg4[%c0_60, %c0_61, %c0_62], %62 {strides = array<i32>} : memref<1x64x128xbf16, #tpu.memory_space<vmem>>, vector<1x64x128xbf16>,
    return
  }
  func.func @transform_0(%arg0: i32) -> (i32, i32, i32) {
    %c0_i32 = arith.constant 0 : i32
    %c0_i32_0 = arith.constant 0 : i32
    %c0_i32_1 = arith.constant 0 : i32
    return %arg0, %c0_i32, %c0_i32_0 : i32, i32, i32
  }
  func.func @transform_1(%arg0: i32) -> (i32, i32, i32) {
    %c0_i32 = arith.constant 0 : i32
    %c0_i32_0 = arith.constant 0 : i32
    %c0_i32_1 = arith.constant 0 : i32
    %c0_i32_2 = arith.constant 0 : i32
    return %c0_i32, %c0_i32_0, %c0_i32_1 : i32, i32, i32
  }
  func.func @transform_2(%arg0: i32) -> (i32, i32) {
    %c0_i32 = arith.constant 0 : i32
    %c0_i32_0 = arith.constant 0 : i32
    %c0_i32_1 = arith.constant 0 : i32
    return %c0_i32, %c0_i32_0 : i32, i32
  }
  func.func @transform_3(%arg0: i32) -> (i32, i32, i32) {
    %c0_i32 = arith.constant 0 : i32
    %c0_i32_0 = arith.constant 0 : i32
    %c0_i32_1 = arith.constant 0 : i32
    return %arg0, %c0_i32, %c0_i32_0 : i32, i32, i32
  }
}

module attributes {stable_mosaic.version = 11 : i64} {
  func.func @_tap_conv_kernel(%arg0: i32, %arg1: memref<1x64x128xbf16, #tpu.memory_space<vmem>>, %arg2: memref<3x64x64xbf16, #tpu.memory_space<vmem>>, %arg3: memref<64x1xf32, #tpu.memory_space<vmem>>, %arg4: memref<1x64x128xbf16, #tpu.memory_space<vmem>>, %arg5: memref<64x256xbf16, #tpu.memory_space<vmem>>) attributes {dimension_semantics = [#tpu.dimension_semantics<parallel>], iteration_bounds = array<i64: 2>, scalar_prefetch = 0 : i64, scratch_operands = 1 : i64, tpu.core_type = #tpu.core_type<tc>, window_params = [{transform_indices = @transform_0, window_bounds = array<i64: 1, 64, 128>}, {pipeline_mode = #tpu.pipeline_mode<synchronous>, transform_indices = @transform_1, window_bounds = array<i64: 3, 64, 64>}, {pipeline_mode = #tpu.pipeline_mode<synchronous>, transform_indices = @transform_2, window_bounds = array<i64: 64, 1>}, {transform_indices = @transform_3, window_bounds = array<i64: 1, 64, 128>}]} {
    %cst = arith.constant 0.000000e+00 : bf16
    %0 = vector.broadcast %cst : bf16 to vector<64x256xbf16>
    %c0 = arith.constant 0 : index
    %c0_0 = arith.constant 0 : index
    %1 = vector.load %arg5[%c0, %c0_0] : memref<64x256xbf16, #tpu.memory_space<vmem>>, vector<64x256xbf16>
    tpu.vector_store %arg5[%c0, %c0_0], %0 {strides = array<i32>} : memref<64x256xbf16, #tpu.memory_space<vmem>>, vector<64x256xbf16>,
    %c0_1 = arith.constant 0 : index
    %c0_2 = arith.constant 0 : index
    %c0_3 = arith.constant 0 : index
    %2 = vector.load %arg1[%c0_1, %c0_2, %c0_3] : memref<1x64x128xbf16, #tpu.memory_space<vmem>>, vector<1x64x10xbf16>
    %3 = vector.shape_cast %2 : vector<1x64x10xbf16> to vector<64x10xbf16>
    %c0_4 = arith.constant 0 : index
    %c1 = arith.constant 1 : index
    %4 = vector.load %arg5[%c0_4, %c1] : memref<64x256xbf16, #tpu.memory_space<vmem>>, vector<64x10xbf16>
    tpu.vector_store %arg5[%c0_4, %c1], %3 {strides = array<i32>} : memref<64x256xbf16, #tpu.memory_space<vmem>>, vector<64x10xbf16>,
    %c0_5 = arith.constant 0 : index
    %c0_6 = arith.constant 0 : index
    %c0_7 = arith.constant 0 : index
    %5 = vector.load %arg2[%c0_5, %c0_6, %c0_7] : memref<3x64x64xbf16, #tpu.memory_space<vmem>>, vector<1x64x64xbf16>
    %6 = vector.shape_cast %5 : vector<1x64x64xbf16> to vector<64x64xbf16>
    %c0_8 = arith.constant 0 : index
    %c0_9 = arith.constant 0 : index
    %7 = vector.load %arg5[%c0_8, %c0_9] : memref<64x256xbf16, #tpu.memory_space<vmem>>, vector<64x128xbf16>
    %cst_10 = arith.constant dense<0.000000e+00> : vector<64x128xf32>
    %8 = tpu.matmul %6, %7, %cst_10 {dimension_numbers = #tpu.dot_dimension_numbers<[1], [0], [0], [1], [0, 0, 1, 1], [], []>} : vector<64x64xbf16>, vector<64x128xbf16>, vector<64x128xf32> -> vector<64x128xf32>
    %c1_11 = arith.constant 1 : index
    %c0_12 = arith.constant 0 : index
    %c0_13 = arith.constant 0 : index
    %9 = vector.load %arg2[%c1_11, %c0_12, %c0_13] : memref<3x64x64xbf16, #tpu.memory_space<vmem>>, vector<1x64x64xbf16>
    %10 = vector.shape_cast %9 : vector<1x64x64xbf16> to vector<64x64xbf16>
    %c0_14 = arith.constant 0 : index
    %c1_15 = arith.constant 1 : index
    %11 = vector.load %arg5[%c0_14, %c1_15] : memref<64x256xbf16, #tpu.memory_space<vmem>>, vector<64x128xbf16>
    %cst_16 = arith.constant dense<0.000000e+00> : vector<64x128xf32>
    %12 = tpu.matmul %10, %11, %cst_16 {dimension_numbers = #tpu.dot_dimension_numbers<[1], [0], [0], [1], [0, 0, 1, 1], [], []>} : vector<64x64xbf16>, vector<64x128xbf16>, vector<64x128xf32> -> vector<64x128xf32>
    %13 = arith.addf %8, %12 : vector<64x128xf32>
    %c2 = arith.constant 2 : index
    %c0_17 = arith.constant 0 : index
    %c0_18 = arith.constant 0 : index
    %14 = vector.load %arg2[%c2, %c0_17, %c0_18] : memref<3x64x64xbf16, #tpu.memory_space<vmem>>, vector<1x64x64xbf16>
    %15 = vector.shape_cast %14 : vector<1x64x64xbf16> to vector<64x64xbf16>
    %c0_19 = arith.constant 0 : index
    %c2_20 = arith.constant 2 : index
    %16 = vector.load %arg5[%c0_19, %c2_20] : memref<64x256xbf16, #tpu.memory_space<vmem>>, vector<64x128xbf16>
    %cst_21 = arith.constant dense<0.000000e+00> : vector<64x128xf32>
    %17 = tpu.matmul %15, %16, %cst_21 {dimension_numbers = #tpu.dot_dimension_numbers<[1], [0], [0], [1], [0, 0, 1, 1], [], []>} : vector<64x64xbf16>, vector<64x128xbf16>, vector<64x128xf32> -> vector<64x128xf32>
    %18 = arith.addf %13, %17 : vector<64x128xf32>
    %c0_22 = arith.constant 0 : index
    %c0_23 = arith.constant 0 : index
    %19 = vector.load %arg3[%c0_22, %c0_23] : memref<64x1xf32, #tpu.memory_space<vmem>>, vector<64x1xf32>
    %20 = vector.broadcast %19 : vector<64x1xf32> to vector<64x128xf32>
    %21 = arith.addf %18, %20 : vector<64x128xf32>
    %cst_24 = arith.constant 0.000000e+00 : f32
    %22 = vector.broadcast %cst_24 : f32 to vector<64x128xf32>
    %23 = arith.maximumf %21, %22 : vector<64x128xf32>
    %24 = arith.truncf %23 : vector<64x128xf32> to vector<64x128xbf16>
    %c0_25 = arith.constant 0 : index
    %c0_26 = arith.constant 0 : index
    %c0_27 = arith.constant 0 : index
    %25 = vector.load %arg4[%c0_25, %c0_26, %c0_27] : memref<1x64x128xbf16, #tpu.memory_space<vmem>>, vector<1x64x128xbf16>
    %26 = vector.shape_cast %25 : vector<1x64x128xbf16> to vector<64x128xbf16>
    %27 = vector.shape_cast %24 : vector<64x128xbf16> to vector<1x64x128xbf16>
    tpu.vector_store %arg4[%c0_25, %c0_26, %c0_27], %27 {strides = array<i32>} : memref<1x64x128xbf16, #tpu.memory_space<vmem>>, vector<1x64x128xbf16>,
    return
  }
  func.func @transform_0(%arg0: i32) -> (i32, i32, i32) {
    %c0_i32 = arith.constant 0 : i32
    %c0_i32_0 = arith.constant 0 : i32
    %c0_i32_1 = arith.constant 0 : i32
    return %arg0, %c0_i32, %c0_i32_0 : i32, i32, i32
  }
  func.func @transform_1(%arg0: i32) -> (i32, i32, i32) {
    %c0_i32 = arith.constant 0 : i32
    %c0_i32_0 = arith.constant 0 : i32
    %c0_i32_1 = arith.constant 0 : i32
    %c0_i32_2 = arith.constant 0 : i32
    return %c0_i32, %c0_i32_0, %c0_i32_1 : i32, i32, i32
  }
  func.func @transform_2(%arg0: i32) -> (i32, i32) {
    %c0_i32 = arith.constant 0 : i32
    %c0_i32_0 = arith.constant 0 : i32
    %c0_i32_1 = arith.constant 0 : i32
    return %c0_i32, %c0_i32_0 : i32, i32
  }
  func.func @transform_3(%arg0: i32) -> (i32, i32, i32) {
    %c0_i32 = arith.constant 0 : i32
    %c0_i32_0 = arith.constant 0 : i32
    %c0_i32_1 = arith.constant 0 : i32
    return %arg0, %c0_i32, %c0_i32_0 : i32, i32, i32
  }
}

module attributes {stable_mosaic.version = 11 : i64} {
  func.func @_tap_conv_kernel(%arg0: i32, %arg1: memref<1x32x20xbf16, #tpu.memory_space<vmem>>, %arg2: memref<3x32x32xbf16, #tpu.memory_space<vmem>>, %arg3: memref<32x1xf32, #tpu.memory_space<vmem>>, %arg4: memref<1x32x128xbf16, #tpu.memory_space<vmem>>, %arg5: memref<32x256xbf16, #tpu.memory_space<vmem>>) attributes {dimension_semantics = [#tpu.dimension_semantics<parallel>], iteration_bounds = array<i64: 2>, scalar_prefetch = 0 : i64, scratch_operands = 1 : i64, tpu.core_type = #tpu.core_type<tc>, window_params = [{transform_indices = @transform_0, window_bounds = array<i64: 1, 32, 20>}, {pipeline_mode = #tpu.pipeline_mode<synchronous>, transform_indices = @transform_1, window_bounds = array<i64: 3, 32, 32>}, {pipeline_mode = #tpu.pipeline_mode<synchronous>, transform_indices = @transform_2, window_bounds = array<i64: 32, 1>}, {transform_indices = @transform_3, window_bounds = array<i64: 1, 32, 128>}]} {
    %cst = arith.constant 0.000000e+00 : bf16
    %0 = vector.broadcast %cst : bf16 to vector<32x256xbf16>
    %c0 = arith.constant 0 : index
    %c0_0 = arith.constant 0 : index
    %1 = vector.load %arg5[%c0, %c0_0] : memref<32x256xbf16, #tpu.memory_space<vmem>>, vector<32x256xbf16>
    tpu.vector_store %arg5[%c0, %c0_0], %0 {strides = array<i32>} : memref<32x256xbf16, #tpu.memory_space<vmem>>, vector<32x256xbf16>,
    %c0_1 = arith.constant 0 : index
    %c0_2 = arith.constant 0 : index
    %c0_3 = arith.constant 0 : index
    %2 = vector.load %arg1[%c0_1, %c0_2, %c0_3] : memref<1x32x20xbf16, #tpu.memory_space<vmem>>, vector<1x32x20xbf16>
    %3 = vector.shape_cast %2 : vector<1x32x20xbf16> to vector<32x20xbf16>
    %c0_4 = arith.constant 0 : index
    %c1 = arith.constant 1 : index
    %4 = vector.load %arg5[%c0_4, %c1] : memref<32x256xbf16, #tpu.memory_space<vmem>>, vector<32x20xbf16>
    tpu.vector_store %arg5[%c0_4, %c1], %3 {strides = array<i32>} : memref<32x256xbf16, #tpu.memory_space<vmem>>, vector<32x20xbf16>,
    %c0_5 = arith.constant 0 : index
    %c0_6 = arith.constant 0 : index
    %c0_7 = arith.constant 0 : index
    %5 = vector.load %arg2[%c0_5, %c0_6, %c0_7] : memref<3x32x32xbf16, #tpu.memory_space<vmem>>, vector<1x32x32xbf16>
    %6 = vector.shape_cast %5 : vector<1x32x32xbf16> to vector<32x32xbf16>
    %c0_8 = arith.constant 0 : index
    %c0_9 = arith.constant 0 : index
    %7 = vector.load %arg5[%c0_8, %c0_9] : memref<32x256xbf16, #tpu.memory_space<vmem>>, vector<32x128xbf16>
    %cst_10 = arith.constant dense<0.000000e+00> : vector<32x128xf32>
    %8 = tpu.matmul %6, %7, %cst_10 {dimension_numbers = #tpu.dot_dimension_numbers<[1], [0], [0], [1], [0, 0, 1, 1], [], []>} : vector<32x32xbf16>, vector<32x128xbf16>, vector<32x128xf32> -> vector<32x128xf32>
    %c1_11 = arith.constant 1 : index
    %c0_12 = arith.constant 0 : index
    %c0_13 = arith.constant 0 : index
    %9 = vector.load %arg2[%c1_11, %c0_12, %c0_13] : memref<3x32x32xbf16, #tpu.memory_space<vmem>>, vector<1x32x32xbf16>
    %10 = vector.shape_cast %9 : vector<1x32x32xbf16> to vector<32x32xbf16>
    %c0_14 = arith.constant 0 : index
    %c1_15 = arith.constant 1 : index
    %11 = vector.load %arg5[%c0_14, %c1_15] : memref<32x256xbf16, #tpu.memory_space<vmem>>, vector<32x128xbf16>
    %cst_16 = arith.constant dense<0.000000e+00> : vector<32x128xf32>
    %12 = tpu.matmul %10, %11, %cst_16 {dimension_numbers = #tpu.dot_dimension_numbers<[1], [0], [0], [1], [0, 0, 1, 1], [], []>} : vector<32x32xbf16>, vector<32x128xbf16>, vector<32x128xf32> -> vector<32x128xf32>
    %13 = arith.addf %8, %12 : vector<32x128xf32>
    %c2 = arith.constant 2 : index
    %c0_17 = arith.constant 0 : index
    %c0_18 = arith.constant 0 : index
    %14 = vector.load %arg2[%c2, %c0_17, %c0_18] : memref<3x32x32xbf16, #tpu.memory_space<vmem>>, vector<1x32x32xbf16>
    %15 = vector.shape_cast %14 : vector<1x32x32xbf16> to vector<32x32xbf16>
    %c0_19 = arith.constant 0 : index
    %c2_20 = arith.constant 2 : index
    %16 = vector.load %arg5[%c0_19, %c2_20] : memref<32x256xbf16, #tpu.memory_space<vmem>>, vector<32x128xbf16>
    %cst_21 = arith.constant dense<0.000000e+00> : vector<32x128xf32>
    %17 = tpu.matmul %15, %16, %cst_21 {dimension_numbers = #tpu.dot_dimension_numbers<[1], [0], [0], [1], [0, 0, 1, 1], [], []>} : vector<32x32xbf16>, vector<32x128xbf16>, vector<32x128xf32> -> vector<32x128xf32>
    %18 = arith.addf %13, %17 : vector<32x128xf32>
    %c0_22 = arith.constant 0 : index
    %c0_23 = arith.constant 0 : index
    %19 = vector.load %arg3[%c0_22, %c0_23] : memref<32x1xf32, #tpu.memory_space<vmem>>, vector<32x1xf32>
    %20 = vector.broadcast %19 : vector<32x1xf32> to vector<32x128xf32>
    %21 = arith.addf %18, %20 : vector<32x128xf32>
    %cst_24 = arith.constant 0.000000e+00 : f32
    %22 = vector.broadcast %cst_24 : f32 to vector<32x128xf32>
    %23 = arith.maximumf %21, %22 : vector<32x128xf32>
    %24 = arith.truncf %23 : vector<32x128xf32> to vector<32x128xbf16>
    %c0_25 = arith.constant 0 : index
    %c0_26 = arith.constant 0 : index
    %c0_27 = arith.constant 0 : index
    %25 = vector.load %arg4[%c0_25, %c0_26, %c0_27] : memref<1x32x128xbf16, #tpu.memory_space<vmem>>, vector<1x32x128xbf16>
    %26 = vector.shape_cast %25 : vector<1x32x128xbf16> to vector<32x128xbf16>
    %27 = vector.shape_cast %24 : vector<32x128xbf16> to vector<1x32x128xbf16>
    tpu.vector_store %arg4[%c0_25, %c0_26, %c0_27], %27 {strides = array<i32>} : memref<1x32x128xbf16, #tpu.memory_space<vmem>>, vector<1x32x128xbf16>,
    return
  }
  func.func @transform_0(%arg0: i32) -> (i32, i32, i32) {
    %c0_i32 = arith.constant 0 : i32
    %c0_i32_0 = arith.constant 0 : i32
    %c0_i32_1 = arith.constant 0 : i32
    return %arg0, %c0_i32, %c0_i32_0 : i32, i32, i32
  }
  func.func @transform_1(%arg0: i32) -> (i32, i32, i32) {
    %c0_i32 = arith.constant 0 : i32
    %c0_i32_0 = arith.constant 0 : i32
    %c0_i32_1 = arith.constant 0 : i32
    %c0_i32_2 = arith.constant 0 : i32
    return %c0_i32, %c0_i32_0, %c0_i32_1 : i32, i32, i32
  }
  func.func @transform_2(%arg0: i32) -> (i32, i32) {
    %c0_i32 = arith.constant 0 : i32
    %c0_i32_0 = arith.constant 0 : i32
    %c0_i32_1 = arith.constant 0 : i32
    return %c0_i32, %c0_i32_0 : i32, i32
  }
  func.func @transform_3(%arg0: i32) -> (i32, i32, i32) {
    %c0_i32 = arith.constant 0 : i32
    %c0_i32_0 = arith.constant 0 : i32
    %c0_i32_1 = arith.constant 0 : i32
    return %arg0, %c0_i32, %c0_i32_0 : i32, i32, i32
  }
}

module attributes {stable_mosaic.version = 11 : i64} {
  func.func @_tap_conv_kernel(%arg0: i32, %arg1: memref<1x16x40xbf16, #tpu.memory_space<vmem>>, %arg2: memref<3x16x16xbf16, #tpu.memory_space<vmem>>, %arg3: memref<16x1xf32, #tpu.memory_space<vmem>>, %arg4: memref<1x16x128xbf16, #tpu.memory_space<vmem>>, %arg5: memref<16x256xbf16, #tpu.memory_space<vmem>>) attributes {dimension_semantics = [#tpu.dimension_semantics<parallel>], iteration_bounds = array<i64: 2>, scalar_prefetch = 0 : i64, scratch_operands = 1 : i64, tpu.core_type = #tpu.core_type<tc>, window_params = [{transform_indices = @transform_0, window_bounds = array<i64: 1, 16, 40>}, {pipeline_mode = #tpu.pipeline_mode<synchronous>, transform_indices = @transform_1, window_bounds = array<i64: 3, 16, 16>}, {pipeline_mode = #tpu.pipeline_mode<synchronous>, transform_indices = @transform_2, window_bounds = array<i64: 16, 1>}, {transform_indices = @transform_3, window_bounds = array<i64: 1, 16, 128>}]} {
    %cst = arith.constant 0.000000e+00 : bf16
    %0 = vector.broadcast %cst : bf16 to vector<16x256xbf16>
    %c0 = arith.constant 0 : index
    %c0_0 = arith.constant 0 : index
    %1 = vector.load %arg5[%c0, %c0_0] : memref<16x256xbf16, #tpu.memory_space<vmem>>, vector<16x256xbf16>
    tpu.vector_store %arg5[%c0, %c0_0], %0 {strides = array<i32>} : memref<16x256xbf16, #tpu.memory_space<vmem>>, vector<16x256xbf16>,
    %c0_1 = arith.constant 0 : index
    %c0_2 = arith.constant 0 : index
    %c0_3 = arith.constant 0 : index
    %2 = vector.load %arg1[%c0_1, %c0_2, %c0_3] : memref<1x16x40xbf16, #tpu.memory_space<vmem>>, vector<1x16x40xbf16>
    %3 = vector.shape_cast %2 : vector<1x16x40xbf16> to vector<16x40xbf16>
    %c0_4 = arith.constant 0 : index
    %c1 = arith.constant 1 : index
    %4 = vector.load %arg5[%c0_4, %c1] : memref<16x256xbf16, #tpu.memory_space<vmem>>, vector<16x40xbf16>
    tpu.vector_store %arg5[%c0_4, %c1], %3 {strides = array<i32>} : memref<16x256xbf16, #tpu.memory_space<vmem>>, vector<16x40xbf16>,
    %c0_5 = arith.constant 0 : index
    %c0_6 = arith.constant 0 : index
    %c0_7 = arith.constant 0 : index
    %5 = vector.load %arg2[%c0_5, %c0_6, %c0_7] : memref<3x16x16xbf16, #tpu.memory_space<vmem>>, vector<1x16x16xbf16>
    %6 = vector.shape_cast %5 : vector<1x16x16xbf16> to vector<16x16xbf16>
    %c0_8 = arith.constant 0 : index
    %c0_9 = arith.constant 0 : index
    %7 = vector.load %arg5[%c0_8, %c0_9] : memref<16x256xbf16, #tpu.memory_space<vmem>>, vector<16x128xbf16>
    %cst_10 = arith.constant dense<0.000000e+00> : vector<16x128xf32>
    %8 = tpu.matmul %6, %7, %cst_10 {dimension_numbers = #tpu.dot_dimension_numbers<[1], [0], [0], [1], [0, 0, 1, 1], [], []>} : vector<16x16xbf16>, vector<16x128xbf16>, vector<16x128xf32> -> vector<16x128xf32>
    %c1_11 = arith.constant 1 : index
    %c0_12 = arith.constant 0 : index
    %c0_13 = arith.constant 0 : index
    %9 = vector.load %arg2[%c1_11, %c0_12, %c0_13] : memref<3x16x16xbf16, #tpu.memory_space<vmem>>, vector<1x16x16xbf16>
    %10 = vector.shape_cast %9 : vector<1x16x16xbf16> to vector<16x16xbf16>
    %c0_14 = arith.constant 0 : index
    %c1_15 = arith.constant 1 : index
    %11 = vector.load %arg5[%c0_14, %c1_15] : memref<16x256xbf16, #tpu.memory_space<vmem>>, vector<16x128xbf16>
    %cst_16 = arith.constant dense<0.000000e+00> : vector<16x128xf32>
    %12 = tpu.matmul %10, %11, %cst_16 {dimension_numbers = #tpu.dot_dimension_numbers<[1], [0], [0], [1], [0, 0, 1, 1], [], []>} : vector<16x16xbf16>, vector<16x128xbf16>, vector<16x128xf32> -> vector<16x128xf32>
    %13 = arith.addf %8, %12 : vector<16x128xf32>
    %c2 = arith.constant 2 : index
    %c0_17 = arith.constant 0 : index
    %c0_18 = arith.constant 0 : index
    %14 = vector.load %arg2[%c2, %c0_17, %c0_18] : memref<3x16x16xbf16, #tpu.memory_space<vmem>>, vector<1x16x16xbf16>
    %15 = vector.shape_cast %14 : vector<1x16x16xbf16> to vector<16x16xbf16>
    %c0_19 = arith.constant 0 : index
    %c2_20 = arith.constant 2 : index
    %16 = vector.load %arg5[%c0_19, %c2_20] : memref<16x256xbf16, #tpu.memory_space<vmem>>, vector<16x128xbf16>
    %cst_21 = arith.constant dense<0.000000e+00> : vector<16x128xf32>
    %17 = tpu.matmul %15, %16, %cst_21 {dimension_numbers = #tpu.dot_dimension_numbers<[1], [0], [0], [1], [0, 0, 1, 1], [], []>} : vector<16x16xbf16>, vector<16x128xbf16>, vector<16x128xf32> -> vector<16x128xf32>
    %18 = arith.addf %13, %17 : vector<16x128xf32>
    %c0_22 = arith.constant 0 : index
    %c0_23 = arith.constant 0 : index
    %19 = vector.load %arg3[%c0_22, %c0_23] : memref<16x1xf32, #tpu.memory_space<vmem>>, vector<16x1xf32>
    %20 = vector.broadcast %19 : vector<16x1xf32> to vector<16x128xf32>
    %21 = arith.addf %18, %20 : vector<16x128xf32>
    %cst_24 = arith.constant 0.000000e+00 : f32
    %22 = vector.broadcast %cst_24 : f32 to vector<16x128xf32>
    %23 = arith.maximumf %21, %22 : vector<16x128xf32>
    %24 = arith.truncf %23 : vector<16x128xf32> to vector<16x128xbf16>
    %c0_25 = arith.constant 0 : index
    %c0_26 = arith.constant 0 : index
    %c0_27 = arith.constant 0 : index
    %25 = vector.load %arg4[%c0_25, %c0_26, %c0_27] : memref<1x16x128xbf16, #tpu.memory_space<vmem>>, vector<1x16x128xbf16>
    %26 = vector.shape_cast %25 : vector<1x16x128xbf16> to vector<16x128xbf16>
    %27 = vector.shape_cast %24 : vector<16x128xbf16> to vector<1x16x128xbf16>
    tpu.vector_store %arg4[%c0_25, %c0_26, %c0_27], %27 {strides = array<i32>} : memref<1x16x128xbf16, #tpu.memory_space<vmem>>, vector<1x16x128xbf16>,
    return
  }
  func.func @transform_0(%arg0: i32) -> (i32, i32, i32) {
    %c0_i32 = arith.constant 0 : i32
    %c0_i32_0 = arith.constant 0 : i32
    %c0_i32_1 = arith.constant 0 : i32
    return %arg0, %c0_i32, %c0_i32_0 : i32, i32, i32
  }
  func.func @transform_1(%arg0: i32) -> (i32, i32, i32) {
    %c0_i32 = arith.constant 0 : i32
    %c0_i32_0 = arith.constant 0 : i32
    %c0_i32_1 = arith.constant 0 : i32
    %c0_i32_2 = arith.constant 0 : i32
    return %c0_i32, %c0_i32_0, %c0_i32_1 : i32, i32, i32
  }
  func.func @transform_2(%arg0: i32) -> (i32, i32) {
    %c0_i32 = arith.constant 0 : i32
    %c0_i32_0 = arith.constant 0 : i32
    %c0_i32_1 = arith.constant 0 : i32
    return %c0_i32, %c0_i32_0 : i32, i32
  }
  func.func @transform_3(%arg0: i32) -> (i32, i32, i32) {
    %c0_i32 = arith.constant 0 : i32
    %c0_i32_0 = arith.constant 0 : i32
    %c0_i32_1 = arith.constant 0 : i32
    return %arg0, %c0_i32, %c0_i32_0 : i32, i32, i32
  }
}

module attributes {stable_mosaic.version = 11 : i64} {
  func.func @_tap_conv_kernel(%arg0: i32, %arg1: memref<1x16x80xbf16, #tpu.memory_space<vmem>>, %arg2: memref<3x16x16xbf16, #tpu.memory_space<vmem>>, %arg3: memref<16x1xf32, #tpu.memory_space<vmem>>, %arg4: memref<1x16x128xbf16, #tpu.memory_space<vmem>>, %arg5: memref<16x256xbf16, #tpu.memory_space<vmem>>) attributes {dimension_semantics = [#tpu.dimension_semantics<parallel>], iteration_bounds = array<i64: 2>, scalar_prefetch = 0 : i64, scratch_operands = 1 : i64, tpu.core_type = #tpu.core_type<tc>, window_params = [{transform_indices = @transform_0, window_bounds = array<i64: 1, 16, 80>}, {pipeline_mode = #tpu.pipeline_mode<synchronous>, transform_indices = @transform_1, window_bounds = array<i64: 3, 16, 16>}, {pipeline_mode = #tpu.pipeline_mode<synchronous>, transform_indices = @transform_2, window_bounds = array<i64: 16, 1>}, {transform_indices = @transform_3, window_bounds = array<i64: 1, 16, 128>}]} {
    %cst = arith.constant 0.000000e+00 : bf16
    %0 = vector.broadcast %cst : bf16 to vector<16x256xbf16>
    %c0 = arith.constant 0 : index
    %c0_0 = arith.constant 0 : index
    %1 = vector.load %arg5[%c0, %c0_0] : memref<16x256xbf16, #tpu.memory_space<vmem>>, vector<16x256xbf16>
    tpu.vector_store %arg5[%c0, %c0_0], %0 {strides = array<i32>} : memref<16x256xbf16, #tpu.memory_space<vmem>>, vector<16x256xbf16>,
    %c0_1 = arith.constant 0 : index
    %c0_2 = arith.constant 0 : index
    %c0_3 = arith.constant 0 : index
    %2 = vector.load %arg1[%c0_1, %c0_2, %c0_3] : memref<1x16x80xbf16, #tpu.memory_space<vmem>>, vector<1x16x80xbf16>
    %3 = vector.shape_cast %2 : vector<1x16x80xbf16> to vector<16x80xbf16>
    %c0_4 = arith.constant 0 : index
    %c1 = arith.constant 1 : index
    %4 = vector.load %arg5[%c0_4, %c1] : memref<16x256xbf16, #tpu.memory_space<vmem>>, vector<16x80xbf16>
    tpu.vector_store %arg5[%c0_4, %c1], %3 {strides = array<i32>} : memref<16x256xbf16, #tpu.memory_space<vmem>>, vector<16x80xbf16>,
    %c0_5 = arith.constant 0 : index
    %c0_6 = arith.constant 0 : index
    %c0_7 = arith.constant 0 : index
    %5 = vector.load %arg2[%c0_5, %c0_6, %c0_7] : memref<3x16x16xbf16, #tpu.memory_space<vmem>>, vector<1x16x16xbf16>
    %6 = vector.shape_cast %5 : vector<1x16x16xbf16> to vector<16x16xbf16>
    %c0_8 = arith.constant 0 : index
    %c0_9 = arith.constant 0 : index
    %7 = vector.load %arg5[%c0_8, %c0_9] : memref<16x256xbf16, #tpu.memory_space<vmem>>, vector<16x128xbf16>
    %cst_10 = arith.constant dense<0.000000e+00> : vector<16x128xf32>
    %8 = tpu.matmul %6, %7, %cst_10 {dimension_numbers = #tpu.dot_dimension_numbers<[1], [0], [0], [1], [0, 0, 1, 1], [], []>} : vector<16x16xbf16>, vector<16x128xbf16>, vector<16x128xf32> -> vector<16x128xf32>
    %c1_11 = arith.constant 1 : index
    %c0_12 = arith.constant 0 : index
    %c0_13 = arith.constant 0 : index
    %9 = vector.load %arg2[%c1_11, %c0_12, %c0_13] : memref<3x16x16xbf16, #tpu.memory_space<vmem>>, vector<1x16x16xbf16>
    %10 = vector.shape_cast %9 : vector<1x16x16xbf16> to vector<16x16xbf16>
    %c0_14 = arith.constant 0 : index
    %c1_15 = arith.constant 1 : index
    %11 = vector.load %arg5[%c0_14, %c1_15] : memref<16x256xbf16, #tpu.memory_space<vmem>>, vector<16x128xbf16>
    %cst_16 = arith.constant dense<0.000000e+00> : vector<16x128xf32>
    %12 = tpu.matmul %10, %11, %cst_16 {dimension_numbers = #tpu.dot_dimension_numbers<[1], [0], [0], [1], [0, 0, 1, 1], [], []>} : vector<16x16xbf16>, vector<16x128xbf16>, vector<16x128xf32> -> vector<16x128xf32>
    %13 = arith.addf %8, %12 : vector<16x128xf32>
    %c2 = arith.constant 2 : index
    %c0_17 = arith.constant 0 : index
    %c0_18 = arith.constant 0 : index
    %14 = vector.load %arg2[%c2, %c0_17, %c0_18] : memref<3x16x16xbf16, #tpu.memory_space<vmem>>, vector<1x16x16xbf16>
    %15 = vector.shape_cast %14 : vector<1x16x16xbf16> to vector<16x16xbf16>
    %c0_19 = arith.constant 0 : index
    %c2_20 = arith.constant 2 : index
    %16 = vector.load %arg5[%c0_19, %c2_20] : memref<16x256xbf16, #tpu.memory_space<vmem>>, vector<16x128xbf16>
    %cst_21 = arith.constant dense<0.000000e+00> : vector<16x128xf32>
    %17 = tpu.matmul %15, %16, %cst_21 {dimension_numbers = #tpu.dot_dimension_numbers<[1], [0], [0], [1], [0, 0, 1, 1], [], []>} : vector<16x16xbf16>, vector<16x128xbf16>, vector<16x128xf32> -> vector<16x128xf32>
    %18 = arith.addf %13, %17 : vector<16x128xf32>
    %c0_22 = arith.constant 0 : index
    %c0_23 = arith.constant 0 : index
    %19 = vector.load %arg3[%c0_22, %c0_23] : memref<16x1xf32, #tpu.memory_space<vmem>>, vector<16x1xf32>
    %20 = vector.broadcast %19 : vector<16x1xf32> to vector<16x128xf32>
    %21 = arith.addf %18, %20 : vector<16x128xf32>
    %cst_24 = arith.constant 0.000000e+00 : f32
    %22 = vector.broadcast %cst_24 : f32 to vector<16x128xf32>
    %23 = arith.maximumf %21, %22 : vector<16x128xf32>
    %24 = arith.truncf %23 : vector<16x128xf32> to vector<16x128xbf16>
    %c0_25 = arith.constant 0 : index
    %c0_26 = arith.constant 0 : index
    %c0_27 = arith.constant 0 : index
    %25 = vector.load %arg4[%c0_25, %c0_26, %c0_27] : memref<1x16x128xbf16, #tpu.memory_space<vmem>>, vector<1x16x128xbf16>
    %26 = vector.shape_cast %25 : vector<1x16x128xbf16> to vector<16x128xbf16>
    %27 = vector.shape_cast %24 : vector<16x128xbf16> to vector<1x16x128xbf16>
    tpu.vector_store %arg4[%c0_25, %c0_26, %c0_27], %27 {strides = array<i32>} : memref<1x16x128xbf16, #tpu.memory_space<vmem>>, vector<1x16x128xbf16>,
    return
  }
  func.func @transform_0(%arg0: i32) -> (i32, i32, i32) {
    %c0_i32 = arith.constant 0 : i32
    %c0_i32_0 = arith.constant 0 : i32
    %c0_i32_1 = arith.constant 0 : i32
    return %arg0, %c0_i32, %c0_i32_0 : i32, i32, i32
  }
  func.func @transform_1(%arg0: i32) -> (i32, i32, i32) {
    %c0_i32 = arith.constant 0 : i32
    %c0_i32_0 = arith.constant 0 : i32
    %c0_i32_1 = arith.constant 0 : i32
    %c0_i32_2 = arith.constant 0 : i32
    return %c0_i32, %c0_i32_0, %c0_i32_1 : i32, i32, i32
  }
  func.func @transform_2(%arg0: i32) -> (i32, i32) {
    %c0_i32 = arith.constant 0 : i32
    %c0_i32_0 = arith.constant 0 : i32
    %c0_i32_1 = arith.constant 0 : i32
    return %c0_i32, %c0_i32_0 : i32, i32
  }
  func.func @transform_3(%arg0: i32) -> (i32, i32, i32) {
    %c0_i32 = arith.constant 0 : i32
    %c0_i32_0 = arith.constant 0 : i32
    %c0_i32_1 = arith.constant 0 : i32
    return %arg0, %c0_i32, %c0_i32_0 : i32, i32, i32
  }
}

module attributes {stable_mosaic.version = 11 : i64} {
  func.func @_tap_conv_kernel(%arg0: i32, %arg1: memref<1x16x160xbf16, #tpu.memory_space<vmem>>, %arg2: memref<3x16x16xbf16, #tpu.memory_space<vmem>>, %arg3: memref<16x1xf32, #tpu.memory_space<vmem>>, %arg4: memref<1x16x256xbf16, #tpu.memory_space<vmem>>, %arg5: memref<16x384xbf16, #tpu.memory_space<vmem>>) attributes {dimension_semantics = [#tpu.dimension_semantics<parallel>], iteration_bounds = array<i64: 2>, scalar_prefetch = 0 : i64, scratch_operands = 1 : i64, tpu.core_type = #tpu.core_type<tc>, window_params = [{transform_indices = @transform_0, window_bounds = array<i64: 1, 16, 160>}, {pipeline_mode = #tpu.pipeline_mode<synchronous>, transform_indices = @transform_1, window_bounds = array<i64: 3, 16, 16>}, {pipeline_mode = #tpu.pipeline_mode<synchronous>, transform_indices = @transform_2, window_bounds = array<i64: 16, 1>}, {transform_indices = @transform_3, window_bounds = array<i64: 1, 16, 256>}]} {
    %cst = arith.constant 0.000000e+00 : bf16
    %0 = vector.broadcast %cst : bf16 to vector<16x384xbf16>
    %c0 = arith.constant 0 : index
    %c0_0 = arith.constant 0 : index
    %1 = vector.load %arg5[%c0, %c0_0] : memref<16x384xbf16, #tpu.memory_space<vmem>>, vector<16x384xbf16>
    tpu.vector_store %arg5[%c0, %c0_0], %0 {strides = array<i32>} : memref<16x384xbf16, #tpu.memory_space<vmem>>, vector<16x384xbf16>,
    %c0_1 = arith.constant 0 : index
    %c0_2 = arith.constant 0 : index
    %c0_3 = arith.constant 0 : index
    %2 = vector.load %arg1[%c0_1, %c0_2, %c0_3] : memref<1x16x160xbf16, #tpu.memory_space<vmem>>, vector<1x16x160xbf16>
    %3 = vector.shape_cast %2 : vector<1x16x160xbf16> to vector<16x160xbf16>
    %c0_4 = arith.constant 0 : index
    %c1 = arith.constant 1 : index
    %4 = vector.load %arg5[%c0_4, %c1] : memref<16x384xbf16, #tpu.memory_space<vmem>>, vector<16x160xbf16>
    tpu.vector_store %arg5[%c0_4, %c1], %3 {strides = array<i32>} : memref<16x384xbf16, #tpu.memory_space<vmem>>, vector<16x160xbf16>,
    %c0_5 = arith.constant 0 : index
    %c0_6 = arith.constant 0 : index
    %c0_7 = arith.constant 0 : index
    %5 = vector.load %arg2[%c0_5, %c0_6, %c0_7] : memref<3x16x16xbf16, #tpu.memory_space<vmem>>, vector<1x16x16xbf16>
    %6 = vector.shape_cast %5 : vector<1x16x16xbf16> to vector<16x16xbf16>
    %c0_8 = arith.constant 0 : index
    %c0_9 = arith.constant 0 : index
    %7 = vector.load %arg5[%c0_8, %c0_9] : memref<16x384xbf16, #tpu.memory_space<vmem>>, vector<16x256xbf16>
    %cst_10 = arith.constant dense<0.000000e+00> : vector<16x256xf32>
    %8 = tpu.matmul %6, %7, %cst_10 {dimension_numbers = #tpu.dot_dimension_numbers<[1], [0], [0], [1], [0, 0, 1, 1], [], []>} : vector<16x16xbf16>, vector<16x256xbf16>, vector<16x256xf32> -> vector<16x256xf32>
    %c1_11 = arith.constant 1 : index
    %c0_12 = arith.constant 0 : index
    %c0_13 = arith.constant 0 : index
    %9 = vector.load %arg2[%c1_11, %c0_12, %c0_13] : memref<3x16x16xbf16, #tpu.memory_space<vmem>>, vector<1x16x16xbf16>
    %10 = vector.shape_cast %9 : vector<1x16x16xbf16> to vector<16x16xbf16>
    %c0_14 = arith.constant 0 : index
    %c1_15 = arith.constant 1 : index
    %11 = vector.load %arg5[%c0_14, %c1_15] : memref<16x384xbf16, #tpu.memory_space<vmem>>, vector<16x256xbf16>
    %cst_16 = arith.constant dense<0.000000e+00> : vector<16x256xf32>
    %12 = tpu.matmul %10, %11, %cst_16 {dimension_numbers = #tpu.dot_dimension_numbers<[1], [0], [0], [1], [0, 0, 1, 1], [], []>} : vector<16x16xbf16>, vector<16x256xbf16>, vector<16x256xf32> -> vector<16x256xf32>
    %13 = arith.addf %8, %12 : vector<16x256xf32>
    %c2 = arith.constant 2 : index
    %c0_17 = arith.constant 0 : index
    %c0_18 = arith.constant 0 : index
    %14 = vector.load %arg2[%c2, %c0_17, %c0_18] : memref<3x16x16xbf16, #tpu.memory_space<vmem>>, vector<1x16x16xbf16>
    %15 = vector.shape_cast %14 : vector<1x16x16xbf16> to vector<16x16xbf16>
    %c0_19 = arith.constant 0 : index
    %c2_20 = arith.constant 2 : index
    %16 = vector.load %arg5[%c0_19, %c2_20] : memref<16x384xbf16, #tpu.memory_space<vmem>>, vector<16x256xbf16>
    %cst_21 = arith.constant dense<0.000000e+00> : vector<16x256xf32>
    %17 = tpu.matmul %15, %16, %cst_21 {dimension_numbers = #tpu.dot_dimension_numbers<[1], [0], [0], [1], [0, 0, 1, 1], [], []>} : vector<16x16xbf16>, vector<16x256xbf16>, vector<16x256xf32> -> vector<16x256xf32>
    %18 = arith.addf %13, %17 : vector<16x256xf32>
    %c0_22 = arith.constant 0 : index
    %c0_23 = arith.constant 0 : index
    %19 = vector.load %arg3[%c0_22, %c0_23] : memref<16x1xf32, #tpu.memory_space<vmem>>, vector<16x1xf32>
    %20 = vector.broadcast %19 : vector<16x1xf32> to vector<16x256xf32>
    %21 = arith.addf %18, %20 : vector<16x256xf32>
    %22 = math.tanh %21 : vector<16x256xf32>
    %23 = arith.truncf %22 : vector<16x256xf32> to vector<16x256xbf16>
    %c0_24 = arith.constant 0 : index
    %c0_25 = arith.constant 0 : index
    %c0_26 = arith.constant 0 : index
    %24 = vector.load %arg4[%c0_24, %c0_25, %c0_26] : memref<1x16x256xbf16, #tpu.memory_space<vmem>>, vector<1x16x256xbf16>
    %25 = vector.shape_cast %24 : vector<1x16x256xbf16> to vector<16x256xbf16>
    %26 = vector.shape_cast %23 : vector<16x256xbf16> to vector<1x16x256xbf16>
    tpu.vector_store %arg4[%c0_24, %c0_25, %c0_26], %26 {strides = array<i32>} : memref<1x16x256xbf16, #tpu.memory_space<vmem>>, vector<1x16x256xbf16>,
    return
  }
  func.func @transform_0(%arg0: i32) -> (i32, i32, i32) {
    %c0_i32 = arith.constant 0 : i32
    %c0_i32_0 = arith.constant 0 : i32
    %c0_i32_1 = arith.constant 0 : i32
    return %arg0, %c0_i32, %c0_i32_0 : i32, i32, i32
  }
  func.func @transform_1(%arg0: i32) -> (i32, i32, i32) {
    %c0_i32 = arith.constant 0 : i32
    %c0_i32_0 = arith.constant 0 : i32
    %c0_i32_1 = arith.constant 0 : i32
    %c0_i32_2 = arith.constant 0 : i32
    return %c0_i32, %c0_i32_0, %c0_i32_1 : i32, i32, i32
  }
  func.func @transform_2(%arg0: i32) -> (i32, i32) {
    %c0_i32 = arith.constant 0 : i32
    %c0_i32_0 = arith.constant 0 : i32
    %c0_i32_1 = arith.constant 0 : i32
    return %c0_i32, %c0_i32_0 : i32, i32
  }
  func.func @transform_3(%arg0: i32) -> (i32, i32, i32) {
    %c0_i32 = arith.constant 0 : i32
    %c0_i32_0 = arith.constant 0 : i32
    %c0_i32_1 = arith.constant 0 : i32
    return %arg0, %c0_i32, %c0_i32_0 : i32, i32, i32
  }
}

</mosaic_0001>

<llo_original>
// kernel: ecg_reconstructor_forward.12
$region0: #{ecg_reconstructor_forward.12}
  #allocation0 [shape = 'u32[]', space=smem, size = 0x4, offset = 0x4, fixed_abs, tag = 'smem constant byte address 0x4 - core index']
  #allocation1 [shape = 'u32[144,128]{1,0:T(1,128)}', space=vmem, size = 0x12000, scoped, tag = 'internal scratch']
  #allocation2 [shape = 'bf16[16,384]{1,0:T(16,128)(2,1)}', space=vmem, size = 0x3000, scoped, tag = 'scratch operand']
  %s0 = inlined_call_operand.vmem [shape: bf16[2,16,160], index: 0, kind: input, shape index: {}]
  %s1 = inlined_call_operand.vmem [shape: bf16[3,16,16], index: 1, kind: input, shape index: {}]
  %s2 = inlined_call_operand.vmem [shape: f32[16,1], index: 2, kind: input, shape index: {}]
  %s3 = inlined_call_operand.vmem [shape: bf16[2,16,256], index: 3, kind: output, shape index: {}]
  %s4 = sld [smem:[#allocation0]]
  $region45: #{ecg_reconstructor_forward.12} parent=0
    _
  %s6 = ssub.s32 1, %s4
  %s7 = scalar_select 0, %s6, %s4
  loop: start=0, step=1, limit=4
  $region2: #{ecg_reconstructor_forward.12} parent=0 // loop_pre_header
    _
  $region3: #{ecg_reconstructor_forward.12} parent=0 // loop_header
    %s9 = sphi 0, %s13
    %p10 = scmp.ge.s32.totalorder %s9, 4
    %s19 = sphi 0, %s21
    %s22 = sphi 0, %s19
    %s23 = sphi 0, %s22
    %s39 = sphi 0, %s23
    %s43 = sphi 0, %s43
    %s45 = sphi 0, %s43
    %s46 = sphi 0, %s45
    %s60 = sphi 0, %s46
    %s64 = sphi 0, %s64
    %s66 = sphi 0, %s64
    %s67 = sphi 0, %s66
    %s81 = sphi 0, %s67
    %s87 = sphi 0, %s89
    %s90 = sphi 0, %s87
    %s91 = sphi 0, %s90
    %s107 = sphi 0, %s91
  $region4: #{ecg_reconstructor_forward.12} parent=0 // loop_header_branch
    %12 = sbr.rel (%p10) target = $region8
  $region5: #{ecg_reconstructor_forward.12} parent=0 // loop_body
    %s14 = ssub.s32 %s9, 1
    %s15 = ssub.s32 %s9, 2
    %s16 = sadd.s32 %s9, 1
    %s17 = ssub.s32 %s9, %s16
    %p18 = scmp.eq.s32.totalorder %s17, 0
    %s20 = sadd.s32 %s19, 1
    %s21 = scalar_select %p18, %s19, %s20
    %p24 = pneg %p18
    %p25 = scmp.eq.s32.totalorder %s9, 1
    %p26 = por %p24, %p25
    %p27 = scmp.ne.s32.totalorder %s19, %s22
    %p28 = scmp.eq.s32.totalorder %s9, 0
    %p29 = por %p27, %p28
    %p30 = scmp.ne.s32.totalorder %s19, %s22
    %p31 = scmp.eq.s32.totalorder %s14, 1
    %p32 = por %p30, %p31
    %p33 = scmp.ne.s32.totalorder %s22, %s23
    %p34 = scmp.eq.s32.totalorder %s14, 0
    %p35 = por %p33, %p34
    %p36 = scmp.ne.s32.totalorder %s22, %s23
    %p37 = scmp.eq.s32.totalorder %s15, 1
    %p38 = por %p36, %p37
    %p40 = scmp.ne.s32.totalorder %s23, %s39
    %p41 = scmp.eq.s32.totalorder %s15, 0
    %p42 = por %p40, %p41
    %s44 = sadd.s32 %s43, 1
    %p47 = scmp.eq.s32.totalorder %s9, 1
    %p48 = scmp.ne.s32.totalorder %s43, %s45
    %p49 = scmp.eq.s32.totalorder %s9, 0
    %p50 = por %p48, %p49
    %p51 = scmp.ne.s32.totalorder %s43, %s45
    %p52 = scmp.eq.s32.totalorder %s14, 1
    %p53 = por %p51, %p52
    %p54 = scmp.ne.s32.totalorder %s45, %s46
    %p55 = scmp.eq.s32.totalorder %s14, 0
    %p56 = por %p54, %p55
    %p57 = scmp.ne.s32.totalorder %s45, %s46
    %p58 = scmp.eq.s32.totalorder %s15, 1
    %p59 = por %p57, %p58
    %p61 = scmp.ne.s32.totalorder %s46, %s60
    %p62 = scmp.eq.s32.totalorder %s15, 0
    %p63 = por %p61, %p62
    %s65 = sadd.s32 %s64, 1
    %p68 = scmp.eq.s32.totalorder %s9, 1
    %p69 = scmp.ne.s32.totalorder %s64, %s66
    %p70 = scmp.eq.s32.totalorder %s9, 0
    %p71 = por %p69, %p70
    %p72 = scmp.ne.s32.totalorder %s64, %s66
    %p73 = scmp.eq.s32.totalorder %s14, 1
    %p74 = por %p72, %p73
    %p75 = scmp.ne.s32.totalorder %s66, %s67
    %p76 = scmp.eq.s32.totalorder %s14, 0
    %p77 = por %p75, %p76
    %p78 = scmp.ne.s32.totalorder %s66, %s67
    %p79 = scmp.eq.s32.totalorder %s15, 1
    %p80 = por %p78, %p79
    %p82 = scmp.ne.s32.totalorder %s67, %s81
    %p83 = scmp.eq.s32.totalorder %s15, 0
    %p84 = por %p82, %p83
    %s85 = ssub.s32 %s9, %s16
    %p86 = scmp.eq.s32.totalorder %s85, 0
    %s88 = sadd.s32 %s87, 1
    %s89 = scalar_select %p86, %s87, %s88
    %p92 = pneg %p86
    %p93 = scmp.eq.s32.totalorder %s9, 1
    %p94 = por %p92, %p93
    %p95 = scmp.ne.s32.totalorder %s87, %s90
    %p96 = scmp.eq.s32.totalorder %s9, 0
    %p97 = por %p95, %p96
    %p98 = scmp.ne.s32.totalorder %s87, %s90
    %p99 = scmp.eq.s32.totalorder %s14, 1
    %p100 = por %p98, %p99
    %p101 = scmp.ne.s32.totalorder %s90, %s91
    %p102 = scmp.eq.s32.totalorder %s14, 0
    %p103 = por %p101, %p102
    %p104 = scmp.ne.s32.totalorder %s90, %s91
    %p105 = scmp.eq.s32.totalorder %s15, 1
    %p106 = por %p104, %p105
    %p108 = scmp.ne.s32.totalorder %s91, %s107
    %p109 = scmp.eq.s32.totalorder %s15, 0
    %p110 = por %p108, %p109
    %p111 = scmp.le.s32.totalorder 1, %s9
    %p112 = scmp.lt.s32.totalorder %s9, 3
    %p113 = pnand %p111, %p112
    %p114 = pneg %p113
    // Predicated region
    $region9: #{ecg_reconstructor_forward.12} parent=5 // pred_check
      _
    $region10: #{ecg_reconstructor_forward.12} parent=5 // pred_check_branch
      %116 = sbr.rel (%p113) target = $region12
    $region11: #{ecg_reconstructor_forward.12} parent=5 // pred_region
      %s117 = ssub.s32 %s9, 1
      // Predicated region
      $region13: #{ecg_reconstructor_forward.12} parent=11 // pred_check
        %p118 = pneg %p56
      $region14: #{ecg_reconstructor_forward.12} parent=11 // pred_check_branch
        %120 = sbr.rel (%p118) target = $region16
      $region15: #{ecg_reconstructor_forward.12} parent=11 // pred_region
        _
      $region16: #{ecg_reconstructor_forward.12} parent=11 // pred_fallthru
        _
      // Predicated region
      $region17: #{ecg_reconstructor_forward.12} parent=11 // pred_check
        %p121 = pneg %p77
      $region18: #{ecg_reconstructor_forward.12} parent=11 // pred_check_branch
        %123 = sbr.rel (%p121) target = $region20
      $region19: #{ecg_reconstructor_forward.12} parent=11 // pred_region
        _
      $region20: #{ecg_reconstructor_forward.12} parent=11 // pred_fallthru
        _
    $region12: #{ecg_reconstructor_forward.12} parent=5 // pred_fallthru
      _
    %p124 = scmp.lt.s32.totalorder %s9, 2
    // Predicated region
    $region21: #{ecg_reconstructor_forward.12} parent=5 // pred_check
      %p125 = pneg %p124
    $region22: #{ecg_reconstructor_forward.12} parent=5 // pred_check_branch
      %127 = sbr.rel (%p125) target = $region24
    $region23: #{ecg_reconstructor_forward.12} parent=5 // pred_region
      // Predicated region
      $region25: #{ecg_reconstructor_forward.12} parent=23 // pred_check
        %p128 = pneg %p29
      $region26: #{ecg_reconstructor_forward.12} parent=23 // pred_check_branch
        %130 = sbr.rel (%p128) target = $region28
      $region27: #{ecg_reconstructor_forward.12} parent=23 // pred_region
        %p131 = scmp.lt.s32.totalorder %s9, 1
        %s132 = scalar_select %p131, %s9, 1
        %s133 = smul.addr %s132, 4
        %s134 = smul.addr %s133, 4
        %s135 = scalar_lea.vmem %s0, %s134
      $region28: #{ecg_reconstructor_forward.12} parent=23 // pred_fallthru
        _
    $region24: #{ecg_reconstructor_forward.12} parent=5 // pred_fallthru
      _
    %p136 = scmp.le.s32.totalorder 1, %s9
    %p137 = scmp.lt.s32.totalorder %s9, 3
    %p138 = pnand %p136, %p137
    %p139 = pneg %p138
    // Predicated region
    $region29: #{ecg_reconstructor_forward.12} parent=5 // pred_check
      _
    $region30: #{ecg_reconstructor_forward.12} parent=5 // pred_check_branch
      %141 = sbr.rel (%p138) target = $region32
    $region31: #{ecg_reconstructor_forward.12} parent=5 // pred_region
      %s142 = ssub.s32 %s9, 1
      %p143 = scmp.lt.s32.totalorder %s14, 1
      %s144 = scalar_select %p143, %s14, 1
      %s145 = smul.addr %s144, 4
      %s146 = smul.addr %s145, 4
      %s147 = scalar_lea.vmem %s0, %s146
      %p148 = pneg %p35
      %p149 = pneg %p32
      %p150 = pneg %p56
      %p151 = pneg %p53
      %p152 = pneg %p77
      %p153 = pneg %p74
      %p154 = pneg %p103
      %p155 = pneg %p100
      %p156 = scmp.lt.s32.totalorder %s14, 1
      %s157 = scalar_select %p156, %s14, 1
      %s158 = smul.addr %s157, 4
      %s159 = smul.addr %s158, 4
      %s160 = scalar_lea.vmem %s3, %s159
      %p161 = scmp.lt.s32.totalorder %s14, 1
      %s162 = scalar_select %p161, %s14, 1
      %s163 = smul.addr %s162, 4
      %s164 = smul.addr %s163, 4
      %s165 = scalar_lea.vmem %s0, %s164
      %p166 = scmp.lt.s32.totalorder %s14, 1
      %s167 = scalar_select %p166, %s14, 1
      %s168 = smul.addr %s167, 4
      %s169 = smul.addr %s168, 4
      %s170 = scalar_lea.vmem %s3, %s169
      %172 = vst [vmem:[#allocation2] sm:$0xff] 0
      %173 = vst [vmem:[#allocation2 + $0x8] sm:$0xff] 0
      %174 = vst [vmem:[#allocation2 + $0x10] sm:$0xff] 0
      %v175 = vld [vmem:[%s165] sm:$0xff]
      %v176 = vld [vmem:[%s165 + $0x8] sm:$0xff]
      %v179 = vunpack.c.l.b16 %v175
      %v180 = vunpack.c.h.b16 %v175
      %v181 = vunpack.c.l.b16 %v176
      %v182 = vunpack.c.h.b16 %v176
      %v183 = vpack.c.b16 %v181, %v179
      %v184 = vpack.c.b16 %v182, %v180
      %185 = vrot.lane.b32.xlu0 %v183, 1
      %v186 = vpop.permute.xlu0 %185
      %187 = vrot.lane.b32.xlu0 %v184, 1
      %v188 = vpop.permute.xlu0 %187
      %vm189 = vcmask 7168
      %v190 = vsel %vm189, %v186, %v188
      %vm193 = vcmask 1047560
      %194 = vst.msk [vmem:[#allocation2] sm:$0xff] %vm193, %v186
      %vm195 = vcmask 269312
      %196 = vst.msk [vmem:[#allocation2 + $0x8] sm:$0xff] %vm195, %v190
      %v197 = vld [vmem:[%s1] sm:$0xf]
      %v198 = vld [vmem:[%s1 + $0x4] sm:$0xf]
      %v199 = vld [vmem:[#allocation2] sm:$0xff]
      %v200 = vld [vmem:[#allocation2 + $0x8] sm:$0xff]
      %s201 = scalar_lea.vmem %s1, 8
      %v202 = vld [vmem:[%s201] sm:$0xf]
      %v203 = vld [vmem:[%s201 + $0x4] sm:$0xf]
      %v204 = vld [vmem:[#allocation2] sm:$0xff]
      %v205 = vld [vmem:[#allocation2 + $0x8] sm:$0xff]
      %v206 = vld [vmem:[#allocation2 + $0x10] sm:$0xff]
      %v209 = vunpack.c.l.b16 %v202
      %v210 = vunpack.c.l.b16 %v203
      %v211 = vpack.c.b16 %v210, %v209
      %215 = vrot.lane.b32.xlu0 %v204, 127
      %v216 = vpop.permute.xlu0 %215
      %217 = vrot.lane.b32.xlu0 %v205, 127
      %v218 = vpop.permute.xlu0 %217
      %219 = vrot.lane.b32.xlu0 %v206, 127
      %v220 = vpop.permute.xlu0 %219
      %vm221 = vcmask 1039360
      %v222 = vsel %vm221, %v216, %v218
      %v223 = vsel %vm221, %v218, %v220
      %vm226 = vcmask 130048
      %v228 = vsel %vm226, %v211, 0
      %230 = vmatprep.subr.bf16.mxu0 %v223
      %231 = vmatpush1.bf16.msra.mxu0 %v222
      %232 = vmatprep.subr.bf16.mxu0 0
      %233 = vmatpush1.bf16.msra.mxu0 0
      %234 = vmatprep.subr.bf16.mxu0 0
      %235 = vmatpush1.bf16.msra.mxu0 0
      %236 = vmatprep.subr.bf16.mxu0 0
      %237 = vmatpush1.bf16.msra.mxu0 0
      %238 = vmatprep.subr.bf16.mxu0 0
      %239 = vmatpush1.bf16.msra.mxu0 0
      %240 = vmatprep.subr.bf16.mxu0 0
      %241 = vmatpush1.bf16.msra.mxu0 0
      %242 = vmatprep.subr.bf16.mxu0 0
      %243 = vmatpush1.bf16.msra.mxu0 0
      %244 = vmatprep.subr.bf16.mxu0 0
      %245 = vmatpush1.bf16.msra.mxu0 0
      %246 = vmatprep.subr.bf16.mxu0 0
      %247 = vmatpush1.bf16.msra.mxu0 0
      %248 = vmatprep.subr.bf16.mxu0 0
      %249 = vmatpush1.bf16.msra.mxu0 0
      %250 = vmatprep.subr.bf16.mxu0 0
      %251 = vmatpush1.bf16.msra.mxu0 0
      %252 = vmatprep.subr.bf16.mxu0 0
      %253 = vmatpush1.bf16.msra.mxu0 0
      %254 = vmatprep.subr.bf16.mxu0 0
      %255 = vmatpush1.bf16.msra.mxu0 0
      %256 = vmatprep.subr.bf16.mxu0 0
      %257 = vmatpush1.bf16.msra.mxu0 0
      %258 = vmatprep.subr.bf16.mxu0 0
      %259 = vmatpush1.bf16.msra.mxu0 0
      %260 = vmatprep.subr.bf16.mxu0 0
      %261 = vmatpush1.bf16.msra.mxu0 0
      %262 = vmatprep.mubr.bf16.mxu0 0
      %263 = vmatmul.mubr.bf16.gmra.mrb[0].mxu0 %v228
      %v264 = vpop.f32.mrb[0].mxu0
      %v265 = vadd.f32 0.0, %v264
      %v266 = vpop.f32.mrb[0].mxu0
      %v267 = vadd.f32 0.0, %v266
      %v268 = vpop.f32.mrb[0].mxu0
      %v269 = vadd.f32 0.0, %v268
      %v270 = vpop.f32.mrb[0].mxu0
      %v271 = vadd.f32 0.0, %v270
      %272 = vdwg.mxu0
      %v275 = vunpack.c.l.b16 %v197
      %v276 = vunpack.c.l.b16 %v198
      %v277 = vpack.c.b16 %v276, %v275
      %v279 = vsel %vm226, %v277, 0
      %281 = vmatprep.subr.bf16.mxu0 %v200
      %282 = vmatpush1.bf16.msra.mxu0 %v199
      %283 = vmatprep.subr.bf16.mxu0 0
      %284 = vmatpush1.bf16.msra.mxu0 0
      %285 = vmatprep.subr.bf16.mxu0 0
      %286 = vmatpush1.bf16.msra.mxu0 0
      %287 = vmatprep.subr.bf16.mxu0 0
      %288 = vmatpush1.bf16.msra.mxu0 0
      %289 = vmatprep.subr.bf16.mxu0 0
      %290 = vmatpush1.bf16.msra.mxu0 0
      %291 = vmatprep.subr.bf16.mxu0 0
      %292 = vmatpush1.bf16.msra.mxu0 0
      %293 = vmatprep.subr.bf16.mxu0 0
      %294 = vmatpush1.bf16.msra.mxu0 0
      %295 = vmatprep.subr.bf16.mxu0 0
      %296 = vmatpush1.bf16.msra.mxu0 0
      %297 = vmatprep.subr.bf16.mxu0 0
      %298 = vmatpush1.bf16.msra.mxu0 0
      %299 = vmatprep.subr.bf16.mxu0 0
      %300 = vmatpush1.bf16.msra.mxu0 0
      %301 = vmatprep.subr.bf16.mxu0 0
      %302 = vmatpush1.bf16.msra.mxu0 0
      %303 = vmatprep.subr.bf16.mxu0 0
      %304 = vmatpush1.bf16.msra.mxu0 0
      %305 = vmatprep.subr.bf16.mxu0 0
      %306 = vmatpush1.bf16.msra.mxu0 0
      %307 = vmatprep.subr.bf16.mxu0 0
      %308 = vmatpush1.bf16.msra.mxu0 0
      %309 = vmatprep.subr.bf16.mxu0 0
      %310 = vmatpush1.bf16.msra.mxu0 0
      %311 = vmatprep.subr.bf16.mxu0 0
      %312 = vmatpush1.bf16.msra.mxu0 0
      %313 = vmatprep.mubr.bf16.mxu0 0
      %314 = vmatmul.mubr.bf16.gmra.mrb[0].mxu0 %v279
      %v315 = vpop.f32.mrb[0].mxu0
      %v316 = vadd.f32 %v265, %v315
      %v317 = vpop.f32.mrb[0].mxu0
      %v318 = vadd.f32 %v267, %v317
      %v319 = vpop.f32.mrb[0].mxu0
      %v320 = vadd.f32 %v269, %v319
      %v321 = vpop.f32.mrb[0].mxu0
      %v322 = vadd.f32 %v271, %v321
      %323 = vdwg.mxu0
      %s324 = scalar_lea.vmem %s1, 16
      %v325 = vld [vmem:[%s324] sm:$0xf]
      %v326 = vld [vmem:[%s324 + $0x4] sm:$0xf]
      %v329 = vunpack.c.l.b16 %v325
      %v330 = vunpack.c.l.b16 %v326
      %v331 = vpack.c.b16 %v330, %v329
      %332 = vrot.lane.b32.xlu0 %v204, 126
      %v333 = vpop.permute.xlu0 %332
      %334 = vrot.lane.b32.xlu0 %v205, 126
      %v335 = vpop.permute.xlu0 %334
      %336 = vrot.lane.b32.xlu0 %v206, 126
      %v337 = vpop.permute.xlu0 %336
      %vm338 = vcmask 1031168
      %v339 = vsel %vm338, %v333, %v335
      %v340 = vsel %vm338, %v335, %v337
      %v344 = vsel %vm226, %v331, 0
      %346 = vmatprep.subr.bf16.mxu0 %v340
      %347 = vmatpush1.bf16.msra.mxu0 %v339
      %348 = vmatprep.subr.bf16.mxu0 0
      %349 = vmatpush1.bf16.msra.mxu0 0
      %350 = vmatprep.subr.bf16.mxu0 0
      %351 = vmatpush1.bf16.msra.mxu0 0
      %352 = vmatprep.subr.bf16.mxu0 0
      %353 = vmatpush1.bf16.msra.mxu0 0
      %354 = vmatprep.subr.bf16.mxu0 0
      %355 = vmatpush1.bf16.msra.mxu0 0
      %356 = vmatprep.subr.bf16.mxu0 0
      %357 = vmatpush1.bf16.msra.mxu0 0
      %358 = vmatprep.subr.bf16.mxu0 0
      %359 = vmatpush1.bf16.msra.mxu0 0
      %360 = vmatprep.subr.bf16.mxu0 0
      %361 = vmatpush1.bf16.msra.mxu0 0
      %362 = vmatprep.subr.bf16.mxu0 0
      %363 = vmatpush1.bf16.msra.mxu0 0
      %364 = vmatprep.subr.bf16.mxu0 0
      %365 = vmatpush1.bf16.msra.mxu0 0
      %366 = vmatprep.subr.bf16.mxu0 0
      %367 = vmatpush1.bf16.msra.mxu0 0
      %368 = vmatprep.subr.bf16.mxu0 0
      %369 = vmatpush1.bf16.msra.mxu0 0
      %370 = vmatprep.subr.bf16.mxu0 0
      %371 = vmatpush1.bf16.msra.mxu0 0
      %372 = vmatprep.subr.bf16.mxu0 0
      %373 = vmatpush1.bf16.msra.mxu0 0
      %374 = vmatprep.subr.bf16.mxu0 0
      %375 = vmatpush1.bf16.msra.mxu0 0
      %376 = vmatprep.subr.bf16.mxu0 0
      %377 = vmatpush1.bf16.msra.mxu0 0
      %378 = vmatprep.mubr.bf16.mxu0 0
      %379 = vmatmul.mubr.bf16.gmra.mrb[0].mxu0 %v344
      %v380 = vpop.f32.mrb[0].mxu0
      %v381 = vadd.f32 0.0, %v380
      %v382 = vpop.f32.mrb[0].mxu0
      %v383 = vadd.f32 0.0, %v382
      %v384 = vpop.f32.mrb[0].mxu0
      %v385 = vadd.f32 0.0, %v384
      %v386 = vpop.f32.mrb[0].mxu0
      %v387 = vadd.f32 0.0, %v386
      %388 = vdwg.mxu0
      %v389 = vadd.f32 %v316, %v381
      %v390 = vadd.f32 %v318, %v383
      %v391 = vadd.f32 %v320, %v385
      %v392 = vadd.f32 %v322, %v387
      %v393 = vld [vmem:[%s2] sm:$0xff]
      %v394 = vld [vmem:[%s2 + $0x8] sm:$0xff]
      %396 = vset.pattern.permute.xlu0 0
      %397 = vperm.xlu0 %396, %v393
      %v398 = vpop.permute.xlu0 %397
      %401 = vset.pattern.permute.xlu0 0
      %402 = vperm.xlu0 %401, %v394
      %v403 = vpop.permute.xlu0 %402
      %v405 = vadd.f32 %v389, %v398
      %v406 = vadd.f32 %v390, %v398
      %v407 = vadd.f32 %v391, %v403
      %v408 = vadd.f32 %v392, %v403
      %vm409 = vcmp.ge.f32.partialorder %v405, 0.0
      %vm410 = vcmp.ge.f32.partialorder %v406, 0.0
      %vm411 = vcmp.ge.f32.partialorder %v407, 0.0
      %vm412 = vcmp.ge.f32.partialorder %v408, 0.0
      %v413 = vmul.f32 %v405, 0.2
      %v414 = vmul.f32 %v406, 0.2
      %v415 = vmul.f32 %v407, 0.2
      %v416 = vmul.f32 %v408, 0.2
      %v417 = vsel %vm409, %v405, %v413
      %v418 = vsel %vm410, %v406, %v414
      %v419 = vsel %vm411, %v407, %v415
      %v420 = vsel %vm412, %v408, %v416
      %v421 = vpack.c.bf16 %v419, %v417
      %v422 = vpack.c.bf16 %v420, %v418
      %v425 = vunpack.c.l.b16 %v421
      %v426 = vunpack.c.l.b16 %v422
      %v427 = vunpack.c.h.b16 %v421
      %v428 = vunpack.c.h.b16 %v422
      %v429 = vpack.c.b16 %v426, %v425
      %v430 = vpack.c.b16 %v428, %v427
      %433 = vst [vmem:[%s170] sm:$0xff] %v429
      %434 = vst [vmem:[%s170 + $0x8] sm:$0xff] %v430
      %p435 = scmp.lt.s32.totalorder %s14, 1
      %s436 = scalar_select %p435, %s14, 1
      %s437 = smul.addr %s436, 4
      %s438 = smul.addr %s437, 4
      %s439 = scalar_lea.vmem %s3, %s438
      // Predicated region
      $region33: #{ecg_reconstructor_forward.12} parent=31 // pred_check
        %p440 = pneg %p100
      $region34: #{ecg_reconstructor_forward.12} parent=31 // pred_check_branch
        %442 = sbr.rel (%p440) target = $region36
      $region35: #{ecg_reconstructor_forward.12} parent=31 // pred_region
        _
      $region36: #{ecg_reconstructor_forward.12} parent=31 // pred_fallthru
        _
    $region32: #{ecg_reconstructor_forward.12} parent=5 // pred_fallthru
      _
    %p443 = scmp.le.s32.totalorder 2, %s9
    // Predicated region
    $region37: #{ecg_reconstructor_forward.12} parent=5 // pred_check
      %p444 = pneg %p443
    $region38: #{ecg_reconstructor_forward.12} parent=5 // pred_check_branch
      %446 = sbr.rel (%p444) target = $region40
    $region39: #{ecg_reconstructor_forward.12} parent=5 // pred_region
      %s447 = ssub.s32 %s9, 2
      // Predicated region
      $region41: #{ecg_reconstructor_forward.12} parent=39 // pred_check
        %p448 = pneg %p106
      $region42: #{ecg_reconstructor_forward.12} parent=39 // pred_check_branch
        %450 = sbr.rel (%p448) target = $region44
      $region43: #{ecg_reconstructor_forward.12} parent=39 // pred_region
        %p451 = scmp.lt.s32.totalorder %s15, 1
        %s452 = scalar_select %p451, %s15, 1
        %s453 = smul.addr %s452, 4
        %s454 = smul.addr %s453, 4
        %s455 = scalar_lea.vmem %s3, %s454
      $region44: #{ecg_reconstructor_forward.12} parent=39 // pred_fallthru
        _
    $region40: #{ecg_reconstructor_forward.12} parent=5 // pred_fallthru
      _
  $region6: #{ecg_reconstructor_forward.12} parent=0 // loop_footer
    %s13 = sadd.s32 1, %s9
  $region7: #{ecg_reconstructor_forward.12} parent=0 // loop_footer_branch
    %8 = sbr.rel target = $region3
  $region8: #{ecg_reconstructor_forward.12} parent=0 // loop_exit
    _

// kernel: ecg_reconstructor_forward.13
$region0: #{ecg_reconstructor_forward.13}
  #allocation0 [shape = 'u32[]', space=smem, size = 0x4, offset = 0x4, fixed_abs, tag = 'smem constant byte address 0x4 - core index']
  #allocation1 [shape = 'u32[144,128]{1,0:T(1,128)}', space=vmem, size = 0x12000, scoped, tag = 'internal scratch']
  #allocation2 [shape = 'bf16[16,256]{1,0:T(16,128)(2,1)}', space=vmem, size = 0x2000, scoped, tag = 'scratch operand']
  %s0 = inlined_call_operand.vmem [shape: bf16[2,16,80], index: 0, kind: input, shape index: {}]
  %s1 = inlined_call_operand.vmem [shape: bf16[3,16,16], index: 1, kind: input, shape index: {}]
  %s2 = inlined_call_operand.vmem [shape: f32[16,1], index: 2, kind: input, shape index: {}]
  %s3 = inlined_call_operand.vmem [shape: bf16[2,16,128], index: 3, kind: output, shape index: {}]
  %s4 = sld [smem:[#allocation0]]
  $region45: #{ecg_reconstructor_forward.13} parent=0
    _
  %s6 = ssub.s32 1, %s4
  %s7 = scalar_select 0, %s6, %s4
  loop: start=0, step=1, limit=4
  $region2: #{ecg_reconstructor_forward.13} parent=0 // loop_pre_header
    _
  $region3: #{ecg_reconstructor_forward.13} parent=0 // loop_header
    %s9 = sphi 0, %s13
    %p10 = scmp.ge.s32.totalorder %s9, 4
    %s19 = sphi 0, %s21
    %s22 = sphi 0, %s19
    %s23 = sphi 0, %s22
    %s39 = sphi 0, %s23
    %s43 = sphi 0, %s43
    %s45 = sphi 0, %s43
    %s46 = sphi 0, %s45
    %s60 = sphi 0, %s46
    %s64 = sphi 0, %s64
    %s66 = sphi 0, %s64
    %s67 = sphi 0, %s66
    %s81 = sphi 0, %s67
    %s87 = sphi 0, %s89
    %s90 = sphi 0, %s87
    %s91 = sphi 0, %s90
    %s107 = sphi 0, %s91
  $region4: #{ecg_reconstructor_forward.13} parent=0 // loop_header_branch
    %12 = sbr.rel (%p10) target = $region8
  $region5: #{ecg_reconstructor_forward.13} parent=0 // loop_body
    %s14 = ssub.s32 %s9, 1
    %s15 = ssub.s32 %s9, 2
    %s16 = sadd.s32 %s9, 1
    %s17 = ssub.s32 %s9, %s16
    %p18 = scmp.eq.s32.totalorder %s17, 0
    %s20 = sadd.s32 %s19, 1
    %s21 = scalar_select %p18, %s19, %s20
    %p24 = pneg %p18
    %p25 = scmp.eq.s32.totalorder %s9, 1
    %p26 = por %p24, %p25
    %p27 = scmp.ne.s32.totalorder %s19, %s22
    %p28 = scmp.eq.s32.totalorder %s9, 0
    %p29 = por %p27, %p28
    %p30 = scmp.ne.s32.totalorder %s19, %s22
    %p31 = scmp.eq.s32.totalorder %s14, 1
    %p32 = por %p30, %p31
    %p33 = scmp.ne.s32.totalorder %s22, %s23
    %p34 = scmp.eq.s32.totalorder %s14, 0
    %p35 = por %p33, %p34
    %p36 = scmp.ne.s32.totalorder %s22, %s23
    %p37 = scmp.eq.s32.totalorder %s15, 1
    %p38 = por %p36, %p37
    %p40 = scmp.ne.s32.totalorder %s23, %s39
    %p41 = scmp.eq.s32.totalorder %s15, 0
    %p42 = por %p40, %p41
    %s44 = sadd.s32 %s43, 1
    %p47 = scmp.eq.s32.totalorder %s9, 1
    %p48 = scmp.ne.s32.totalorder %s43, %s45
    %p49 = scmp.eq.s32.totalorder %s9, 0
    %p50 = por %p48, %p49
    %p51 = scmp.ne.s32.totalorder %s43, %s45
    %p52 = scmp.eq.s32.totalorder %s14, 1
    %p53 = por %p51, %p52
    %p54 = scmp.ne.s32.totalorder %s45, %s46
    %p55 = scmp.eq.s32.totalorder %s14, 0
    %p56 = por %p54, %p55
    %p57 = scmp.ne.s32.totalorder %s45, %s46
    %p58 = scmp.eq.s32.totalorder %s15, 1
    %p59 = por %p57, %p58
    %p61 = scmp.ne.s32.totalorder %s46, %s60
    %p62 = scmp.eq.s32.totalorder %s15, 0
    %p63 = por %p61, %p62
    %s65 = sadd.s32 %s64, 1
    %p68 = scmp.eq.s32.totalorder %s9, 1
    %p69 = scmp.ne.s32.totalorder %s64, %s66
    %p70 = scmp.eq.s32.totalorder %s9, 0
    %p71 = por %p69, %p70
    %p72 = scmp.ne.s32.totalorder %s64, %s66
    %p73 = scmp.eq.s32.totalorder %s14, 1
    %p74 = por %p72, %p73
    %p75 = scmp.ne.s32.totalorder %s66, %s67
    %p76 = scmp.eq.s32.totalorder %s14, 0
    %p77 = por %p75, %p76
    %p78 = scmp.ne.s32.totalorder %s66, %s67
    %p79 = scmp.eq.s32.totalorder %s15, 1
    %p80 = por %p78, %p79
    %p82 = scmp.ne.s32.totalorder %s67, %s81
    %p83 = scmp.eq.s32.totalorder %s15, 0
    %p84 = por %p82, %p83
    %s85 = ssub.s32 %s9, %s16
    %p86 = scmp.eq.s32.totalorder %s85, 0
    %s88 = sadd.s32 %s87, 1
    %s89 = scalar_select %p86, %s87, %s88
    %p92 = pneg %p86
    %p93 = scmp.eq.s32.totalorder %s9, 1
    %p94 = por %p92, %p93
    %p95 = scmp.ne.s32.totalorder %s87, %s90
    %p96 = scmp.eq.s32.totalorder %s9, 0
    %p97 = por %p95, %p96
    %p98 = scmp.ne.s32.totalorder %s87, %s90
    %p99 = scmp.eq.s32.totalorder %s14, 1
    %p100 = por %p98, %p99
    %p101 = scmp.ne.s32.totalorder %s90, %s91
    %p102 = scmp.eq.s32.totalorder %s14, 0
    %p103 = por %p101, %p102
    %p104 = scmp.ne.s32.totalorder %s90, %s91
    %p105 = scmp.eq.s32.totalorder %s15, 1
    %p106 = por %p104, %p105
    %p108 = scmp.ne.s32.totalorder %s91, %s107
    %p109 = scmp.eq.s32.totalorder %s15, 0
    %p110 = por %p108, %p109
    %p111 = scmp.le.s32.totalorder 1, %s9
    %p112 = scmp.lt.s32.totalorder %s9, 3
    %p113 = pnand %p111, %p112
    %p114 = pneg %p113
    // Predicated region
    $region9: #{ecg_reconstructor_forward.13} parent=5 // pred_check
      _
    $region10: #{ecg_reconstructor_forward.13} parent=5 // pred_check_branch
      %116 = sbr.rel (%p113) target = $region12
    $region11: #{ecg_reconstructor_forward.13} parent=5 // pred_region
      %s117 = ssub.s32 %s9, 1
      // Predicated region
      $region13: #{ecg_reconstructor_forward.13} parent=11 // pred_check
        %p118 = pneg %p56
      $region14: #{ecg_reconstructor_forward.13} parent=11 // pred_check_branch
        %120 = sbr.rel (%p118) target = $region16
      $region15: #{ecg_reconstructor_forward.13} parent=11 // pred_region
        _
      $region16: #{ecg_reconstructor_forward.13} parent=11 // pred_fallthru
        _
      // Predicated region
      $region17: #{ecg_reconstructor_forward.13} parent=11 // pred_check
        %p121 = pneg %p77
      $region18: #{ecg_reconstructor_forward.13} parent=11 // pred_check_branch
        %123 = sbr.rel (%p121) target = $region20
      $region19: #{ecg_reconstructor_forward.13} parent=11 // pred_region
        _
      $region20: #{ecg_reconstructor_forward.13} parent=11 // pred_fallthru
        _
    $region12: #{ecg_reconstructor_forward.13} parent=5 // pred_fallthru
      _
    %p124 = scmp.lt.s32.totalorder %s9, 2
    // Predicated region
    $region21: #{ecg_reconstructor_forward.13} parent=5 // pred_check
      %p125 = pneg %p124
    $region22: #{ecg_reconstructor_forward.13} parent=5 // pred_check_branch
      %127 = sbr.rel (%p125) target = $region24
    $region23: #{ecg_reconstructor_forward.13} parent=5 // pred_region
      // Predicated region
      $region25: #{ecg_reconstructor_forward.13} parent=23 // pred_check
        %p128 = pneg %p29
      $region26: #{ecg_reconstructor_forward.13} parent=23 // pred_check_branch
        %130 = sbr.rel (%p128) target = $region28
      $region27: #{ecg_reconstructor_forward.13} parent=23 // pred_region
        %p131 = scmp.lt.s32.totalorder %s9, 1
        %s132 = scalar_select %p131, %s9, 1
        %s133 = smul.addr %s132, 2
        %s134 = smul.addr %s133, 4
        %s135 = scalar_lea.vmem %s0, %s134
      $region28: #{ecg_reconstructor_forward.13} parent=23 // pred_fallthru
        _
    $region24: #{ecg_reconstructor_forward.13} parent=5 // pred_fallthru
      _
    %p136 = scmp.le.s32.totalorder 1, %s9
    %p137 = scmp.lt.s32.totalorder %s9, 3
    %p138 = pnand %p136, %p137
    %p139 = pneg %p138
    // Predicated region
    $region29: #{ecg_reconstructor_forward.13} parent=5 // pred_check
      _
    $region30: #{ecg_reconstructor_forward.13} parent=5 // pred_check_branch
      %141 = sbr.rel (%p138) target = $region32
    $region31: #{ecg_reconstructor_forward.13} parent=5 // pred_region
      %s142 = ssub.s32 %s9, 1
      %p143 = scmp.lt.s32.totalorder %s14, 1
      %s144 = scalar_select %p143, %s14, 1
      %s145 = smul.addr %s144, 2
      %s146 = smul.addr %s145, 4
      %s147 = scalar_lea.vmem %s0, %s146
      %p148 = pneg %p35
      %p149 = pneg %p32
      %p150 = pneg %p56
      %p151 = pneg %p53
      %p152 = pneg %p77
      %p153 = pneg %p74
      %p154 = pneg %p103
      %p155 = pneg %p100
      %p156 = scmp.lt.s32.totalorder %s14, 1
      %s157 = scalar_select %p156, %s14, 1
      %s158 = smul.addr %s157, 2
      %s159 = smul.addr %s158, 4
      %s160 = scalar_lea.vmem %s3, %s159
      %p161 = scmp.lt.s32.totalorder %s14, 1
      %s162 = scalar_select %p161, %s14, 1
      %s163 = smul.addr %s162, 2
      %s164 = smul.addr %s163, 4
      %s165 = scalar_lea.vmem %s0, %s164
      %p166 = scmp.lt.s32.totalorder %s14, 1
      %s167 = scalar_select %p166, %s14, 1
      %s168 = smul.addr %s167, 2
      %s169 = smul.addr %s168, 4
      %s170 = scalar_lea.vmem %s3, %s169
      %172 = vst [vmem:[#allocation2] sm:$0xff] 0
      %173 = vst [vmem:[#allocation2 + $0x8] sm:$0xff] 0
      %v174 = vld [vmem:[%s165] sm:$0xf]
      %v175 = vld [vmem:[%s165 + $0x4] sm:$0xf]
      %v178 = vunpack.c.l.b16 %v174
      %v179 = vunpack.c.l.b16 %v175
      %v180 = vpack.c.b16 %v179, %v178
      %181 = vrot.lane.b32.xlu0 %v180, 1
      %v182 = vpop.permute.xlu0 %181
      %vm184 = vcmask 662536
      %185 = vst.msk [vmem:[#allocation2] sm:$0xff] %vm184, %v182
      %v186 = vld [vmem:[%s1] sm:$0xf]
      %v187 = vld [vmem:[%s1 + $0x4] sm:$0xf]
      %v188 = vld [vmem:[#allocation2] sm:$0xff]
      %s189 = scalar_lea.vmem %s1, 8
      %v190 = vld [vmem:[%s189] sm:$0xf]
      %v191 = vld [vmem:[%s189 + $0x4] sm:$0xf]
      %v192 = vld [vmem:[#allocation2] sm:$0xff]
      %v193 = vld [vmem:[#allocation2 + $0x8] sm:$0xff]
      %v196 = vunpack.c.l.b16 %v190
      %v197 = vunpack.c.l.b16 %v191
      %v198 = vpack.c.b16 %v197, %v196
      %201 = vrot.lane.b32.xlu0 %v192, 127
      %v202 = vpop.permute.xlu0 %201
      %203 = vrot.lane.b32.xlu0 %v193, 127
      %v204 = vpop.permute.xlu0 %203
      %vm205 = vcmask 1039360
      %v206 = vsel %vm205, %v202, %v204
      %vm208 = vcmask 130048
      %v210 = vsel %vm208, %v198, 0
      %212 = vmatprep.subr.bf16.mxu0 0
      %213 = vmatpush1.bf16.msra.mxu0 %v206
      %214 = vmatprep.subr.bf16.mxu0 0
      %215 = vmatpush1.bf16.msra.mxu0 0
      %216 = vmatprep.subr.bf16.mxu0 0
      %217 = vmatpush1.bf16.msra.mxu0 0
      %218 = vmatprep.subr.bf16.mxu0 0
      %219 = vmatpush1.bf16.msra.mxu0 0
      %220 = vmatprep.subr.bf16.mxu0 0
      %221 = vmatpush1.bf16.msra.mxu0 0
      %222 = vmatprep.subr.bf16.mxu0 0
      %223 = vmatpush1.bf16.msra.mxu0 0
      %224 = vmatprep.subr.bf16.mxu0 0
      %225 = vmatpush1.bf16.msra.mxu0 0
      %226 = vmatprep.subr.bf16.mxu0 0
      %227 = vmatpush1.bf16.msra.mxu0 0
      %228 = vmatprep.subr.bf16.mxu0 0
      %229 = vmatpush1.bf16.msra.mxu0 0
      %230 = vmatprep.subr.bf16.mxu0 0
      %231 = vmatpush1.bf16.msra.mxu0 0
      %232 = vmatprep.subr.bf16.mxu0 0
      %233 = vmatpush1.bf16.msra.mxu0 0
      %234 = vmatprep.subr.bf16.mxu0 0
      %235 = vmatpush1.bf16.msra.mxu0 0
      %236 = vmatprep.subr.bf16.mxu0 0
      %237 = vmatpush1.bf16.msra.mxu0 0
      %238 = vmatprep.subr.bf16.mxu0 0
      %239 = vmatpush1.bf16.msra.mxu0 0
      %240 = vmatprep.subr.bf16.mxu0 0
      %241 = vmatpush1.bf16.msra.mxu0 0
      %242 = vmatprep.subr.bf16.mxu0 0
      %243 = vmatpush1.bf16.msra.mxu0 0
      %244 = vmatprep.mubr.bf16.mxu0 0
      %245 = vmatmul.mubr.bf16.gmra.mrb[0].mxu0 %v210
      %v246 = vpop.f32.mrb[0].mxu0
      %v247 = vadd.f32 0.0, %v246
      %v248 = vpop.f32.mrb[0].mxu0
      %v249 = vpop.f32.mrb[0].mxu0
      %v250 = vadd.f32 0.0, %v249
      %v251 = vpop.f32.mrb[0].mxu0
      %252 = vdwg.mxu0
      %v255 = vunpack.c.l.b16 %v186
      %v256 = vunpack.c.l.b16 %v187
      %v257 = vpack.c.b16 %v256, %v255
      %v259 = vsel %vm208, %v257, 0
      %261 = vmatprep.subr.bf16.mxu0 0
      %262 = vmatpush1.bf16.msra.mxu0 %v188
      %263 = vmatprep.subr.bf16.mxu0 0
      %264 = vmatpush1.bf16.msra.mxu0 0
      %265 = vmatprep.subr.bf16.mxu0 0
      %266 = vmatpush1.bf16.msra.mxu0 0
      %267 = vmatprep.subr.bf16.mxu0 0
      %268 = vmatpush1.bf16.msra.mxu0 0
      %269 = vmatprep.subr.bf16.mxu0 0
      %270 = vmatpush1.bf16.msra.mxu0 0
      %271 = vmatprep.subr.bf16.mxu0 0
      %272 = vmatpush1.bf16.msra.mxu0 0
      %273 = vmatprep.subr.bf16.mxu0 0
      %274 = vmatpush1.bf16.msra.mxu0 0
      %275 = vmatprep.subr.bf16.mxu0 0
      %276 = vmatpush1.bf16.msra.mxu0 0
      %277 = vmatprep.subr.bf16.mxu0 0
      %278 = vmatpush1.bf16.msra.mxu0 0
      %279 = vmatprep.subr.bf16.mxu0 0
      %280 = vmatpush1.bf16.msra.mxu0 0
      %281 = vmatprep.subr.bf16.mxu0 0
      %282 = vmatpush1.bf16.msra.mxu0 0
      %283 = vmatprep.subr.bf16.mxu0 0
      %284 = vmatpush1.bf16.msra.mxu0 0
      %285 = vmatprep.subr.bf16.mxu0 0
      %286 = vmatpush1.bf16.msra.mxu0 0
      %287 = vmatprep.subr.bf16.mxu0 0
      %288 = vmatpush1.bf16.msra.mxu0 0
      %289 = vmatprep.subr.bf16.mxu0 0
      %290 = vmatpush1.bf16.msra.mxu0 0
      %291 = vmatprep.subr.bf16.mxu0 0
      %292 = vmatpush1.bf16.msra.mxu0 0
      %293 = vmatprep.mubr.bf16.mxu0 0
      %294 = vmatmul.mubr.bf16.gmra.mrb[0].mxu0 %v259
      %v295 = vpop.f32.mrb[0].mxu0
      %v296 = vadd.f32 %v247, %v295
      %v297 = vpop.f32.mrb[0].mxu0
      %v298 = vpop.f32.mrb[0].mxu0
      %v299 = vadd.f32 %v250, %v298
      %v300 = vpop.f32.mrb[0].mxu0
      %301 = vdwg.mxu0
      %s302 = scalar_lea.vmem %s1, 16
      %v303 = vld [vmem:[%s302] sm:$0xf]
      %v304 = vld [vmem:[%s302 + $0x4] sm:$0xf]
      %v307 = vunpack.c.l.b16 %v303
      %v308 = vunpack.c.l.b16 %v304
      %v309 = vpack.c.b16 %v308, %v307
      %310 = vrot.lane.b32.xlu0 %v192, 126
      %v311 = vpop.permute.xlu0 %310
      %312 = vrot.lane.b32.xlu0 %v193, 126
      %v313 = vpop.permute.xlu0 %312
      %vm314 = vcmask 1031168
      %v315 = vsel %vm314, %v311, %v313
      %v318 = vsel %vm208, %v309, 0
      %320 = vmatprep.subr.bf16.mxu0 0
      %321 = vmatpush1.bf16.msra.mxu0 %v315
      %322 = vmatprep.subr.bf16.mxu0 0
      %323 = vmatpush1.bf16.msra.mxu0 0
      %324 = vmatprep.subr.bf16.mxu0 0
      %325 = vmatpush1.bf16.msra.mxu0 0
      %326 = vmatprep.subr.bf16.mxu0 0
      %327 = vmatpush1.bf16.msra.mxu0 0
      %328 = vmatprep.subr.bf16.mxu0 0
      %329 = vmatpush1.bf16.msra.mxu0 0
      %330 = vmatprep.subr.bf16.mxu0 0
      %331 = vmatpush1.bf16.msra.mxu0 0
      %332 = vmatprep.subr.bf16.mxu0 0
      %333 = vmatpush1.bf16.msra.mxu0 0
      %334 = vmatprep.subr.bf16.mxu0 0
      %335 = vmatpush1.bf16.msra.mxu0 0
      %336 = vmatprep.subr.bf16.mxu0 0
      %337 = vmatpush1.bf16.msra.mxu0 0
      %338 = vmatprep.subr.bf16.mxu0 0
      %339 = vmatpush1.bf16.msra.mxu0 0
      %340 = vmatprep.subr.bf16.mxu0 0
      %341 = vmatpush1.bf16.msra.mxu0 0
      %342 = vmatprep.subr.bf16.mxu0 0
      %343 = vmatpush1.bf16.msra.mxu0 0
      %344 = vmatprep.subr.bf16.mxu0 0
      %345 = vmatpush1.bf16.msra.mxu0 0
      %346 = vmatprep.subr.bf16.mxu0 0
      %347 = vmatpush1.bf16.msra.mxu0 0
      %348 = vmatprep.subr.bf16.mxu0 0
      %349 = vmatpush1.bf16.msra.mxu0 0
      %350 = vmatprep.subr.bf16.mxu0 0
      %351 = vmatpush1.bf16.msra.mxu0 0
      %352 = vmatprep.mubr.bf16.mxu0 0
      %353 = vmatmul.mubr.bf16.gmra.mrb[0].mxu0 %v318
      %v354 = vpop.f32.mrb[0].mxu0
      %v355 = vadd.f32 0.0, %v354
      %v356 = vpop.f32.mrb[0].mxu0
      %v357 = vpop.f32.mrb[0].mxu0
      %v358 = vadd.f32 0.0, %v357
      %v359 = vpop.f32.mrb[0].mxu0
      %360 = vdwg.mxu0
      %v361 = vadd.f32 %v296, %v355
      %v362 = vadd.f32 %v299, %v358
      %v363 = vld [vmem:[%s2] sm:$0xff]
      %v364 = vld [vmem:[%s2 + $0x8] sm:$0xff]
      %366 = vset.pattern.permute.xlu0 0
      %367 = vperm.xlu0 %366, %v363
      %v368 = vpop.permute.xlu0 %367
      %371 = vset.pattern.permute.xlu0 0
      %372 = vperm.xlu0 %371, %v364
      %v373 = vpop.permute.xlu0 %372
      %v375 = vadd.f32 %v361, %v368
      %v376 = vadd.f32 %v362, %v373
      %vm377 = vcmp.ge.f32.partialorder %v375, 0.0
      %vm378 = vcmp.ge.f32.partialorder %v376, 0.0
      %v379 = vmul.f32 %v375, 0.2
      %v380 = vmul.f32 %v376, 0.2
      %v381 = vsel %vm377, %v375, %v379
      %v382 = vsel %vm378, %v376, %v380
      %v383 = vpack.c.bf16 %v382, %v381
      %v385 = vunpack.c.l.b16 %v383
      %v386 = vunpack.c.h.b16 %v383
      %v387 = vpack.c.b16 %v385, %v385
      %v388 = vpack.c.b16 %v386, %v386
      %391 = vst [vmem:[%s170] sm:$0xf] %v387
      %392 = vst [vmem:[%s170 + $0x4] sm:$0xf] %v388
      %p393 = scmp.lt.s32.totalorder %s14, 1
      %s394 = scalar_select %p393, %s14, 1
      %s395 = smul.addr %s394, 2
      %s396 = smul.addr %s395, 4
      %s397 = scalar_lea.vmem %s3, %s396
      // Predicated region
      $region33: #{ecg_reconstructor_forward.13} parent=31 // pred_check
        %p398 = pneg %p100
      $region34: #{ecg_reconstructor_forward.13} parent=31 // pred_check_branch
        %400 = sbr.rel (%p398) target = $region36
      $region35: #{ecg_reconstructor_forward.13} parent=31 // pred_region
        _
      $region36: #{ecg_reconstructor_forward.13} parent=31 // pred_fallthru
        _
    $region32: #{ecg_reconstructor_forward.13} parent=5 // pred_fallthru
      _
    %p401 = scmp.le.s32.totalorder 2, %s9
    // Predicated region
    $region37: #{ecg_reconstructor_forward.13} parent=5 // pred_check
      %p402 = pneg %p401
    $region38: #{ecg_reconstructor_forward.13} parent=5 // pred_check_branch
      %404 = sbr.rel (%p402) target = $region40
    $region39: #{ecg_reconstructor_forward.13} parent=5 // pred_region
      %s405 = ssub.s32 %s9, 2
      // Predicated region
      $region41: #{ecg_reconstructor_forward.13} parent=39 // pred_check
        %p406 = pneg %p106
      $region42: #{ecg_reconstructor_forward.13} parent=39 // pred_check_branch
        %408 = sbr.rel (%p406) target = $region44
      $region43: #{ecg_reconstructor_forward.13} parent=39 // pred_region
        %p409 = scmp.lt.s32.totalorder %s15, 1
        %s410 = scalar_select %p409, %s15, 1
        %s411 = smul.addr %s410, 2
        %s412 = smul.addr %s411, 4
        %s413 = scalar_lea.vmem %s3, %s412
      $region44: #{ecg_reconstructor_forward.13} parent=39 // pred_fallthru
        _
    $region40: #{ecg_reconstructor_forward.13} parent=5 // pred_fallthru
      _
  $region6: #{ecg_reconstructor_forward.13} parent=0 // loop_footer
    %s13 = sadd.s32 1, %s9
  $region7: #{ecg_reconstructor_forward.13} parent=0 // loop_footer_branch
    %8 = sbr.rel target = $region3
  $region8: #{ecg_reconstructor_forward.13} parent=0 // loop_exit
    _

// kernel: ecg_reconstructor_forward.14
$region0: #{ecg_reconstructor_forward.14}
  #allocation0 [shape = 'u32[]', space=smem, size = 0x4, offset = 0x4, fixed_abs, tag = 'smem constant byte address 0x4 - core index']
  #allocation1 [shape = 'u32[144,128]{1,0:T(1,128)}', space=vmem, size = 0x12000, scoped, tag = 'internal scratch']
  #allocation2 [shape = 'bf16[16,256]{1,0:T(16,128)(2,1)}', space=vmem, size = 0x2000, scoped, tag = 'scratch operand']
  %s0 = inlined_call_operand.vmem [shape: bf16[2,16,40], index: 0, kind: input, shape index: {}]
  %s1 = inlined_call_operand.vmem [shape: bf16[3,16,16], index: 1, kind: input, shape index: {}]
  %s2 = inlined_call_operand.vmem [shape: f32[16,1], index: 2, kind: input, shape index: {}]
  %s3 = inlined_call_operand.vmem [shape: bf16[2,16,128], index: 3, kind: output, shape index: {}]
  %s4 = sld [smem:[#allocation0]]
  $region45: #{ecg_reconstructor_forward.14} parent=0
    _
  %s6 = ssub.s32 1, %s4
  %s7 = scalar_select 0, %s6, %s4
  loop: start=0, step=1, limit=4
  $region2: #{ecg_reconstructor_forward.14} parent=0 // loop_pre_header
    _
  $region3: #{ecg_reconstructor_forward.14} parent=0 // loop_header
    %s9 = sphi 0, %s13
    %p10 = scmp.ge.s32.totalorder %s9, 4
    %s19 = sphi 0, %s21
    %s22 = sphi 0, %s19
    %s23 = sphi 0, %s22
    %s39 = sphi 0, %s23
    %s43 = sphi 0, %s43
    %s45 = sphi 0, %s43
    %s46 = sphi 0, %s45
    %s60 = sphi 0, %s46
    %s64 = sphi 0, %s64
    %s66 = sphi 0, %s64
    %s67 = sphi 0, %s66
    %s81 = sphi 0, %s67
    %s87 = sphi 0, %s89
    %s90 = sphi 0, %s87
    %s91 = sphi 0, %s90
    %s107 = sphi 0, %s91
  $region4: #{ecg_reconstructor_forward.14} parent=0 // loop_header_branch
    %12 = sbr.rel (%p10) target = $region8
  $region5: #{ecg_reconstructor_forward.14} parent=0 // loop_body
    %s14 = ssub.s32 %s9, 1
    %s15 = ssub.s32 %s9, 2
    %s16 = sadd.s32 %s9, 1
    %s17 = ssub.s32 %s9, %s16
    %p18 = scmp.eq.s32.totalorder %s17, 0
    %s20 = sadd.s32 %s19, 1
    %s21 = scalar_select %p18, %s19, %s20
    %p24 = pneg %p18
    %p25 = scmp.eq.s32.totalorder %s9, 1
    %p26 = por %p24, %p25
    %p27 = scmp.ne.s32.totalorder %s19, %s22
    %p28 = scmp.eq.s32.totalorder %s9, 0
    %p29 = por %p27, %p28
    %p30 = scmp.ne.s32.totalorder %s19, %s22
    %p31 = scmp.eq.s32.totalorder %s14, 1
    %p32 = por %p30, %p31
    %p33 = scmp.ne.s32.totalorder %s22, %s23
    %p34 = scmp.eq.s32.totalorder %s14, 0
    %p35 = por %p33, %p34
    %p36 = scmp.ne.s32.totalorder %s22, %s23
    %p37 = scmp.eq.s32.totalorder %s15, 1
    %p38 = por %p36, %p37
    %p40 = scmp.ne.s32.totalorder %s23, %s39
    %p41 = scmp.eq.s32.totalorder %s15, 0
    %p42 = por %p40, %p41
    %s44 = sadd.s32 %s43, 1
    %p47 = scmp.eq.s32.totalorder %s9, 1
    %p48 = scmp.ne.s32.totalorder %s43, %s45
    %p49 = scmp.eq.s32.totalorder %s9, 0
    %p50 = por %p48, %p49
    %p51 = scmp.ne.s32.totalorder %s43, %s45
    %p52 = scmp.eq.s32.totalorder %s14, 1
    %p53 = por %p51, %p52
    %p54 = scmp.ne.s32.totalorder %s45, %s46
    %p55 = scmp.eq.s32.totalorder %s14, 0
    %p56 = por %p54, %p55
    %p57 = scmp.ne.s32.totalorder %s45, %s46
    %p58 = scmp.eq.s32.totalorder %s15, 1
    %p59 = por %p57, %p58
    %p61 = scmp.ne.s32.totalorder %s46, %s60
    %p62 = scmp.eq.s32.totalorder %s15, 0
    %p63 = por %p61, %p62
    %s65 = sadd.s32 %s64, 1
    %p68 = scmp.eq.s32.totalorder %s9, 1
    %p69 = scmp.ne.s32.totalorder %s64, %s66
    %p70 = scmp.eq.s32.totalorder %s9, 0
    %p71 = por %p69, %p70
    %p72 = scmp.ne.s32.totalorder %s64, %s66
    %p73 = scmp.eq.s32.totalorder %s14, 1
    %p74 = por %p72, %p73
    %p75 = scmp.ne.s32.totalorder %s66, %s67
    %p76 = scmp.eq.s32.totalorder %s14, 0
    %p77 = por %p75, %p76
    %p78 = scmp.ne.s32.totalorder %s66, %s67
    %p79 = scmp.eq.s32.totalorder %s15, 1
    %p80 = por %p78, %p79
    %p82 = scmp.ne.s32.totalorder %s67, %s81
    %p83 = scmp.eq.s32.totalorder %s15, 0
    %p84 = por %p82, %p83
    %s85 = ssub.s32 %s9, %s16
    %p86 = scmp.eq.s32.totalorder %s85, 0
    %s88 = sadd.s32 %s87, 1
    %s89 = scalar_select %p86, %s87, %s88
    %p92 = pneg %p86
    %p93 = scmp.eq.s32.totalorder %s9, 1
    %p94 = por %p92, %p93
    %p95 = scmp.ne.s32.totalorder %s87, %s90
    %p96 = scmp.eq.s32.totalorder %s9, 0
    %p97 = por %p95, %p96
    %p98 = scmp.ne.s32.totalorder %s87, %s90
    %p99 = scmp.eq.s32.totalorder %s14, 1
    %p100 = por %p98, %p99
    %p101 = scmp.ne.s32.totalorder %s90, %s91
    %p102 = scmp.eq.s32.totalorder %s14, 0
    %p103 = por %p101, %p102
    %p104 = scmp.ne.s32.totalorder %s90, %s91
    %p105 = scmp.eq.s32.totalorder %s15, 1
    %p106 = por %p104, %p105
    %p108 = scmp.ne.s32.totalorder %s91, %s107
    %p109 = scmp.eq.s32.totalorder %s15, 0
    %p110 = por %p108, %p109
    %p111 = scmp.le.s32.totalorder 1, %s9
    %p112 = scmp.lt.s32.totalorder %s9, 3
    %p113 = pnand %p111, %p112
    %p114 = pneg %p113
    // Predicated region
    $region9: #{ecg_reconstructor_forward.14} parent=5 // pred_check
      _
    $region10: #{ecg_reconstructor_forward.14} parent=5 // pred_check_branch
      %116 = sbr.rel (%p113) target = $region12
    $region11: #{ecg_reconstructor_forward.14} parent=5 // pred_region
      %s117 = ssub.s32 %s9, 1
      // Predicated region
      $region13: #{ecg_reconstructor_forward.14} parent=11 // pred_check
        %p118 = pneg %p56
      $region14: #{ecg_reconstructor_forward.14} parent=11 // pred_check_branch
        %120 = sbr.rel (%p118) target = $region16
      $region15: #{ecg_reconstructor_forward.14} parent=11 // pred_region
        _
      $region16: #{ecg_reconstructor_forward.14} parent=11 // pred_fallthru
        _
      // Predicated region
      $region17: #{ecg_reconstructor_forward.14} parent=11 // pred_check
        %p121 = pneg %p77
      $region18: #{ecg_reconstructor_forward.14} parent=11 // pred_check_branch
        %123 = sbr.rel (%p121) target = $region20
      $region19: #{ecg_reconstructor_forward.14} parent=11 // pred_region
        _
      $region20: #{ecg_reconstructor_forward.14} parent=11 // pred_fallthru
        _
    $region12: #{ecg_reconstructor_forward.14} parent=5 // pred_fallthru
      _
    %p124 = scmp.lt.s32.totalorder %s9, 2
    // Predicated region
    $region21: #{ecg_reconstructor_forward.14} parent=5 // pred_check
      %p125 = pneg %p124
    $region22: #{ecg_reconstructor_forward.14} parent=5 // pred_check_branch
      %127 = sbr.rel (%p125) target = $region24
    $region23: #{ecg_reconstructor_forward.14} parent=5 // pred_region
      // Predicated region
      $region25: #{ecg_reconstructor_forward.14} parent=23 // pred_check
        %p128 = pneg %p29
      $region26: #{ecg_reconstructor_forward.14} parent=23 // pred_check_branch
        %130 = sbr.rel (%p128) target = $region28
      $region27: #{ecg_reconstructor_forward.14} parent=23 // pred_region
        %p131 = scmp.lt.s32.totalorder %s9, 1
        %s132 = scalar_select %p131, %s9, 1
        %s133 = smul.addr %s132, 2
        %s134 = smul.addr %s133, 4
        %s135 = scalar_lea.vmem %s0, %s134
      $region28: #{ecg_reconstructor_forward.14} parent=23 // pred_fallthru
        _
    $region24: #{ecg_reconstructor_forward.14} parent=5 // pred_fallthru
      _
    %p136 = scmp.le.s32.totalorder 1, %s9
    %p137 = scmp.lt.s32.totalorder %s9, 3
    %p138 = pnand %p136, %p137
    %p139 = pneg %p138
    // Predicated region
    $region29: #{ecg_reconstructor_forward.14} parent=5 // pred_check
      _
    $region30: #{ecg_reconstructor_forward.14} parent=5 // pred_check_branch
      %141 = sbr.rel (%p138) target = $region32
    $region31: #{ecg_reconstructor_forward.14} parent=5 // pred_region
      %s142 = ssub.s32 %s9, 1
      %p143 = scmp.lt.s32.totalorder %s14, 1
      %s144 = scalar_select %p143, %s14, 1
      %s145 = smul.addr %s144, 2
      %s146 = smul.addr %s145, 4
      %s147 = scalar_lea.vmem %s0, %s146
      %p148 = pneg %p35
      %p149 = pneg %p32
      %p150 = pneg %p56
      %p151 = pneg %p53
      %p152 = pneg %p77
      %p153 = pneg %p74
      %p154 = pneg %p103
      %p155 = pneg %p100
      %p156 = scmp.lt.s32.totalorder %s14, 1
      %s157 = scalar_select %p156, %s14, 1
      %s158 = smul.addr %s157, 2
      %s159 = smul.addr %s158, 4
      %s160 = scalar_lea.vmem %s3, %s159
      %p161 = scmp.lt.s32.totalorder %s14, 1
      %s162 = scalar_select %p161, %s14, 1
      %s163 = smul.addr %s162, 2
      %s164 = smul.addr %s163, 4
      %s165 = scalar_lea.vmem %s0, %s164
      %p166 = scmp.lt.s32.totalorder %s14, 1
      %s167 = scalar_select %p166, %s14, 1
      %s168 = smul.addr %s167, 2
      %s169 = smul.addr %s168, 4
      %s170 = scalar_lea.vmem %s3, %s169
      %172 = vst [vmem:[#allocation2] sm:$0xff] 0
      %173 = vst [vmem:[#allocation2 + $0x8] sm:$0xff] 0
      %v174 = vld [vmem:[%s165] sm:$0xf]
      %v175 = vld [vmem:[%s165 + $0x4] sm:$0xf]
      %v178 = vunpack.c.l.b16 %v174
      %v179 = vunpack.c.l.b16 %v175
      %v180 = vpack.c.b16 %v179, %v178
      %181 = vrot.lane.b32.xlu0 %v180, 1
      %v182 = vpop.permute.xlu0 %181
      %vm184 = vcmask 334856
      %185 = vst.msk [vmem:[#allocation2] sm:$0xff] %vm184, %v182
      %v186 = vld [vmem:[%s1] sm:$0xf]
      %v187 = vld [vmem:[%s1 + $0x4] sm:$0xf]
      %v188 = vld [vmem:[#allocation2] sm:$0xff]
      %s189 = scalar_lea.vmem %s1, 8
      %v190 = vld [vmem:[%s189] sm:$0xf]
      %v191 = vld [vmem:[%s189 + $0x4] sm:$0xf]
      %v192 = vld [vmem:[#allocation2] sm:$0xff]
      %v193 = vld [vmem:[#allocation2 + $0x8] sm:$0xff]
      %v196 = vunpack.c.l.b16 %v190
      %v197 = vunpack.c.l.b16 %v191
      %v198 = vpack.c.b16 %v197, %v196
      %201 = vrot.lane.b32.xlu0 %v192, 127
      %v202 = vpop.permute.xlu0 %201
      %203 = vrot.lane.b32.xlu0 %v193, 127
      %v204 = vpop.permute.xlu0 %203
      %vm205 = vcmask 1039360
      %v206 = vsel %vm205, %v202, %v204
      %vm208 = vcmask 130048
      %v210 = vsel %vm208, %v198, 0
      %212 = vmatprep.subr.bf16.mxu0 0
      %213 = vmatpush1.bf16.msra.mxu0 %v206
      %214 = vmatprep.subr.bf16.mxu0 0
      %215 = vmatpush1.bf16.msra.mxu0 0
      %216 = vmatprep.subr.bf16.mxu0 0
      %217 = vmatpush1.bf16.msra.mxu0 0
      %218 = vmatprep.subr.bf16.mxu0 0
      %219 = vmatpush1.bf16.msra.mxu0 0
      %220 = vmatprep.subr.bf16.mxu0 0
      %221 = vmatpush1.bf16.msra.mxu0 0
      %222 = vmatprep.subr.bf16.mxu0 0
      %223 = vmatpush1.bf16.msra.mxu0 0
      %224 = vmatprep.subr.bf16.mxu0 0
      %225 = vmatpush1.bf16.msra.mxu0 0
      %226 = vmatprep.subr.bf16.mxu0 0
      %227 = vmatpush1.bf16.msra.mxu0 0
      %228 = vmatprep.subr.bf16.mxu0 0
      %229 = vmatpush1.bf16.msra.mxu0 0
      %230 = vmatprep.subr.bf16.mxu0 0
      %231 = vmatpush1.bf16.msra.mxu0 0
      %232 = vmatprep.subr.bf16.mxu0 0
      %233 = vmatpush1.bf16.msra.mxu0 0
      %234 = vmatprep.subr.bf16.mxu0 0
      %235 = vmatpush1.bf16.msra.mxu0 0
      %236 = vmatprep.subr.bf16.mxu0 0
      %237 = vmatpush1.bf16.msra.mxu0 0
      %238 = vmatprep.subr.bf16.mxu0 0
      %239 = vmatpush1.bf16.msra.mxu0 0
      %240 = vmatprep.subr.bf16.mxu0 0
      %241 = vmatpush1.bf16.msra.mxu0 0
      %242 = vmatprep.subr.bf16.mxu0 0
      %243 = vmatpush1.bf16.msra.mxu0 0
      %244 = vmatprep.mubr.bf16.mxu0 0
      %245 = vmatmul.mubr.bf16.gmra.mrb[0].mxu0 %v210
      %v246 = vpop.f32.mrb[0].mxu0
      %v247 = vadd.f32 0.0, %v246
      %v248 = vpop.f32.mrb[0].mxu0
      %v249 = vpop.f32.mrb[0].mxu0
      %v250 = vadd.f32 0.0, %v249
      %v251 = vpop.f32.mrb[0].mxu0
      %252 = vdwg.mxu0
      %v255 = vunpack.c.l.b16 %v186
      %v256 = vunpack.c.l.b16 %v187
      %v257 = vpack.c.b16 %v256, %v255
      %v259 = vsel %vm208, %v257, 0
      %261 = vmatprep.subr.bf16.mxu0 0
      %262 = vmatpush1.bf16.msra.mxu0 %v188
      %263 = vmatprep.subr.bf16.mxu0 0
      %264 = vmatpush1.bf16.msra.mxu0 0
      %265 = vmatprep.subr.bf16.mxu0 0
      %266 = vmatpush1.bf16.msra.mxu0 0
      %267 = vmatprep.subr.bf16.mxu0 0
      %268 = vmatpush1.bf16.msra.mxu0 0
      %269 = vmatprep.subr.bf16.mxu0 0
      %270 = vmatpush1.bf16.msra.mxu0 0
      %271 = vmatprep.subr.bf16.mxu0 0
      %272 = vmatpush1.bf16.msra.mxu0 0
      %273 = vmatprep.subr.bf16.mxu0 0
      %274 = vmatpush1.bf16.msra.mxu0 0
      %275 = vmatprep.subr.bf16.mxu0 0
      %276 = vmatpush1.bf16.msra.mxu0 0
      %277 = vmatprep.subr.bf16.mxu0 0
      %278 = vmatpush1.bf16.msra.mxu0 0
      %279 = vmatprep.subr.bf16.mxu0 0
      %280 = vmatpush1.bf16.msra.mxu0 0
      %281 = vmatprep.subr.bf16.mxu0 0
      %282 = vmatpush1.bf16.msra.mxu0 0
      %283 = vmatprep.subr.bf16.mxu0 0
      %284 = vmatpush1.bf16.msra.mxu0 0
      %285 = vmatprep.subr.bf16.mxu0 0
      %286 = vmatpush1.bf16.msra.mxu0 0
      %287 = vmatprep.subr.bf16.mxu0 0
      %288 = vmatpush1.bf16.msra.mxu0 0
      %289 = vmatprep.subr.bf16.mxu0 0
      %290 = vmatpush1.bf16.msra.mxu0 0
      %291 = vmatprep.subr.bf16.mxu0 0
      %292 = vmatpush1.bf16.msra.mxu0 0
      %293 = vmatprep.mubr.bf16.mxu0 0
      %294 = vmatmul.mubr.bf16.gmra.mrb[0].mxu0 %v259
      %v295 = vpop.f32.mrb[0].mxu0
      %v296 = vadd.f32 %v247, %v295
      %v297 = vpop.f32.mrb[0].mxu0
      %v298 = vpop.f32.mrb[0].mxu0
      %v299 = vadd.f32 %v250, %v298
      %v300 = vpop.f32.mrb[0].mxu0
      %301 = vdwg.mxu0
      %s302 = scalar_lea.vmem %s1, 16
      %v303 = vld [vmem:[%s302] sm:$0xf]
      %v304 = vld [vmem:[%s302 + $0x4] sm:$0xf]
      %v307 = vunpack.c.l.b16 %v303
      %v308 = vunpack.c.l.b16 %v304
      %v309 = vpack.c.b16 %v308, %v307
      %310 = vrot.lane.b32.xlu0 %v192, 126
      %v311 = vpop.permute.xlu0 %310
      %312 = vrot.lane.b32.xlu0 %v193, 126
      %v313 = vpop.permute.xlu0 %312
      %vm314 = vcmask 1031168
      %v315 = vsel %vm314, %v311, %v313
      %v318 = vsel %vm208, %v309, 0
      %320 = vmatprep.subr.bf16.mxu0 0
      %321 = vmatpush1.bf16.msra.mxu0 %v315
      %322 = vmatprep.subr.bf16.mxu0 0
      %323 = vmatpush1.bf16.msra.mxu0 0
      %324 = vmatprep.subr.bf16.mxu0 0
      %325 = vmatpush1.bf16.msra.mxu0 0
      %326 = vmatprep.subr.bf16.mxu0 0
      %327 = vmatpush1.bf16.msra.mxu0 0
      %328 = vmatprep.subr.bf16.mxu0 0
      %329 = vmatpush1.bf16.msra.mxu0 0
      %330 = vmatprep.subr.bf16.mxu0 0
      %331 = vmatpush1.bf16.msra.mxu0 0
      %332 = vmatprep.subr.bf16.mxu0 0
      %333 = vmatpush1.bf16.msra.mxu0 0
      %334 = vmatprep.subr.bf16.mxu0 0
      %335 = vmatpush1.bf16.msra.mxu0 0
      %336 = vmatprep.subr.bf16.mxu0 0
      %337 = vmatpush1.bf16.msra.mxu0 0
      %338 = vmatprep.subr.bf16.mxu0 0
      %339 = vmatpush1.bf16.msra.mxu0 0
      %340 = vmatprep.subr.bf16.mxu0 0
      %341 = vmatpush1.bf16.msra.mxu0 0
      %342 = vmatprep.subr.bf16.mxu0 0
      %343 = vmatpush1.bf16.msra.mxu0 0
      %344 = vmatprep.subr.bf16.mxu0 0
      %345 = vmatpush1.bf16.msra.mxu0 0
      %346 = vmatprep.subr.bf16.mxu0 0
      %347 = vmatpush1.bf16.msra.mxu0 0
      %348 = vmatprep.subr.bf16.mxu0 0
      %349 = vmatpush1.bf16.msra.mxu0 0
      %350 = vmatprep.subr.bf16.mxu0 0
      %351 = vmatpush1.bf16.msra.mxu0 0
      %352 = vmatprep.mubr.bf16.mxu0 0
      %353 = vmatmul.mubr.bf16.gmra.mrb[0].mxu0 %v318
      %v354 = vpop.f32.mrb[0].mxu0
      %v355 = vadd.f32 0.0, %v354
      %v356 = vpop.f32.mrb[0].mxu0
      %v357 = vpop.f32.mrb[0].mxu0
      %v358 = vadd.f32 0.0, %v357
      %v359 = vpop.f32.mrb[0].mxu0
      %360 = vdwg.mxu0
      %v361 = vadd.f32 %v296, %v355
      %v362 = vadd.f32 %v299, %v358
      %v363 = vld [vmem:[%s2] sm:$0xff]
      %v364 = vld [vmem:[%s2 + $0x8] sm:$0xff]
      %366 = vset.pattern.permute.xlu0 0
      %367 = vperm.xlu0 %366, %v363
      %v368 = vpop.permute.xlu0 %367
      %371 = vset.pattern.permute.xlu0 0
      %372 = vperm.xlu0 %371, %v364
      %v373 = vpop.permute.xlu0 %372
      %v375 = vadd.f32 %v361, %v368
      %v376 = vadd.f32 %v362, %v373
      %vm377 = vcmp.ge.f32.partialorder %v375, 0.0
      %vm378 = vcmp.ge.f32.partialorder %v376, 0.0
      %v379 = vmul.f32 %v375, 0.2
      %v380 = vmul.f32 %v376, 0.2
      %v381 = vsel %vm377, %v375, %v379
      %v382 = vsel %vm378, %v376, %v380
      %v383 = vpack.c.bf16 %v382, %v381
      %v385 = vunpack.c.l.b16 %v383
      %v386 = vunpack.c.h.b16 %v383
      %v387 = vpack.c.b16 %v385, %v385
      %v388 = vpack.c.b16 %v386, %v386
      %391 = vst [vmem:[%s170] sm:$0xf] %v387
      %392 = vst [vmem:[%s170 + $0x4] sm:$0xf] %v388
      %p393 = scmp.lt.s32.totalorder %s14, 1
      %s394 = scalar_select %p393, %s14, 1
      %s395 = smul.addr %s394, 2
      %s396 = smul.addr %s395, 4
      %s397 = scalar_lea.vmem %s3, %s396
      // Predicated region
      $region33: #{ecg_reconstructor_forward.14} parent=31 // pred_check
        %p398 = pneg %p100
      $region34: #{ecg_reconstructor_forward.14} parent=31 // pred_check_branch
        %400 = sbr.rel (%p398) target = $region36
      $region35: #{ecg_reconstructor_forward.14} parent=31 // pred_region
        _
      $region36: #{ecg_reconstructor_forward.14} parent=31 // pred_fallthru
        _
    $region32: #{ecg_reconstructor_forward.14} parent=5 // pred_fallthru
      _
    %p401 = scmp.le.s32.totalorder 2, %s9
    // Predicated region
    $region37: #{ecg_reconstructor_forward.14} parent=5 // pred_check
      %p402 = pneg %p401
    $region38: #{ecg_reconstructor_forward.14} parent=5 // pred_check_branch
      %404 = sbr.rel (%p402) target = $region40
    $region39: #{ecg_reconstructor_forward.14} parent=5 // pred_region
      %s405 = ssub.s32 %s9, 2
      // Predicated region
      $region41: #{ecg_reconstructor_forward.14} parent=39 // pred_check
        %p406 = pneg %p106
      $region42: #{ecg_reconstructor_forward.14} parent=39 // pred_check_branch
        %408 = sbr.rel (%p406) target = $region44
      $region43: #{ecg_reconstructor_forward.14} parent=39 // pred_region
        %p409 = scmp.lt.s32.totalorder %s15, 1
        %s410 = scalar_select %p409, %s15, 1
        %s411 = smul.addr %s410, 2
        %s412 = smul.addr %s411, 4
        %s413 = scalar_lea.vmem %s3, %s412
      $region44: #{ecg_reconstructor_forward.14} parent=39 // pred_fallthru
        _
    $region40: #{ecg_reconstructor_forward.14} parent=5 // pred_fallthru
      _
  $region6: #{ecg_reconstructor_forward.14} parent=0 // loop_footer
    %s13 = sadd.s32 1, %s9
  $region7: #{ecg_reconstructor_forward.14} parent=0 // loop_footer_branch
    %8 = sbr.rel target = $region3
  $region8: #{ecg_reconstructor_forward.14} parent=0 // loop_exit
    _

// kernel: ecg_reconstructor_forward.15
$region0: #{ecg_reconstructor_forward.15}
  #allocation0 [shape = 'u32[]', space=smem, size = 0x4, offset = 0x4, fixed_abs, tag = 'smem constant byte address 0x4 - core index']
  #allocation1 [shape = 'u32[144,128]{1,0:T(1,128)}', space=vmem, size = 0x12000, scoped, tag = 'internal scratch']
  #allocation2 [shape = 'bf16[32,256]{1,0:T(16,128)(2,1)}', space=vmem, size = 0x4000, scoped, tag = 'scratch operand']
  %s0 = inlined_call_operand.vmem [shape: bf16[2,32,20], index: 0, kind: input, shape index: {}]
  %s1 = inlined_call_operand.vmem [shape: bf16[3,32,32], index: 1, kind: input, shape index: {}]
  %s2 = inlined_call_operand.vmem [shape: f32[32,1], index: 2, kind: input, shape index: {}]
  %s3 = inlined_call_operand.vmem [shape: bf16[2,32,128], index: 3, kind: output, shape index: {}]
  %s4 = sld [smem:[#allocation0]]
  $region45: #{ecg_reconstructor_forward.15} parent=0
    _
  %s6 = ssub.s32 1, %s4
  %s7 = scalar_select 0, %s6, %s4
  loop: start=0, step=1, limit=4
  $region2: #{ecg_reconstructor_forward.15} parent=0 // loop_pre_header
    _
  $region3: #{ecg_reconstructor_forward.15} parent=0 // loop_header
    %s9 = sphi 0, %s13
    %p10 = scmp.ge.s32.totalorder %s9, 4
    %s19 = sphi 0, %s21
    %s22 = sphi 0, %s19
    %s23 = sphi 0, %s22
    %s39 = sphi 0, %s23
    %s43 = sphi 0, %s43
    %s45 = sphi 0, %s43
    %s46 = sphi 0, %s45
    %s60 = sphi 0, %s46
    %s64 = sphi 0, %s64
    %s66 = sphi 0, %s64
    %s67 = sphi 0, %s66
    %s81 = sphi 0, %s67
    %s87 = sphi 0, %s89
    %s90 = sphi 0, %s87
    %s91 = sphi 0, %s90
    %s107 = sphi 0, %s91
  $region4: #{ecg_reconstructor_forward.15} parent=0 // loop_header_branch
    %12 = sbr.rel (%p10) target = $region8
  $region5: #{ecg_reconstructor_forward.15} parent=0 // loop_body
    %s14 = ssub.s32 %s9, 1
    %s15 = ssub.s32 %s9, 2
    %s16 = sadd.s32 %s9, 1
    %s17 = ssub.s32 %s9, %s16
    %p18 = scmp.eq.s32.totalorder %s17, 0
    %s20 = sadd.s32 %s19, 1
    %s21 = scalar_select %p18, %s19, %s20
    %p24 = pneg %p18
    %p25 = scmp.eq.s32.totalorder %s9, 1
    %p26 = por %p24, %p25
    %p27 = scmp.ne.s32.totalorder %s19, %s22
    %p28 = scmp.eq.s32.totalorder %s9, 0
    %p29 = por %p27, %p28
    %p30 = scmp.ne.s32.totalorder %s19, %s22
    %p31 = scmp.eq.s32.totalorder %s14, 1
    %p32 = por %p30, %p31
    %p33 = scmp.ne.s32.totalorder %s22, %s23
    %p34 = scmp.eq.s32.totalorder %s14, 0
    %p35 = por %p33, %p34
    %p36 = scmp.ne.s32.totalorder %s22, %s23
    %p37 = scmp.eq.s32.totalorder %s15, 1
    %p38 = por %p36, %p37
    %p40 = scmp.ne.s32.totalorder %s23, %s39
    %p41 = scmp.eq.s32.totalorder %s15, 0
    %p42 = por %p40, %p41
    %s44 = sadd.s32 %s43, 1
    %p47 = scmp.eq.s32.totalorder %s9, 1
    %p48 = scmp.ne.s32.totalorder %s43, %s45
    %p49 = scmp.eq.s32.totalorder %s9, 0
    %p50 = por %p48, %p49
    %p51 = scmp.ne.s32.totalorder %s43, %s45
    %p52 = scmp.eq.s32.totalorder %s14, 1
    %p53 = por %p51, %p52
    %p54 = scmp.ne.s32.totalorder %s45, %s46
    %p55 = scmp.eq.s32.totalorder %s14, 0
    %p56 = por %p54, %p55
    %p57 = scmp.ne.s32.totalorder %s45, %s46
    %p58 = scmp.eq.s32.totalorder %s15, 1
    %p59 = por %p57, %p58
    %p61 = scmp.ne.s32.totalorder %s46, %s60
    %p62 = scmp.eq.s32.totalorder %s15, 0
    %p63 = por %p61, %p62
    %s65 = sadd.s32 %s64, 1
    %p68 = scmp.eq.s32.totalorder %s9, 1
    %p69 = scmp.ne.s32.totalorder %s64, %s66
    %p70 = scmp.eq.s32.totalorder %s9, 0
    %p71 = por %p69, %p70
    %p72 = scmp.ne.s32.totalorder %s64, %s66
    %p73 = scmp.eq.s32.totalorder %s14, 1
    %p74 = por %p72, %p73
    %p75 = scmp.ne.s32.totalorder %s66, %s67
    %p76 = scmp.eq.s32.totalorder %s14, 0
    %p77 = por %p75, %p76
    %p78 = scmp.ne.s32.totalorder %s66, %s67
    %p79 = scmp.eq.s32.totalorder %s15, 1
    %p80 = por %p78, %p79
    %p82 = scmp.ne.s32.totalorder %s67, %s81
    %p83 = scmp.eq.s32.totalorder %s15, 0
    %p84 = por %p82, %p83
    %s85 = ssub.s32 %s9, %s16
    %p86 = scmp.eq.s32.totalorder %s85, 0
    %s88 = sadd.s32 %s87, 1
    %s89 = scalar_select %p86, %s87, %s88
    %p92 = pneg %p86
    %p93 = scmp.eq.s32.totalorder %s9, 1
    %p94 = por %p92, %p93
    %p95 = scmp.ne.s32.totalorder %s87, %s90
    %p96 = scmp.eq.s32.totalorder %s9, 0
    %p97 = por %p95, %p96
    %p98 = scmp.ne.s32.totalorder %s87, %s90
    %p99 = scmp.eq.s32.totalorder %s14, 1
    %p100 = por %p98, %p99
    %p101 = scmp.ne.s32.totalorder %s90, %s91
    %p102 = scmp.eq.s32.totalorder %s14, 0
    %p103 = por %p101, %p102
    %p104 = scmp.ne.s32.totalorder %s90, %s91
    %p105 = scmp.eq.s32.totalorder %s15, 1
    %p106 = por %p104, %p105
    %p108 = scmp.ne.s32.totalorder %s91, %s107
    %p109 = scmp.eq.s32.totalorder %s15, 0
    %p110 = por %p108, %p109
    %p111 = scmp.le.s32.totalorder 1, %s9
    %p112 = scmp.lt.s32.totalorder %s9, 3
    %p113 = pnand %p111, %p112
    %p114 = pneg %p113
    // Predicated region
    $region9: #{ecg_reconstructor_forward.15} parent=5 // pred_check
      _
    $region10: #{ecg_reconstructor_forward.15} parent=5 // pred_check_branch
      %116 = sbr.rel (%p113) target = $region12
    $region11: #{ecg_reconstructor_forward.15} parent=5 // pred_region
      %s117 = ssub.s32 %s9, 1
      // Predicated region
      $region13: #{ecg_reconstructor_forward.15} parent=11 // pred_check
        %p118 = pneg %p56
      $region14: #{ecg_reconstructor_forward.15} parent=11 // pred_check_branch
        %120 = sbr.rel (%p118) target = $region16
      $region15: #{ecg_reconstructor_forward.15} parent=11 // pred_region
        _
      $region16: #{ecg_reconstructor_forward.15} parent=11 // pred_fallthru
        _
      // Predicated region
      $region17: #{ecg_reconstructor_forward.15} parent=11 // pred_check
        %p121 = pneg %p77
      $region18: #{ecg_reconstructor_forward.15} parent=11 // pred_check_branch
        %123 = sbr.rel (%p121) target = $region20
      $region19: #{ecg_reconstructor_forward.15} parent=11 // pred_region
        _
      $region20: #{ecg_reconstructor_forward.15} parent=11 // pred_fallthru
        _
    $region12: #{ecg_reconstructor_forward.15} parent=5 // pred_fallthru
      _
    %p124 = scmp.lt.s32.totalorder %s9, 2
    // Predicated region
    $region21: #{ecg_reconstructor_forward.15} parent=5 // pred_check
      %p125 = pneg %p124
    $region22: #{ecg_reconstructor_forward.15} parent=5 // pred_check_branch
      %127 = sbr.rel (%p125) target = $region24
    $region23: #{ecg_reconstructor_forward.15} parent=5 // pred_region
      // Predicated region
      $region25: #{ecg_reconstructor_forward.15} parent=23 // pred_check
        %p128 = pneg %p29
      $region26: #{ecg_reconstructor_forward.15} parent=23 // pred_check_branch
        %130 = sbr.rel (%p128) target = $region28
      $region27: #{ecg_reconstructor_forward.15} parent=23 // pred_region
        %p131 = scmp.lt.s32.totalorder %s9, 1
        %s132 = scalar_select %p131, %s9, 1
        %s133 = smul.addr %s132, 4
        %s134 = smul.addr %s133, 4
        %s135 = scalar_lea.vmem %s0, %s134
      $region28: #{ecg_reconstructor_forward.15} parent=23 // pred_fallthru
        _
    $region24: #{ecg_reconstructor_forward.15} parent=5 // pred_fallthru
      _
    %p136 = scmp.le.s32.totalorder 1, %s9
    %p137 = scmp.lt.s32.totalorder %s9, 3
    %p138 = pnand %p136, %p137
    %p139 = pneg %p138
    // Predicated region
    $region29: #{ecg_reconstructor_forward.15} parent=5 // pred_check
      _
    $region30: #{ecg_reconstructor_forward.15} parent=5 // pred_check_branch
      %141 = sbr.rel (%p138) target = $region32
    $region31: #{ecg_reconstructor_forward.15} parent=5 // pred_region
      %s142 = ssub.s32 %s9, 1
      %p143 = scmp.lt.s32.totalorder %s14, 1
      %s144 = scalar_select %p143, %s14, 1
      %s145 = smul.addr %s144, 4
      %s146 = smul.addr %s145, 4
      %s147 = scalar_lea.vmem %s0, %s146
      %p148 = pneg %p35
      %p149 = pneg %p32
      %p150 = pneg %p56
      %p151 = pneg %p53
      %p152 = pneg %p77
      %p153 = pneg %p74
      %p154 = pneg %p103
      %p155 = pneg %p100
      %p156 = scmp.lt.s32.totalorder %s14, 1
      %s157 = scalar_select %p156, %s14, 1
      %s158 = smul.addr %s157, 4
      %s159 = smul.addr %s158, 4
      %s160 = scalar_lea.vmem %s3, %s159
      %p161 = scmp.lt.s32.totalorder %s14, 1
      %s162 = scalar_select %p161, %s14, 1
      %s163 = smul.addr %s162, 4
      %s164 = smul.addr %s163, 4
      %s165 = scalar_lea.vmem %s0, %s164
      %p166 = scmp.lt.s32.totalorder %s14, 1
      %s167 = scalar_select %p166, %s14, 1
      %s168 = smul.addr %s167, 4
      %s169 = smul.addr %s168, 4
      %s170 = scalar_lea.vmem %s3, %s169
      %172 = vst [vmem:[#allocation2] sm:$0xff] 0
      %173 = vst [vmem:[#allocation2 + $0x8] sm:$0xff] 0
      %174 = vst [vmem:[#allocation2 + $0x10] sm:$0xff] 0
      %175 = vst [vmem:[#allocation2 + $0x18] sm:$0xff] 0
      %v176 = vld [vmem:[%s165] sm:$0xf]
      %v177 = vld [vmem:[%s165 + $0x4] sm:$0xf]
      %v178 = vld [vmem:[%s165 + $0x8] sm:$0xf]
      %v179 = vld [vmem:[%s165 + $0xc] sm:$0xf]
      %v184 = vunpack.c.l.b16 %v176
      %v185 = vunpack.c.l.b16 %v177
      %v186 = vunpack.c.l.b16 %v178
      %v187 = vunpack.c.l.b16 %v179
      %v188 = vpack.c.b16 %v185, %v184
      %v189 = vpack.c.b16 %v187, %v186
      %190 = vrot.lane.b32.xlu0 %v188, 1
      %v191 = vpop.permute.xlu0 %190
      %192 = vrot.lane.b32.xlu0 %v189, 1
      %v193 = vpop.permute.xlu0 %192
      %vm196 = vcmask 171016
      %197 = vst.msk [vmem:[#allocation2] sm:$0xff] %vm196, %v191
      %198 = vst.msk [vmem:[#allocation2 + $0x10] sm:$0xff] %vm196, %v193
      %v199 = vld [vmem:[%s1] sm:$0xf]
      %v200 = vld [vmem:[%s1 + $0x4] sm:$0xf]
      %v201 = vld [vmem:[%s1 + $0x8] sm:$0xf]
      %v202 = vld [vmem:[%s1 + $0xc] sm:$0xf]
      %v203 = vld [vmem:[#allocation2] sm:$0xff]
      %v204 = vld [vmem:[#allocation2 + $0x10] sm:$0xff]
      %s205 = scalar_lea.vmem %s1, 16
      %v206 = vld [vmem:[%s205] sm:$0xf]
      %v207 = vld [vmem:[%s205 + $0x4] sm:$0xf]
      %v208 = vld [vmem:[%s205 + $0x8] sm:$0xf]
      %v209 = vld [vmem:[%s205 + $0xc] sm:$0xf]
      %v210 = vld [vmem:[#allocation2] sm:$0xff]
      %v211 = vld [vmem:[#allocation2 + $0x8] sm:$0xff]
      %v212 = vld [vmem:[#allocation2 + $0x10] sm:$0xff]
      %v213 = vld [vmem:[#allocation2 + $0x18] sm:$0xff]
      %v218 = vunpack.c.l.b16 %v206
      %v219 = vunpack.c.l.b16 %v207
      %v220 = vunpack.c.l.b16 %v208
      %v221 = vunpack.c.l.b16 %v209
      %v222 = vpack.c.b16 %v219, %v218
      %v223 = vpack.c.b16 %v221, %v220
      %228 = vrot.lane.b32.xlu0 %v210, 127
      %v229 = vpop.permute.xlu0 %228
      %230 = vrot.lane.b32.xlu0 %v211, 127
      %v231 = vpop.permute.xlu0 %230
      %232 = vrot.lane.b32.xlu0 %v212, 127
      %v233 = vpop.permute.xlu0 %232
      %234 = vrot.lane.b32.xlu0 %v213, 127
      %v235 = vpop.permute.xlu0 %234
      %vm236 = vcmask 1039360
      %v237 = vsel %vm236, %v229, %v231
      %v238 = vsel %vm236, %v233, %v235
      %vm241 = vcmask 261120
      %v243 = vsel %vm241, %v222, 0
      %v246 = vsel %vm241, %v223, 0
      %248 = vmatprep.subr.bf16.mxu0 0
      %249 = vmatpush1.bf16.msra.mxu0 %v237
      %250 = vmatprep.subr.bf16.mxu0 0
      %251 = vmatpush1.bf16.msra.mxu0 %v238
      %252 = vmatprep.subr.bf16.mxu0 0
      %253 = vmatpush1.bf16.msra.mxu0 0
      %254 = vmatprep.subr.bf16.mxu0 0
      %255 = vmatpush1.bf16.msra.mxu0 0
      %256 = vmatprep.subr.bf16.mxu0 0
      %257 = vmatpush1.bf16.msra.mxu0 0
      %258 = vmatprep.subr.bf16.mxu0 0
      %259 = vmatpush1.bf16.msra.mxu0 0
      %260 = vmatprep.subr.bf16.mxu0 0
      %261 = vmatpush1.bf16.msra.mxu0 0
      %262 = vmatprep.subr.bf16.mxu0 0
      %263 = vmatpush1.bf16.msra.mxu0 0
      %264 = vmatprep.subr.bf16.mxu0 0
      %265 = vmatpush1.bf16.msra.mxu0 0
      %266 = vmatprep.subr.bf16.mxu0 0
      %267 = vmatpush1.bf16.msra.mxu0 0
      %268 = vmatprep.subr.bf16.mxu0 0
      %269 = vmatpush1.bf16.msra.mxu0 0
      %270 = vmatprep.subr.bf16.mxu0 0
      %271 = vmatpush1.bf16.msra.mxu0 0
      %272 = vmatprep.subr.bf16.mxu0 0
      %273 = vmatpush1.bf16.msra.mxu0 0
      %274 = vmatprep.subr.bf16.mxu0 0
      %275 = vmatpush1.bf16.msra.mxu0 0
      %276 = vmatprep.subr.bf16.mxu0 0
      %277 = vmatpush1.bf16.msra.mxu0 0
      %278 = vmatprep.subr.bf16.mxu0 0
      %279 = vmatpush1.bf16.msra.mxu0 0
      %280 = vmatprep.mubr.bf16.mxu0 0
      %281 = vmatmul.mubr.bf16.gmra.mrb[0].mxu0 %v243
      %v282 = vpop.f32.mrb[0].mxu0
      %v283 = vadd.f32 0.0, %v282
      %v284 = vpop.f32.mrb[0].mxu0
      %v285 = vpop.f32.mrb[0].mxu0
      %v286 = vadd.f32 0.0, %v285
      %v287 = vpop.f32.mrb[0].mxu0
      %288 = vmatprep.mubr.bf16.mxu0 0
      %289 = vmatmul.mubr.bf16.gmra.mrb[0].mxu0 %v246
      %v290 = vpop.f32.mrb[0].mxu0
      %v291 = vadd.f32 0.0, %v290
      %v292 = vpop.f32.mrb[0].mxu0
      %v293 = vpop.f32.mrb[0].mxu0
      %v294 = vadd.f32 0.0, %v293
      %v295 = vpop.f32.mrb[0].mxu0
      %296 = vdwg.mxu0
      %v301 = vunpack.c.l.b16 %v199
      %v302 = vunpack.c.l.b16 %v200
      %v303 = vunpack.c.l.b16 %v201
      %v304 = vunpack.c.l.b16 %v202
      %v305 = vpack.c.b16 %v302, %v301
      %v306 = vpack.c.b16 %v304, %v303
      %v308 = vsel %vm241, %v305, 0
      %v311 = vsel %vm241, %v306, 0
      %313 = vmatprep.subr.bf16.mxu0 0
      %314 = vmatpush1.bf16.msra.mxu0 %v203
      %315 = vmatprep.subr.bf16.mxu0 0
      %316 = vmatpush1.bf16.msra.mxu0 %v204
      %317 = vmatprep.subr.bf16.mxu0 0
      %318 = vmatpush1.bf16.msra.mxu0 0
      %319 = vmatprep.subr.bf16.mxu0 0
      %320 = vmatpush1.bf16.msra.mxu0 0
      %321 = vmatprep.subr.bf16.mxu0 0
      %322 = vmatpush1.bf16.msra.mxu0 0
      %323 = vmatprep.subr.bf16.mxu0 0
      %324 = vmatpush1.bf16.msra.mxu0 0
      %325 = vmatprep.subr.bf16.mxu0 0
      %326 = vmatpush1.bf16.msra.mxu0 0
      %327 = vmatprep.subr.bf16.mxu0 0
      %328 = vmatpush1.bf16.msra.mxu0 0
      %329 = vmatprep.subr.bf16.mxu0 0
      %330 = vmatpush1.bf16.msra.mxu0 0
      %331 = vmatprep.subr.bf16.mxu0 0
      %332 = vmatpush1.bf16.msra.mxu0 0
      %333 = vmatprep.subr.bf16.mxu0 0
      %334 = vmatpush1.bf16.msra.mxu0 0
      %335 = vmatprep.subr.bf16.mxu0 0
      %336 = vmatpush1.bf16.msra.mxu0 0
      %337 = vmatprep.subr.bf16.mxu0 0
      %338 = vmatpush1.bf16.msra.mxu0 0
      %339 = vmatprep.subr.bf16.mxu0 0
      %340 = vmatpush1.bf16.msra.mxu0 0
      %341 = vmatprep.subr.bf16.mxu0 0
      %342 = vmatpush1.bf16.msra.mxu0 0
      %343 = vmatprep.subr.bf16.mxu0 0
      %344 = vmatpush1.bf16.msra.mxu0 0
      %345 = vmatprep.mubr.bf16.mxu0 0
      %346 = vmatmul.mubr.bf16.gmra.mrb[0].mxu0 %v308
      %v347 = vpop.f32.mrb[0].mxu0
      %v348 = vadd.f32 %v283, %v347
      %v349 = vpop.f32.mrb[0].mxu0
      %v350 = vpop.f32.mrb[0].mxu0
      %v351 = vadd.f32 %v286, %v350
      %v352 = vpop.f32.mrb[0].mxu0
      %353 = vmatprep.mubr.bf16.mxu0 0
      %354 = vmatmul.mubr.bf16.gmra.mrb[0].mxu0 %v311
      %v355 = vpop.f32.mrb[0].mxu0
      %v356 = vadd.f32 %v291, %v355
      %v357 = vpop.f32.mrb[0].mxu0
      %v358 = vpop.f32.mrb[0].mxu0
      %v359 = vadd.f32 %v294, %v358
      %v360 = vpop.f32.mrb[0].mxu0
      %361 = vdwg.mxu0
      %s362 = scalar_lea.vmem %s1, 32
      %v363 = vld [vmem:[%s362] sm:$0xf]
      %v364 = vld [vmem:[%s362 + $0x4] sm:$0xf]
      %v365 = vld [vmem:[%s362 + $0x8] sm:$0xf]
      %v366 = vld [vmem:[%s362 + $0xc] sm:$0xf]
      %v371 = vunpack.c.l.b16 %v363
      %v372 = vunpack.c.l.b16 %v364
      %v373 = vunpack.c.l.b16 %v365
      %v374 = vunpack.c.l.b16 %v366
      %v375 = vpack.c.b16 %v372, %v371
      %v376 = vpack.c.b16 %v374, %v373
      %377 = vrot.lane.b32.xlu0 %v210, 126
      %v378 = vpop.permute.xlu0 %377
      %379 = vrot.lane.b32.xlu0 %v211, 126
      %v380 = vpop.permute.xlu0 %379
      %381 = vrot.lane.b32.xlu0 %v212, 126
      %v382 = vpop.permute.xlu0 %381
      %383 = vrot.lane.b32.xlu0 %v213, 126
      %v384 = vpop.permute.xlu0 %383
      %vm385 = vcmask 1031168
      %v386 = vsel %vm385, %v378, %v380
      %v387 = vsel %vm385, %v382, %v384
      %v391 = vsel %vm241, %v375, 0
      %v394 = vsel %vm241, %v376, 0
      %396 = vmatprep.subr.bf16.mxu0 0
      %397 = vmatpush1.bf16.msra.mxu0 %v386
      %398 = vmatprep.subr.bf16.mxu0 0
      %399 = vmatpush1.bf16.msra.mxu0 %v387
      %400 = vmatprep.subr.bf16.mxu0 0
      %401 = vmatpush1.bf16.msra.mxu0 0
      %402 = vmatprep.subr.bf16.mxu0 0
      %403 = vmatpush1.bf16.msra.mxu0 0
      %404 = vmatprep.subr.bf16.mxu0 0
      %405 = vmatpush1.bf16.msra.mxu0 0
      %406 = vmatprep.subr.bf16.mxu0 0
      %407 = vmatpush1.bf16.msra.mxu0 0
      %408 = vmatprep.subr.bf16.mxu0 0
      %409 = vmatpush1.bf16.msra.mxu0 0
      %410 = vmatprep.subr.bf16.mxu0 0
      %411 = vmatpush1.bf16.msra.mxu0 0
      %412 = vmatprep.subr.bf16.mxu0 0
      %413 = vmatpush1.bf16.msra.mxu0 0
      %414 = vmatprep.subr.bf16.mxu0 0
      %415 = vmatpush1.bf16.msra.mxu0 0
      %416 = vmatprep.subr.bf16.mxu0 0
      %417 = vmatpush1.bf16.msra.mxu0 0
      %418 = vmatprep.subr.bf16.mxu0 0
      %419 = vmatpush1.bf16.msra.mxu0 0
      %420 = vmatprep.subr.bf16.mxu0 0
      %421 = vmatpush1.bf16.msra.mxu0 0
      %422 = vmatprep.subr.bf16.mxu0 0
      %423 = vmatpush1.bf16.msra.mxu0 0
      %424 = vmatprep.subr.bf16.mxu0 0
      %425 = vmatpush1.bf16.msra.mxu0 0
      %426 = vmatprep.subr.bf16.mxu0 0
      %427 = vmatpush1.bf16.msra.mxu0 0
      %428 = vmatprep.mubr.bf16.mxu0 0
      %429 = vmatmul.mubr.bf16.gmra.mrb[0].mxu0 %v391
      %v430 = vpop.f32.mrb[0].mxu0
      %v431 = vadd.f32 0.0, %v430
      %v432 = vpop.f32.mrb[0].mxu0
      %v433 = vpop.f32.mrb[0].mxu0
      %v434 = vadd.f32 0.0, %v433
      %v435 = vpop.f32.mrb[0].mxu0
      %436 = vmatprep.mubr.bf16.mxu0 0
      %437 = vmatmul.mubr.bf16.gmra.mrb[0].mxu0 %v394
      %v438 = vpop.f32.mrb[0].mxu0
      %v439 = vadd.f32 0.0, %v438
      %v440 = vpop.f32.mrb[0].mxu0
      %v441 = vpop.f32.mrb[0].mxu0
      %v442 = vadd.f32 0.0, %v441
      %v443 = vpop.f32.mrb[0].mxu0
      %444 = vdwg.mxu0
      %v445 = vadd.f32 %v348, %v431
      %v446 = vadd.f32 %v351, %v434
      %v447 = vadd.f32 %v356, %v439
      %v448 = vadd.f32 %v359, %v442
      %v449 = vld [vmem:[%s2] sm:$0xff]
      %v450 = vld [vmem:[%s2 + $0x8] sm:$0xff]
      %v451 = vld [vmem:[%s2 + $0x10] sm:$0xff]
      %v452 = vld [vmem:[%s2 + $0x18] sm:$0xff]
      %454 = vset.pattern.permute.xlu0 0
      %455 = vperm.xlu0 %454, %v449
      %v456 = vpop.permute.xlu0 %455
      %459 = vset.pattern.permute.xlu0 0
      %460 = vperm.xlu0 %459, %v450
      %v461 = vpop.permute.xlu0 %460
      %464 = vset.pattern.permute.xlu0 0
      %465 = vperm.xlu0 %464, %v451
      %v466 = vpop.permute.xlu0 %465
      %469 = vset.pattern.permute.xlu0 0
      %470 = vperm.xlu0 %469, %v452
      %v471 = vpop.permute.xlu0 %470
      %v473 = vadd.f32 %v445, %v456
      %v474 = vadd.f32 %v446, %v461
      %v475 = vadd.f32 %v447, %v466
      %v476 = vadd.f32 %v448, %v471
      %vm477 = vcmp.ge.f32.partialorder %v473, 0.0
      %vm478 = vcmp.ge.f32.partialorder %v474, 0.0
      %vm479 = vcmp.ge.f32.partialorder %v475, 0.0
      %vm480 = vcmp.ge.f32.partialorder %v476, 0.0
      %v481 = vmul.f32 %v473, 0.2
      %v482 = vmul.f32 %v474, 0.2
      %v483 = vmul.f32 %v475, 0.2
      %v484 = vmul.f32 %v476, 0.2
      %v485 = vsel %vm477, %v473, %v481
      %v486 = vsel %vm478, %v474, %v482
      %v487 = vsel %vm479, %v475, %v483
      %v488 = vsel %vm480, %v476, %v484
      %v489 = vpack.c.bf16 %v486, %v485
      %v490 = vpack.c.bf16 %v488, %v487
      %v493 = vunpack.c.l.b16 %v489
      %v494 = vunpack.c.h.b16 %v489
      %v495 = vunpack.c.l.b16 %v490
      %v496 = vunpack.c.h.b16 %v490
      %v497 = vpack.c.b16 %v493, %v493
      %v498 = vpack.c.b16 %v494, %v494
      %v499 = vpack.c.b16 %v495, %v495
      %v500 = vpack.c.b16 %v496, %v496
      %505 = vst [vmem:[%s170] sm:$0xf] %v497
      %506 = vst [vmem:[%s170 + $0x4] sm:$0xf] %v498
      %507 = vst [vmem:[%s170 + $0x8] sm:$0xf] %v499
      %508 = vst [vmem:[%s170 + $0xc] sm:$0xf] %v500
      %p509 = scmp.lt.s32.totalorder %s14, 1
      %s510 = scalar_select %p509, %s14, 1
      %s511 = smul.addr %s510, 4
      %s512 = smul.addr %s511, 4
      %s513 = scalar_lea.vmem %s3, %s512
      // Predicated region
      $region33: #{ecg_reconstructor_forward.15} parent=31 // pred_check
        %p514 = pneg %p100
      $region34: #{ecg_reconstructor_forward.15} parent=31 // pred_check_branch
        %516 = sbr.rel (%p514) target = $region36
      $region35: #{ecg_reconstructor_forward.15} parent=31 // pred_region
        _
      $region36: #{ecg_reconstructor_forward.15} parent=31 // pred_fallthru
        _
    $region32: #{ecg_reconstructor_forward.15} parent=5 // pred_fallthru
      _
    %p517 = scmp.le.s32.totalorder 2, %s9
    // Predicated region
    $region37: #{ecg_reconstructor_forward.15} parent=5 // pred_check
      %p518 = pneg %p517
    $region38: #{ecg_reconstructor_forward.15} parent=5 // pred_check_branch
      %520 = sbr.rel (%p518) target = $region40
    $region39: #{ecg_reconstructor_forward.15} parent=5 // pred_region
      %s521 = ssub.s32 %s9, 2
      // Predicated region
      $region41: #{ecg_reconstructor_forward.15} parent=39 // pred_check
        %p522 = pneg %p106
      $region42: #{ecg_reconstructor_forward.15} parent=39 // pred_check_branch
        %524 = sbr.rel (%p522) target = $region44
      $region43: #{ecg_reconstructor_forward.15} parent=39 // pred_region
        %p525 = scmp.lt.s32.totalorder %s15, 1
        %s526 = scalar_select %p525, %s15, 1
        %s527 = smul.addr %s526, 4
        %s528 = smul.addr %s527, 4
        %s529 = scalar_lea.vmem %s3, %s528
      $region44: #{ecg_reconstructor_forward.15} parent=39 // pred_fallthru
        _
    $region40: #{ecg_reconstructor_forward.15} parent=5 // pred_fallthru
      _
  $region6: #{ecg_reconstructor_forward.15} parent=0 // loop_footer
    %s13 = sadd.s32 1, %s9
  $region7: #{ecg_reconstructor_forward.15} parent=0 // loop_footer_branch
    %8 = sbr.rel target = $region3
  $region8: #{ecg_reconstructor_forward.15} parent=0 // loop_exit
    _

// kernel: ecg_reconstructor_forward.16
$region0: #{ecg_reconstructor_forward.16}
  #allocation0 [shape = 'u32[]', space=smem, size = 0x4, offset = 0x4, fixed_abs, tag = 'smem constant byte address 0x4 - core index']
  #allocation1 [shape = 'u32[144,128]{1,0:T(1,128)}', space=vmem, size = 0x12000, scoped, tag = 'internal scratch']
  #allocation2 [shape = 'bf16[64,256]{1,0:T(16,128)(2,1)}', space=vmem, size = 0x8000, scoped, tag = 'scratch operand']
  %s0 = inlined_call_operand.vmem [shape: bf16[2,64,10], index: 0, kind: input, shape index: {}]
  %s1 = inlined_call_operand.vmem [shape: bf16[3,64,64], index: 1, kind: input, shape index: {}]
  %s2 = inlined_call_operand.vmem [shape: f32[64,1], index: 2, kind: input, shape index: {}]
  %s3 = inlined_call_operand.vmem [shape: bf16[2,64,128], index: 3, kind: output, shape index: {}]
  %s4 = sld [smem:[#allocation0]]
  $region45: #{ecg_reconstructor_forward.16} parent=0
    _
  %s6 = ssub.s32 1, %s4
  %s7 = scalar_select 0, %s6, %s4
  loop: start=0, step=1, limit=4
  $region2: #{ecg_reconstructor_forward.16} parent=0 // loop_pre_header
    _
  $region3: #{ecg_reconstructor_forward.16} parent=0 // loop_header
    %s9 = sphi 0, %s13
    %p10 = scmp.ge.s32.totalorder %s9, 4
    %s19 = sphi 0, %s21
    %s22 = sphi 0, %s19
    %s23 = sphi 0, %s22
    %s39 = sphi 0, %s23
    %s43 = sphi 0, %s43
    %s45 = sphi 0, %s43
    %s46 = sphi 0, %s45
    %s60 = sphi 0, %s46
    %s64 = sphi 0, %s64
    %s66 = sphi 0, %s64
    %s67 = sphi 0, %s66
    %s81 = sphi 0, %s67
    %s87 = sphi 0, %s89
    %s90 = sphi 0, %s87
    %s91 = sphi 0, %s90
    %s107 = sphi 0, %s91
  $region4: #{ecg_reconstructor_forward.16} parent=0 // loop_header_branch
    %12 = sbr.rel (%p10) target = $region8
  $region5: #{ecg_reconstructor_forward.16} parent=0 // loop_body
    %s14 = ssub.s32 %s9, 1
    %s15 = ssub.s32 %s9, 2
    %s16 = sadd.s32 %s9, 1
    %s17 = ssub.s32 %s9, %s16
    %p18 = scmp.eq.s32.totalorder %s17, 0
    %s20 = sadd.s32 %s19, 1
    %s21 = scalar_select %p18, %s19, %s20
    %p24 = pneg %p18
    %p25 = scmp.eq.s32.totalorder %s9, 1
    %p26 = por %p24, %p25
    %p27 = scmp.ne.s32.totalorder %s19, %s22
    %p28 = scmp.eq.s32.totalorder %s9, 0
    %p29 = por %p27, %p28
    %p30 = scmp.ne.s32.totalorder %s19, %s22
    %p31 = scmp.eq.s32.totalorder %s14, 1
    %p32 = por %p30, %p31
    %p33 = scmp.ne.s32.totalorder %s22, %s23
    %p34 = scmp.eq.s32.totalorder %s14, 0
    %p35 = por %p33, %p34
    %p36 = scmp.ne.s32.totalorder %s22, %s23
    %p37 = scmp.eq.s32.totalorder %s15, 1
    %p38 = por %p36, %p37
    %p40 = scmp.ne.s32.totalorder %s23, %s39
    %p41 = scmp.eq.s32.totalorder %s15, 0
    %p42 = por %p40, %p41
    %s44 = sadd.s32 %s43, 1
    %p47 = scmp.eq.s32.totalorder %s9, 1
    %p48 = scmp.ne.s32.totalorder %s43, %s45
    %p49 = scmp.eq.s32.totalorder %s9, 0
    %p50 = por %p48, %p49
    %p51 = scmp.ne.s32.totalorder %s43, %s45
    %p52 = scmp.eq.s32.totalorder %s14, 1
    %p53 = por %p51, %p52
    %p54 = scmp.ne.s32.totalorder %s45, %s46
    %p55 = scmp.eq.s32.totalorder %s14, 0
    %p56 = por %p54, %p55
    %p57 = scmp.ne.s32.totalorder %s45, %s46
    %p58 = scmp.eq.s32.totalorder %s15, 1
    %p59 = por %p57, %p58
    %p61 = scmp.ne.s32.totalorder %s46, %s60
    %p62 = scmp.eq.s32.totalorder %s15, 0
    %p63 = por %p61, %p62
    %s65 = sadd.s32 %s64, 1
    %p68 = scmp.eq.s32.totalorder %s9, 1
    %p69 = scmp.ne.s32.totalorder %s64, %s66
    %p70 = scmp.eq.s32.totalorder %s9, 0
    %p71 = por %p69, %p70
    %p72 = scmp.ne.s32.totalorder %s64, %s66
    %p73 = scmp.eq.s32.totalorder %s14, 1
    %p74 = por %p72, %p73
    %p75 = scmp.ne.s32.totalorder %s66, %s67
    %p76 = scmp.eq.s32.totalorder %s14, 0
    %p77 = por %p75, %p76
    %p78 = scmp.ne.s32.totalorder %s66, %s67
    %p79 = scmp.eq.s32.totalorder %s15, 1
    %p80 = por %p78, %p79
    %p82 = scmp.ne.s32.totalorder %s67, %s81
    %p83 = scmp.eq.s32.totalorder %s15, 0
    %p84 = por %p82, %p83
    %s85 = ssub.s32 %s9, %s16
    %p86 = scmp.eq.s32.totalorder %s85, 0
    %s88 = sadd.s32 %s87, 1
    %s89 = scalar_select %p86, %s87, %s88
    %p92 = pneg %p86
    %p93 = scmp.eq.s32.totalorder %s9, 1
    %p94 = por %p92, %p93
    %p95 = scmp.ne.s32.totalorder %s87, %s90
    %p96 = scmp.eq.s32.totalorder %s9, 0
    %p97 = por %p95, %p96
    %p98 = scmp.ne.s32.totalorder %s87, %s90
    %p99 = scmp.eq.s32.totalorder %s14, 1
    %p100 = por %p98, %p99
    %p101 = scmp.ne.s32.totalorder %s90, %s91
    %p102 = scmp.eq.s32.totalorder %s14, 0
    %p103 = por %p101, %p102
    %p104 = scmp.ne.s32.totalorder %s90, %s91
    %p105 = scmp.eq.s32.totalorder %s15, 1
    %p106 = por %p104, %p105
    %p108 = scmp.ne.s32.totalorder %s91, %s107
    %p109 = scmp.eq.s32.totalorder %s15, 0
    %p110 = por %p108, %p109
    %p111 = scmp.le.s32.totalorder 1, %s9
    %p112 = scmp.lt.s32.totalorder %s9, 3
    %p113 = pnand %p111, %p112
    %p114 = pneg %p113
    // Predicated region
    $region9: #{ecg_reconstructor_forward.16} parent=5 // pred_check
      _
    $region10: #{ecg_reconstructor_forward.16} parent=5 // pred_check_branch
      %116 = sbr.rel (%p113) target = $region12
    $region11: #{ecg_reconstructor_forward.16} parent=5 // pred_region
      %s117 = ssub.s32 %s9, 1
      // Predicated region
      $region13: #{ecg_reconstructor_forward.16} parent=11 // pred_check
        %p118 = pneg %p56
      $region14: #{ecg_reconstructor_forward.16} parent=11 // pred_check_branch
        %120 = sbr.rel (%p118) target = $region16
      $region15: #{ecg_reconstructor_forward.16} parent=11 // pred_region
        _
      $region16: #{ecg_reconstructor_forward.16} parent=11 // pred_fallthru
        _
      // Predicated region
      $region17: #{ecg_reconstructor_forward.16} parent=11 // pred_check
        %p121 = pneg %p77
      $region18: #{ecg_reconstructor_forward.16} parent=11 // pred_check_branch
        %123 = sbr.rel (%p121) target = $region20
      $region19: #{ecg_reconstructor_forward.16} parent=11 // pred_region
        _
      $region20: #{ecg_reconstructor_forward.16} parent=11 // pred_fallthru
        _
    $region12: #{ecg_reconstructor_forward.16} parent=5 // pred_fallthru
      _
    %p124 = scmp.lt.s32.totalorder %s9, 2
    // Predicated region
    $region21: #{ecg_reconstructor_forward.16} parent=5 // pred_check
      %p125 = pneg %p124
    $region22: #{ecg_reconstructor_forward.16} parent=5 // pred_check_branch
      %127 = sbr.rel (%p125) target = $region24
    $region23: #{ecg_reconstructor_forward.16} parent=5 // pred_region
      // Predicated region
      $region25: #{ecg_reconstructor_forward.16} parent=23 // pred_check
        %p128 = pneg %p29
      $region26: #{ecg_reconstructor_forward.16} parent=23 // pred_check_branch
        %130 = sbr.rel (%p128) target = $region28
      $region27: #{ecg_reconstructor_forward.16} parent=23 // pred_region
        %p131 = scmp.lt.s32.totalorder %s9, 1
        %s132 = scalar_select %p131, %s9, 1
        %s133 = smul.addr %s132, 8
        %s134 = smul.addr %s133, 4
        %s135 = scalar_lea.vmem %s0, %s134
      $region28: #{ecg_reconstructor_forward.16} parent=23 // pred_fallthru
        _
    $region24: #{ecg_reconstructor_forward.16} parent=5 // pred_fallthru
      _
    %p136 = scmp.le.s32.totalorder 1, %s9
    %p137 = scmp.lt.s32.totalorder %s9, 3
    %p138 = pnand %p136, %p137
    %p139 = pneg %p138
    // Predicated region
    $region29: #{ecg_reconstructor_forward.16} parent=5 // pred_check
      _
    $region30: #{ecg_reconstructor_forward.16} parent=5 // pred_check_branch
      %141 = sbr.rel (%p138) target = $region32
    $region31: #{ecg_reconstructor_forward.16} parent=5 // pred_region
      %s142 = ssub.s32 %s9, 1
      %p143 = scmp.lt.s32.totalorder %s14, 1
      %s144 = scalar_select %p143, %s14, 1
      %s145 = smul.addr %s144, 8
      %s146 = smul.addr %s145, 4
      %s147 = scalar_lea.vmem %s0, %s146
      %p148 = pneg %p35
      %p149 = pneg %p32
      %p150 = pneg %p56
      %p151 = pneg %p53
      %p152 = pneg %p77
      %p153 = pneg %p74
      %p154 = pneg %p103
      %p155 = pneg %p100
      %p156 = scmp.lt.s32.totalorder %s14, 1
      %s157 = scalar_select %p156, %s14, 1
      %s158 = smul.addr %s157, 8
      %s159 = smul.addr %s158, 4
      %s160 = scalar_lea.vmem %s3, %s159
      %p161 = scmp.lt.s32.totalorder %s14, 1
      %s162 = scalar_select %p161, %s14, 1
      %s163 = smul.addr %s162, 8
      %s164 = smul.addr %s163, 4
      %s165 = scalar_lea.vmem %s0, %s164
      %p166 = scmp.lt.s32.totalorder %s14, 1
      %s167 = scalar_select %p166, %s14, 1
      %s168 = smul.addr %s167, 8
      %s169 = smul.addr %s168, 4
      %s170 = scalar_lea.vmem %s3, %s169
      %172 = vst [vmem:[#allocation2] sm:$0xff] 0
      %173 = vst [vmem:[#allocation2 + $0x8] sm:$0xff] 0
      %174 = vst [vmem:[#allocation2 + $0x10] sm:$0xff] 0
      %175 = vst [vmem:[#allocation2 + $0x18] sm:$0xff] 0
      %176 = vst [vmem:[#allocation2 + $0x20] sm:$0xff] 0
      %177 = vst [vmem:[#allocation2 + $0x28] sm:$0xff] 0
      %178 = vst [vmem:[#allocation2 + $0x30] sm:$0xff] 0
      %179 = vst [vmem:[#allocation2 + $0x38] sm:$0xff] 0
      %v180 = vld [vmem:[%s165] sm:$0xf]
      %v181 = vld [vmem:[%s165 + $0x4] sm:$0xf]
      %v182 = vld [vmem:[%s165 + $0x8] sm:$0xf]
      %v183 = vld [vmem:[%s165 + $0xc] sm:$0xf]
      %v184 = vld [vmem:[%s165 + $0x10] sm:$0xf]
      %v185 = vld [vmem:[%s165 + $0x14] sm:$0xf]
      %v186 = vld [vmem:[%s165 + $0x18] sm:$0xf]
      %v187 = vld [vmem:[%s165 + $0x1c] sm:$0xf]
      %v196 = vunpack.c.l.b16 %v180
      %v197 = vunpack.c.l.b16 %v181
      %v198 = vunpack.c.l.b16 %v182
      %v199 = vunpack.c.l.b16 %v183
      %v200 = vunpack.c.l.b16 %v184
      %v201 = vunpack.c.l.b16 %v185
      %v202 = vunpack.c.l.b16 %v186
      %v203 = vunpack.c.l.b16 %v187
      %v204 = vpack.c.b16 %v197, %v196
      %v205 = vpack.c.b16 %v199, %v198
      %v206 = vpack.c.b16 %v201, %v200
      %v207 = vpack.c.b16 %v203, %v202
      %208 = vrot.lane.b32.xlu0 %v204, 1
      %v209 = vpop.permute.xlu0 %208
      %210 = vrot.lane.b32.xlu0 %v205, 1
      %v211 = vpop.permute.xlu0 %210
      %212 = vrot.lane.b32.xlu0 %v206, 1
      %v213 = vpop.permute.xlu0 %212
      %214 = vrot.lane.b32.xlu0 %v207, 1
      %v215 = vpop.permute.xlu0 %214
      %vm220 = vcmask 89096
      %221 = vst.msk [vmem:[#allocation2] sm:$0xff] %vm220, %v209
      %222 = vst.msk [vmem:[#allocation2 + $0x10] sm:$0xff] %vm220, %v211
      %223 = vst.msk [vmem:[#allocation2 + $0x20] sm:$0xff] %vm220, %v213
      %224 = vst.msk [vmem:[#allocation2 + $0x30] sm:$0xff] %vm220, %v215
      %v225 = vld [vmem:[%s1] sm:$0xf]
      %v226 = vld [vmem:[%s1 + $0x4] sm:$0xf]
      %v227 = vld [vmem:[%s1 + $0x8] sm:$0xf]
      %v228 = vld [vmem:[%s1 + $0xc] sm:$0xf]
      %v229 = vld [vmem:[%s1 + $0x10] sm:$0xf]
      %v230 = vld [vmem:[%s1 + $0x14] sm:$0xf]
      %v231 = vld [vmem:[%s1 + $0x18] sm:$0xf]
      %v232 = vld [vmem:[%s1 + $0x1c] sm:$0xf]
      %v233 = vld [vmem:[#allocation2] sm:$0xff]
      %v234 = vld [vmem:[#allocation2 + $0x10] sm:$0xff]
      %v235 = vld [vmem:[#allocation2 + $0x20] sm:$0xff]
      %v236 = vld [vmem:[#allocation2 + $0x30] sm:$0xff]
      %s237 = scalar_lea.vmem %s1, 32
      %v238 = vld [vmem:[%s237] sm:$0xf]
      %v239 = vld [vmem:[%s237 + $0x4] sm:$0xf]
      %v240 = vld [vmem:[%s237 + $0x8] sm:$0xf]
      %v241 = vld [vmem:[%s237 + $0xc] sm:$0xf]
      %v242 = vld [vmem:[%s237 + $0x10] sm:$0xf]
      %v243 = vld [vmem:[%s237 + $0x14] sm:$0xf]
      %v244 = vld [vmem:[%s237 + $0x18] sm:$0xf]
      %v245 = vld [vmem:[%s237 + $0x1c] sm:$0xf]
      %v246 = vld [vmem:[#allocation2] sm:$0xff]
      %v247 = vld [vmem:[#allocation2 + $0x8] sm:$0xff]
      %v248 = vld [vmem:[#allocation2 + $0x10] sm:$0xff]
      %v249 = vld [vmem:[#allocation2 + $0x18] sm:$0xff]
      %v250 = vld [vmem:[#allocation2 + $0x20] sm:$0xff]
      %v251 = vld [vmem:[#allocation2 + $0x28] sm:$0xff]
      %v252 = vld [vmem:[#allocation2 + $0x30] sm:$0xff]
      %v253 = vld [vmem:[#allocation2 + $0x38] sm:$0xff]
      %v262 = vunpack.c.l.b16 %v238
      %v263 = vunpack.c.l.b16 %v239
      %v264 = vunpack.c.l.b16 %v240
      %v265 = vunpack.c.l.b16 %v241
      %v266 = vunpack.c.l.b16 %v242
      %v267 = vunpack.c.l.b16 %v243
      %v268 = vunpack.c.l.b16 %v244
      %v269 = vunpack.c.l.b16 %v245
      %v270 = vpack.c.b16 %v263, %v262
      %v271 = vpack.c.b16 %v265, %v264
      %v272 = vpack.c.b16 %v267, %v266
      %v273 = vpack.c.b16 %v269, %v268
      %282 = vrot.lane.b32.xlu0 %v246, 127
      %v283 = vpop.permute.xlu0 %282
      %284 = vrot.lane.b32.xlu0 %v247, 127
      %v285 = vpop.permute.xlu0 %284
      %286 = vrot.lane.b32.xlu0 %v248, 127
      %v287 = vpop.permute.xlu0 %286
      %288 = vrot.lane.b32.xlu0 %v249, 127
      %v289 = vpop.permute.xlu0 %288
      %290 = vrot.lane.b32.xlu0 %v250, 127
      %v291 = vpop.permute.xlu0 %290
      %292 = vrot.lane.b32.xlu0 %v251, 127
      %v293 = vpop.permute.xlu0 %292
      %294 = vrot.lane.b32.xlu0 %v252, 127
      %v295 = vpop.permute.xlu0 %294
      %296 = vrot.lane.b32.xlu0 %v253, 127
      %v297 = vpop.permute.xlu0 %296
      %vm298 = vcmask 1039360
      %v299 = vsel %vm298, %v283, %v285
      %v300 = vsel %vm298, %v287, %v289
      %v301 = vsel %vm298, %v291, %v293
      %v302 = vsel %vm298, %v295, %v297
      %vm307 = vcmask 523264
      %v309 = vsel %vm307, %v270, 0
      %v312 = vsel %vm307, %v271, 0
      %v315 = vsel %vm307, %v272, 0
      %v318 = vsel %vm307, %v273, 0
      %320 = vmatprep.subr.bf16.mxu0 0
      %321 = vmatpush1.bf16.msra.mxu0 %v299
      %322 = vmatprep.subr.bf16.mxu0 0
      %323 = vmatpush1.bf16.msra.mxu0 %v300
      %324 = vmatprep.subr.bf16.mxu0 0
      %325 = vmatpush1.bf16.msra.mxu0 %v301
      %326 = vmatprep.subr.bf16.mxu0 0
      %327 = vmatpush1.bf16.msra.mxu0 %v302
      %328 = vmatprep.subr.bf16.mxu0 0
      %329 = vmatpush1.bf16.msra.mxu0 0
      %330 = vmatprep.subr.bf16.mxu0 0
      %331 = vmatpush1.bf16.msra.mxu0 0
      %332 = vmatprep.subr.bf16.mxu0 0
      %333 = vmatpush1.bf16.msra.mxu0 0
      %334 = vmatprep.subr.bf16.mxu0 0
      %335 = vmatpush1.bf16.msra.mxu0 0
      %336 = vmatprep.subr.bf16.mxu0 0
      %337 = vmatpush1.bf16.msra.mxu0 0
      %338 = vmatprep.subr.bf16.mxu0 0
      %339 = vmatpush1.bf16.msra.mxu0 0
      %340 = vmatprep.subr.bf16.mxu0 0
      %341 = vmatpush1.bf16.msra.mxu0 0
      %342 = vmatprep.subr.bf16.mxu0 0
      %343 = vmatpush1.bf16.msra.mxu0 0
      %344 = vmatprep.subr.bf16.mxu0 0
      %345 = vmatpush1.bf16.msra.mxu0 0
      %346 = vmatprep.subr.bf16.mxu0 0
      %347 = vmatpush1.bf16.msra.mxu0 0
      %348 = vmatprep.subr.bf16.mxu0 0
      %349 = vmatpush1.bf16.msra.mxu0 0
      %350 = vmatprep.subr.bf16.mxu0 0
      %351 = vmatpush1.bf16.msra.mxu0 0
      %352 = vmatprep.mubr.bf16.mxu0 0
      %353 = vmatmul.mubr.bf16.gmra.mrb[0].mxu0 %v309
      %v354 = vpop.f32.mrb[0].mxu0
      %v355 = vadd.f32 0.0, %v354
      %v356 = vpop.f32.mrb[0].mxu0
      %v357 = vpop.f32.mrb[0].mxu0
      %v358 = vadd.f32 0.0, %v357
      %v359 = vpop.f32.mrb[0].mxu0
      %360 = vmatprep.mubr.bf16.mxu0 0
      %361 = vmatmul.mubr.bf16.gmra.mrb[0].mxu0 %v312
      %v362 = vpop.f32.mrb[0].mxu0
      %v363 = vadd.f32 0.0, %v362
      %v364 = vpop.f32.mrb[0].mxu0
      %v365 = vpop.f32.mrb[0].mxu0
      %v366 = vadd.f32 0.0, %v365
      %v367 = vpop.f32.mrb[0].mxu0
      %368 = vmatprep.mubr.bf16.mxu0 0
      %369 = vmatmul.mubr.bf16.gmra.mrb[0].mxu0 %v315
      %v370 = vpop.f32.mrb[0].mxu0
      %v371 = vadd.f32 0.0, %v370
      %v372 = vpop.f32.mrb[0].mxu0
      %v373 = vpop.f32.mrb[0].mxu0
      %v374 = vadd.f32 0.0, %v373
      %v375 = vpop.f32.mrb[0].mxu0
      %376 = vmatprep.mubr.bf16.mxu0 0
      %377 = vmatmul.mubr.bf16.gmra.mrb[0].mxu0 %v318
      %v378 = vpop.f32.mrb[0].mxu0
      %v379 = vadd.f32 0.0, %v378
      %v380 = vpop.f32.mrb[0].mxu0
      %v381 = vpop.f32.mrb[0].mxu0
      %v382 = vadd.f32 0.0, %v381
      %v383 = vpop.f32.mrb[0].mxu0
      %384 = vdwg.mxu0
      %v393 = vunpack.c.l.b16 %v225
      %v394 = vunpack.c.l.b16 %v226
      %v395 = vunpack.c.l.b16 %v227
      %v396 = vunpack.c.l.b16 %v228
      %v397 = vunpack.c.l.b16 %v229
      %v398 = vunpack.c.l.b16 %v230
      %v399 = vunpack.c.l.b16 %v231
      %v400 = vunpack.c.l.b16 %v232
      %v401 = vpack.c.b16 %v394, %v393
      %v402 = vpack.c.b16 %v396, %v395
      %v403 = vpack.c.b16 %v398, %v397
      %v404 = vpack.c.b16 %v400, %v399
      %v406 = vsel %vm307, %v401, 0
      %v409 = vsel %vm307, %v402, 0
      %v412 = vsel %vm307, %v403, 0
      %v415 = vsel %vm307, %v404, 0
      %417 = vmatprep.subr.bf16.mxu0 0
      %418 = vmatpush1.bf16.msra.mxu0 %v233
      %419 = vmatprep.subr.bf16.mxu0 0
      %420 = vmatpush1.bf16.msra.mxu0 %v234
      %421 = vmatprep.subr.bf16.mxu0 0
      %422 = vmatpush1.bf16.msra.mxu0 %v235
      %423 = vmatprep.subr.bf16.mxu0 0
      %424 = vmatpush1.bf16.msra.mxu0 %v236
      %425 = vmatprep.subr.bf16.mxu0 0
      %426 = vmatpush1.bf16.msra.mxu0 0
      %427 = vmatprep.subr.bf16.mxu0 0
      %428 = vmatpush1.bf16.msra.mxu0 0
      %429 = vmatprep.subr.bf16.mxu0 0
      %430 = vmatpush1.bf16.msra.mxu0 0
      %431 = vmatprep.subr.bf16.mxu0 0
      %432 = vmatpush1.bf16.msra.mxu0 0
      %433 = vmatprep.subr.bf16.mxu0 0
      %434 = vmatpush1.bf16.msra.mxu0 0
      %435 = vmatprep.subr.bf16.mxu0 0
      %436 = vmatpush1.bf16.msra.mxu0 0
      %437 = vmatprep.subr.bf16.mxu0 0
      %438 = vmatpush1.bf16.msra.mxu0 0
      %439 = vmatprep.subr.bf16.mxu0 0
      %440 = vmatpush1.bf16.msra.mxu0 0
      %441 = vmatprep.subr.bf16.mxu0 0
      %442 = vmatpush1.bf16.msra.mxu0 0
      %443 = vmatprep.subr.bf16.mxu0 0
      %444 = vmatpush1.bf16.msra.mxu0 0
      %445 = vmatprep.subr.bf16.mxu0 0
      %446 = vmatpush1.bf16.msra.mxu0 0
      %447 = vmatprep.subr.bf16.mxu0 0
      %448 = vmatpush1.bf16.msra.mxu0 0
      %449 = vmatprep.mubr.bf16.mxu0 0
      %450 = vmatmul.mubr.bf16.gmra.mrb[0].mxu0 %v406
      %v451 = vpop.f32.mrb[0].mxu0
      %v452 = vadd.f32 %v355, %v451
      %v453 = vpop.f32.mrb[0].mxu0
      %v454 = vpop.f32.mrb[0].mxu0
      %v455 = vadd.f32 %v358, %v454
      %v456 = vpop.f32.mrb[0].mxu0
      %457 = vmatprep.mubr.bf16.mxu0 0
      %458 = vmatmul.mubr.bf16.gmra.mrb[0].mxu0 %v409
      %v459 = vpop.f32.mrb[0].mxu0
      %v460 = vadd.f32 %v363, %v459
      %v461 = vpop.f32.mrb[0].mxu0
      %v462 = vpop.f32.mrb[0].mxu0
      %v463 = vadd.f32 %v366, %v462
      %v464 = vpop.f32.mrb[0].mxu0
      %465 = vmatprep.mubr.bf16.mxu0 0
      %466 = vmatmul.mubr.bf16.gmra.mrb[0].mxu0 %v412
      %v467 = vpop.f32.mrb[0].mxu0
      %v468 = vadd.f32 %v371, %v467
      %v469 = vpop.f32.mrb[0].mxu0
      %v470 = vpop.f32.mrb[0].mxu0
      %v471 = vadd.f32 %v374, %v470
      %v472 = vpop.f32.mrb[0].mxu0
      %473 = vmatprep.mubr.bf16.mxu0 0
      %474 = vmatmul.mubr.bf16.gmra.mrb[0].mxu0 %v415
      %v475 = vpop.f32.mrb[0].mxu0
      %v476 = vadd.f32 %v379, %v475
      %v477 = vpop.f32.mrb[0].mxu0
      %v478 = vpop.f32.mrb[0].mxu0
      %v479 = vadd.f32 %v382, %v478
      %v480 = vpop.f32.mrb[0].mxu0
      %481 = vdwg.mxu0
      %s482 = scalar_lea.vmem %s1, 64
      %v483 = vld [vmem:[%s482] sm:$0xf]
      %v484 = vld [vmem:[%s482 + $0x4] sm:$0xf]
      %v485 = vld [vmem:[%s482 + $0x8] sm:$0xf]
      %v486 = vld [vmem:[%s482 + $0xc] sm:$0xf]
      %v487 = vld [vmem:[%s482 + $0x10] sm:$0xf]
      %v488 = vld [vmem:[%s482 + $0x14] sm:$0xf]
      %v489 = vld [vmem:[%s482 + $0x18] sm:$0xf]
      %v490 = vld [vmem:[%s482 + $0x1c] sm:$0xf]
      %v499 = vunpack.c.l.b16 %v483
      %v500 = vunpack.c.l.b16 %v484
      %v501 = vunpack.c.l.b16 %v485
      %v502 = vunpack.c.l.b16 %v486
      %v503 = vunpack.c.l.b16 %v487
      %v504 = vunpack.c.l.b16 %v488
      %v505 = vunpack.c.l.b16 %v489
      %v506 = vunpack.c.l.b16 %v490
      %v507 = vpack.c.b16 %v500, %v499
      %v508 = vpack.c.b16 %v502, %v501
      %v509 = vpack.c.b16 %v504, %v503
      %v510 = vpack.c.b16 %v506, %v505
      %511 = vrot.lane.b32.xlu0 %v246, 126
      %v512 = vpop.permute.xlu0 %511
      %513 = vrot.lane.b32.xlu0 %v247, 126
      %v514 = vpop.permute.xlu0 %513
      %515 = vrot.lane.b32.xlu0 %v248, 126
      %v516 = vpop.permute.xlu0 %515
      %517 = vrot.lane.b32.xlu0 %v249, 126
      %v518 = vpop.permute.xlu0 %517
      %519 = vrot.lane.b32.xlu0 %v250, 126
      %v520 = vpop.permute.xlu0 %519
      %521 = vrot.lane.b32.xlu0 %v251, 126
      %v522 = vpop.permute.xlu0 %521
      %523 = vrot.lane.b32.xlu0 %v252, 126
      %v524 = vpop.permute.xlu0 %523
      %525 = vrot.lane.b32.xlu0 %v253, 126
      %v526 = vpop.permute.xlu0 %525
      %vm527 = vcmask 1031168
      %v528 = vsel %vm527, %v512, %v514
      %v529 = vsel %vm527, %v516, %v518
      %v530 = vsel %vm527, %v520, %v522
      %v531 = vsel %vm527, %v524, %v526
      %v537 = vsel %vm307, %v507, 0
      %v540 = vsel %vm307, %v508, 0
      %v543 = vsel %vm307, %v509, 0
      %v546 = vsel %vm307, %v510, 0
      %548 = vmatprep.subr.bf16.mxu0 0
      %549 = vmatpush1.bf16.msra.mxu0 %v528
      %550 = vmatprep.subr.bf16.mxu0 0
      %551 = vmatpush1.bf16.msra.mxu0 %v529
      %552 = vmatprep.subr.bf16.mxu0 0
      %553 = vmatpush1.bf16.msra.mxu0 %v530
      %554 = vmatprep.subr.bf16.mxu0 0
      %555 = vmatpush1.bf16.msra.mxu0 %v531
      %556 = vmatprep.subr.bf16.mxu0 0
      %557 = vmatpush1.bf16.msra.mxu0 0
      %558 = vmatprep.subr.bf16.mxu0 0
      %559 = vmatpush1.bf16.msra.mxu0 0
      %560 = vmatprep.subr.bf16.mxu0 0
      %561 = vmatpush1.bf16.msra.mxu0 0
      %562 = vmatprep.subr.bf16.mxu0 0
      %563 = vmatpush1.bf16.msra.mxu0 0
      %564 = vmatprep.subr.bf16.mxu0 0
      %565 = vmatpush1.bf16.msra.mxu0 0
      %566 = vmatprep.subr.bf16.mxu0 0
      %567 = vmatpush1.bf16.msra.mxu0 0
      %568 = vmatprep.subr.bf16.mxu0 0
      %569 = vmatpush1.bf16.msra.mxu0 0
      %570 = vmatprep.subr.bf16.mxu0 0
      %571 = vmatpush1.bf16.msra.mxu0 0
      %572 = vmatprep.subr.bf16.mxu0 0
      %573 = vmatpush1.bf16.msra.mxu0 0
      %574 = vmatprep.subr.bf16.mxu0 0
      %575 = vmatpush1.bf16.msra.mxu0 0
      %576 = vmatprep.subr.bf16.mxu0 0
      %577 = vmatpush1.bf16.msra.mxu0 0
      %578 = vmatprep.subr.bf16.mxu0 0
      %579 = vmatpush1.bf16.msra.mxu0 0
      %580 = vmatprep.mubr.bf16.mxu0 0
      %581 = vmatmul.mubr.bf16.gmra.mrb[0].mxu0 %v537
      %v582 = vpop.f32.mrb[0].mxu0
      %v583 = vadd.f32 0.0, %v582
      %v584 = vpop.f32.mrb[0].mxu0
      %v585 = vpop.f32.mrb[0].mxu0
      %v586 = vadd.f32 0.0, %v585
      %v587 = vpop.f32.mrb[0].mxu0
      %588 = vmatprep.mubr.bf16.mxu0 0
      %589 = vmatmul.mubr.bf16.gmra.mrb[0].mxu0 %v540
      %v590 = vpop.f32.mrb[0].mxu0
      %v591 = vadd.f32 0.0, %v590
      %v592 = vpop.f32.mrb[0].mxu0
      %v593 = vpop.f32.mrb[0].mxu0
      %v594 = vadd.f32 0.0, %v593
      %v595 = vpop.f32.mrb[0].mxu0
      %596 = vmatprep.mubr.bf16.mxu0 0
      %597 = vmatmul.mubr.bf16.gmra.mrb[0].mxu0 %v543
      %v598 = vpop.f32.mrb[0].mxu0
      %v599 = vadd.f32 0.0, %v598
      %v600 = vpop.f32.mrb[0].mxu0
      %v601 = vpop.f32.mrb[0].mxu0
      %v602 = vadd.f32 0.0, %v601
      %v603 = vpop.f32.mrb[0].mxu0
      %604 = vmatprep.mubr.bf16.mxu0 0
      %605 = vmatmul.mubr.bf16.gmra.mrb[0].mxu0 %v546
      %v606 = vpop.f32.mrb[0].mxu0
      %v607 = vadd.f32 0.0, %v606
      %v608 = vpop.f32.mrb[0].mxu0
      %v609 = vpop.f32.mrb[0].mxu0
      %v610 = vadd.f32 0.0, %v609
      %v611 = vpop.f32.mrb[0].mxu0
      %612 = vdwg.mxu0
      %v613 = vadd.f32 %v452, %v583
      %v614 = vadd.f32 %v455, %v586
      %v615 = vadd.f32 %v460, %v591
      %v616 = vadd.f32 %v463, %v594
      %v617 = vadd.f32 %v468, %v599
      %v618 = vadd.f32 %v471, %v602
      %v619 = vadd.f32 %v476, %v607
      %v620 = vadd.f32 %v479, %v610
      %v621 = vld [vmem:[%s2] sm:$0xff]
      %v622 = vld [vmem:[%s2 + $0x8] sm:$0xff]
      %v623 = vld [vmem:[%s2 + $0x10] sm:$0xff]
      %v624 = vld [vmem:[%s2 + $0x18] sm:$0xff]
      %v625 = vld [vmem:[%s2 + $0x20] sm:$0xff]
      %v626 = vld [vmem:[%s2 + $0x28] sm:$0xff]
      %v627 = vld [vmem:[%s2 + $0x30] sm:$0xff]
      %v628 = vld [vmem:[%s2 + $0x38] sm:$0xff]
      %630 = vset.pattern.permute.xlu0 0
      %631 = vperm.xlu0 %630, %v621
      %v632 = vpop.permute.xlu0 %631
      %635 = vset.pattern.permute.xlu0 0
      %636 = vperm.xlu0 %635, %v622
      %v637 = vpop.permute.xlu0 %636
      %640 = vset.pattern.permute.xlu0 0
      %641 = vperm.xlu0 %640, %v623
      %v642 = vpop.permute.xlu0 %641
      %645 = vset.pattern.permute.xlu0 0
      %646 = vperm.xlu0 %645, %v624
      %v647 = vpop.permute.xlu0 %646
      %650 = vset.pattern.permute.xlu0 0
      %651 = vperm.xlu0 %650, %v625
      %v652 = vpop.permute.xlu0 %651
      %655 = vset.pattern.permute.xlu0 0
      %656 = vperm.xlu0 %655, %v626
      %v657 = vpop.permute.xlu0 %656
      %660 = vset.pattern.permute.xlu0 0
      %661 = vperm.xlu0 %660, %v627
      %v662 = vpop.permute.xlu0 %661
      %665 = vset.pattern.permute.xlu0 0
      %666 = vperm.xlu0 %665, %v628
      %v667 = vpop.permute.xlu0 %666
      %v669 = vadd.f32 %v613, %v632
      %v670 = vadd.f32 %v614, %v637
      %v671 = vadd.f32 %v615, %v642
      %v672 = vadd.f32 %v616, %v647
      %v673 = vadd.f32 %v617, %v652
      %v674 = vadd.f32 %v618, %v657
      %v675 = vadd.f32 %v619, %v662
      %v676 = vadd.f32 %v620, %v667
      %vm677 = vcmp.ge.f32.partialorder %v669, 0.0
      %vm678 = vcmp.ge.f32.partialorder %v670, 0.0
      %vm679 = vcmp.ge.f32.partialorder %v671, 0.0
      %vm680 = vcmp.ge.f32.partialorder %v672, 0.0
      %vm681 = vcmp.ge.f32.partialorder %v673, 0.0
      %vm682 = vcmp.ge.f32.partialorder %v674, 0.0
      %vm683 = vcmp.ge.f32.partialorder %v675, 0.0
      %vm684 = vcmp.ge.f32.partialorder %v676, 0.0
      %v685 = vmul.f32 %v669, 0.2
      %v686 = vmul.f32 %v670, 0.2
      %v687 = vmul.f32 %v671, 0.2
      %v688 = vmul.f32 %v672, 0.2
      %v689 = vmul.f32 %v673, 0.2
      %v690 = vmul.f32 %v674, 0.2
      %v691 = vmul.f32 %v675, 0.2
      %v692 = vmul.f32 %v676, 0.2
      %v693 = vsel %vm677, %v669, %v685
      %v694 = vsel %vm678, %v670, %v686
      %v695 = vsel %vm679, %v671, %v687
      %v696 = vsel %vm680, %v672, %v688
      %v697 = vsel %vm681, %v673, %v689
      %v698 = vsel %vm682, %v674, %v690
      %v699 = vsel %vm683, %v675, %v691
      %v700 = vsel %vm684, %v676, %v692
      %v701 = vpack.c.bf16 %v694, %v693
      %v702 = vpack.c.bf16 %v696, %v695
      %v703 = vpack.c.bf16 %v698, %v697
      %v704 = vpack.c.bf16 %v700, %v699
      %v709 = vunpack.c.l.b16 %v701
      %v710 = vunpack.c.h.b16 %v701
      %v711 = vunpack.c.l.b16 %v702
      %v712 = vunpack.c.h.b16 %v702
      %v713 = vunpack.c.l.b16 %v703
      %v714 = vunpack.c.h.b16 %v703
      %v715 = vunpack.c.l.b16 %v704
      %v716 = vunpack.c.h.b16 %v704
      %v717 = vpack.c.b16 %v709, %v709
      %v718 = vpack.c.b16 %v710, %v710
      %v719 = vpack.c.b16 %v711, %v711
      %v720 = vpack.c.b16 %v712, %v712
      %v721 = vpack.c.b16 %v713, %v713
      %v722 = vpack.c.b16 %v714, %v714
      %v723 = vpack.c.b16 %v715, %v715
      %v724 = vpack.c.b16 %v716, %v716
      %733 = vst [vmem:[%s170] sm:$0xf] %v717
      %734 = vst [vmem:[%s170 + $0x4] sm:$0xf] %v718
      %735 = vst [vmem:[%s170 + $0x8] sm:$0xf] %v719
      %736 = vst [vmem:[%s170 + $0xc] sm:$0xf] %v720
      %737 = vst [vmem:[%s170 + $0x10] sm:$0xf] %v721
      %738 = vst [vmem:[%s170 + $0x14] sm:$0xf] %v722
      %739 = vst [vmem:[%s170 + $0x18] sm:$0xf] %v723
      %740 = vst [vmem:[%s170 + $0x1c] sm:$0xf] %v724
      %p741 = scmp.lt.s32.totalorder %s14, 1
      %s742 = scalar_select %p741, %s14, 1
      %s743 = smul.addr %s742, 8
      %s744 = smul.addr %s743, 4
      %s745 = scalar_lea.vmem %s3, %s744
      // Predicated region
      $region33: #{ecg_reconstructor_forward.16} parent=31 // pred_check
        %p746 = pneg %p100
      $region34: #{ecg_reconstructor_forward.16} parent=31 // pred_check_branch
        %748 = sbr.rel (%p746) target = $region36
      $region35: #{ecg_reconstructor_forward.16} parent=31 // pred_region
        _
      $region36: #{ecg_reconstructor_forward.16} parent=31 // pred_fallthru
        _
    $region32: #{ecg_reconstructor_forward.16} parent=5 // pred_fallthru
      _
    %p749 = scmp.le.s32.totalorder 2, %s9
    // Predicated region
    $region37: #{ecg_reconstructor_forward.16} parent=5 // pred_check
      %p750 = pneg %p749
    $region38: #{ecg_reconstructor_forward.16} parent=5 // pred_check_branch
      %752 = sbr.rel (%p750) target = $region40
    $region39: #{ecg_reconstructor_forward.16} parent=5 // pred_region
      %s753 = ssub.s32 %s9, 2
      // Predicated region
      $region41: #{ecg_reconstructor_forward.16} parent=39 // pred_check
        %p754 = pneg %p106
      $region42: #{ecg_reconstructor_forward.16} parent=39 // pred_check_branch
        %756 = sbr.rel (%p754) target = $region44
      $region43: #{ecg_reconstructor_forward.16} parent=39 // pred_region
        %p757 = scmp.lt.s32.totalorder %s15, 1
        %s758 = scalar_select %p757, %s15, 1
        %s759 = smul.addr %s758, 8
        %s760 = smul.addr %s759, 4
        %s761 = scalar_lea.vmem %s3, %s760
      $region44: #{ecg_reconstructor_forward.16} parent=39 // pred_fallthru
        _
    $region40: #{ecg_reconstructor_forward.16} parent=5 // pred_fallthru
      _
  $region6: #{ecg_reconstructor_forward.16} parent=0 // loop_footer
    %s13 = sadd.s32 1, %s9
  $region7: #{ecg_reconstructor_forward.16} parent=0 // loop_footer_branch
    %8 = sbr.rel target = $region3
  $region8: #{ecg_reconstructor_forward.16} parent=0 // loop_exit
    _

// kernel: ecg_reconstructor_forward.17
$region0: #{ecg_reconstructor_forward.17}
  #allocation0 [shape = 'u32[]', space=smem, size = 0x4, offset = 0x4, fixed_abs, tag = 'smem constant byte address 0x4 - core index']
  #allocation1 [shape = 'u32[144,128]{1,0:T(1,128)}', space=vmem, size = 0x12000, scoped, tag = 'internal scratch']
  #allocation2 [shape = 'bf16[64,256]{1,0:T(16,128)(2,1)}', space=vmem, size = 0x8000, scoped, tag = 'scratch operand']
  %s0 = inlined_call_operand.vmem [shape: bf16[2,64,128], index: 0, kind: input, shape index: {}]
  %s1 = inlined_call_operand.vmem [shape: bf16[10,16,64], index: 1, kind: input, shape index: {}]
  %s2 = inlined_call_operand.vmem [shape: f32[16,1], index: 2, kind: input, shape index: {}]
  %s3 = inlined_call_operand.vmem [shape: bf16[2,16,128], index: 3, kind: output, shape index: {}]
  %s4 = sld [smem:[#allocation0]]
  $region45: #{ecg_reconstructor_forward.17} parent=0
    _
  %s6 = ssub.s32 1, %s4
  %s7 = scalar_select 0, %s6, %s4
  loop: start=0, step=1, limit=4
  $region2: #{ecg_reconstructor_forward.17} parent=0 // loop_pre_header
    _
  $region3: #{ecg_reconstructor_forward.17} parent=0 // loop_header
    %s9 = sphi 0, %s13
    %p10 = scmp.ge.s32.totalorder %s9, 4
    %s19 = sphi 0, %s21
    %s22 = sphi 0, %s19
    %s23 = sphi 0, %s22
    %s39 = sphi 0, %s23
    %s43 = sphi 0, %s43
    %s45 = sphi 0, %s43
    %s46 = sphi 0, %s45
    %s60 = sphi 0, %s46
    %s64 = sphi 0, %s64
    %s66 = sphi 0, %s64
    %s67 = sphi 0, %s66
    %s81 = sphi 0, %s67
    %s87 = sphi 0, %s89
    %s90 = sphi 0, %s87
    %s91 = sphi 0, %s90
    %s107 = sphi 0, %s91
  $region4: #{ecg_reconstructor_forward.17} parent=0 // loop_header_branch
    %12 = sbr.rel (%p10) target = $region8
  $region5: #{ecg_reconstructor_forward.17} parent=0 // loop_body
    %s14 = ssub.s32 %s9, 1
    %s15 = ssub.s32 %s9, 2
    %s16 = sadd.s32 %s9, 1
    %s17 = ssub.s32 %s9, %s16
    %p18 = scmp.eq.s32.totalorder %s17, 0
    %s20 = sadd.s32 %s19, 1
    %s21 = scalar_select %p18, %s19, %s20
    %p24 = pneg %p18
    %p25 = scmp.eq.s32.totalorder %s9, 1
    %p26 = por %p24, %p25
    %p27 = scmp.ne.s32.totalorder %s19, %s22
    %p28 = scmp.eq.s32.totalorder %s9, 0
    %p29 = por %p27, %p28
    %p30 = scmp.ne.s32.totalorder %s19, %s22
    %p31 = scmp.eq.s32.totalorder %s14, 1
    %p32 = por %p30, %p31
    %p33 = scmp.ne.s32.totalorder %s22, %s23
    %p34 = scmp.eq.s32.totalorder %s14, 0
    %p35 = por %p33, %p34
    %p36 = scmp.ne.s32.totalorder %s22, %s23
    %p37 = scmp.eq.s32.totalorder %s15, 1
    %p38 = por %p36, %p37
    %p40 = scmp.ne.s32.totalorder %s23, %s39
    %p41 = scmp.eq.s32.totalorder %s15, 0
    %p42 = por %p40, %p41
    %s44 = sadd.s32 %s43, 1
    %p47 = scmp.eq.s32.totalorder %s9, 1
    %p48 = scmp.ne.s32.totalorder %s43, %s45
    %p49 = scmp.eq.s32.totalorder %s9, 0
    %p50 = por %p48, %p49
    %p51 = scmp.ne.s32.totalorder %s43, %s45
    %p52 = scmp.eq.s32.totalorder %s14, 1
    %p53 = por %p51, %p52
    %p54 = scmp.ne.s32.totalorder %s45, %s46
    %p55 = scmp.eq.s32.totalorder %s14, 0
    %p56 = por %p54, %p55
    %p57 = scmp.ne.s32.totalorder %s45, %s46
    %p58 = scmp.eq.s32.totalorder %s15, 1
    %p59 = por %p57, %p58
    %p61 = scmp.ne.s32.totalorder %s46, %s60
    %p62 = scmp.eq.s32.totalorder %s15, 0
    %p63 = por %p61, %p62
    %s65 = sadd.s32 %s64, 1
    %p68 = scmp.eq.s32.totalorder %s9, 1
    %p69 = scmp.ne.s32.totalorder %s64, %s66
    %p70 = scmp.eq.s32.totalorder %s9, 0
    %p71 = por %p69, %p70
    %p72 = scmp.ne.s32.totalorder %s64, %s66
    %p73 = scmp.eq.s32.totalorder %s14, 1
    %p74 = por %p72, %p73
    %p75 = scmp.ne.s32.totalorder %s66, %s67
    %p76 = scmp.eq.s32.totalorder %s14, 0
    %p77 = por %p75, %p76
    %p78 = scmp.ne.s32.totalorder %s66, %s67
    %p79 = scmp.eq.s32.totalorder %s15, 1
    %p80 = por %p78, %p79
    %p82 = scmp.ne.s32.totalorder %s67, %s81
    %p83 = scmp.eq.s32.totalorder %s15, 0
    %p84 = por %p82, %p83
    %s85 = ssub.s32 %s9, %s16
    %p86 = scmp.eq.s32.totalorder %s85, 0
    %s88 = sadd.s32 %s87, 1
    %s89 = scalar_select %p86, %s87, %s88
    %p92 = pneg %p86
    %p93 = scmp.eq.s32.totalorder %s9, 1
    %p94 = por %p92, %p93
    %p95 = scmp.ne.s32.totalorder %s87, %s90
    %p96 = scmp.eq.s32.totalorder %s9, 0
    %p97 = por %p95, %p96
    %p98 = scmp.ne.s32.totalorder %s87, %s90
    %p99 = scmp.eq.s32.totalorder %s14, 1
    %p100 = por %p98, %p99
    %p101 = scmp.ne.s32.totalorder %s90, %s91
    %p102 = scmp.eq.s32.totalorder %s14, 0
    %p103 = por %p101, %p102
    %p104 = scmp.ne.s32.totalorder %s90, %s91
    %p105 = scmp.eq.s32.totalorder %s15, 1
    %p106 = por %p104, %p105
    %p108 = scmp.ne.s32.totalorder %s91, %s107
    %p109 = scmp.eq.s32.totalorder %s15, 0
    %p110 = por %p108, %p109
    %p111 = scmp.le.s32.totalorder 1, %s9
    %p112 = scmp.lt.s32.totalorder %s9, 3
    %p113 = pnand %p111, %p112
    %p114 = pneg %p113
    // Predicated region
    $region9: #{ecg_reconstructor_forward.17} parent=5 // pred_check
      _
    $region10: #{ecg_reconstructor_forward.17} parent=5 // pred_check_branch
      %116 = sbr.rel (%p113) target = $region12
    $region11: #{ecg_reconstructor_forward.17} parent=5 // pred_region
      %s117 = ssub.s32 %s9, 1
      // Predicated region
      $region13: #{ecg_reconstructor_forward.17} parent=11 // pred_check
        %p118 = pneg %p56
      $region14: #{ecg_reconstructor_forward.17} parent=11 // pred_check_branch
        %120 = sbr.rel (%p118) target = $region16
      $region15: #{ecg_reconstructor_forward.17} parent=11 // pred_region
        _
      $region16: #{ecg_reconstructor_forward.17} parent=11 // pred_fallthru
        _
      // Predicated region
      $region17: #{ecg_reconstructor_forward.17} parent=11 // pred_check
        %p121 = pneg %p77
      $region18: #{ecg_reconstructor_forward.17} parent=11 // pred_check_branch
        %123 = sbr.rel (%p121) target = $region20
      $region19: #{ecg_reconstructor_forward.17} parent=11 // pred_region
        _
      $region20: #{ecg_reconstructor_forward.17} parent=11 // pred_fallthru
        _
    $region12: #{ecg_reconstructor_forward.17} parent=5 // pred_fallthru
      _
    %p124 = scmp.lt.s32.totalorder %s9, 2
    // Predicated region
    $region21: #{ecg_reconstructor_forward.17} parent=5 // pred_check
      %p125 = pneg %p124
    $region22: #{ecg_reconstructor_forward.17} parent=5 // pred_check_branch
      %127 = sbr.rel (%p125) target = $region24
    $region23: #{ecg_reconstructor_forward.17} parent=5 // pred_region
      // Predicated region
      $region25: #{ecg_reconstructor_forward.17} parent=23 // pred_check
        %p128 = pneg %p29
      $region26: #{ecg_reconstructor_forward.17} parent=23 // pred_check_branch
        %130 = sbr.rel (%p128) target = $region28
      $region27: #{ecg_reconstructor_forward.17} parent=23 // pred_region
        %p131 = scmp.lt.s32.totalorder %s9, 1
        %s132 = scalar_select %p131, %s9, 1
        %s133 = smul.addr %s132, 8
        %s134 = smul.addr %s133, 4
        %s135 = scalar_lea.vmem %s0, %s134
      $region28: #{ecg_reconstructor_forward.17} parent=23 // pred_fallthru
        _
    $region24: #{ecg_reconstructor_forward.17} parent=5 // pred_fallthru
      _
    %p136 = scmp.le.s32.totalorder 1, %s9
    %p137 = scmp.lt.s32.totalorder %s9, 3
    %p138 = pnand %p136, %p137
    %p139 = pneg %p138
    // Predicated region
    $region29: #{ecg_reconstructor_forward.17} parent=5 // pred_check
      _
    $region30: #{ecg_reconstructor_forward.17} parent=5 // pred_check_branch
      %141 = sbr.rel (%p138) target = $region32
    $region31: #{ecg_reconstructor_forward.17} parent=5 // pred_region
      %s142 = ssub.s32 %s9, 1
      %p143 = scmp.lt.s32.totalorder %s14, 1
      %s144 = scalar_select %p143, %s14, 1
      %s145 = smul.addr %s144, 8
      %s146 = smul.addr %s145, 4
      %s147 = scalar_lea.vmem %s0, %s146
      %p148 = pneg %p35
      %p149 = pneg %p32
      %p150 = pneg %p56
      %p151 = pneg %p53
      %p152 = pneg %p77
      %p153 = pneg %p74
      %p154 = pneg %p103
      %p155 = pneg %p100
      %p156 = scmp.lt.s32.totalorder %s14, 1
      %s157 = scalar_select %p156, %s14, 1
      %s158 = smul.addr %s157, 2
      %s159 = smul.addr %s158, 4
      %s160 = scalar_lea.vmem %s3, %s159
      %p161 = scmp.lt.s32.totalorder %s14, 1
      %s162 = scalar_select %p161, %s14, 1
      %s163 = smul.addr %s162, 8
      %s164 = smul.addr %s163, 4
      %s165 = scalar_lea.vmem %s0, %s164
      %p166 = scmp.lt.s32.totalorder %s14, 1
      %s167 = scalar_select %p166, %s14, 1
      %s168 = smul.addr %s167, 2
      %s169 = smul.addr %s168, 4
      %s170 = scalar_lea.vmem %s3, %s169
      %172 = vst [vmem:[#allocation2] sm:$0xff] 0
      %173 = vst [vmem:[#allocation2 + $0x8] sm:$0xff] 0
      %174 = vst [vmem:[#allocation2 + $0x10] sm:$0xff] 0
      %175 = vst [vmem:[#allocation2 + $0x18] sm:$0xff] 0
      %176 = vst [vmem:[#allocation2 + $0x20] sm:$0xff] 0
      %177 = vst [vmem:[#allocation2 + $0x28] sm:$0xff] 0
      %178 = vst [vmem:[#allocation2 + $0x30] sm:$0xff] 0
      %179 = vst [vmem:[#allocation2 + $0x38] sm:$0xff] 0
      %v180 = vld [vmem:[%s165] sm:$0xf]
      %v181 = vld [vmem:[%s165 + $0x4] sm:$0xf]
      %v182 = vld [vmem:[%s165 + $0x8] sm:$0xf]
      %v183 = vld [vmem:[%s165 + $0xc] sm:$0xf]
      %v184 = vld [vmem:[%s165 + $0x10] sm:$0xf]
      %v185 = vld [vmem:[%s165 + $0x14] sm:$0xf]
      %v186 = vld [vmem:[%s165 + $0x18] sm:$0xf]
      %v187 = vld [vmem:[%s165 + $0x1c] sm:$0xf]
      %v196 = vunpack.c.l.b16 %v180
      %v197 = vunpack.c.l.b16 %v181
      %v198 = vunpack.c.l.b16 %v182
      %v199 = vunpack.c.l.b16 %v183
      %v200 = vunpack.c.l.b16 %v184
      %v201 = vunpack.c.l.b16 %v185
      %v202 = vunpack.c.l.b16 %v186
      %v203 = vunpack.c.l.b16 %v187
      %v204 = vpack.c.b16 %v197, %v196
      %v205 = vpack.c.b16 %v199, %v198
      %v206 = vpack.c.b16 %v201, %v200
      %v207 = vpack.c.b16 %v203, %v202
      %vm212 = vcmask 80896
      %213 = vst.msk [vmem:[#allocation2] sm:$0xff] %vm212, %v204
      %214 = vst.msk [vmem:[#allocation2 + $0x10] sm:$0xff] %vm212, %v205
      %215 = vst.msk [vmem:[#allocation2 + $0x20] sm:$0xff] %vm212, %v206
      %216 = vst.msk [vmem:[#allocation2 + $0x30] sm:$0xff] %vm212, %v207
      %v217 = vld [vmem:[%s1] sm:$0xf]
      %v218 = vld [vmem:[%s1 + $0x4] sm:$0xf]
      %v219 = vld [vmem:[#allocation2] sm:$0xff]
      %v220 = vld [vmem:[#allocation2 + $0x10] sm:$0xff]
      %v221 = vld [vmem:[#allocation2 + $0x20] sm:$0xff]
      %v222 = vld [vmem:[#allocation2 + $0x30] sm:$0xff]
      %s223 = scalar_lea.vmem %s1, 8
      %v224 = vld [vmem:[%s223] sm:$0xf]
      %v225 = vld [vmem:[%s223 + $0x4] sm:$0xf]
      %v226 = vld [vmem:[#allocation2] sm:$0xff]
      %v227 = vld [vmem:[#allocation2 + $0x8] sm:$0xff]
      %v228 = vld [vmem:[#allocation2 + $0x10] sm:$0xff]
      %v229 = vld [vmem:[#allocation2 + $0x18] sm:$0xff]
      %v230 = vld [vmem:[#allocation2 + $0x20] sm:$0xff]
      %v231 = vld [vmem:[#allocation2 + $0x28] sm:$0xff]
      %v232 = vld [vmem:[#allocation2 + $0x30] sm:$0xff]
      %v233 = vld [vmem:[#allocation2 + $0x38] sm:$0xff]
      %v236 = vunpack.c.l.b16 %v224
      %v237 = vunpack.c.l.b16 %v225
      %v238 = vpack.c.b16 %v237, %v236
      %247 = vrot.lane.b32.xlu0 %v226, 127
      %v248 = vpop.permute.xlu0 %247
      %249 = vrot.lane.b32.xlu0 %v227, 127
      %v250 = vpop.permute.xlu0 %249
      %251 = vrot.lane.b32.xlu0 %v228, 127
      %v252 = vpop.permute.xlu0 %251
      %253 = vrot.lane.b32.xlu0 %v229, 127
      %v254 = vpop.permute.xlu0 %253
      %255 = vrot.lane.b32.xlu0 %v230, 127
      %v256 = vpop.permute.xlu0 %255
      %257 = vrot.lane.b32.xlu0 %v231, 127
      %v258 = vpop.permute.xlu0 %257
      %259 = vrot.lane.b32.xlu0 %v232, 127
      %v260 = vpop.permute.xlu0 %259
      %261 = vrot.lane.b32.xlu0 %v233, 127
      %v262 = vpop.permute.xlu0 %261
      %vm263 = vcmask 1039360
      %v264 = vsel %vm263, %v248, %v250
      %v265 = vsel %vm263, %v252, %v254
      %v266 = vsel %vm263, %v256, %v258
      %v267 = vsel %vm263, %v260, %v262
      %vm272 = vcmask 523264
      %v274 = vsel %vm272, %v238, 0
      %276 = vmatprep.subr.bf16.mxu0 0
      %277 = vmatpush1.bf16.msra.mxu0 %v264
      %278 = vmatprep.subr.bf16.mxu0 0
      %279 = vmatpush1.bf16.msra.mxu0 %v265
      %280 = vmatprep.subr.bf16.mxu0 0
      %281 = vmatpush1.bf16.msra.mxu0 %v266
      %282 = vmatprep.subr.bf16.mxu0 0
      %283 = vmatpush1.bf16.msra.mxu0 %v267
      %284 = vmatprep.subr.bf16.mxu0 0
      %285 = vmatpush1.bf16.msra.mxu0 0
      %286 = vmatprep.subr.bf16.mxu0 0
      %287 = vmatpush1.bf16.msra.mxu0 0
      %288 = vmatprep.subr.bf16.mxu0 0
      %289 = vmatpush1.bf16.msra.mxu0 0
      %290 = vmatprep.subr.bf16.mxu0 0
      %291 = vmatpush1.bf16.msra.mxu0 0
      %292 = vmatprep.subr.bf16.mxu0 0
      %293 = vmatpush1.bf16.msra.mxu0 0
      %294 = vmatprep.subr.bf16.mxu0 0
      %295 = vmatpush1.bf16.msra.mxu0 0
      %296 = vmatprep.subr.bf16.mxu0 0
      %297 = vmatpush1.bf16.msra.mxu0 0
      %298 = vmatprep.subr.bf16.mxu0 0
      %299 = vmatpush1.bf16.msra.mxu0 0
      %300 = vmatprep.subr.bf16.mxu0 0
      %301 = vmatpush1.bf16.msra.mxu0 0
      %302 = vmatprep.subr.bf16.mxu0 0
      %303 = vmatpush1.bf16.msra.mxu0 0
      %304 = vmatprep.subr.bf16.mxu0 0
      %305 = vmatpush1.bf16.msra.mxu0 0
      %306 = vmatprep.subr.bf16.mxu0 0
      %307 = vmatpush1.bf16.msra.mxu0 0
      %308 = vmatprep.mubr.bf16.mxu0 0
      %309 = vmatmul.mubr.bf16.gmra.mrb[0].mxu0 %v274
      %v310 = vpop.f32.mrb[0].mxu0
      %v311 = vadd.f32 0.0, %v310
      %v312 = vpop.f32.mrb[0].mxu0
      %v313 = vpop.f32.mrb[0].mxu0
      %v314 = vadd.f32 0.0, %v313
      %v315 = vpop.f32.mrb[0].mxu0
      %316 = vdwg.mxu0
      %v319 = vunpack.c.l.b16 %v217
      %v320 = vunpack.c.l.b16 %v218
      %v321 = vpack.c.b16 %v320, %v319
      %v323 = vsel %vm272, %v321, 0
      %325 = vmatprep.subr.bf16.mxu0 0
      %326 = vmatpush1.bf16.msra.mxu0 %v219
      %327 = vmatprep.subr.bf16.mxu0 0
      %328 = vmatpush1.bf16.msra.mxu0 %v220
      %329 = vmatprep.subr.bf16.mxu0 0
      %330 = vmatpush1.bf16.msra.mxu0 %v221
      %331 = vmatprep.subr.bf16.mxu0 0
      %332 = vmatpush1.bf16.msra.mxu0 %v222
      %333 = vmatprep.subr.bf16.mxu0 0
      %334 = vmatpush1.bf16.msra.mxu0 0
      %335 = vmatprep.subr.bf16.mxu0 0
      %336 = vmatpush1.bf16.msra.mxu0 0
      %337 = vmatprep.subr.bf16.mxu0 0
      %338 = vmatpush1.bf16.msra.mxu0 0
      %339 = vmatprep.subr.bf16.mxu0 0
      %340 = vmatpush1.bf16.msra.mxu0 0
      %341 = vmatprep.subr.bf16.mxu0 0
      %342 = vmatpush1.bf16.msra.mxu0 0
      %343 = vmatprep.subr.bf16.mxu0 0
      %344 = vmatpush1.bf16.msra.mxu0 0
      %345 = vmatprep.subr.bf16.mxu0 0
      %346 = vmatpush1.bf16.msra.mxu0 0
      %347 = vmatprep.subr.bf16.mxu0 0
      %348 = vmatpush1.bf16.msra.mxu0 0
      %349 = vmatprep.subr.bf16.mxu0 0
      %350 = vmatpush1.bf16.msra.mxu0 0
      %351 = vmatprep.subr.bf16.mxu0 0
      %352 = vmatpush1.bf16.msra.mxu0 0
      %353 = vmatprep.subr.bf16.mxu0 0
      %354 = vmatpush1.bf16.msra.mxu0 0
      %355 = vmatprep.subr.bf16.mxu0 0
      %356 = vmatpush1.bf16.msra.mxu0 0
      %357 = vmatprep.mubr.bf16.mxu0 0
      %358 = vmatmul.mubr.bf16.gmra.mrb[0].mxu0 %v323
      %v359 = vpop.f32.mrb[0].mxu0
      %v360 = vadd.f32 %v311, %v359
      %v361 = vpop.f32.mrb[0].mxu0
      %v362 = vpop.f32.mrb[0].mxu0
      %v363 = vadd.f32 %v314, %v362
      %v364 = vpop.f32.mrb[0].mxu0
      %365 = vdwg.mxu0
      %s366 = scalar_lea.vmem %s1, 16
      %v367 = vld [vmem:[%s366] sm:$0xf]
      %v368 = vld [vmem:[%s366 + $0x4] sm:$0xf]
      %v371 = vunpack.c.l.b16 %v367
      %v372 = vunpack.c.l.b16 %v368
      %v373 = vpack.c.b16 %v372, %v371
      %374 = vrot.lane.b32.xlu0 %v226, 126
      %v375 = vpop.permute.xlu0 %374
      %376 = vrot.lane.b32.xlu0 %v227, 126
      %v377 = vpop.permute.xlu0 %376
      %378 = vrot.lane.b32.xlu0 %v228, 126
      %v379 = vpop.permute.xlu0 %378
      %380 = vrot.lane.b32.xlu0 %v229, 126
      %v381 = vpop.permute.xlu0 %380
      %382 = vrot.lane.b32.xlu0 %v230, 126
      %v383 = vpop.permute.xlu0 %382
      %384 = vrot.lane.b32.xlu0 %v231, 126
      %v385 = vpop.permute.xlu0 %384
      %386 = vrot.lane.b32.xlu0 %v232, 126
      %v387 = vpop.permute.xlu0 %386
      %388 = vrot.lane.b32.xlu0 %v233, 126
      %v389 = vpop.permute.xlu0 %388
      %vm390 = vcmask 1031168
      %v391 = vsel %vm390, %v375, %v377
      %v392 = vsel %vm390, %v379, %v381
      %v393 = vsel %vm390, %v383, %v385
      %v394 = vsel %vm390, %v387, %v389
      %v400 = vsel %vm272, %v373, 0
      %402 = vmatprep.subr.bf16.mxu0 0
      %403 = vmatpush1.bf16.msra.mxu0 %v391
      %404 = vmatprep.subr.bf16.mxu0 0
      %405 = vmatpush1.bf16.msra.mxu0 %v392
      %406 = vmatprep.subr.bf16.mxu0 0
      %407 = vmatpush1.bf16.msra.mxu0 %v393
      %408 = vmatprep.subr.bf16.mxu0 0
      %409 = vmatpush1.bf16.msra.mxu0 %v394
      %410 = vmatprep.subr.bf16.mxu0 0
      %411 = vmatpush1.bf16.msra.mxu0 0
      %412 = vmatprep.subr.bf16.mxu0 0
      %413 = vmatpush1.bf16.msra.mxu0 0
      %414 = vmatprep.subr.bf16.mxu0 0
      %415 = vmatpush1.bf16.msra.mxu0 0
      %416 = vmatprep.subr.bf16.mxu0 0
      %417 = vmatpush1.bf16.msra.mxu0 0
      %418 = vmatprep.subr.bf16.mxu0 0
      %419 = vmatpush1.bf16.msra.mxu0 0
      %420 = vmatprep.subr.bf16.mxu0 0
      %421 = vmatpush1.bf16.msra.mxu0 0
      %422 = vmatprep.subr.bf16.mxu0 0
      %423 = vmatpush1.bf16.msra.mxu0 0
      %424 = vmatprep.subr.bf16.mxu0 0
      %425 = vmatpush1.bf16.msra.mxu0 0
      %426 = vmatprep.subr.bf16.mxu0 0
      %427 = vmatpush1.bf16.msra.mxu0 0
      %428 = vmatprep.subr.bf16.mxu0 0
      %429 = vmatpush1.bf16.msra.mxu0 0
      %430 = vmatprep.subr.bf16.mxu0 0
      %431 = vmatpush1.bf16.msra.mxu0 0
      %432 = vmatprep.subr.bf16.mxu0 0
      %433 = vmatpush1.bf16.msra.mxu0 0
      %434 = vmatprep.mubr.bf16.mxu0 0
      %435 = vmatmul.mubr.bf16.gmra.mrb[0].mxu0 %v400
      %v436 = vpop.f32.mrb[0].mxu0
      %v437 = vadd.f32 0.0, %v436
      %v438 = vpop.f32.mrb[0].mxu0
      %v439 = vpop.f32.mrb[0].mxu0
      %v440 = vadd.f32 0.0, %v439
      %v441 = vpop.f32.mrb[0].mxu0
      %442 = vdwg.mxu0
      %v443 = vadd.f32 %v360, %v437
      %v444 = vadd.f32 %v363, %v440
      %s445 = scalar_lea.vmem %s1, 24
      %v446 = vld [vmem:[%s445] sm:$0xf]
      %v447 = vld [vmem:[%s445 + $0x4] sm:$0xf]
      %v450 = vunpack.c.l.b16 %v446
      %v451 = vunpack.c.l.b16 %v447
      %v452 = vpack.c.b16 %v451, %v450
      %453 = vrot.lane.b32.xlu0 %v226, 125
      %v454 = vpop.permute.xlu0 %453
      %455 = vrot.lane.b32.xlu0 %v227, 125
      %v456 = vpop.permute.xlu0 %455
      %457 = vrot.lane.b32.xlu0 %v228, 125
      %v458 = vpop.permute.xlu0 %457
      %459 = vrot.lane.b32.xlu0 %v229, 125
      %v460 = vpop.permute.xlu0 %459
      %461 = vrot.lane.b32.xlu0 %v230, 125
      %v462 = vpop.permute.xlu0 %461
      %463 = vrot.lane.b32.xlu0 %v231, 125
      %v464 = vpop.permute.xlu0 %463
      %465 = vrot.lane.b32.xlu0 %v232, 125
      %v466 = vpop.permute.xlu0 %465
      %467 = vrot.lane.b32.xlu0 %v233, 125
      %v468 = vpop.permute.xlu0 %467
      %vm469 = vcmask 1022976
      %v470 = vsel %vm469, %v454, %v456
      %v471 = vsel %vm469, %v458, %v460
      %v472 = vsel %vm469, %v462, %v464
      %v473 = vsel %vm469, %v466, %v468
      %v479 = vsel %vm272, %v452, 0
      %481 = vmatprep.subr.bf16.mxu0 0
      %482 = vmatpush1.bf16.msra.mxu0 %v470
      %483 = vmatprep.subr.bf16.mxu0 0
      %484 = vmatpush1.bf16.msra.mxu0 %v471
      %485 = vmatprep.subr.bf16.mxu0 0
      %486 = vmatpush1.bf16.msra.mxu0 %v472
      %487 = vmatprep.subr.bf16.mxu0 0
      %488 = vmatpush1.bf16.msra.mxu0 %v473
      %489 = vmatprep.subr.bf16.mxu0 0
      %490 = vmatpush1.bf16.msra.mxu0 0
      %491 = vmatprep.subr.bf16.mxu0 0
      %492 = vmatpush1.bf16.msra.mxu0 0
      %493 = vmatprep.subr.bf16.mxu0 0
      %494 = vmatpush1.bf16.msra.mxu0 0
      %495 = vmatprep.subr.bf16.mxu0 0
      %496 = vmatpush1.bf16.msra.mxu0 0
      %497 = vmatprep.subr.bf16.mxu0 0
      %498 = vmatpush1.bf16.msra.mxu0 0
      %499 = vmatprep.subr.bf16.mxu0 0
      %500 = vmatpush1.bf16.msra.mxu0 0
      %501 = vmatprep.subr.bf16.mxu0 0
      %502 = vmatpush1.bf16.msra.mxu0 0
      %503 = vmatprep.subr.bf16.mxu0 0
      %504 = vmatpush1.bf16.msra.mxu0 0
      %505 = vmatprep.subr.bf16.mxu0 0
      %506 = vmatpush1.bf16.msra.mxu0 0
      %507 = vmatprep.subr.bf16.mxu0 0
      %508 = vmatpush1.bf16.msra.mxu0 0
      %509 = vmatprep.subr.bf16.mxu0 0
      %510 = vmatpush1.bf16.msra.mxu0 0
      %511 = vmatprep.subr.bf16.mxu0 0
      %512 = vmatpush1.bf16.msra.mxu0 0
      %513 = vmatprep.mubr.bf16.mxu0 0
      %514 = vmatmul.mubr.bf16.gmra.mrb[0].mxu0 %v479
      %v515 = vpop.f32.mrb[0].mxu0
      %v516 = vadd.f32 0.0, %v515
      %v517 = vpop.f32.mrb[0].mxu0
      %v518 = vpop.f32.mrb[0].mxu0
      %v519 = vadd.f32 0.0, %v518
      %v520 = vpop.f32.mrb[0].mxu0
      %521 = vdwg.mxu0
      %v522 = vadd.f32 %v443, %v516
      %v523 = vadd.f32 %v444, %v519
      %s524 = scalar_lea.vmem %s1, 32
      %v525 = vld [vmem:[%s524] sm:$0xf]
      %v526 = vld [vmem:[%s524 + $0x4] sm:$0xf]
      %v529 = vunpack.c.l.b16 %v525
      %v530 = vunpack.c.l.b16 %v526
      %v531 = vpack.c.b16 %v530, %v529
      %532 = vrot.lane.b32.xlu0 %v226, 124
      %v533 = vpop.permute.xlu0 %532
      %534 = vrot.lane.b32.xlu0 %v227, 124
      %v535 = vpop.permute.xlu0 %534
      %536 = vrot.lane.b32.xlu0 %v228, 124
      %v537 = vpop.permute.xlu0 %536
      %538 = vrot.lane.b32.xlu0 %v229, 124
      %v539 = vpop.permute.xlu0 %538
      %540 = vrot.lane.b32.xlu0 %v230, 124
      %v541 = vpop.permute.xlu0 %540
      %542 = vrot.lane.b32.xlu0 %v231, 124
      %v543 = vpop.permute.xlu0 %542
      %544 = vrot.lane.b32.xlu0 %v232, 124
      %v545 = vpop.permute.xlu0 %544
      %546 = vrot.lane.b32.xlu0 %v233, 124
      %v547 = vpop.permute.xlu0 %546
      %vm548 = vcmask 1014784
      %v549 = vsel %vm548, %v533, %v535
      %v550 = vsel %vm548, %v537, %v539
      %v551 = vsel %vm548, %v541, %v543
      %v552 = vsel %vm548, %v545, %v547
      %v558 = vsel %vm272, %v531, 0
      %560 = vmatprep.subr.bf16.mxu0 0
      %561 = vmatpush1.bf16.msra.mxu0 %v549
      %562 = vmatprep.subr.bf16.mxu0 0
      %563 = vmatpush1.bf16.msra.mxu0 %v550
      %564 = vmatprep.subr.bf16.mxu0 0
      %565 = vmatpush1.bf16.msra.mxu0 %v551
      %566 = vmatprep.subr.bf16.mxu0 0
      %567 = vmatpush1.bf16.msra.mxu0 %v552
      %568 = vmatprep.subr.bf16.mxu0 0
      %569 = vmatpush1.bf16.msra.mxu0 0
      %570 = vmatprep.subr.bf16.mxu0 0
      %571 = vmatpush1.bf16.msra.mxu0 0
      %572 = vmatprep.subr.bf16.mxu0 0
      %573 = vmatpush1.bf16.msra.mxu0 0
      %574 = vmatprep.subr.bf16.mxu0 0
      %575 = vmatpush1.bf16.msra.mxu0 0
      %576 = vmatprep.subr.bf16.mxu0 0
      %577 = vmatpush1.bf16.msra.mxu0 0
      %578 = vmatprep.subr.bf16.mxu0 0
      %579 = vmatpush1.bf16.msra.mxu0 0
      %580 = vmatprep.subr.bf16.mxu0 0
      %581 = vmatpush1.bf16.msra.mxu0 0
      %582 = vmatprep.subr.bf16.mxu0 0
      %583 = vmatpush1.bf16.msra.mxu0 0
      %584 = vmatprep.subr.bf16.mxu0 0
      %585 = vmatpush1.bf16.msra.mxu0 0
      %586 = vmatprep.subr.bf16.mxu0 0
      %587 = vmatpush1.bf16.msra.mxu0 0
      %588 = vmatprep.subr.bf16.mxu0 0
      %589 = vmatpush1.bf16.msra.mxu0 0
      %590 = vmatprep.subr.bf16.mxu0 0
      %591 = vmatpush1.bf16.msra.mxu0 0
      %592 = vmatprep.mubr.bf16.mxu0 0
      %593 = vmatmul.mubr.bf16.gmra.mrb[0].mxu0 %v558
      %v594 = vpop.f32.mrb[0].mxu0
      %v595 = vadd.f32 0.0, %v594
      %v596 = vpop.f32.mrb[0].mxu0
      %v597 = vpop.f32.mrb[0].mxu0
      %v598 = vadd.f32 0.0, %v597
      %v599 = vpop.f32.mrb[0].mxu0
      %600 = vdwg.mxu0
      %v601 = vadd.f32 %v522, %v595
      %v602 = vadd.f32 %v523, %v598
      %s603 = scalar_lea.vmem %s1, 40
      %v604 = vld [vmem:[%s603] sm:$0xf]
      %v605 = vld [vmem:[%s603 + $0x4] sm:$0xf]
      %v608 = vunpack.c.l.b16 %v604
      %v609 = vunpack.c.l.b16 %v605
      %v610 = vpack.c.b16 %v609, %v608
      %611 = vrot.lane.b32.xlu0 %v226, 123
      %v612 = vpop.permute.xlu0 %611
      %613 = vrot.lane.b32.xlu0 %v227, 123
      %v614 = vpop.permute.xlu0 %613
      %615 = vrot.lane.b32.xlu0 %v228, 123
      %v616 = vpop.permute.xlu0 %615
      %617 = vrot.lane.b32.xlu0 %v229, 123
      %v618 = vpop.permute.xlu0 %617
      %619 = vrot.lane.b32.xlu0 %v230, 123
      %v620 = vpop.permute.xlu0 %619
      %621 = vrot.lane.b32.xlu0 %v231, 123
      %v622 = vpop.permute.xlu0 %621
      %623 = vrot.lane.b32.xlu0 %v232, 123
      %v624 = vpop.permute.xlu0 %623
      %625 = vrot.lane.b32.xlu0 %v233, 123
      %v626 = vpop.permute.xlu0 %625
      %vm627 = vcmask 1006592
      %v628 = vsel %vm627, %v612, %v614
      %v629 = vsel %vm627, %v616, %v618
      %v630 = vsel %vm627, %v620, %v622
      %v631 = vsel %vm627, %v624, %v626
      %v637 = vsel %vm272, %v610, 0
      %639 = vmatprep.subr.bf16.mxu0 0
      %640 = vmatpush1.bf16.msra.mxu0 %v628
      %641 = vmatprep.subr.bf16.mxu0 0
      %642 = vmatpush1.bf16.msra.mxu0 %v629
      %643 = vmatprep.subr.bf16.mxu0 0
      %644 = vmatpush1.bf16.msra.mxu0 %v630
      %645 = vmatprep.subr.bf16.mxu0 0
      %646 = vmatpush1.bf16.msra.mxu0 %v631
      %647 = vmatprep.subr.bf16.mxu0 0
      %648 = vmatpush1.bf16.msra.mxu0 0
      %649 = vmatprep.subr.bf16.mxu0 0
      %650 = vmatpush1.bf16.msra.mxu0 0
      %651 = vmatprep.subr.bf16.mxu0 0
      %652 = vmatpush1.bf16.msra.mxu0 0
      %653 = vmatprep.subr.bf16.mxu0 0
      %654 = vmatpush1.bf16.msra.mxu0 0
      %655 = vmatprep.subr.bf16.mxu0 0
      %656 = vmatpush1.bf16.msra.mxu0 0
      %657 = vmatprep.subr.bf16.mxu0 0
      %658 = vmatpush1.bf16.msra.mxu0 0
      %659 = vmatprep.subr.bf16.mxu0 0
      %660 = vmatpush1.bf16.msra.mxu0 0
      %661 = vmatprep.subr.bf16.mxu0 0
      %662 = vmatpush1.bf16.msra.mxu0 0
      %663 = vmatprep.subr.bf16.mxu0 0
      %664 = vmatpush1.bf16.msra.mxu0 0
      %665 = vmatprep.subr.bf16.mxu0 0
      %666 = vmatpush1.bf16.msra.mxu0 0
      %667 = vmatprep.subr.bf16.mxu0 0
      %668 = vmatpush1.bf16.msra.mxu0 0
      %669 = vmatprep.subr.bf16.mxu0 0
      %670 = vmatpush1.bf16.msra.mxu0 0
      %671 = vmatprep.mubr.bf16.mxu0 0
      %672 = vmatmul.mubr.bf16.gmra.mrb[0].mxu0 %v637
      %v673 = vpop.f32.mrb[0].mxu0
      %v674 = vadd.f32 0.0, %v673
      %v675 = vpop.f32.mrb[0].mxu0
      %v676 = vpop.f32.mrb[0].mxu0
      %v677 = vadd.f32 0.0, %v676
      %v678 = vpop.f32.mrb[0].mxu0
      %679 = vdwg.mxu0
      %v680 = vadd.f32 %v601, %v674
      %v681 = vadd.f32 %v602, %v677
      %s682 = scalar_lea.vmem %s1, 48
      %v683 = vld [vmem:[%s682] sm:$0xf]
      %v684 = vld [vmem:[%s682 + $0x4] sm:$0xf]
      %v687 = vunpack.c.l.b16 %v683
      %v688 = vunpack.c.l.b16 %v684
      %v689 = vpack.c.b16 %v688, %v687
      %690 = vrot.lane.b32.xlu0 %v226, 122
      %v691 = vpop.permute.xlu0 %690
      %692 = vrot.lane.b32.xlu0 %v227, 122
      %v693 = vpop.permute.xlu0 %692
      %694 = vrot.lane.b32.xlu0 %v228, 122
      %v695 = vpop.permute.xlu0 %694
      %696 = vrot.lane.b32.xlu0 %v229, 122
      %v697 = vpop.permute.xlu0 %696
      %698 = vrot.lane.b32.xlu0 %v230, 122
      %v699 = vpop.permute.xlu0 %698
      %700 = vrot.lane.b32.xlu0 %v231, 122
      %v701 = vpop.permute.xlu0 %700
      %702 = vrot.lane.b32.xlu0 %v232, 122
      %v703 = vpop.permute.xlu0 %702
      %704 = vrot.lane.b32.xlu0 %v233, 122
      %v705 = vpop.permute.xlu0 %704
      %vm706 = vcmask 998400
      %v707 = vsel %vm706, %v691, %v693
      %v708 = vsel %vm706, %v695, %v697
      %v709 = vsel %vm706, %v699, %v701
      %v710 = vsel %vm706, %v703, %v705
      %v716 = vsel %vm272, %v689, 0
      %718 = vmatprep.subr.bf16.mxu0 0
      %719 = vmatpush1.bf16.msra.mxu0 %v707
      %720 = vmatprep.subr.bf16.mxu0 0
      %721 = vmatpush1.bf16.msra.mxu0 %v708
      %722 = vmatprep.subr.bf16.mxu0 0
      %723 = vmatpush1.bf16.msra.mxu0 %v709
      %724 = vmatprep.subr.bf16.mxu0 0
      %725 = vmatpush1.bf16.msra.mxu0 %v710
      %726 = vmatprep.subr.bf16.mxu0 0
      %727 = vmatpush1.bf16.msra.mxu0 0
      %728 = vmatprep.subr.bf16.mxu0 0
      %729 = vmatpush1.bf16.msra.mxu0 0
      %730 = vmatprep.subr.bf16.mxu0 0
      %731 = vmatpush1.bf16.msra.mxu0 0
      %732 = vmatprep.subr.bf16.mxu0 0
      %733 = vmatpush1.bf16.msra.mxu0 0
      %734 = vmatprep.subr.bf16.mxu0 0
      %735 = vmatpush1.bf16.msra.mxu0 0
      %736 = vmatprep.subr.bf16.mxu0 0
      %737 = vmatpush1.bf16.msra.mxu0 0
      %738 = vmatprep.subr.bf16.mxu0 0
      %739 = vmatpush1.bf16.msra.mxu0 0
      %740 = vmatprep.subr.bf16.mxu0 0
      %741 = vmatpush1.bf16.msra.mxu0 0
      %742 = vmatprep.subr.bf16.mxu0 0
      %743 = vmatpush1.bf16.msra.mxu0 0
      %744 = vmatprep.subr.bf16.mxu0 0
      %745 = vmatpush1.bf16.msra.mxu0 0
      %746 = vmatprep.subr.bf16.mxu0 0
      %747 = vmatpush1.bf16.msra.mxu0 0
      %748 = vmatprep.subr.bf16.mxu0 0
      %749 = vmatpush1.bf16.msra.mxu0 0
      %750 = vmatprep.mubr.bf16.mxu0 0
      %751 = vmatmul.mubr.bf16.gmra.mrb[0].mxu0 %v716
      %v752 = vpop.f32.mrb[0].mxu0
      %v753 = vadd.f32 0.0, %v752
      %v754 = vpop.f32.mrb[0].mxu0
      %v755 = vpop.f32.mrb[0].mxu0
      %v756 = vadd.f32 0.0, %v755
      %v757 = vpop.f32.mrb[0].mxu0
      %758 = vdwg.mxu0
      %v759 = vadd.f32 %v680, %v753
      %v760 = vadd.f32 %v681, %v756
      %s761 = scalar_lea.vmem %s1, 56
      %v762 = vld [vmem:[%s761] sm:$0xf]
      %v763 = vld [vmem:[%s761 + $0x4] sm:$0xf]
      %v766 = vunpack.c.l.b16 %v762
      %v767 = vunpack.c.l.b16 %v763
      %v768 = vpack.c.b16 %v767, %v766
      %769 = vrot.lane.b32.xlu0 %v226, 121
      %v770 = vpop.permute.xlu0 %769
      %771 = vrot.lane.b32.xlu0 %v227, 121
      %v772 = vpop.permute.xlu0 %771
      %773 = vrot.lane.b32.xlu0 %v228, 121
      %v774 = vpop.permute.xlu0 %773
      %775 = vrot.lane.b32.xlu0 %v229, 121
      %v776 = vpop.permute.xlu0 %775
      %777 = vrot.lane.b32.xlu0 %v230, 121
      %v778 = vpop.permute.xlu0 %777
      %779 = vrot.lane.b32.xlu0 %v231, 121
      %v780 = vpop.permute.xlu0 %779
      %781 = vrot.lane.b32.xlu0 %v232, 121
      %v782 = vpop.permute.xlu0 %781
      %783 = vrot.lane.b32.xlu0 %v233, 121
      %v784 = vpop.permute.xlu0 %783
      %vm785 = vcmask 990208
      %v786 = vsel %vm785, %v770, %v772
      %v787 = vsel %vm785, %v774, %v776
      %v788 = vsel %vm785, %v778, %v780
      %v789 = vsel %vm785, %v782, %v784
      %v795 = vsel %vm272, %v768, 0
      %797 = vmatprep.subr.bf16.mxu0 0
      %798 = vmatpush1.bf16.msra.mxu0 %v786
      %799 = vmatprep.subr.bf16.mxu0 0
      %800 = vmatpush1.bf16.msra.mxu0 %v787
      %801 = vmatprep.subr.bf16.mxu0 0
      %802 = vmatpush1.bf16.msra.mxu0 %v788
      %803 = vmatprep.subr.bf16.mxu0 0
      %804 = vmatpush1.bf16.msra.mxu0 %v789
      %805 = vmatprep.subr.bf16.mxu0 0
      %806 = vmatpush1.bf16.msra.mxu0 0
      %807 = vmatprep.subr.bf16.mxu0 0
      %808 = vmatpush1.bf16.msra.mxu0 0
      %809 = vmatprep.subr.bf16.mxu0 0
      %810 = vmatpush1.bf16.msra.mxu0 0
      %811 = vmatprep.subr.bf16.mxu0 0
      %812 = vmatpush1.bf16.msra.mxu0 0
      %813 = vmatprep.subr.bf16.mxu0 0
      %814 = vmatpush1.bf16.msra.mxu0 0
      %815 = vmatprep.subr.bf16.mxu0 0
      %816 = vmatpush1.bf16.msra.mxu0 0
      %817 = vmatprep.subr.bf16.mxu0 0
      %818 = vmatpush1.bf16.msra.mxu0 0
      %819 = vmatprep.subr.bf16.mxu0 0
      %820 = vmatpush1.bf16.msra.mxu0 0
      %821 = vmatprep.subr.bf16.mxu0 0
      %822 = vmatpush1.bf16.msra.mxu0 0
      %823 = vmatprep.subr.bf16.mxu0 0
      %824 = vmatpush1.bf16.msra.mxu0 0
      %825 = vmatprep.subr.bf16.mxu0 0
      %826 = vmatpush1.bf16.msra.mxu0 0
      %827 = vmatprep.subr.bf16.mxu0 0
      %828 = vmatpush1.bf16.msra.mxu0 0
      %829 = vmatprep.mubr.bf16.mxu0 0
      %830 = vmatmul.mubr.bf16.gmra.mrb[0].mxu0 %v795
      %v831 = vpop.f32.mrb[0].mxu0
      %v832 = vadd.f32 0.0, %v831
      %v833 = vpop.f32.mrb[0].mxu0
      %v834 = vpop.f32.mrb[0].mxu0
      %v835 = vadd.f32 0.0, %v834
      %v836 = vpop.f32.mrb[0].mxu0
      %837 = vdwg.mxu0
      %v838 = vadd.f32 %v759, %v832
      %v839 = vadd.f32 %v760, %v835
      %s840 = scalar_lea.vmem %s1, 64
      %v841 = vld [vmem:[%s840] sm:$0xf]
      %v842 = vld [vmem:[%s840 + $0x4] sm:$0xf]
      %v845 = vunpack.c.l.b16 %v841
      %v846 = vunpack.c.l.b16 %v842
      %v847 = vpack.c.b16 %v846, %v845
      %848 = vrot.lane.b32.xlu0 %v226, 120
      %v849 = vpop.permute.xlu0 %848
      %850 = vrot.lane.b32.xlu0 %v227, 120
      %v851 = vpop.permute.xlu0 %850
      %852 = vrot.lane.b32.xlu0 %v228, 120
      %v853 = vpop.permute.xlu0 %852
      %854 = vrot.lane.b32.xlu0 %v229, 120
      %v855 = vpop.permute.xlu0 %854
      %856 = vrot.lane.b32.xlu0 %v230, 120
      %v857 = vpop.permute.xlu0 %856
      %858 = vrot.lane.b32.xlu0 %v231, 120
      %v859 = vpop.permute.xlu0 %858
      %860 = vrot.lane.b32.xlu0 %v232, 120
      %v861 = vpop.permute.xlu0 %860
      %862 = vrot.lane.b32.xlu0 %v233, 120
      %v863 = vpop.permute.xlu0 %862
      %vm864 = vcmask 982016
      %v865 = vsel %vm864, %v849, %v851
      %v866 = vsel %vm864, %v853, %v855
      %v867 = vsel %vm864, %v857, %v859
      %v868 = vsel %vm864, %v861, %v863
      %v874 = vsel %vm272, %v847, 0
      %876 = vmatprep.subr.bf16.mxu0 0
      %877 = vmatpush1.bf16.msra.mxu0 %v865
      %878 = vmatprep.subr.bf16.mxu0 0
      %879 = vmatpush1.bf16.msra.mxu0 %v866
      %880 = vmatprep.subr.bf16.mxu0 0
      %881 = vmatpush1.bf16.msra.mxu0 %v867
      %882 = vmatprep.subr.bf16.mxu0 0
      %883 = vmatpush1.bf16.msra.mxu0 %v868
      %884 = vmatprep.subr.bf16.mxu0 0
      %885 = vmatpush1.bf16.msra.mxu0 0
      %886 = vmatprep.subr.bf16.mxu0 0
      %887 = vmatpush1.bf16.msra.mxu0 0
      %888 = vmatprep.subr.bf16.mxu0 0
      %889 = vmatpush1.bf16.msra.mxu0 0
      %890 = vmatprep.subr.bf16.mxu0 0
      %891 = vmatpush1.bf16.msra.mxu0 0
      %892 = vmatprep.subr.bf16.mxu0 0
      %893 = vmatpush1.bf16.msra.mxu0 0
      %894 = vmatprep.subr.bf16.mxu0 0
      %895 = vmatpush1.bf16.msra.mxu0 0
      %896 = vmatprep.subr.bf16.mxu0 0
      %897 = vmatpush1.bf16.msra.mxu0 0
      %898 = vmatprep.subr.bf16.mxu0 0
      %899 = vmatpush1.bf16.msra.mxu0 0
      %900 = vmatprep.subr.bf16.mxu0 0
      %901 = vmatpush1.bf16.msra.mxu0 0
      %902 = vmatprep.subr.bf16.mxu0 0
      %903 = vmatpush1.bf16.msra.mxu0 0
      %904 = vmatprep.subr.bf16.mxu0 0
      %905 = vmatpush1.bf16.msra.mxu0 0
      %906 = vmatprep.subr.bf16.mxu0 0
      %907 = vmatpush1.bf16.msra.mxu0 0
      %908 = vmatprep.mubr.bf16.mxu0 0
      %909 = vmatmul.mubr.bf16.gmra.mrb[0].mxu0 %v874
      %v910 = vpop.f32.mrb[0].mxu0
      %v911 = vadd.f32 0.0, %v910
      %v912 = vpop.f32.mrb[0].mxu0
      %v913 = vpop.f32.mrb[0].mxu0
      %v914 = vadd.f32 0.0, %v913
      %v915 = vpop.f32.mrb[0].mxu0
      %916 = vdwg.mxu0
      %v917 = vadd.f32 %v838, %v911
      %v918 = vadd.f32 %v839, %v914
      %s919 = scalar_lea.vmem %s1, 72
      %v920 = vld [vmem:[%s919] sm:$0xf]
      %v921 = vld [vmem:[%s919 + $0x4] sm:$0xf]
      %v924 = vunpack.c.l.b16 %v920
      %v925 = vunpack.c.l.b16 %v921
      %v926 = vpack.c.b16 %v925, %v924
      %927 = vrot.lane.b32.xlu0 %v226, 119
      %v928 = vpop.permute.xlu0 %927
      %929 = vrot.lane.b32.xlu0 %v227, 119
      %v930 = vpop.permute.xlu0 %929
      %931 = vrot.lane.b32.xlu0 %v228, 119
      %v932 = vpop.permute.xlu0 %931
      %933 = vrot.lane.b32.xlu0 %v229, 119
      %v934 = vpop.permute.xlu0 %933
      %935 = vrot.lane.b32.xlu0 %v230, 119
      %v936 = vpop.permute.xlu0 %935
      %937 = vrot.lane.b32.xlu0 %v231, 119
      %v938 = vpop.permute.xlu0 %937
      %939 = vrot.lane.b32.xlu0 %v232, 119
      %v940 = vpop.permute.xlu0 %939
      %941 = vrot.lane.b32.xlu0 %v233, 119
      %v942 = vpop.permute.xlu0 %941
      %vm943 = vcmask 973824
      %v944 = vsel %vm943, %v928, %v930
      %v945 = vsel %vm943, %v932, %v934
      %v946 = vsel %vm943, %v936, %v938
      %v947 = vsel %vm943, %v940, %v942
      %v953 = vsel %vm272, %v926, 0
      %955 = vmatprep.subr.bf16.mxu0 0
      %956 = vmatpush1.bf16.msra.mxu0 %v944
      %957 = vmatprep.subr.bf16.mxu0 0
      %958 = vmatpush1.bf16.msra.mxu0 %v945
      %959 = vmatprep.subr.bf16.mxu0 0
      %960 = vmatpush1.bf16.msra.mxu0 %v946
      %961 = vmatprep.subr.bf16.mxu0 0
      %962 = vmatpush1.bf16.msra.mxu0 %v947
      %963 = vmatprep.subr.bf16.mxu0 0
      %964 = vmatpush1.bf16.msra.mxu0 0
      %965 = vmatprep.subr.bf16.mxu0 0
      %966 = vmatpush1.bf16.msra.mxu0 0
      %967 = vmatprep.subr.bf16.mxu0 0
      %968 = vmatpush1.bf16.msra.mxu0 0
      %969 = vmatprep.subr.bf16.mxu0 0
      %970 = vmatpush1.bf16.msra.mxu0 0
      %971 = vmatprep.subr.bf16.mxu0 0
      %972 = vmatpush1.bf16.msra.mxu0 0
      %973 = vmatprep.subr.bf16.mxu0 0
      %974 = vmatpush1.bf16.msra.mxu0 0
      %975 = vmatprep.subr.bf16.mxu0 0
      %976 = vmatpush1.bf16.msra.mxu0 0
      %977 = vmatprep.subr.bf16.mxu0 0
      %978 = vmatpush1.bf16.msra.mxu0 0
      %979 = vmatprep.subr.bf16.mxu0 0
      %980 = vmatpush1.bf16.msra.mxu0 0
      %981 = vmatprep.subr.bf16.mxu0 0
      %982 = vmatpush1.bf16.msra.mxu0 0
      %983 = vmatprep.subr.bf16.mxu0 0
      %984 = vmatpush1.bf16.msra.mxu0 0
      %985 = vmatprep.subr.bf16.mxu0 0
      %986 = vmatpush1.bf16.msra.mxu0 0
      %987 = vmatprep.mubr.bf16.mxu0 0
      %988 = vmatmul.mubr.bf16.gmra.mrb[0].mxu0 %v953
      %v989 = vpop.f32.mrb[0].mxu0
      %v990 = vadd.f32 0.0, %v989
      %v991 = vpop.f32.mrb[0].mxu0
      %v992 = vpop.f32.mrb[0].mxu0
      %v993 = vadd.f32 0.0, %v992
      %v994 = vpop.f32.mrb[0].mxu0
      %995 = vdwg.mxu0
      %v996 = vadd.f32 %v917, %v990
      %v997 = vadd.f32 %v918, %v993
      %v998 = vld [vmem:[%s2] sm:$0xff]
      %v999 = vld [vmem:[%s2 + $0x8] sm:$0xff]
      %1001 = vset.pattern.permute.xlu0 0
      %1002 = vperm.xlu0 %1001, %v998
      %v1003 = vpop.permute.xlu0 %1002
      %1006 = vset.pattern.permute.xlu0 0
      %1007 = vperm.xlu0 %1006, %v999
      %v1008 = vpop.permute.xlu0 %1007
      %v1010 = vadd.f32 %v996, %v1003
      %v1011 = vadd.f32 %v997, %v1008
      %v1012 = vpack.c.bf16 %v1011, %v1010
      %v1014 = vunpack.c.l.b16 %v1012
      %v1015 = vunpack.c.h.b16 %v1012
      %v1016 = vpack.c.b16 %v1014, %v1014
      %v1017 = vpack.c.b16 %v1015, %v1015
      %1020 = vst [vmem:[%s170] sm:$0xf] %v1016
      %1021 = vst [vmem:[%s170 + $0x4] sm:$0xf] %v1017
      %p1022 = scmp.lt.s32.totalorder %s14, 1
      %s1023 = scalar_select %p1022, %s14, 1
      %s1024 = smul.addr %s1023, 2
      %s1025 = smul.addr %s1024, 4
      %s1026 = scalar_lea.vmem %s3, %s1025
      // Predicated region
      $region33: #{ecg_reconstructor_forward.17} parent=31 // pred_check
        %p1027 = pneg %p100
      $region34: #{ecg_reconstructor_forward.17} parent=31 // pred_check_branch
        %1029 = sbr.rel (%p1027) target = $region36
      $region35: #{ecg_reconstructor_forward.17} parent=31 // pred_region
        _
      $region36: #{ecg_reconstructor_forward.17} parent=31 // pred_fallthru
        _
    $region32: #{ecg_reconstructor_forward.17} parent=5 // pred_fallthru
      _
    %p1030 = scmp.le.s32.totalorder 2, %s9
    // Predicated region
    $region37: #{ecg_reconstructor_forward.17} parent=5 // pred_check
      %p1031 = pneg %p1030
    $region38: #{ecg_reconstructor_forward.17} parent=5 // pred_check_branch
      %1033 = sbr.rel (%p1031) target = $region40
    $region39: #{ecg_reconstructor_forward.17} parent=5 // pred_region
      %s1034 = ssub.s32 %s9, 2
      // Predicated region
      $region41: #{ecg_reconstructor_forward.17} parent=39 // pred_check
        %p1035 = pneg %p106
      $region42: #{ecg_reconstructor_forward.17} parent=39 // pred_check_branch
        %1037 = sbr.rel (%p1035) target = $region44
      $region43: #{ecg_reconstructor_forward.17} parent=39 // pred_region
        %p1038 = scmp.lt.s32.totalorder %s15, 1
        %s1039 = scalar_select %p1038, %s15, 1
        %s1040 = smul.addr %s1039, 2
        %s1041 = smul.addr %s1040, 4
        %s1042 = scalar_lea.vmem %s3, %s1041
      $region44: #{ecg_reconstructor_forward.17} parent=39 // pred_fallthru
        _
    $region40: #{ecg_reconstructor_forward.17} parent=5 // pred_fallthru
      _
  $region6: #{ecg_reconstructor_forward.17} parent=0 // loop_footer
    %s13 = sadd.s32 1, %s9
  $region7: #{ecg_reconstructor_forward.17} parent=0 // loop_footer_branch
    %8 = sbr.rel target = $region3
  $region8: #{ecg_reconstructor_forward.17} parent=0 // loop_exit
    _

// kernel: ecg_reconstructor_forward.19
$region0: #{ecg_reconstructor_forward.19}
  #allocation0 [shape = 'u32[]', space=smem, size = 0x4, offset = 0x4, fixed_abs, tag = 'smem constant byte address 0x4 - core index']
  #allocation1 [shape = 'u32[144,128]{1,0:T(1,128)}', space=vmem, size = 0x12000, scoped, tag = 'internal scratch']
  #allocation2 [shape = 'bf16[64,256]{1,0:T(16,128)(2,1)}', space=vmem, size = 0x8000, scoped, tag = 'scratch operand']
  %s0 = inlined_call_operand.vmem [shape: bf16[2,64,128], index: 0, kind: input, shape index: {}]
  %s1 = inlined_call_operand.vmem [shape: bf16[3,64,64], index: 1, kind: input, shape index: {}]
  %s2 = inlined_call_operand.vmem [shape: f32[64,1], index: 2, kind: input, shape index: {}]
  %s3 = inlined_call_operand.vmem [shape: bf16[2,64,128], index: 3, kind: output, shape index: {}]
  %s4 = sld [smem:[#allocation0]]
  $region45: #{ecg_reconstructor_forward.19} parent=0
    _
  %s6 = ssub.s32 1, %s4
  %s7 = scalar_select 0, %s6, %s4
  loop: start=0, step=1, limit=4
  $region2: #{ecg_reconstructor_forward.19} parent=0 // loop_pre_header
    _
  $region3: #{ecg_reconstructor_forward.19} parent=0 // loop_header
    %s9 = sphi 0, %s13
    %p10 = scmp.ge.s32.totalorder %s9, 4
    %s19 = sphi 0, %s21
    %s22 = sphi 0, %s19
    %s23 = sphi 0, %s22
    %s39 = sphi 0, %s23
    %s43 = sphi 0, %s43
    %s45 = sphi 0, %s43
    %s46 = sphi 0, %s45
    %s60 = sphi 0, %s46
    %s64 = sphi 0, %s64
    %s66 = sphi 0, %s64
    %s67 = sphi 0, %s66
    %s81 = sphi 0, %s67
    %s87 = sphi 0, %s89
    %s90 = sphi 0, %s87
    %s91 = sphi 0, %s90
    %s107 = sphi 0, %s91
  $region4: #{ecg_reconstructor_forward.19} parent=0 // loop_header_branch
    %12 = sbr.rel (%p10) target = $region8
  $region5: #{ecg_reconstructor_forward.19} parent=0 // loop_body
    %s14 = ssub.s32 %s9, 1
    %s15 = ssub.s32 %s9, 2
    %s16 = sadd.s32 %s9, 1
    %s17 = ssub.s32 %s9, %s16
    %p18 = scmp.eq.s32.totalorder %s17, 0
    %s20 = sadd.s32 %s19, 1
    %s21 = scalar_select %p18, %s19, %s20
    %p24 = pneg %p18
    %p25 = scmp.eq.s32.totalorder %s9, 1
    %p26 = por %p24, %p25
    %p27 = scmp.ne.s32.totalorder %s19, %s22
    %p28 = scmp.eq.s32.totalorder %s9, 0
    %p29 = por %p27, %p28
    %p30 = scmp.ne.s32.totalorder %s19, %s22
    %p31 = scmp.eq.s32.totalorder %s14, 1
    %p32 = por %p30, %p31
    %p33 = scmp.ne.s32.totalorder %s22, %s23
    %p34 = scmp.eq.s32.totalorder %s14, 0
    %p35 = por %p33, %p34
    %p36 = scmp.ne.s32.totalorder %s22, %s23
    %p37 = scmp.eq.s32.totalorder %s15, 1
    %p38 = por %p36, %p37
    %p40 = scmp.ne.s32.totalorder %s23, %s39
    %p41 = scmp.eq.s32.totalorder %s15, 0
    %p42 = por %p40, %p41
    %s44 = sadd.s32 %s43, 1
    %p47 = scmp.eq.s32.totalorder %s9, 1
    %p48 = scmp.ne.s32.totalorder %s43, %s45
    %p49 = scmp.eq.s32.totalorder %s9, 0
    %p50 = por %p48, %p49
    %p51 = scmp.ne.s32.totalorder %s43, %s45
    %p52 = scmp.eq.s32.totalorder %s14, 1
    %p53 = por %p51, %p52
    %p54 = scmp.ne.s32.totalorder %s45, %s46
    %p55 = scmp.eq.s32.totalorder %s14, 0
    %p56 = por %p54, %p55
    %p57 = scmp.ne.s32.totalorder %s45, %s46
    %p58 = scmp.eq.s32.totalorder %s15, 1
    %p59 = por %p57, %p58
    %p61 = scmp.ne.s32.totalorder %s46, %s60
    %p62 = scmp.eq.s32.totalorder %s15, 0
    %p63 = por %p61, %p62
    %s65 = sadd.s32 %s64, 1
    %p68 = scmp.eq.s32.totalorder %s9, 1
    %p69 = scmp.ne.s32.totalorder %s64, %s66
    %p70 = scmp.eq.s32.totalorder %s9, 0
    %p71 = por %p69, %p70
    %p72 = scmp.ne.s32.totalorder %s64, %s66
    %p73 = scmp.eq.s32.totalorder %s14, 1
    %p74 = por %p72, %p73
    %p75 = scmp.ne.s32.totalorder %s66, %s67
    %p76 = scmp.eq.s32.totalorder %s14, 0
    %p77 = por %p75, %p76
    %p78 = scmp.ne.s32.totalorder %s66, %s67
    %p79 = scmp.eq.s32.totalorder %s15, 1
    %p80 = por %p78, %p79
    %p82 = scmp.ne.s32.totalorder %s67, %s81
    %p83 = scmp.eq.s32.totalorder %s15, 0
    %p84 = por %p82, %p83
    %s85 = ssub.s32 %s9, %s16
    %p86 = scmp.eq.s32.totalorder %s85, 0
    %s88 = sadd.s32 %s87, 1
    %s89 = scalar_select %p86, %s87, %s88
    %p92 = pneg %p86
    %p93 = scmp.eq.s32.totalorder %s9, 1
    %p94 = por %p92, %p93
    %p95 = scmp.ne.s32.totalorder %s87, %s90
    %p96 = scmp.eq.s32.totalorder %s9, 0
    %p97 = por %p95, %p96
    %p98 = scmp.ne.s32.totalorder %s87, %s90
    %p99 = scmp.eq.s32.totalorder %s14, 1
    %p100 = por %p98, %p99
    %p101 = scmp.ne.s32.totalorder %s90, %s91
    %p102 = scmp.eq.s32.totalorder %s14, 0
    %p103 = por %p101, %p102
    %p104 = scmp.ne.s32.totalorder %s90, %s91
    %p105 = scmp.eq.s32.totalorder %s15, 1
    %p106 = por %p104, %p105
    %p108 = scmp.ne.s32.totalorder %s91, %s107
    %p109 = scmp.eq.s32.totalorder %s15, 0
    %p110 = por %p108, %p109
    %p111 = scmp.le.s32.totalorder 1, %s9
    %p112 = scmp.lt.s32.totalorder %s9, 3
    %p113 = pnand %p111, %p112
    %p114 = pneg %p113
    // Predicated region
    $region9: #{ecg_reconstructor_forward.19} parent=5 // pred_check
      _
    $region10: #{ecg_reconstructor_forward.19} parent=5 // pred_check_branch
      %116 = sbr.rel (%p113) target = $region12
    $region11: #{ecg_reconstructor_forward.19} parent=5 // pred_region
      %s117 = ssub.s32 %s9, 1
      // Predicated region
      $region13: #{ecg_reconstructor_forward.19} parent=11 // pred_check
        %p118 = pneg %p56
      $region14: #{ecg_reconstructor_forward.19} parent=11 // pred_check_branch
        %120 = sbr.rel (%p118) target = $region16
      $region15: #{ecg_reconstructor_forward.19} parent=11 // pred_region
        _
      $region16: #{ecg_reconstructor_forward.19} parent=11 // pred_fallthru
        _
      // Predicated region
      $region17: #{ecg_reconstructor_forward.19} parent=11 // pred_check
        %p121 = pneg %p77
      $region18: #{ecg_reconstructor_forward.19} parent=11 // pred_check_branch
        %123 = sbr.rel (%p121) target = $region20
      $region19: #{ecg_reconstructor_forward.19} parent=11 // pred_region
        _
      $region20: #{ecg_reconstructor_forward.19} parent=11 // pred_fallthru
        _
    $region12: #{ecg_reconstructor_forward.19} parent=5 // pred_fallthru
      _
    %p124 = scmp.lt.s32.totalorder %s9, 2
    // Predicated region
    $region21: #{ecg_reconstructor_forward.19} parent=5 // pred_check
      %p125 = pneg %p124
    $region22: #{ecg_reconstructor_forward.19} parent=5 // pred_check_branch
      %127 = sbr.rel (%p125) target = $region24
    $region23: #{ecg_reconstructor_forward.19} parent=5 // pred_region
      // Predicated region
      $region25: #{ecg_reconstructor_forward.19} parent=23 // pred_check
        %p128 = pneg %p29
      $region26: #{ecg_reconstructor_forward.19} parent=23 // pred_check_branch
        %130 = sbr.rel (%p128) target = $region28
      $region27: #{ecg_reconstructor_forward.19} parent=23 // pred_region
        %p131 = scmp.lt.s32.totalorder %s9, 1
        %s132 = scalar_select %p131, %s9, 1
        %s133 = smul.addr %s132, 8
        %s134 = smul.addr %s133, 4
        %s135 = scalar_lea.vmem %s0, %s134
      $region28: #{ecg_reconstructor_forward.19} parent=23 // pred_fallthru
        _
    $region24: #{ecg_reconstructor_forward.19} parent=5 // pred_fallthru
      _
    %p136 = scmp.le.s32.totalorder 1, %s9
    %p137 = scmp.lt.s32.totalorder %s9, 3
    %p138 = pnand %p136, %p137
    %p139 = pneg %p138
    // Predicated region
    $region29: #{ecg_reconstructor_forward.19} parent=5 // pred_check
      _
    $region30: #{ecg_reconstructor_forward.19} parent=5 // pred_check_branch
      %141 = sbr.rel (%p138) target = $region32
    $region31: #{ecg_reconstructor_forward.19} parent=5 // pred_region
      %s142 = ssub.s32 %s9, 1
      %p143 = scmp.lt.s32.totalorder %s14, 1
      %s144 = scalar_select %p143, %s14, 1
      %s145 = smul.addr %s144, 8
      %s146 = smul.addr %s145, 4
      %s147 = scalar_lea.vmem %s0, %s146
      %p148 = pneg %p35
      %p149 = pneg %p32
      %p150 = pneg %p56
      %p151 = pneg %p53
      %p152 = pneg %p77
      %p153 = pneg %p74
      %p154 = pneg %p103
      %p155 = pneg %p100
      %p156 = scmp.lt.s32.totalorder %s14, 1
      %s157 = scalar_select %p156, %s14, 1
      %s158 = smul.addr %s157, 8
      %s159 = smul.addr %s158, 4
      %s160 = scalar_lea.vmem %s3, %s159
      %p161 = scmp.lt.s32.totalorder %s14, 1
      %s162 = scalar_select %p161, %s14, 1
      %s163 = smul.addr %s162, 8
      %s164 = smul.addr %s163, 4
      %s165 = scalar_lea.vmem %s0, %s164
      %p166 = scmp.lt.s32.totalorder %s14, 1
      %s167 = scalar_select %p166, %s14, 1
      %s168 = smul.addr %s167, 8
      %s169 = smul.addr %s168, 4
      %s170 = scalar_lea.vmem %s3, %s169
      %172 = vst [vmem:[#allocation2] sm:$0xff] 0
      %173 = vst [vmem:[#allocation2 + $0x8] sm:$0xff] 0
      %174 = vst [vmem:[#allocation2 + $0x10] sm:$0xff] 0
      %175 = vst [vmem:[#allocation2 + $0x18] sm:$0xff] 0
      %176 = vst [vmem:[#allocation2 + $0x20] sm:$0xff] 0
      %177 = vst [vmem:[#allocation2 + $0x28] sm:$0xff] 0
      %178 = vst [vmem:[#allocation2 + $0x30] sm:$0xff] 0
      %179 = vst [vmem:[#allocation2 + $0x38] sm:$0xff] 0
      %v180 = vld [vmem:[%s165] sm:$0xf]
      %v181 = vld [vmem:[%s165 + $0x4] sm:$0xf]
      %v182 = vld [vmem:[%s165 + $0x8] sm:$0xf]
      %v183 = vld [vmem:[%s165 + $0xc] sm:$0xf]
      %v184 = vld [vmem:[%s165 + $0x10] sm:$0xf]
      %v185 = vld [vmem:[%s165 + $0x14] sm:$0xf]
      %v186 = vld [vmem:[%s165 + $0x18] sm:$0xf]
      %v187 = vld [vmem:[%s165 + $0x1c] sm:$0xf]
      %v196 = vunpack.c.l.b16 %v180
      %v197 = vunpack.c.l.b16 %v181
      %v198 = vunpack.c.l.b16 %v182
      %v199 = vunpack.c.l.b16 %v183
      %v200 = vunpack.c.l.b16 %v184
      %v201 = vunpack.c.l.b16 %v185
      %v202 = vunpack.c.l.b16 %v186
      %v203 = vunpack.c.l.b16 %v187
      %v204 = vpack.c.b16 %v197, %v196
      %v205 = vpack.c.b16 %v199, %v198
      %v206 = vpack.c.b16 %v201, %v200
      %v207 = vpack.c.b16 %v203, %v202
      %208 = vrot.lane.b32.xlu0 %v204, 1
      %v209 = vpop.permute.xlu0 %208
      %210 = vrot.lane.b32.xlu0 %v205, 1
      %v211 = vpop.permute.xlu0 %210
      %212 = vrot.lane.b32.xlu0 %v206, 1
      %v213 = vpop.permute.xlu0 %212
      %214 = vrot.lane.b32.xlu0 %v207, 1
      %v215 = vpop.permute.xlu0 %214
      %vm220 = vcmask 89096
      %221 = vst.msk [vmem:[#allocation2] sm:$0xff] %vm220, %v209
      %222 = vst.msk [vmem:[#allocation2 + $0x10] sm:$0xff] %vm220, %v211
      %223 = vst.msk [vmem:[#allocation2 + $0x20] sm:$0xff] %vm220, %v213
      %224 = vst.msk [vmem:[#allocation2 + $0x30] sm:$0xff] %vm220, %v215
      %v225 = vld [vmem:[%s1] sm:$0xf]
      %v226 = vld [vmem:[%s1 + $0x4] sm:$0xf]
      %v227 = vld [vmem:[%s1 + $0x8] sm:$0xf]
      %v228 = vld [vmem:[%s1 + $0xc] sm:$0xf]
      %v229 = vld [vmem:[%s1 + $0x10] sm:$0xf]
      %v230 = vld [vmem:[%s1 + $0x14] sm:$0xf]
      %v231 = vld [vmem:[%s1 + $0x18] sm:$0xf]
      %v232 = vld [vmem:[%s1 + $0x1c] sm:$0xf]
      %v233 = vld [vmem:[#allocation2] sm:$0xff]
      %v234 = vld [vmem:[#allocation2 + $0x10] sm:$0xff]
      %v235 = vld [vmem:[#allocation2 + $0x20] sm:$0xff]
      %v236 = vld [vmem:[#allocation2 + $0x30] sm:$0xff]
      %s237 = scalar_lea.vmem %s1, 32
      %v238 = vld [vmem:[%s237] sm:$0xf]
      %v239 = vld [vmem:[%s237 + $0x4] sm:$0xf]
      %v240 = vld [vmem:[%s237 + $0x8] sm:$0xf]
      %v241 = vld [vmem:[%s237 + $0xc] sm:$0xf]
      %v242 = vld [vmem:[%s237 + $0x10] sm:$0xf]
      %v243 = vld [vmem:[%s237 + $0x14] sm:$0xf]
      %v244 = vld [vmem:[%s237 + $0x18] sm:$0xf]
      %v245 = vld [vmem:[%s237 + $0x1c] sm:$0xf]
      %v246 = vld [vmem:[#allocation2] sm:$0xff]
      %v247 = vld [vmem:[#allocation2 + $0x8] sm:$0xff]
      %v248 = vld [vmem:[#allocation2 + $0x10] sm:$0xff]
      %v249 = vld [vmem:[#allocation2 + $0x18] sm:$0xff]
      %v250 = vld [vmem:[#allocation2 + $0x20] sm:$0xff]
      %v251 = vld [vmem:[#allocation2 + $0x28] sm:$0xff]
      %v252 = vld [vmem:[#allocation2 + $0x30] sm:$0xff]
      %v253 = vld [vmem:[#allocation2 + $0x38] sm:$0xff]
      %v262 = vunpack.c.l.b16 %v238
      %v263 = vunpack.c.l.b16 %v239
      %v264 = vunpack.c.l.b16 %v240
      %v265 = vunpack.c.l.b16 %v241
      %v266 = vunpack.c.l.b16 %v242
      %v267 = vunpack.c.l.b16 %v243
      %v268 = vunpack.c.l.b16 %v244
      %v269 = vunpack.c.l.b16 %v245
      %v270 = vpack.c.b16 %v263, %v262
      %v271 = vpack.c.b16 %v265, %v264
      %v272 = vpack.c.b16 %v267, %v266
      %v273 = vpack.c.b16 %v269, %v268
      %282 = vrot.lane.b32.xlu0 %v246, 127
      %v283 = vpop.permute.xlu0 %282
      %284 = vrot.lane.b32.xlu0 %v247, 127
      %v285 = vpop.permute.xlu0 %284
      %286 = vrot.lane.b32.xlu0 %v248, 127
      %v287 = vpop.permute.xlu0 %286
      %288 = vrot.lane.b32.xlu0 %v249, 127
      %v289 = vpop.permute.xlu0 %288
      %290 = vrot.lane.b32.xlu0 %v250, 127
      %v291 = vpop.permute.xlu0 %290
      %292 = vrot.lane.b32.xlu0 %v251, 127
      %v293 = vpop.permute.xlu0 %292
      %294 = vrot.lane.b32.xlu0 %v252, 127
      %v295 = vpop.permute.xlu0 %294
      %296 = vrot.lane.b32.xlu0 %v253, 127
      %v297 = vpop.permute.xlu0 %296
      %vm298 = vcmask 1039360
      %v299 = vsel %vm298, %v283, %v285
      %v300 = vsel %vm298, %v287, %v289
      %v301 = vsel %vm298, %v291, %v293
      %v302 = vsel %vm298, %v295, %v297
      %vm307 = vcmask 523264
      %v309 = vsel %vm307, %v270, 0
      %v312 = vsel %vm307, %v271, 0
      %v315 = vsel %vm307, %v272, 0
      %v318 = vsel %vm307, %v273, 0
      %320 = vmatprep.subr.bf16.mxu0 0
      %321 = vmatpush1.bf16.msra.mxu0 %v299
      %322 = vmatprep.subr.bf16.mxu0 0
      %323 = vmatpush1.bf16.msra.mxu0 %v300
      %324 = vmatprep.subr.bf16.mxu0 0
      %325 = vmatpush1.bf16.msra.mxu0 %v301
      %326 = vmatprep.subr.bf16.mxu0 0
      %327 = vmatpush1.bf16.msra.mxu0 %v302
      %328 = vmatprep.subr.bf16.mxu0 0
      %329 = vmatpush1.bf16.msra.mxu0 0
      %330 = vmatprep.subr.bf16.mxu0 0
      %331 = vmatpush1.bf16.msra.mxu0 0
      %332 = vmatprep.subr.bf16.mxu0 0
      %333 = vmatpush1.bf16.msra.mxu0 0
      %334 = vmatprep.subr.bf16.mxu0 0
      %335 = vmatpush1.bf16.msra.mxu0 0
      %336 = vmatprep.subr.bf16.mxu0 0
      %337 = vmatpush1.bf16.msra.mxu0 0
      %338 = vmatprep.subr.bf16.mxu0 0
      %339 = vmatpush1.bf16.msra.mxu0 0
      %340 = vmatprep.subr.bf16.mxu0 0
      %341 = vmatpush1.bf16.msra.mxu0 0
      %342 = vmatprep.subr.bf16.mxu0 0
      %343 = vmatpush1.bf16.msra.mxu0 0
      %344 = vmatprep.subr.bf16.mxu0 0
      %345 = vmatpush1.bf16.msra.mxu0 0
      %346 = vmatprep.subr.bf16.mxu0 0
      %347 = vmatpush1.bf16.msra.mxu0 0
      %348 = vmatprep.subr.bf16.mxu0 0
      %349 = vmatpush1.bf16.msra.mxu0 0
      %350 = vmatprep.subr.bf16.mxu0 0
      %351 = vmatpush1.bf16.msra.mxu0 0
      %352 = vmatprep.mubr.bf16.mxu0 0
      %353 = vmatmul.mubr.bf16.gmra.mrb[0].mxu0 %v309
      %v354 = vpop.f32.mrb[0].mxu0
      %v355 = vadd.f32 0.0, %v354
      %v356 = vpop.f32.mrb[0].mxu0
      %v357 = vpop.f32.mrb[0].mxu0
      %v358 = vadd.f32 0.0, %v357
      %v359 = vpop.f32.mrb[0].mxu0
      %360 = vmatprep.mubr.bf16.mxu0 0
      %361 = vmatmul.mubr.bf16.gmra.mrb[0].mxu0 %v312
      %v362 = vpop.f32.mrb[0].mxu0
      %v363 = vadd.f32 0.0, %v362
      %v364 = vpop.f32.mrb[0].mxu0
      %v365 = vpop.f32.mrb[0].mxu0
      %v366 = vadd.f32 0.0, %v365
      %v367 = vpop.f32.mrb[0].mxu0
      %368 = vmatprep.mubr.bf16.mxu0 0
      %369 = vmatmul.mubr.bf16.gmra.mrb[0].mxu0 %v315
      %v370 = vpop.f32.mrb[0].mxu0
      %v371 = vadd.f32 0.0, %v370
      %v372 = vpop.f32.mrb[0].mxu0
      %v373 = vpop.f32.mrb[0].mxu0
      %v374 = vadd.f32 0.0, %v373
      %v375 = vpop.f32.mrb[0].mxu0
      %376 = vmatprep.mubr.bf16.mxu0 0
      %377 = vmatmul.mubr.bf16.gmra.mrb[0].mxu0 %v318
      %v378 = vpop.f32.mrb[0].mxu0
      %v379 = vadd.f32 0.0, %v378
      %v380 = vpop.f32.mrb[0].mxu0
      %v381 = vpop.f32.mrb[0].mxu0
      %v382 = vadd.f32 0.0, %v381
      %v383 = vpop.f32.mrb[0].mxu0
      %384 = vdwg.mxu0
      %v393 = vunpack.c.l.b16 %v225
      %v394 = vunpack.c.l.b16 %v226
      %v395 = vunpack.c.l.b16 %v227
      %v396 = vunpack.c.l.b16 %v228
      %v397 = vunpack.c.l.b16 %v229
      %v398 = vunpack.c.l.b16 %v230
      %v399 = vunpack.c.l.b16 %v231
      %v400 = vunpack.c.l.b16 %v232
      %v401 = vpack.c.b16 %v394, %v393
      %v402 = vpack.c.b16 %v396, %v395
      %v403 = vpack.c.b16 %v398, %v397
      %v404 = vpack.c.b16 %v400, %v399
      %v406 = vsel %vm307, %v401, 0
      %v409 = vsel %vm307, %v402, 0
      %v412 = vsel %vm307, %v403, 0
      %v415 = vsel %vm307, %v404, 0
      %417 = vmatprep.subr.bf16.mxu0 0
      %418 = vmatpush1.bf16.msra.mxu0 %v233
      %419 = vmatprep.subr.bf16.mxu0 0
      %420 = vmatpush1.bf16.msra.mxu0 %v234
      %421 = vmatprep.subr.bf16.mxu0 0
      %422 = vmatpush1.bf16.msra.mxu0 %v235
      %423 = vmatprep.subr.bf16.mxu0 0
      %424 = vmatpush1.bf16.msra.mxu0 %v236
      %425 = vmatprep.subr.bf16.mxu0 0
      %426 = vmatpush1.bf16.msra.mxu0 0
      %427 = vmatprep.subr.bf16.mxu0 0
      %428 = vmatpush1.bf16.msra.mxu0 0
      %429 = vmatprep.subr.bf16.mxu0 0
      %430 = vmatpush1.bf16.msra.mxu0 0
      %431 = vmatprep.subr.bf16.mxu0 0
      %432 = vmatpush1.bf16.msra.mxu0 0
      %433 = vmatprep.subr.bf16.mxu0 0
      %434 = vmatpush1.bf16.msra.mxu0 0
      %435 = vmatprep.subr.bf16.mxu0 0
      %436 = vmatpush1.bf16.msra.mxu0 0
      %437 = vmatprep.subr.bf16.mxu0 0
      %438 = vmatpush1.bf16.msra.mxu0 0
      %439 = vmatprep.subr.bf16.mxu0 0
      %440 = vmatpush1.bf16.msra.mxu0 0
      %441 = vmatprep.subr.bf16.mxu0 0
      %442 = vmatpush1.bf16.msra.mxu0 0
      %443 = vmatprep.subr.bf16.mxu0 0
      %444 = vmatpush1.bf16.msra.mxu0 0
      %445 = vmatprep.subr.bf16.mxu0 0
      %446 = vmatpush1.bf16.msra.mxu0 0
      %447 = vmatprep.subr.bf16.mxu0 0
      %448 = vmatpush1.bf16.msra.mxu0 0
      %449 = vmatprep.mubr.bf16.mxu0 0
      %450 = vmatmul.mubr.bf16.gmra.mrb[0].mxu0 %v406
      %v451 = vpop.f32.mrb[0].mxu0
      %v452 = vadd.f32 %v355, %v451
      %v453 = vpop.f32.mrb[0].mxu0
      %v454 = vpop.f32.mrb[0].mxu0
      %v455 = vadd.f32 %v358, %v454
      %v456 = vpop.f32.mrb[0].mxu0
      %457 = vmatprep.mubr.bf16.mxu0 0
      %458 = vmatmul.mubr.bf16.gmra.mrb[0].mxu0 %v409
      %v459 = vpop.f32.mrb[0].mxu0
      %v460 = vadd.f32 %v363, %v459
      %v461 = vpop.f32.mrb[0].mxu0
      %v462 = vpop.f32.mrb[0].mxu0
      %v463 = vadd.f32 %v366, %v462
      %v464 = vpop.f32.mrb[0].mxu0
      %465 = vmatprep.mubr.bf16.mxu0 0
      %466 = vmatmul.mubr.bf16.gmra.mrb[0].mxu0 %v412
      %v467 = vpop.f32.mrb[0].mxu0
      %v468 = vadd.f32 %v371, %v467
      %v469 = vpop.f32.mrb[0].mxu0
      %v470 = vpop.f32.mrb[0].mxu0
      %v471 = vadd.f32 %v374, %v470
      %v472 = vpop.f32.mrb[0].mxu0
      %473 = vmatprep.mubr.bf16.mxu0 0
      %474 = vmatmul.mubr.bf16.gmra.mrb[0].mxu0 %v415
      %v475 = vpop.f32.mrb[0].mxu0
      %v476 = vadd.f32 %v379, %v475
      %v477 = vpop.f32.mrb[0].mxu0
      %v478 = vpop.f32.mrb[0].mxu0
      %v479 = vadd.f32 %v382, %v478
      %v480 = vpop.f32.mrb[0].mxu0
      %481 = vdwg.mxu0
      %s482 = scalar_lea.vmem %s1, 64
      %v483 = vld [vmem:[%s482] sm:$0xf]
      %v484 = vld [vmem:[%s482 + $0x4] sm:$0xf]
      %v485 = vld [vmem:[%s482 + $0x8] sm:$0xf]
      %v486 = vld [vmem:[%s482 + $0xc] sm:$0xf]
      %v487 = vld [vmem:[%s482 + $0x10] sm:$0xf]
      %v488 = vld [vmem:[%s482 + $0x14] sm:$0xf]
      %v489 = vld [vmem:[%s482 + $0x18] sm:$0xf]
      %v490 = vld [vmem:[%s482 + $0x1c] sm:$0xf]
      %v499 = vunpack.c.l.b16 %v483
      %v500 = vunpack.c.l.b16 %v484
      %v501 = vunpack.c.l.b16 %v485
      %v502 = vunpack.c.l.b16 %v486
      %v503 = vunpack.c.l.b16 %v487
      %v504 = vunpack.c.l.b16 %v488
      %v505 = vunpack.c.l.b16 %v489
      %v506 = vunpack.c.l.b16 %v490
      %v507 = vpack.c.b16 %v500, %v499
      %v508 = vpack.c.b16 %v502, %v501
      %v509 = vpack.c.b16 %v504, %v503
      %v510 = vpack.c.b16 %v506, %v505
      %511 = vrot.lane.b32.xlu0 %v246, 126
      %v512 = vpop.permute.xlu0 %511
      %513 = vrot.lane.b32.xlu0 %v247, 126
      %v514 = vpop.permute.xlu0 %513
      %515 = vrot.lane.b32.xlu0 %v248, 126
      %v516 = vpop.permute.xlu0 %515
      %517 = vrot.lane.b32.xlu0 %v249, 126
      %v518 = vpop.permute.xlu0 %517
      %519 = vrot.lane.b32.xlu0 %v250, 126
      %v520 = vpop.permute.xlu0 %519
      %521 = vrot.lane.b32.xlu0 %v251, 126
      %v522 = vpop.permute.xlu0 %521
      %523 = vrot.lane.b32.xlu0 %v252, 126
      %v524 = vpop.permute.xlu0 %523
      %525 = vrot.lane.b32.xlu0 %v253, 126
      %v526 = vpop.permute.xlu0 %525
      %vm527 = vcmask 1031168
      %v528 = vsel %vm527, %v512, %v514
      %v529 = vsel %vm527, %v516, %v518
      %v530 = vsel %vm527, %v520, %v522
      %v531 = vsel %vm527, %v524, %v526
      %v537 = vsel %vm307, %v507, 0
      %v540 = vsel %vm307, %v508, 0
      %v543 = vsel %vm307, %v509, 0
      %v546 = vsel %vm307, %v510, 0
      %548 = vmatprep.subr.bf16.mxu0 0
      %549 = vmatpush1.bf16.msra.mxu0 %v528
      %550 = vmatprep.subr.bf16.mxu0 0
      %551 = vmatpush1.bf16.msra.mxu0 %v529
      %552 = vmatprep.subr.bf16.mxu0 0
      %553 = vmatpush1.bf16.msra.mxu0 %v530
      %554 = vmatprep.subr.bf16.mxu0 0
      %555 = vmatpush1.bf16.msra.mxu0 %v531
      %556 = vmatprep.subr.bf16.mxu0 0
      %557 = vmatpush1.bf16.msra.mxu0 0
      %558 = vmatprep.subr.bf16.mxu0 0
      %559 = vmatpush1.bf16.msra.mxu0 0
      %560 = vmatprep.subr.bf16.mxu0 0
      %561 = vmatpush1.bf16.msra.mxu0 0
      %562 = vmatprep.subr.bf16.mxu0 0
      %563 = vmatpush1.bf16.msra.mxu0 0
      %564 = vmatprep.subr.bf16.mxu0 0
      %565 = vmatpush1.bf16.msra.mxu0 0
      %566 = vmatprep.subr.bf16.mxu0 0
      %567 = vmatpush1.bf16.msra.mxu0 0
      %568 = vmatprep.subr.bf16.mxu0 0
      %569 = vmatpush1.bf16.msra.mxu0 0
      %570 = vmatprep.subr.bf16.mxu0 0
      %571 = vmatpush1.bf16.msra.mxu0 0
      %572 = vmatprep.subr.bf16.mxu0 0
      %573 = vmatpush1.bf16.msra.mxu0 0
      %574 = vmatprep.subr.bf16.mxu0 0
      %575 = vmatpush1.bf16.msra.mxu0 0
      %576 = vmatprep.subr.bf16.mxu0 0
      %577 = vmatpush1.bf16.msra.mxu0 0
      %578 = vmatprep.subr.bf16.mxu0 0
      %579 = vmatpush1.bf16.msra.mxu0 0
      %580 = vmatprep.mubr.bf16.mxu0 0
      %581 = vmatmul.mubr.bf16.gmra.mrb[0].mxu0 %v537
      %v582 = vpop.f32.mrb[0].mxu0
      %v583 = vadd.f32 0.0, %v582
      %v584 = vpop.f32.mrb[0].mxu0
      %v585 = vpop.f32.mrb[0].mxu0
      %v586 = vadd.f32 0.0, %v585
      %v587 = vpop.f32.mrb[0].mxu0
      %588 = vmatprep.mubr.bf16.mxu0 0
      %589 = vmatmul.mubr.bf16.gmra.mrb[0].mxu0 %v540
      %v590 = vpop.f32.mrb[0].mxu0
      %v591 = vadd.f32 0.0, %v590
      %v592 = vpop.f32.mrb[0].mxu0
      %v593 = vpop.f32.mrb[0].mxu0
      %v594 = vadd.f32 0.0, %v593
      %v595 = vpop.f32.mrb[0].mxu0
      %596 = vmatprep.mubr.bf16.mxu0 0
      %597 = vmatmul.mubr.bf16.gmra.mrb[0].mxu0 %v543
      %v598 = vpop.f32.mrb[0].mxu0
      %v599 = vadd.f32 0.0, %v598
      %v600 = vpop.f32.mrb[0].mxu0
      %v601 = vpop.f32.mrb[0].mxu0
      %v602 = vadd.f32 0.0, %v601
      %v603 = vpop.f32.mrb[0].mxu0
      %604 = vmatprep.mubr.bf16.mxu0 0
      %605 = vmatmul.mubr.bf16.gmra.mrb[0].mxu0 %v546
      %v606 = vpop.f32.mrb[0].mxu0
      %v607 = vadd.f32 0.0, %v606
      %v608 = vpop.f32.mrb[0].mxu0
      %v609 = vpop.f32.mrb[0].mxu0
      %v610 = vadd.f32 0.0, %v609
      %v611 = vpop.f32.mrb[0].mxu0
      %612 = vdwg.mxu0
      %v613 = vadd.f32 %v452, %v583
      %v614 = vadd.f32 %v455, %v586
      %v615 = vadd.f32 %v460, %v591
      %v616 = vadd.f32 %v463, %v594
      %v617 = vadd.f32 %v468, %v599
      %v618 = vadd.f32 %v471, %v602
      %v619 = vadd.f32 %v476, %v607
      %v620 = vadd.f32 %v479, %v610
      %v621 = vld [vmem:[%s2] sm:$0xff]
      %v622 = vld [vmem:[%s2 + $0x8] sm:$0xff]
      %v623 = vld [vmem:[%s2 + $0x10] sm:$0xff]
      %v624 = vld [vmem:[%s2 + $0x18] sm:$0xff]
      %v625 = vld [vmem:[%s2 + $0x20] sm:$0xff]
      %v626 = vld [vmem:[%s2 + $0x28] sm:$0xff]
      %v627 = vld [vmem:[%s2 + $0x30] sm:$0xff]
      %v628 = vld [vmem:[%s2 + $0x38] sm:$0xff]
      %630 = vset.pattern.permute.xlu0 0
      %631 = vperm.xlu0 %630, %v621
      %v632 = vpop.permute.xlu0 %631
      %635 = vset.pattern.permute.xlu0 0
      %636 = vperm.xlu0 %635, %v622
      %v637 = vpop.permute.xlu0 %636
      %640 = vset.pattern.permute.xlu0 0
      %641 = vperm.xlu0 %640, %v623
      %v642 = vpop.permute.xlu0 %641
      %645 = vset.pattern.permute.xlu0 0
      %646 = vperm.xlu0 %645, %v624
      %v647 = vpop.permute.xlu0 %646
      %650 = vset.pattern.permute.xlu0 0
      %651 = vperm.xlu0 %650, %v625
      %v652 = vpop.permute.xlu0 %651
      %655 = vset.pattern.permute.xlu0 0
      %656 = vperm.xlu0 %655, %v626
      %v657 = vpop.permute.xlu0 %656
      %660 = vset.pattern.permute.xlu0 0
      %661 = vperm.xlu0 %660, %v627
      %v662 = vpop.permute.xlu0 %661
      %665 = vset.pattern.permute.xlu0 0
      %666 = vperm.xlu0 %665, %v628
      %v667 = vpop.permute.xlu0 %666
      %v669 = vadd.f32 %v613, %v632
      %v670 = vadd.f32 %v614, %v637
      %v671 = vadd.f32 %v615, %v642
      %v672 = vadd.f32 %v616, %v647
      %v673 = vadd.f32 %v617, %v652
      %v674 = vadd.f32 %v618, %v657
      %v675 = vadd.f32 %v619, %v662
      %v676 = vadd.f32 %v620, %v667
      %v677 = vmax.f32 %v669, 0.0
      %v678 = vmax.f32 %v670, 0.0
      %v679 = vmax.f32 %v671, 0.0
      %v680 = vmax.f32 %v672, 0.0
      %v681 = vmax.f32 %v673, 0.0
      %v682 = vmax.f32 %v674, 0.0
      %v683 = vmax.f32 %v675, 0.0
      %v684 = vmax.f32 %v676, 0.0
      %v685 = vpack.c.bf16 %v678, %v677
      %v686 = vpack.c.bf16 %v680, %v679
      %v687 = vpack.c.bf16 %v682, %v681
      %v688 = vpack.c.bf16 %v684, %v683
      %v693 = vunpack.c.l.b16 %v685
      %v694 = vunpack.c.h.b16 %v685
      %v695 = vunpack.c.l.b16 %v686
      %v696 = vunpack.c.h.b16 %v686
      %v697 = vunpack.c.l.b16 %v687
      %v698 = vunpack.c.h.b16 %v687
      %v699 = vunpack.c.l.b16 %v688
      %v700 = vunpack.c.h.b16 %v688
      %v701 = vpack.c.b16 %v693, %v693
      %v702 = vpack.c.b16 %v694, %v694
      %v703 = vpack.c.b16 %v695, %v695
      %v704 = vpack.c.b16 %v696, %v696
      %v705 = vpack.c.b16 %v697, %v697
      %v706 = vpack.c.b16 %v698, %v698
      %v707 = vpack.c.b16 %v699, %v699
      %v708 = vpack.c.b16 %v700, %v700
      %717 = vst [vmem:[%s170] sm:$0xf] %v701
      %718 = vst [vmem:[%s170 + $0x4] sm:$0xf] %v702
      %719 = vst [vmem:[%s170 + $0x8] sm:$0xf] %v703
      %720 = vst [vmem:[%s170 + $0xc] sm:$0xf] %v704
      %721 = vst [vmem:[%s170 + $0x10] sm:$0xf] %v705
      %722 = vst [vmem:[%s170 + $0x14] sm:$0xf] %v706
      %723 = vst [vmem:[%s170 + $0x18] sm:$0xf] %v707
      %724 = vst [vmem:[%s170 + $0x1c] sm:$0xf] %v708
      %p725 = scmp.lt.s32.totalorder %s14, 1
      %s726 = scalar_select %p725, %s14, 1
      %s727 = smul.addr %s726, 8
      %s728 = smul.addr %s727, 4
      %s729 = scalar_lea.vmem %s3, %s728
      // Predicated region
      $region33: #{ecg_reconstructor_forward.19} parent=31 // pred_check
        %p730 = pneg %p100
      $region34: #{ecg_reconstructor_forward.19} parent=31 // pred_check_branch
        %732 = sbr.rel (%p730) target = $region36
      $region35: #{ecg_reconstructor_forward.19} parent=31 // pred_region
        _
      $region36: #{ecg_reconstructor_forward.19} parent=31 // pred_fallthru
        _
    $region32: #{ecg_reconstructor_forward.19} parent=5 // pred_fallthru
      _
    %p733 = scmp.le.s32.totalorder 2, %s9
    // Predicated region
    $region37: #{ecg_reconstructor_forward.19} parent=5 // pred_check
      %p734 = pneg %p733
    $region38: #{ecg_reconstructor_forward.19} parent=5 // pred_check_branch
      %736 = sbr.rel (%p734) target = $region40
    $region39: #{ecg_reconstructor_forward.19} parent=5 // pred_region
      %s737 = ssub.s32 %s9, 2
      // Predicated region
      $region41: #{ecg_reconstructor_forward.19} parent=39 // pred_check
        %p738 = pneg %p106
      $region42: #{ecg_reconstructor_forward.19} parent=39 // pred_check_branch
        %740 = sbr.rel (%p738) target = $region44
      $region43: #{ecg_reconstructor_forward.19} parent=39 // pred_region
        %p741 = scmp.lt.s32.totalorder %s15, 1
        %s742 = scalar_select %p741, %s15, 1
        %s743 = smul.addr %s742, 8
        %s744 = smul.addr %s743, 4
        %s745 = scalar_lea.vmem %s3, %s744
      $region44: #{ecg_reconstructor_forward.19} parent=39 // pred_fallthru
        _
    $region40: #{ecg_reconstructor_forward.19} parent=5 // pred_fallthru
      _
  $region6: #{ecg_reconstructor_forward.19} parent=0 // loop_footer
    %s13 = sadd.s32 1, %s9
  $region7: #{ecg_reconstructor_forward.19} parent=0 // loop_footer_branch
    %8 = sbr.rel target = $region3
  $region8: #{ecg_reconstructor_forward.19} parent=0 // loop_exit
    _

// kernel: ecg_reconstructor_forward.18
$region0: #{ecg_reconstructor_forward.18}
  #allocation0 [shape = 'u32[]', space=smem, size = 0x4, offset = 0x4, fixed_abs, tag = 'smem constant byte address 0x4 - core index']
  #allocation1 [shape = 'u32[144,128]{1,0:T(1,128)}', space=vmem, size = 0x12000, scoped, tag = 'internal scratch']
  #allocation2 [shape = 'bf16[16,256]{1,0:T(16,128)(2,1)}', space=vmem, size = 0x2000, scoped, tag = 'scratch operand']
  %s0 = inlined_call_operand.vmem [shape: bf16[2,16,128], index: 0, kind: input, shape index: {}]
  %s1 = inlined_call_operand.vmem [shape: bf16[10,64,16], index: 1, kind: input, shape index: {}]
  %s2 = inlined_call_operand.vmem [shape: f32[64,1], index: 2, kind: input, shape index: {}]
  %s3 = inlined_call_operand.vmem [shape: bf16[2,64,128], index: 3, kind: output, shape index: {}]
  %s4 = sld [smem:[#allocation0]]
  $region45: #{ecg_reconstructor_forward.18} parent=0
    _
  %s6 = ssub.s32 1, %s4
  %s7 = scalar_select 0, %s6, %s4
  loop: start=0, step=1, limit=4
  $region2: #{ecg_reconstructor_forward.18} parent=0 // loop_pre_header
    _
  $region3: #{ecg_reconstructor_forward.18} parent=0 // loop_header
    %s9 = sphi 0, %s13
    %p10 = scmp.ge.s32.totalorder %s9, 4
    %s19 = sphi 0, %s21
    %s22 = sphi 0, %s19
    %s23 = sphi 0, %s22
    %s39 = sphi 0, %s23
    %s43 = sphi 0, %s43
    %s45 = sphi 0, %s43
    %s46 = sphi 0, %s45
    %s60 = sphi 0, %s46
    %s64 = sphi 0, %s64
    %s66 = sphi 0, %s64
    %s67 = sphi 0, %s66
    %s81 = sphi 0, %s67
    %s87 = sphi 0, %s89
    %s90 = sphi 0, %s87
    %s91 = sphi 0, %s90
    %s107 = sphi 0, %s91
  $region4: #{ecg_reconstructor_forward.18} parent=0 // loop_header_branch
    %12 = sbr.rel (%p10) target = $region8
  $region5: #{ecg_reconstructor_forward.18} parent=0 // loop_body
    %s14 = ssub.s32 %s9, 1
    %s15 = ssub.s32 %s9, 2
    %s16 = sadd.s32 %s9, 1
    %s17 = ssub.s32 %s9, %s16
    %p18 = scmp.eq.s32.totalorder %s17, 0
    %s20 = sadd.s32 %s19, 1
    %s21 = scalar_select %p18, %s19, %s20
    %p24 = pneg %p18
    %p25 = scmp.eq.s32.totalorder %s9, 1
    %p26 = por %p24, %p25
    %p27 = scmp.ne.s32.totalorder %s19, %s22
    %p28 = scmp.eq.s32.totalorder %s9, 0
    %p29 = por %p27, %p28
    %p30 = scmp.ne.s32.totalorder %s19, %s22
    %p31 = scmp.eq.s32.totalorder %s14, 1
    %p32 = por %p30, %p31
    %p33 = scmp.ne.s32.totalorder %s22, %s23
    %p34 = scmp.eq.s32.totalorder %s14, 0
    %p35 = por %p33, %p34
    %p36 = scmp.ne.s32.totalorder %s22, %s23
    %p37 = scmp.eq.s32.totalorder %s15, 1
    %p38 = por %p36, %p37
    %p40 = scmp.ne.s32.totalorder %s23, %s39
    %p41 = scmp.eq.s32.totalorder %s15, 0
    %p42 = por %p40, %p41
    %s44 = sadd.s32 %s43, 1
    %p47 = scmp.eq.s32.totalorder %s9, 1
    %p48 = scmp.ne.s32.totalorder %s43, %s45
    %p49 = scmp.eq.s32.totalorder %s9, 0
    %p50 = por %p48, %p49
    %p51 = scmp.ne.s32.totalorder %s43, %s45
    %p52 = scmp.eq.s32.totalorder %s14, 1
    %p53 = por %p51, %p52
    %p54 = scmp.ne.s32.totalorder %s45, %s46
    %p55 = scmp.eq.s32.totalorder %s14, 0
    %p56 = por %p54, %p55
    %p57 = scmp.ne.s32.totalorder %s45, %s46
    %p58 = scmp.eq.s32.totalorder %s15, 1
    %p59 = por %p57, %p58
    %p61 = scmp.ne.s32.totalorder %s46, %s60
    %p62 = scmp.eq.s32.totalorder %s15, 0
    %p63 = por %p61, %p62
    %s65 = sadd.s32 %s64, 1
    %p68 = scmp.eq.s32.totalorder %s9, 1
    %p69 = scmp.ne.s32.totalorder %s64, %s66
    %p70 = scmp.eq.s32.totalorder %s9, 0
    %p71 = por %p69, %p70
    %p72 = scmp.ne.s32.totalorder %s64, %s66
    %p73 = scmp.eq.s32.totalorder %s14, 1
    %p74 = por %p72, %p73
    %p75 = scmp.ne.s32.totalorder %s66, %s67
    %p76 = scmp.eq.s32.totalorder %s14, 0
    %p77 = por %p75, %p76
    %p78 = scmp.ne.s32.totalorder %s66, %s67
    %p79 = scmp.eq.s32.totalorder %s15, 1
    %p80 = por %p78, %p79
    %p82 = scmp.ne.s32.totalorder %s67, %s81
    %p83 = scmp.eq.s32.totalorder %s15, 0
    %p84 = por %p82, %p83
    %s85 = ssub.s32 %s9, %s16
    %p86 = scmp.eq.s32.totalorder %s85, 0
    %s88 = sadd.s32 %s87, 1
    %s89 = scalar_select %p86, %s87, %s88
    %p92 = pneg %p86
    %p93 = scmp.eq.s32.totalorder %s9, 1
    %p94 = por %p92, %p93
    %p95 = scmp.ne.s32.totalorder %s87, %s90
    %p96 = scmp.eq.s32.totalorder %s9, 0
    %p97 = por %p95, %p96
    %p98 = scmp.ne.s32.totalorder %s87, %s90
    %p99 = scmp.eq.s32.totalorder %s14, 1
    %p100 = por %p98, %p99
    %p101 = scmp.ne.s32.totalorder %s90, %s91
    %p102 = scmp.eq.s32.totalorder %s14, 0
    %p103 = por %p101, %p102
    %p104 = scmp.ne.s32.totalorder %s90, %s91
    %p105 = scmp.eq.s32.totalorder %s15, 1
    %p106 = por %p104, %p105
    %p108 = scmp.ne.s32.totalorder %s91, %s107
    %p109 = scmp.eq.s32.totalorder %s15, 0
    %p110 = por %p108, %p109
    %p111 = scmp.le.s32.totalorder 1, %s9
    %p112 = scmp.lt.s32.totalorder %s9, 3
    %p113 = pnand %p111, %p112
    %p114 = pneg %p113
    // Predicated region
    $region9: #{ecg_reconstructor_forward.18} parent=5 // pred_check
      _
    $region10: #{ecg_reconstructor_forward.18} parent=5 // pred_check_branch
      %116 = sbr.rel (%p113) target = $region12
    $region11: #{ecg_reconstructor_forward.18} parent=5 // pred_region
      %s117 = ssub.s32 %s9, 1
      // Predicated region
      $region13: #{ecg_reconstructor_forward.18} parent=11 // pred_check
        %p118 = pneg %p56
      $region14: #{ecg_reconstructor_forward.18} parent=11 // pred_check_branch
        %120 = sbr.rel (%p118) target = $region16
      $region15: #{ecg_reconstructor_forward.18} parent=11 // pred_region
        _
      $region16: #{ecg_reconstructor_forward.18} parent=11 // pred_fallthru
        _
      // Predicated region
      $region17: #{ecg_reconstructor_forward.18} parent=11 // pred_check
        %p121 = pneg %p77
      $region18: #{ecg_reconstructor_forward.18} parent=11 // pred_check_branch
        %123 = sbr.rel (%p121) target = $region20
      $region19: #{ecg_reconstructor_forward.18} parent=11 // pred_region
        _
      $region20: #{ecg_reconstructor_forward.18} parent=11 // pred_fallthru
        _
    $region12: #{ecg_reconstructor_forward.18} parent=5 // pred_fallthru
      _
    %p124 = scmp.lt.s32.totalorder %s9, 2
    // Predicated region
    $region21: #{ecg_reconstructor_forward.18} parent=5 // pred_check
      %p125 = pneg %p124
    $region22: #{ecg_reconstructor_forward.18} parent=5 // pred_check_branch
      %127 = sbr.rel (%p125) target = $region24
    $region23: #{ecg_reconstructor_forward.18} parent=5 // pred_region
      // Predicated region
      $region25: #{ecg_reconstructor_forward.18} parent=23 // pred_check
        %p128 = pneg %p29
      $region26: #{ecg_reconstructor_forward.18} parent=23 // pred_check_branch
        %130 = sbr.rel (%p128) target = $region28
      $region27: #{ecg_reconstructor_forward.18} parent=23 // pred_region
        %p131 = scmp.lt.s32.totalorder %s9, 1
        %s132 = scalar_select %p131, %s9, 1
        %s133 = smul.addr %s132, 2
        %s134 = smul.addr %s133, 4
        %s135 = scalar_lea.vmem %s0, %s134
      $region28: #{ecg_reconstructor_forward.18} parent=23 // pred_fallthru
        _
    $region24: #{ecg_reconstructor_forward.18} parent=5 // pred_fallthru
      _
    %p136 = scmp.le.s32.totalorder 1, %s9
    %p137 = scmp.lt.s32.totalorder %s9, 3
    %p138 = pnand %p136, %p137
    %p139 = pneg %p138
    // Predicated region
    $region29: #{ecg_reconstructor_forward.18} parent=5 // pred_check
      _
    $region30: #{ecg_reconstructor_forward.18} parent=5 // pred_check_branch
      %141 = sbr.rel (%p138) target = $region32
    $region31: #{ecg_reconstructor_forward.18} parent=5 // pred_region
      %s142 = ssub.s32 %s9, 1
      %p143 = scmp.lt.s32.totalorder %s14, 1
      %s144 = scalar_select %p143, %s14, 1
      %s145 = smul.addr %s144, 2
      %s146 = smul.addr %s145, 4
      %s147 = scalar_lea.vmem %s0, %s146
      %p148 = pneg %p35
      %p149 = pneg %p32
      %p150 = pneg %p56
      %p151 = pneg %p53
      %p152 = pneg %p77
      %p153 = pneg %p74
      %p154 = pneg %p103
      %p155 = pneg %p100
      %p156 = scmp.lt.s32.totalorder %s14, 1
      %s157 = scalar_select %p156, %s14, 1
      %s158 = smul.addr %s157, 8
      %s159 = smul.addr %s158, 4
      %s160 = scalar_lea.vmem %s3, %s159
      %p161 = scmp.lt.s32.totalorder %s14, 1
      %s162 = scalar_select %p161, %s14, 1
      %s163 = smul.addr %s162, 2
      %s164 = smul.addr %s163, 4
      %s165 = scalar_lea.vmem %s0, %s164
      %p166 = scmp.lt.s32.totalorder %s14, 1
      %s167 = scalar_select %p166, %s14, 1
      %s168 = smul.addr %s167, 8
      %s169 = smul.addr %s168, 4
      %s170 = scalar_lea.vmem %s3, %s169
      %172 = vst [vmem:[#allocation2] sm:$0xff] 0
      %173 = vst [vmem:[#allocation2 + $0x8] sm:$0xff] 0
      %v174 = vld [vmem:[%s165] sm:$0xf]
      %v175 = vld [vmem:[%s165 + $0x4] sm:$0xf]
      %v178 = vunpack.c.l.b16 %v174
      %v179 = vunpack.c.l.b16 %v175
      %v180 = vpack.c.b16 %v179, %v178
      %181 = vrot.lane.b32.xlu0 %v180, 9
      %v182 = vpop.permute.xlu0 %181
      %vm184 = vcmask 80968
      %185 = vst.msk [vmem:[#allocation2] sm:$0xff] %vm184, %v182
      %v186 = vld [vmem:[%s1] sm:$0xf]
      %v187 = vld [vmem:[%s1 + $0x4] sm:$0xf]
      %v188 = vld [vmem:[%s1 + $0x8] sm:$0xf]
      %v189 = vld [vmem:[%s1 + $0xc] sm:$0xf]
      %v190 = vld [vmem:[%s1 + $0x10] sm:$0xf]
      %v191 = vld [vmem:[%s1 + $0x14] sm:$0xf]
      %v192 = vld [vmem:[%s1 + $0x18] sm:$0xf]
      %v193 = vld [vmem:[%s1 + $0x1c] sm:$0xf]
      %v194 = vld [vmem:[#allocation2] sm:$0xff]
      %s195 = scalar_lea.vmem %s1, 32
      %v196 = vld [vmem:[%s195] sm:$0xf]
      %v197 = vld [vmem:[%s195 + $0x4] sm:$0xf]
      %v198 = vld [vmem:[%s195 + $0x8] sm:$0xf]
      %v199 = vld [vmem:[%s195 + $0xc] sm:$0xf]
      %v200 = vld [vmem:[%s195 + $0x10] sm:$0xf]
      %v201 = vld [vmem:[%s195 + $0x14] sm:$0xf]
      %v202 = vld [vmem:[%s195 + $0x18] sm:$0xf]
      %v203 = vld [vmem:[%s195 + $0x1c] sm:$0xf]
      %v204 = vld [vmem:[#allocation2] sm:$0xff]
      %v205 = vld [vmem:[#allocation2 + $0x8] sm:$0xff]
      %v214 = vunpack.c.l.b16 %v196
      %v215 = vunpack.c.l.b16 %v197
      %v216 = vunpack.c.l.b16 %v198
      %v217 = vunpack.c.l.b16 %v199
      %v218 = vunpack.c.l.b16 %v200
      %v219 = vunpack.c.l.b16 %v201
      %v220 = vunpack.c.l.b16 %v202
      %v221 = vunpack.c.l.b16 %v203
      %v222 = vpack.c.b16 %v215, %v214
      %v223 = vpack.c.b16 %v217, %v216
      %v224 = vpack.c.b16 %v219, %v218
      %v225 = vpack.c.b16 %v221, %v220
      %228 = vrot.lane.b32.xlu0 %v204, 127
      %v229 = vpop.permute.xlu0 %228
      %230 = vrot.lane.b32.xlu0 %v205, 127
      %v231 = vpop.permute.xlu0 %230
      %vm232 = vcmask 1039360
      %v233 = vsel %vm232, %v229, %v231
      %vm235 = vcmask 130048
      %v237 = vsel %vm235, %v222, 0
      %v240 = vsel %vm235, %v223, 0
      %v243 = vsel %vm235, %v224, 0
      %v246 = vsel %vm235, %v225, 0
      %248 = vmatprep.subr.bf16.mxu0 0
      %249 = vmatpush1.bf16.msra.mxu0 %v233
      %250 = vmatprep.subr.bf16.mxu0 0
      %251 = vmatpush1.bf16.msra.mxu0 0
      %252 = vmatprep.subr.bf16.mxu0 0
      %253 = vmatpush1.bf16.msra.mxu0 0
      %254 = vmatprep.subr.bf16.mxu0 0
      %255 = vmatpush1.bf16.msra.mxu0 0
      %256 = vmatprep.subr.bf16.mxu0 0
      %257 = vmatpush1.bf16.msra.mxu0 0
      %258 = vmatprep.subr.bf16.mxu0 0
      %259 = vmatpush1.bf16.msra.mxu0 0
      %260 = vmatprep.subr.bf16.mxu0 0
      %261 = vmatpush1.bf16.msra.mxu0 0
      %262 = vmatprep.subr.bf16.mxu0 0
      %263 = vmatpush1.bf16.msra.mxu0 0
      %264 = vmatprep.subr.bf16.mxu0 0
      %265 = vmatpush1.bf16.msra.mxu0 0
      %266 = vmatprep.subr.bf16.mxu0 0
      %267 = vmatpush1.bf16.msra.mxu0 0
      %268 = vmatprep.subr.bf16.mxu0 0
      %269 = vmatpush1.bf16.msra.mxu0 0
      %270 = vmatprep.subr.bf16.mxu0 0
      %271 = vmatpush1.bf16.msra.mxu0 0
      %272 = vmatprep.subr.bf16.mxu0 0
      %273 = vmatpush1.bf16.msra.mxu0 0
      %274 = vmatprep.subr.bf16.mxu0 0
      %275 = vmatpush1.bf16.msra.mxu0 0
      %276 = vmatprep.subr.bf16.mxu0 0
      %277 = vmatpush1.bf16.msra.mxu0 0
      %278 = vmatprep.subr.bf16.mxu0 0
      %279 = vmatpush1.bf16.msra.mxu0 0
      %280 = vmatprep.mubr.bf16.mxu0 0
      %281 = vmatmul.mubr.bf16.gmra.mrb[0].mxu0 %v237
      %v282 = vpop.f32.mrb[0].mxu0
      %v283 = vadd.f32 0.0, %v282
      %v284 = vpop.f32.mrb[0].mxu0
      %v285 = vpop.f32.mrb[0].mxu0
      %v286 = vadd.f32 0.0, %v285
      %v287 = vpop.f32.mrb[0].mxu0
      %288 = vmatprep.mubr.bf16.mxu0 0
      %289 = vmatmul.mubr.bf16.gmra.mrb[0].mxu0 %v240
      %v290 = vpop.f32.mrb[0].mxu0
      %v291 = vadd.f32 0.0, %v290
      %v292 = vpop.f32.mrb[0].mxu0
      %v293 = vpop.f32.mrb[0].mxu0
      %v294 = vadd.f32 0.0, %v293
      %v295 = vpop.f32.mrb[0].mxu0
      %296 = vmatprep.mubr.bf16.mxu0 0
      %297 = vmatmul.mubr.bf16.gmra.mrb[0].mxu0 %v243
      %v298 = vpop.f32.mrb[0].mxu0
      %v299 = vadd.f32 0.0, %v298
      %v300 = vpop.f32.mrb[0].mxu0
      %v301 = vpop.f32.mrb[0].mxu0
      %v302 = vadd.f32 0.0, %v301
      %v303 = vpop.f32.mrb[0].mxu0
      %304 = vmatprep.mubr.bf16.mxu0 0
      %305 = vmatmul.mubr.bf16.gmra.mrb[0].mxu0 %v246
      %v306 = vpop.f32.mrb[0].mxu0
      %v307 = vadd.f32 0.0, %v306
      %v308 = vpop.f32.mrb[0].mxu0
      %v309 = vpop.f32.mrb[0].mxu0
      %v310 = vadd.f32 0.0, %v309
      %v311 = vpop.f32.mrb[0].mxu0
      %312 = vdwg.mxu0
      %v321 = vunpack.c.l.b16 %v186
      %v322 = vunpack.c.l.b16 %v187
      %v323 = vunpack.c.l.b16 %v188
      %v324 = vunpack.c.l.b16 %v189
      %v325 = vunpack.c.l.b16 %v190
      %v326 = vunpack.c.l.b16 %v191
      %v327 = vunpack.c.l.b16 %v192
      %v328 = vunpack.c.l.b16 %v193
      %v329 = vpack.c.b16 %v322, %v321
      %v330 = vpack.c.b16 %v324, %v323
      %v331 = vpack.c.b16 %v326, %v325
      %v332 = vpack.c.b16 %v328, %v327
      %v334 = vsel %vm235, %v329, 0
      %v337 = vsel %vm235, %v330, 0
      %v340 = vsel %vm235, %v331, 0
      %v343 = vsel %vm235, %v332, 0
      %345 = vmatprep.subr.bf16.mxu0 0
      %346 = vmatpush1.bf16.msra.mxu0 %v194
      %347 = vmatprep.subr.bf16.mxu0 0
      %348 = vmatpush1.bf16.msra.mxu0 0
      %349 = vmatprep.subr.bf16.mxu0 0
      %350 = vmatpush1.bf16.msra.mxu0 0
      %351 = vmatprep.subr.bf16.mxu0 0
      %352 = vmatpush1.bf16.msra.mxu0 0
      %353 = vmatprep.subr.bf16.mxu0 0
      %354 = vmatpush1.bf16.msra.mxu0 0
      %355 = vmatprep.subr.bf16.mxu0 0
      %356 = vmatpush1.bf16.msra.mxu0 0
      %357 = vmatprep.subr.bf16.mxu0 0
      %358 = vmatpush1.bf16.msra.mxu0 0
      %359 = vmatprep.subr.bf16.mxu0 0
      %360 = vmatpush1.bf16.msra.mxu0 0
      %361 = vmatprep.subr.bf16.mxu0 0
      %362 = vmatpush1.bf16.msra.mxu0 0
      %363 = vmatprep.subr.bf16.mxu0 0
      %364 = vmatpush1.bf16.msra.mxu0 0
      %365 = vmatprep.subr.bf16.mxu0 0
      %366 = vmatpush1.bf16.msra.mxu0 0
      %367 = vmatprep.subr.bf16.mxu0 0
      %368 = vmatpush1.bf16.msra.mxu0 0
      %369 = vmatprep.subr.bf16.mxu0 0
      %370 = vmatpush1.bf16.msra.mxu0 0
      %371 = vmatprep.subr.bf16.mxu0 0
      %372 = vmatpush1.bf16.msra.mxu0 0
      %373 = vmatprep.subr.bf16.mxu0 0
      %374 = vmatpush1.bf16.msra.mxu0 0
      %375 = vmatprep.subr.bf16.mxu0 0
      %376 = vmatpush1.bf16.msra.mxu0 0
      %377 = vmatprep.mubr.bf16.mxu0 0
      %378 = vmatmul.mubr.bf16.gmra.mrb[0].mxu0 %v334
      %v379 = vpop.f32.mrb[0].mxu0
      %v380 = vadd.f32 %v283, %v379
      %v381 = vpop.f32.mrb[0].mxu0
      %v382 = vpop.f32.mrb[0].mxu0
      %v383 = vadd.f32 %v286, %v382
      %v384 = vpop.f32.mrb[0].mxu0
      %385 = vmatprep.mubr.bf16.mxu0 0
      %386 = vmatmul.mubr.bf16.gmra.mrb[0].mxu0 %v337
      %v387 = vpop.f32.mrb[0].mxu0
      %v388 = vadd.f32 %v291, %v387
      %v389 = vpop.f32.mrb[0].mxu0
      %v390 = vpop.f32.mrb[0].mxu0
      %v391 = vadd.f32 %v294, %v390
      %v392 = vpop.f32.mrb[0].mxu0
      %393 = vmatprep.mubr.bf16.mxu0 0
      %394 = vmatmul.mubr.bf16.gmra.mrb[0].mxu0 %v340
      %v395 = vpop.f32.mrb[0].mxu0
      %v396 = vadd.f32 %v299, %v395
      %v397 = vpop.f32.mrb[0].mxu0
      %v398 = vpop.f32.mrb[0].mxu0
      %v399 = vadd.f32 %v302, %v398
      %v400 = vpop.f32.mrb[0].mxu0
      %401 = vmatprep.mubr.bf16.mxu0 0
      %402 = vmatmul.mubr.bf16.gmra.mrb[0].mxu0 %v343
      %v403 = vpop.f32.mrb[0].mxu0
      %v404 = vadd.f32 %v307, %v403
      %v405 = vpop.f32.mrb[0].mxu0
      %v406 = vpop.f32.mrb[0].mxu0
      %v407 = vadd.f32 %v310, %v406
      %v408 = vpop.f32.mrb[0].mxu0
      %409 = vdwg.mxu0
      %s410 = scalar_lea.vmem %s1, 64
      %v411 = vld [vmem:[%s410] sm:$0xf]
      %v412 = vld [vmem:[%s410 + $0x4] sm:$0xf]
      %v413 = vld [vmem:[%s410 + $0x8] sm:$0xf]
      %v414 = vld [vmem:[%s410 + $0xc] sm:$0xf]
      %v415 = vld [vmem:[%s410 + $0x10] sm:$0xf]
      %v416 = vld [vmem:[%s410 + $0x14] sm:$0xf]
      %v417 = vld [vmem:[%s410 + $0x18] sm:$0xf]
      %v418 = vld [vmem:[%s410 + $0x1c] sm:$0xf]
      %v427 = vunpack.c.l.b16 %v411
      %v428 = vunpack.c.l.b16 %v412
      %v429 = vunpack.c.l.b16 %v413
      %v430 = vunpack.c.l.b16 %v414
      %v431 = vunpack.c.l.b16 %v415
      %v432 = vunpack.c.l.b16 %v416
      %v433 = vunpack.c.l.b16 %v417
      %v434 = vunpack.c.l.b16 %v418
      %v435 = vpack.c.b16 %v428, %v427
      %v436 = vpack.c.b16 %v430, %v429
      %v437 = vpack.c.b16 %v432, %v431
      %v438 = vpack.c.b16 %v434, %v433
      %439 = vrot.lane.b32.xlu0 %v204, 126
      %v440 = vpop.permute.xlu0 %439
      %441 = vrot.lane.b32.xlu0 %v205, 126
      %v442 = vpop.permute.xlu0 %441
      %vm443 = vcmask 1031168
      %v444 = vsel %vm443, %v440, %v442
      %v447 = vsel %vm235, %v435, 0
      %v450 = vsel %vm235, %v436, 0
      %v453 = vsel %vm235, %v437, 0
      %v456 = vsel %vm235, %v438, 0
      %458 = vmatprep.subr.bf16.mxu0 0
      %459 = vmatpush1.bf16.msra.mxu0 %v444
      %460 = vmatprep.subr.bf16.mxu0 0
      %461 = vmatpush1.bf16.msra.mxu0 0
      %462 = vmatprep.subr.bf16.mxu0 0
      %463 = vmatpush1.bf16.msra.mxu0 0
      %464 = vmatprep.subr.bf16.mxu0 0
      %465 = vmatpush1.bf16.msra.mxu0 0
      %466 = vmatprep.subr.bf16.mxu0 0
      %467 = vmatpush1.bf16.msra.mxu0 0
      %468 = vmatprep.subr.bf16.mxu0 0
      %469 = vmatpush1.bf16.msra.mxu0 0
      %470 = vmatprep.subr.bf16.mxu0 0
      %471 = vmatpush1.bf16.msra.mxu0 0
      %472 = vmatprep.subr.bf16.mxu0 0
      %473 = vmatpush1.bf16.msra.mxu0 0
      %474 = vmatprep.subr.bf16.mxu0 0
      %475 = vmatpush1.bf16.msra.mxu0 0
      %476 = vmatprep.subr.bf16.mxu0 0
      %477 = vmatpush1.bf16.msra.mxu0 0
      %478 = vmatprep.subr.bf16.mxu0 0
      %479 = vmatpush1.bf16.msra.mxu0 0
      %480 = vmatprep.subr.bf16.mxu0 0
      %481 = vmatpush1.bf16.msra.mxu0 0
      %482 = vmatprep.subr.bf16.mxu0 0
      %483 = vmatpush1.bf16.msra.mxu0 0
      %484 = vmatprep.subr.bf16.mxu0 0
      %485 = vmatpush1.bf16.msra.mxu0 0
      %486 = vmatprep.subr.bf16.mxu0 0
      %487 = vmatpush1.bf16.msra.mxu0 0
      %488 = vmatprep.subr.bf16.mxu0 0
      %489 = vmatpush1.bf16.msra.mxu0 0
      %490 = vmatprep.mubr.bf16.mxu0 0
      %491 = vmatmul.mubr.bf16.gmra.mrb[0].mxu0 %v447
      %v492 = vpop.f32.mrb[0].mxu0
      %v493 = vadd.f32 0.0, %v492
      %v494 = vpop.f32.mrb[0].mxu0
      %v495 = vpop.f32.mrb[0].mxu0
      %v496 = vadd.f32 0.0, %v495
      %v497 = vpop.f32.mrb[0].mxu0
      %498 = vmatprep.mubr.bf16.mxu0 0
      %499 = vmatmul.mubr.bf16.gmra.mrb[0].mxu0 %v450
      %v500 = vpop.f32.mrb[0].mxu0
      %v501 = vadd.f32 0.0, %v500
      %v502 = vpop.f32.mrb[0].mxu0
      %v503 = vpop.f32.mrb[0].mxu0
      %v504 = vadd.f32 0.0, %v503
      %v505 = vpop.f32.mrb[0].mxu0
      %506 = vmatprep.mubr.bf16.mxu0 0
      %507 = vmatmul.mubr.bf16.gmra.mrb[0].mxu0 %v453
      %v508 = vpop.f32.mrb[0].mxu0
      %v509 = vadd.f32 0.0, %v508
      %v510 = vpop.f32.mrb[0].mxu0
      %v511 = vpop.f32.mrb[0].mxu0
      %v512 = vadd.f32 0.0, %v511
      %v513 = vpop.f32.mrb[0].mxu0
      %514 = vmatprep.mubr.bf16.mxu0 0
      %515 = vmatmul.mubr.bf16.gmra.mrb[0].mxu0 %v456
      %v516 = vpop.f32.mrb[0].mxu0
      %v517 = vadd.f32 0.0, %v516
      %v518 = vpop.f32.mrb[0].mxu0
      %v519 = vpop.f32.mrb[0].mxu0
      %v520 = vadd.f32 0.0, %v519
      %v521 = vpop.f32.mrb[0].mxu0
      %522 = vdwg.mxu0
      %v523 = vadd.f32 %v380, %v493
      %v524 = vadd.f32 %v383, %v496
      %v525 = vadd.f32 %v388, %v501
      %v526 = vadd.f32 %v391, %v504
      %v527 = vadd.f32 %v396, %v509
      %v528 = vadd.f32 %v399, %v512
      %v529 = vadd.f32 %v404, %v517
      %v530 = vadd.f32 %v407, %v520
      %s531 = scalar_lea.vmem %s1, 96
      %v532 = vld [vmem:[%s531] sm:$0xf]
      %v533 = vld [vmem:[%s531 + $0x4] sm:$0xf]
      %v534 = vld [vmem:[%s531 + $0x8] sm:$0xf]
      %v535 = vld [vmem:[%s531 + $0xc] sm:$0xf]
      %v536 = vld [vmem:[%s531 + $0x10] sm:$0xf]
      %v537 = vld [vmem:[%s531 + $0x14] sm:$0xf]
      %v538 = vld [vmem:[%s531 + $0x18] sm:$0xf]
      %v539 = vld [vmem:[%s531 + $0x1c] sm:$0xf]
      %v548 = vunpack.c.l.b16 %v532
      %v549 = vunpack.c.l.b16 %v533
      %v550 = vunpack.c.l.b16 %v534
      %v551 = vunpack.c.l.b16 %v535
      %v552 = vunpack.c.l.b16 %v536
      %v553 = vunpack.c.l.b16 %v537
      %v554 = vunpack.c.l.b16 %v538
      %v555 = vunpack.c.l.b16 %v539
      %v556 = vpack.c.b16 %v549, %v548
      %v557 = vpack.c.b16 %v551, %v550
      %v558 = vpack.c.b16 %v553, %v552
      %v559 = vpack.c.b16 %v555, %v554
      %560 = vrot.lane.b32.xlu0 %v204, 125
      %v561 = vpop.permute.xlu0 %560
      %562 = vrot.lane.b32.xlu0 %v205, 125
      %v563 = vpop.permute.xlu0 %562
      %vm564 = vcmask 1022976
      %v565 = vsel %vm564, %v561, %v563
      %v568 = vsel %vm235, %v556, 0
      %v571 = vsel %vm235, %v557, 0
      %v574 = vsel %vm235, %v558, 0
      %v577 = vsel %vm235, %v559, 0
      %579 = vmatprep.subr.bf16.mxu0 0
      %580 = vmatpush1.bf16.msra.mxu0 %v565
      %581 = vmatprep.subr.bf16.mxu0 0
      %582 = vmatpush1.bf16.msra.mxu0 0
      %583 = vmatprep.subr.bf16.mxu0 0
      %584 = vmatpush1.bf16.msra.mxu0 0
      %585 = vmatprep.subr.bf16.mxu0 0
      %586 = vmatpush1.bf16.msra.mxu0 0
      %587 = vmatprep.subr.bf16.mxu0 0
      %588 = vmatpush1.bf16.msra.mxu0 0
      %589 = vmatprep.subr.bf16.mxu0 0
      %590 = vmatpush1.bf16.msra.mxu0 0
      %591 = vmatprep.subr.bf16.mxu0 0
      %592 = vmatpush1.bf16.msra.mxu0 0
      %593 = vmatprep.subr.bf16.mxu0 0
      %594 = vmatpush1.bf16.msra.mxu0 0
      %595 = vmatprep.subr.bf16.mxu0 0
      %596 = vmatpush1.bf16.msra.mxu0 0
      %597 = vmatprep.subr.bf16.mxu0 0
      %598 = vmatpush1.bf16.msra.mxu0 0
      %599 = vmatprep.subr.bf16.mxu0 0
      %600 = vmatpush1.bf16.msra.mxu0 0
      %601 = vmatprep.subr.bf16.mxu0 0
      %602 = vmatpush1.bf16.msra.mxu0 0
      %603 = vmatprep.subr.bf16.mxu0 0
      %604 = vmatpush1.bf16.msra.mxu0 0
      %605 = vmatprep.subr.bf16.mxu0 0
      %606 = vmatpush1.bf16.msra.mxu0 0
      %607 = vmatprep.subr.bf16.mxu0 0
      %608 = vmatpush1.bf16.msra.mxu0 0
      %609 = vmatprep.subr.bf16.mxu0 0
      %610 = vmatpush1.bf16.msra.mxu0 0
      %611 = vmatprep.mubr.bf16.mxu0 0
      %612 = vmatmul.mubr.bf16.gmra.mrb[0].mxu0 %v568
      %v613 = vpop.f32.mrb[0].mxu0
      %v614 = vadd.f32 0.0, %v613
      %v615 = vpop.f32.mrb[0].mxu0
      %v616 = vpop.f32.mrb[0].mxu0
      %v617 = vadd.f32 0.0, %v616
      %v618 = vpop.f32.mrb[0].mxu0
      %619 = vmatprep.mubr.bf16.mxu0 0
      %620 = vmatmul.mubr.bf16.gmra.mrb[0].mxu0 %v571
      %v621 = vpop.f32.mrb[0].mxu0
      %v622 = vadd.f32 0.0, %v621
      %v623 = vpop.f32.mrb[0].mxu0
      %v624 = vpop.f32.mrb[0].mxu0
      %v625 = vadd.f32 0.0, %v624
      %v626 = vpop.f32.mrb[0].mxu0
      %627 = vmatprep.mubr.bf16.mxu0 0
      %628 = vmatmul.mubr.bf16.gmra.mrb[0].mxu0 %v574
      %v629 = vpop.f32.mrb[0].mxu0
      %v630 = vadd.f32 0.0, %v629
      %v631 = vpop.f32.mrb[0].mxu0
      %v632 = vpop.f32.mrb[0].mxu0
      %v633 = vadd.f32 0.0, %v632
      %v634 = vpop.f32.mrb[0].mxu0
      %635 = vmatprep.mubr.bf16.mxu0 0
      %636 = vmatmul.mubr.bf16.gmra.mrb[0].mxu0 %v577
      %v637 = vpop.f32.mrb[0].mxu0
      %v638 = vadd.f32 0.0, %v637
      %v639 = vpop.f32.mrb[0].mxu0
      %v640 = vpop.f32.mrb[0].mxu0
      %v641 = vadd.f32 0.0, %v640
      %v642 = vpop.f32.mrb[0].mxu0
      %643 = vdwg.mxu0
      %v644 = vadd.f32 %v523, %v614
      %v645 = vadd.f32 %v524, %v617
      %v646 = vadd.f32 %v525, %v622
      %v647 = vadd.f32 %v526, %v625
      %v648 = vadd.f32 %v527, %v630
      %v649 = vadd.f32 %v528, %v633
      %v650 = vadd.f32 %v529, %v638
      %v651 = vadd.f32 %v530, %v641
      %s652 = scalar_lea.vmem %s1, 128
      %v653 = vld [vmem:[%s652] sm:$0xf]
      %v654 = vld [vmem:[%s652 + $0x4] sm:$0xf]
      %v655 = vld [vmem:[%s652 + $0x8] sm:$0xf]
      %v656 = vld [vmem:[%s652 + $0xc] sm:$0xf]
      %v657 = vld [vmem:[%s652 + $0x10] sm:$0xf]
      %v658 = vld [vmem:[%s652 + $0x14] sm:$0xf]
      %v659 = vld [vmem:[%s652 + $0x18] sm:$0xf]
      %v660 = vld [vmem:[%s652 + $0x1c] sm:$0xf]
      %v669 = vunpack.c.l.b16 %v653
      %v670 = vunpack.c.l.b16 %v654
      %v671 = vunpack.c.l.b16 %v655
      %v672 = vunpack.c.l.b16 %v656
      %v673 = vunpack.c.l.b16 %v657
      %v674 = vunpack.c.l.b16 %v658
      %v675 = vunpack.c.l.b16 %v659
      %v676 = vunpack.c.l.b16 %v660
      %v677 = vpack.c.b16 %v670, %v669
      %v678 = vpack.c.b16 %v672, %v671
      %v679 = vpack.c.b16 %v674, %v673
      %v680 = vpack.c.b16 %v676, %v675
      %681 = vrot.lane.b32.xlu0 %v204, 124
      %v682 = vpop.permute.xlu0 %681
      %683 = vrot.lane.b32.xlu0 %v205, 124
      %v684 = vpop.permute.xlu0 %683
      %vm685 = vcmask 1014784
      %v686 = vsel %vm685, %v682, %v684
      %v689 = vsel %vm235, %v677, 0
      %v692 = vsel %vm235, %v678, 0
      %v695 = vsel %vm235, %v679, 0
      %v698 = vsel %vm235, %v680, 0
      %700 = vmatprep.subr.bf16.mxu0 0
      %701 = vmatpush1.bf16.msra.mxu0 %v686
      %702 = vmatprep.subr.bf16.mxu0 0
      %703 = vmatpush1.bf16.msra.mxu0 0
      %704 = vmatprep.subr.bf16.mxu0 0
      %705 = vmatpush1.bf16.msra.mxu0 0
      %706 = vmatprep.subr.bf16.mxu0 0
      %707 = vmatpush1.bf16.msra.mxu0 0
      %708 = vmatprep.subr.bf16.mxu0 0
      %709 = vmatpush1.bf16.msra.mxu0 0
      %710 = vmatprep.subr.bf16.mxu0 0
      %711 = vmatpush1.bf16.msra.mxu0 0
      %712 = vmatprep.subr.bf16.mxu0 0
      %713 = vmatpush1.bf16.msra.mxu0 0
      %714 = vmatprep.subr.bf16.mxu0 0
      %715 = vmatpush1.bf16.msra.mxu0 0
      %716 = vmatprep.subr.bf16.mxu0 0
      %717 = vmatpush1.bf16.msra.mxu0 0
      %718 = vmatprep.subr.bf16.mxu0 0
      %719 = vmatpush1.bf16.msra.mxu0 0
      %720 = vmatprep.subr.bf16.mxu0 0
      %721 = vmatpush1.bf16.msra.mxu0 0
      %722 = vmatprep.subr.bf16.mxu0 0
      %723 = vmatpush1.bf16.msra.mxu0 0
      %724 = vmatprep.subr.bf16.mxu0 0
      %725 = vmatpush1.bf16.msra.mxu0 0
      %726 = vmatprep.subr.bf16.mxu0 0
      %727 = vmatpush1.bf16.msra.mxu0 0
      %728 = vmatprep.subr.bf16.mxu0 0
      %729 = vmatpush1.bf16.msra.mxu0 0
      %730 = vmatprep.subr.bf16.mxu0 0
      %731 = vmatpush1.bf16.msra.mxu0 0
      %732 = vmatprep.mubr.bf16.mxu0 0
      %733 = vmatmul.mubr.bf16.gmra.mrb[0].mxu0 %v689
      %v734 = vpop.f32.mrb[0].mxu0
      %v735 = vadd.f32 0.0, %v734
      %v736 = vpop.f32.mrb[0].mxu0
      %v737 = vpop.f32.mrb[0].mxu0
      %v738 = vadd.f32 0.0, %v737
      %v739 = vpop.f32.mrb[0].mxu0
      %740 = vmatprep.mubr.bf16.mxu0 0
      %741 = vmatmul.mubr.bf16.gmra.mrb[0].mxu0 %v692
      %v742 = vpop.f32.mrb[0].mxu0
      %v743 = vadd.f32 0.0, %v742
      %v744 = vpop.f32.mrb[0].mxu0
      %v745 = vpop.f32.mrb[0].mxu0
      %v746 = vadd.f32 0.0, %v745
      %v747 = vpop.f32.mrb[0].mxu0
      %748 = vmatprep.mubr.bf16.mxu0 0
      %749 = vmatmul.mubr.bf16.gmra.mrb[0].mxu0 %v695
      %v750 = vpop.f32.mrb[0].mxu0
      %v751 = vadd.f32 0.0, %v750
      %v752 = vpop.f32.mrb[0].mxu0
      %v753 = vpop.f32.mrb[0].mxu0
      %v754 = vadd.f32 0.0, %v753
      %v755 = vpop.f32.mrb[0].mxu0
      %756 = vmatprep.mubr.bf16.mxu0 0
      %757 = vmatmul.mubr.bf16.gmra.mrb[0].mxu0 %v698
      %v758 = vpop.f32.mrb[0].mxu0
      %v759 = vadd.f32 0.0, %v758
      %v760 = vpop.f32.mrb[0].mxu0
      %v761 = vpop.f32.mrb[0].mxu0
      %v762 = vadd.f32 0.0, %v761
      %v763 = vpop.f32.mrb[0].mxu0
      %764 = vdwg.mxu0
      %v765 = vadd.f32 %v644, %v735
      %v766 = vadd.f32 %v645, %v738
      %v767 = vadd.f32 %v646, %v743
      %v768 = vadd.f32 %v647, %v746
      %v769 = vadd.f32 %v648, %v751
      %v770 = vadd.f32 %v649, %v754
      %v771 = vadd.f32 %v650, %v759
      %v772 = vadd.f32 %v651, %v762
      %s773 = scalar_lea.vmem %s1, 160
      %v774 = vld [vmem:[%s773] sm:$0xf]
      %v775 = vld [vmem:[%s773 + $0x4] sm:$0xf]
      %v776 = vld [vmem:[%s773 + $0x8] sm:$0xf]
      %v777 = vld [vmem:[%s773 + $0xc] sm:$0xf]
      %v778 = vld [vmem:[%s773 + $0x10] sm:$0xf]
      %v779 = vld [vmem:[%s773 + $0x14] sm:$0xf]
      %v780 = vld [vmem:[%s773 + $0x18] sm:$0xf]
      %v781 = vld [vmem:[%s773 + $0x1c] sm:$0xf]
      %v790 = vunpack.c.l.b16 %v774
      %v791 = vunpack.c.l.b16 %v775
      %v792 = vunpack.c.l.b16 %v776
      %v793 = vunpack.c.l.b16 %v777
      %v794 = vunpack.c.l.b16 %v778
      %v795 = vunpack.c.l.b16 %v779
      %v796 = vunpack.c.l.b16 %v780
      %v797 = vunpack.c.l.b16 %v781
      %v798 = vpack.c.b16 %v791, %v790
      %v799 = vpack.c.b16 %v793, %v792
      %v800 = vpack.c.b16 %v795, %v794
      %v801 = vpack.c.b16 %v797, %v796
      %802 = vrot.lane.b32.xlu0 %v204, 123
      %v803 = vpop.permute.xlu0 %802
      %804 = vrot.lane.b32.xlu0 %v205, 123
      %v805 = vpop.permute.xlu0 %804
      %vm806 = vcmask 1006592
      %v807 = vsel %vm806, %v803, %v805
      %v810 = vsel %vm235, %v798, 0
      %v813 = vsel %vm235, %v799, 0
      %v816 = vsel %vm235, %v800, 0
      %v819 = vsel %vm235, %v801, 0
      %821 = vmatprep.subr.bf16.mxu0 0
      %822 = vmatpush1.bf16.msra.mxu0 %v807
      %823 = vmatprep.subr.bf16.mxu0 0
      %824 = vmatpush1.bf16.msra.mxu0 0
      %825 = vmatprep.subr.bf16.mxu0 0
      %826 = vmatpush1.bf16.msra.mxu0 0
      %827 = vmatprep.subr.bf16.mxu0 0
      %828 = vmatpush1.bf16.msra.mxu0 0
      %829 = vmatprep.subr.bf16.mxu0 0
      %830 = vmatpush1.bf16.msra.mxu0 0
      %831 = vmatprep.subr.bf16.mxu0 0
      %832 = vmatpush1.bf16.msra.mxu0 0
      %833 = vmatprep.subr.bf16.mxu0 0
      %834 = vmatpush1.bf16.msra.mxu0 0
      %835 = vmatprep.subr.bf16.mxu0 0
      %836 = vmatpush1.bf16.msra.mxu0 0
      %837 = vmatprep.subr.bf16.mxu0 0
      %838 = vmatpush1.bf16.msra.mxu0 0
      %839 = vmatprep.subr.bf16.mxu0 0
      %840 = vmatpush1.bf16.msra.mxu0 0
      %841 = vmatprep.subr.bf16.mxu0 0
      %842 = vmatpush1.bf16.msra.mxu0 0
      %843 = vmatprep.subr.bf16.mxu0 0
      %844 = vmatpush1.bf16.msra.mxu0 0
      %845 = vmatprep.subr.bf16.mxu0 0
      %846 = vmatpush1.bf16.msra.mxu0 0
      %847 = vmatprep.subr.bf16.mxu0 0
      %848 = vmatpush1.bf16.msra.mxu0 0
      %849 = vmatprep.subr.bf16.mxu0 0
      %850 = vmatpush1.bf16.msra.mxu0 0
      %851 = vmatprep.subr.bf16.mxu0 0
      %852 = vmatpush1.bf16.msra.mxu0 0
      %853 = vmatprep.mubr.bf16.mxu0 0
      %854 = vmatmul.mubr.bf16.gmra.mrb[0].mxu0 %v810
      %v855 = vpop.f32.mrb[0].mxu0
      %v856 = vadd.f32 0.0, %v855
      %v857 = vpop.f32.mrb[0].mxu0
      %v858 = vpop.f32.mrb[0].mxu0
      %v859 = vadd.f32 0.0, %v858
      %v860 = vpop.f32.mrb[0].mxu0
      %861 = vmatprep.mubr.bf16.mxu0 0
      %862 = vmatmul.mubr.bf16.gmra.mrb[0].mxu0 %v813
      %v863 = vpop.f32.mrb[0].mxu0
      %v864 = vadd.f32 0.0, %v863
      %v865 = vpop.f32.mrb[0].mxu0
      %v866 = vpop.f32.mrb[0].mxu0
      %v867 = vadd.f32 0.0, %v866
      %v868 = vpop.f32.mrb[0].mxu0
      %869 = vmatprep.mubr.bf16.mxu0 0
      %870 = vmatmul.mubr.bf16.gmra.mrb[0].mxu0 %v816
      %v871 = vpop.f32.mrb[0].mxu0
      %v872 = vadd.f32 0.0, %v871
      %v873 = vpop.f32.mrb[0].mxu0
      %v874 = vpop.f32.mrb[0].mxu0
      %v875 = vadd.f32 0.0, %v874
      %v876 = vpop.f32.mrb[0].mxu0
      %877 = vmatprep.mubr.bf16.mxu0 0
      %878 = vmatmul.mubr.bf16.gmra.mrb[0].mxu0 %v819
      %v879 = vpop.f32.mrb[0].mxu0
      %v880 = vadd.f32 0.0, %v879
      %v881 = vpop.f32.mrb[0].mxu0
      %v882 = vpop.f32.mrb[0].mxu0
      %v883 = vadd.f32 0.0, %v882
      %v884 = vpop.f32.mrb[0].mxu0
      %885 = vdwg.mxu0
      %v886 = vadd.f32 %v765, %v856
      %v887 = vadd.f32 %v766, %v859
      %v888 = vadd.f32 %v767, %v864
      %v889 = vadd.f32 %v768, %v867
      %v890 = vadd.f32 %v769, %v872
      %v891 = vadd.f32 %v770, %v875
      %v892 = vadd.f32 %v771, %v880
      %v893 = vadd.f32 %v772, %v883
      %s894 = scalar_lea.vmem %s1, 192
      %v895 = vld [vmem:[%s894] sm:$0xf]
      %v896 = vld [vmem:[%s894 + $0x4] sm:$0xf]
      %v897 = vld [vmem:[%s894 + $0x8] sm:$0xf]
      %v898 = vld [vmem:[%s894 + $0xc] sm:$0xf]
      %v899 = vld [vmem:[%s894 + $0x10] sm:$0xf]
      %v900 = vld [vmem:[%s894 + $0x14] sm:$0xf]
      %v901 = vld [vmem:[%s894 + $0x18] sm:$0xf]
      %v902 = vld [vmem:[%s894 + $0x1c] sm:$0xf]
      %v911 = vunpack.c.l.b16 %v895
      %v912 = vunpack.c.l.b16 %v896
      %v913 = vunpack.c.l.b16 %v897
      %v914 = vunpack.c.l.b16 %v898
      %v915 = vunpack.c.l.b16 %v899
      %v916 = vunpack.c.l.b16 %v900
      %v917 = vunpack.c.l.b16 %v901
      %v918 = vunpack.c.l.b16 %v902
      %v919 = vpack.c.b16 %v912, %v911
      %v920 = vpack.c.b16 %v914, %v913
      %v921 = vpack.c.b16 %v916, %v915
      %v922 = vpack.c.b16 %v918, %v917
      %923 = vrot.lane.b32.xlu0 %v204, 122
      %v924 = vpop.permute.xlu0 %923
      %925 = vrot.lane.b32.xlu0 %v205, 122
      %v926 = vpop.permute.xlu0 %925
      %vm927 = vcmask 998400
      %v928 = vsel %vm927, %v924, %v926
      %v931 = vsel %vm235, %v919, 0
      %v934 = vsel %vm235, %v920, 0
      %v937 = vsel %vm235, %v921, 0
      %v940 = vsel %vm235, %v922, 0
      %942 = vmatprep.subr.bf16.mxu0 0
      %943 = vmatpush1.bf16.msra.mxu0 %v928
      %944 = vmatprep.subr.bf16.mxu0 0
      %945 = vmatpush1.bf16.msra.mxu0 0
      %946 = vmatprep.subr.bf16.mxu0 0
      %947 = vmatpush1.bf16.msra.mxu0 0
      %948 = vmatprep.subr.bf16.mxu0 0
      %949 = vmatpush1.bf16.msra.mxu0 0
      %950 = vmatprep.subr.bf16.mxu0 0
      %951 = vmatpush1.bf16.msra.mxu0 0
      %952 = vmatprep.subr.bf16.mxu0 0
      %953 = vmatpush1.bf16.msra.mxu0 0
      %954 = vmatprep.subr.bf16.mxu0 0
      %955 = vmatpush1.bf16.msra.mxu0 0
      %956 = vmatprep.subr.bf16.mxu0 0
      %957 = vmatpush1.bf16.msra.mxu0 0
      %958 = vmatprep.subr.bf16.mxu0 0
      %959 = vmatpush1.bf16.msra.mxu0 0
      %960 = vmatprep.subr.bf16.mxu0 0
      %961 = vmatpush1.bf16.msra.mxu0 0
      %962 = vmatprep.subr.bf16.mxu0 0
      %963 = vmatpush1.bf16.msra.mxu0 0
      %964 = vmatprep.subr.bf16.mxu0 0
      %965 = vmatpush1.bf16.msra.mxu0 0
      %966 = vmatprep.subr.bf16.mxu0 0
      %967 = vmatpush1.bf16.msra.mxu0 0
      %968 = vmatprep.subr.bf16.mxu0 0
      %969 = vmatpush1.bf16.msra.mxu0 0
      %970 = vmatprep.subr.bf16.mxu0 0
      %971 = vmatpush1.bf16.msra.mxu0 0
      %972 = vmatprep.subr.bf16.mxu0 0
      %973 = vmatpush1.bf16.msra.mxu0 0
      %974 = vmatprep.mubr.bf16.mxu0 0
      %975 = vmatmul.mubr.bf16.gmra.mrb[0].mxu0 %v931
      %v976 = vpop.f32.mrb[0].mxu0
      %v977 = vadd.f32 0.0, %v976
      %v978 = vpop.f32.mrb[0].mxu0
      %v979 = vpop.f32.mrb[0].mxu0
      %v980 = vadd.f32 0.0, %v979
      %v981 = vpop.f32.mrb[0].mxu0
      %982 = vmatprep.mubr.bf16.mxu0 0
      %983 = vmatmul.mubr.bf16.gmra.mrb[0].mxu0 %v934
      %v984 = vpop.f32.mrb[0].mxu0
      %v985 = vadd.f32 0.0, %v984
      %v986 = vpop.f32.mrb[0].mxu0
      %v987 = vpop.f32.mrb[0].mxu0
      %v988 = vadd.f32 0.0, %v987
      %v989 = vpop.f32.mrb[0].mxu0
      %990 = vmatprep.mubr.bf16.mxu0 0
      %991 = vmatmul.mubr.bf16.gmra.mrb[0].mxu0 %v937
      %v992 = vpop.f32.mrb[0].mxu0
      %v993 = vadd.f32 0.0, %v992
      %v994 = vpop.f32.mrb[0].mxu0
      %v995 = vpop.f32.mrb[0].mxu0
      %v996 = vadd.f32 0.0, %v995
      %v997 = vpop.f32.mrb[0].mxu0
      %998 = vmatprep.mubr.bf16.mxu0 0
      %999 = vmatmul.mubr.bf16.gmra.mrb[0].mxu0 %v940
      %v1000 = vpop.f32.mrb[0].mxu0
      %v1001 = vadd.f32 0.0, %v1000
      %v1002 = vpop.f32.mrb[0].mxu0
      %v1003 = vpop.f32.mrb[0].mxu0
      %v1004 = vadd.f32 0.0, %v1003
      %v1005 = vpop.f32.mrb[0].mxu0
      %1006 = vdwg.mxu0
      %v1007 = vadd.f32 %v886, %v977
      %v1008 = vadd.f32 %v887, %v980
      %v1009 = vadd.f32 %v888, %v985
      %v1010 = vadd.f32 %v889, %v988
      %v1011 = vadd.f32 %v890, %v993
      %v1012 = vadd.f32 %v891, %v996
      %v1013 = vadd.f32 %v892, %v1001
      %v1014 = vadd.f32 %v893, %v1004
      %s1015 = scalar_lea.vmem %s1, 224
      %v1016 = vld [vmem:[%s1015] sm:$0xf]
      %v1017 = vld [vmem:[%s1015 + $0x4] sm:$0xf]
      %v1018 = vld [vmem:[%s1015 + $0x8] sm:$0xf]
      %v1019 = vld [vmem:[%s1015 + $0xc] sm:$0xf]
      %v1020 = vld [vmem:[%s1015 + $0x10] sm:$0xf]
      %v1021 = vld [vmem:[%s1015 + $0x14] sm:$0xf]
      %v1022 = vld [vmem:[%s1015 + $0x18] sm:$0xf]
      %v1023 = vld [vmem:[%s1015 + $0x1c] sm:$0xf]
      %v1032 = vunpack.c.l.b16 %v1016
      %v1033 = vunpack.c.l.b16 %v1017
      %v1034 = vunpack.c.l.b16 %v1018
      %v1035 = vunpack.c.l.b16 %v1019
      %v1036 = vunpack.c.l.b16 %v1020
      %v1037 = vunpack.c.l.b16 %v1021
      %v1038 = vunpack.c.l.b16 %v1022
      %v1039 = vunpack.c.l.b16 %v1023
      %v1040 = vpack.c.b16 %v1033, %v1032
      %v1041 = vpack.c.b16 %v1035, %v1034
      %v1042 = vpack.c.b16 %v1037, %v1036
      %v1043 = vpack.c.b16 %v1039, %v1038
      %1044 = vrot.lane.b32.xlu0 %v204, 121
      %v1045 = vpop.permute.xlu0 %1044
      %1046 = vrot.lane.b32.xlu0 %v205, 121
      %v1047 = vpop.permute.xlu0 %1046
      %vm1048 = vcmask 990208
      %v1049 = vsel %vm1048, %v1045, %v1047
      %v1052 = vsel %vm235, %v1040, 0
      %v1055 = vsel %vm235, %v1041, 0
      %v1058 = vsel %vm235, %v1042, 0
      %v1061 = vsel %vm235, %v1043, 0
      %1063 = vmatprep.subr.bf16.mxu0 0
      %1064 = vmatpush1.bf16.msra.mxu0 %v1049
      %1065 = vmatprep.subr.bf16.mxu0 0
      %1066 = vmatpush1.bf16.msra.mxu0 0
      %1067 = vmatprep.subr.bf16.mxu0 0
      %1068 = vmatpush1.bf16.msra.mxu0 0
      %1069 = vmatprep.subr.bf16.mxu0 0
      %1070 = vmatpush1.bf16.msra.mxu0 0
      %1071 = vmatprep.subr.bf16.mxu0 0
      %1072 = vmatpush1.bf16.msra.mxu0 0
      %1073 = vmatprep.subr.bf16.mxu0 0
      %1074 = vmatpush1.bf16.msra.mxu0 0
      %1075 = vmatprep.subr.bf16.mxu0 0
      %1076 = vmatpush1.bf16.msra.mxu0 0
      %1077 = vmatprep.subr.bf16.mxu0 0
      %1078 = vmatpush1.bf16.msra.mxu0 0
      %1079 = vmatprep.subr.bf16.mxu0 0
      %1080 = vmatpush1.bf16.msra.mxu0 0
      %1081 = vmatprep.subr.bf16.mxu0 0
      %1082 = vmatpush1.bf16.msra.mxu0 0
      %1083 = vmatprep.subr.bf16.mxu0 0
      %1084 = vmatpush1.bf16.msra.mxu0 0
      %1085 = vmatprep.subr.bf16.mxu0 0
      %1086 = vmatpush1.bf16.msra.mxu0 0
      %1087 = vmatprep.subr.bf16.mxu0 0
      %1088 = vmatpush1.bf16.msra.mxu0 0
      %1089 = vmatprep.subr.bf16.mxu0 0
      %1090 = vmatpush1.bf16.msra.mxu0 0
      %1091 = vmatprep.subr.bf16.mxu0 0
      %1092 = vmatpush1.bf16.msra.mxu0 0
      %1093 = vmatprep.subr.bf16.mxu0 0
      %1094 = vmatpush1.bf16.msra.mxu0 0
      %1095 = vmatprep.mubr.bf16.mxu0 0
      %1096 = vmatmul.mubr.bf16.gmra.mrb[0].mxu0 %v1052
      %v1097 = vpop.f32.mrb[0].mxu0
      %v1098 = vadd.f32 0.0, %v1097
      %v1099 = vpop.f32.mrb[0].mxu0
      %v1100 = vpop.f32.mrb[0].mxu0
      %v1101 = vadd.f32 0.0, %v1100
      %v1102 = vpop.f32.mrb[0].mxu0
      %1103 = vmatprep.mubr.bf16.mxu0 0
      %1104 = vmatmul.mubr.bf16.gmra.mrb[0].mxu0 %v1055
      %v1105 = vpop.f32.mrb[0].mxu0
      %v1106 = vadd.f32 0.0, %v1105
      %v1107 = vpop.f32.mrb[0].mxu0
      %v1108 = vpop.f32.mrb[0].mxu0
      %v1109 = vadd.f32 0.0, %v1108
      %v1110 = vpop.f32.mrb[0].mxu0
      %1111 = vmatprep.mubr.bf16.mxu0 0
      %1112 = vmatmul.mubr.bf16.gmra.mrb[0].mxu0 %v1058
      %v1113 = vpop.f32.mrb[0].mxu0
      %v1114 = vadd.f32 0.0, %v1113
      %v1115 = vpop.f32.mrb[0].mxu0
      %v1116 = vpop.f32.mrb[0].mxu0
      %v1117 = vadd.f32 0.0, %v1116
      %v1118 = vpop.f32.mrb[0].mxu0
      %1119 = vmatprep.mubr.bf16.mxu0 0
      %1120 = vmatmul.mubr.bf16.gmra.mrb[0].mxu0 %v1061
      %v1121 = vpop.f32.mrb[0].mxu0
      %v1122 = vadd.f32 0.0, %v1121
      %v1123 = vpop.f32.mrb[0].mxu0
      %v1124 = vpop.f32.mrb[0].mxu0
      %v1125 = vadd.f32 0.0, %v1124
      %v1126 = vpop.f32.mrb[0].mxu0
      %1127 = vdwg.mxu0
      %v1128 = vadd.f32 %v1007, %v1098
      %v1129 = vadd.f32 %v1008, %v1101
      %v1130 = vadd.f32 %v1009, %v1106
      %v1131 = vadd.f32 %v1010, %v1109
      %v1132 = vadd.f32 %v1011, %v1114
      %v1133 = vadd.f32 %v1012, %v1117
      %v1134 = vadd.f32 %v1013, %v1122
      %v1135 = vadd.f32 %v1014, %v1125
      %s1136 = scalar_lea.vmem %s1, 256
      %v1137 = vld [vmem:[%s1136] sm:$0xf]
      %v1138 = vld [vmem:[%s1136 + $0x4] sm:$0xf]
      %v1139 = vld [vmem:[%s1136 + $0x8] sm:$0xf]
      %v1140 = vld [vmem:[%s1136 + $0xc] sm:$0xf]
      %v1141 = vld [vmem:[%s1136 + $0x10] sm:$0xf]
      %v1142 = vld [vmem:[%s1136 + $0x14] sm:$0xf]
      %v1143 = vld [vmem:[%s1136 + $0x18] sm:$0xf]
      %v1144 = vld [vmem:[%s1136 + $0x1c] sm:$0xf]
      %v1153 = vunpack.c.l.b16 %v1137
      %v1154 = vunpack.c.l.b16 %v1138
      %v1155 = vunpack.c.l.b16 %v1139
      %v1156 = vunpack.c.l.b16 %v1140
      %v1157 = vunpack.c.l.b16 %v1141
      %v1158 = vunpack.c.l.b16 %v1142
      %v1159 = vunpack.c.l.b16 %v1143
      %v1160 = vunpack.c.l.b16 %v1144
      %v1161 = vpack.c.b16 %v1154, %v1153
      %v1162 = vpack.c.b16 %v1156, %v1155
      %v1163 = vpack.c.b16 %v1158, %v1157
      %v1164 = vpack.c.b16 %v1160, %v1159
      %1165 = vrot.lane.b32.xlu0 %v204, 120
      %v1166 = vpop.permute.xlu0 %1165
      %1167 = vrot.lane.b32.xlu0 %v205, 120
      %v1168 = vpop.permute.xlu0 %1167
      %vm1169 = vcmask 982016
      %v1170 = vsel %vm1169, %v1166, %v1168
      %v1173 = vsel %vm235, %v1161, 0
      %v1176 = vsel %vm235, %v1162, 0
      %v1179 = vsel %vm235, %v1163, 0
      %v1182 = vsel %vm235, %v1164, 0
      %1184 = vmatprep.subr.bf16.mxu0 0
      %1185 = vmatpush1.bf16.msra.mxu0 %v1170
      %1186 = vmatprep.subr.bf16.mxu0 0
      %1187 = vmatpush1.bf16.msra.mxu0 0
      %1188 = vmatprep.subr.bf16.mxu0 0
      %1189 = vmatpush1.bf16.msra.mxu0 0
      %1190 = vmatprep.subr.bf16.mxu0 0
      %1191 = vmatpush1.bf16.msra.mxu0 0
      %1192 = vmatprep.subr.bf16.mxu0 0
      %1193 = vmatpush1.bf16.msra.mxu0 0
      %1194 = vmatprep.subr.bf16.mxu0 0
      %1195 = vmatpush1.bf16.msra.mxu0 0
      %1196 = vmatprep.subr.bf16.mxu0 0
      %1197 = vmatpush1.bf16.msra.mxu0 0
      %1198 = vmatprep.subr.bf16.mxu0 0
      %1199 = vmatpush1.bf16.msra.mxu0 0
      %1200 = vmatprep.subr.bf16.mxu0 0
      %1201 = vmatpush1.bf16.msra.mxu0 0
      %1202 = vmatprep.subr.bf16.mxu0 0
      %1203 = vmatpush1.bf16.msra.mxu0 0
      %1204 = vmatprep.subr.bf16.mxu0 0
      %1205 = vmatpush1.bf16.msra.mxu0 0
      %1206 = vmatprep.subr.bf16.mxu0 0
      %1207 = vmatpush1.bf16.msra.mxu0 0
      %1208 = vmatprep.subr.bf16.mxu0 0
      %1209 = vmatpush1.bf16.msra.mxu0 0
      %1210 = vmatprep.subr.bf16.mxu0 0
      %1211 = vmatpush1.bf16.msra.mxu0 0
      %1212 = vmatprep.subr.bf16.mxu0 0
      %1213 = vmatpush1.bf16.msra.mxu0 0
      %1214 = vmatprep.subr.bf16.mxu0 0
      %1215 = vmatpush1.bf16.msra.mxu0 0
      %1216 = vmatprep.mubr.bf16.mxu0 0
      %1217 = vmatmul.mubr.bf16.gmra.mrb[0].mxu0 %v1173
      %v1218 = vpop.f32.mrb[0].mxu0
      %v1219 = vadd.f32 0.0, %v1218
      %v1220 = vpop.f32.mrb[0].mxu0
      %v1221 = vpop.f32.mrb[0].mxu0
      %v1222 = vadd.f32 0.0, %v1221
      %v1223 = vpop.f32.mrb[0].mxu0
      %1224 = vmatprep.mubr.bf16.mxu0 0
      %1225 = vmatmul.mubr.bf16.gmra.mrb[0].mxu0 %v1176
      %v1226 = vpop.f32.mrb[0].mxu0
      %v1227 = vadd.f32 0.0, %v1226
      %v1228 = vpop.f32.mrb[0].mxu0
      %v1229 = vpop.f32.mrb[0].mxu0
      %v1230 = vadd.f32 0.0, %v1229
      %v1231 = vpop.f32.mrb[0].mxu0
      %1232 = vmatprep.mubr.bf16.mxu0 0
      %1233 = vmatmul.mubr.bf16.gmra.mrb[0].mxu0 %v1179
      %v1234 = vpop.f32.mrb[0].mxu0
      %v1235 = vadd.f32 0.0, %v1234
      %v1236 = vpop.f32.mrb[0].mxu0
      %v1237 = vpop.f32.mrb[0].mxu0
      %v1238 = vadd.f32 0.0, %v1237
      %v1239 = vpop.f32.mrb[0].mxu0
      %1240 = vmatprep.mubr.bf16.mxu0 0
      %1241 = vmatmul.mubr.bf16.gmra.mrb[0].mxu0 %v1182
      %v1242 = vpop.f32.mrb[0].mxu0
      %v1243 = vadd.f32 0.0, %v1242
      %v1244 = vpop.f32.mrb[0].mxu0
      %v1245 = vpop.f32.mrb[0].mxu0
      %v1246 = vadd.f32 0.0, %v1245
      %v1247 = vpop.f32.mrb[0].mxu0
      %1248 = vdwg.mxu0
      %v1249 = vadd.f32 %v1128, %v1219
      %v1250 = vadd.f32 %v1129, %v1222
      %v1251 = vadd.f32 %v1130, %v1227
      %v1252 = vadd.f32 %v1131, %v1230
      %v1253 = vadd.f32 %v1132, %v1235
      %v1254 = vadd.f32 %v1133, %v1238
      %v1255 = vadd.f32 %v1134, %v1243
      %v1256 = vadd.f32 %v1135, %v1246
      %s1257 = scalar_lea.vmem %s1, 288
      %v1258 = vld [vmem:[%s1257] sm:$0xf]
      %v1259 = vld [vmem:[%s1257 + $0x4] sm:$0xf]
      %v1260 = vld [vmem:[%s1257 + $0x8] sm:$0xf]
      %v1261 = vld [vmem:[%s1257 + $0xc] sm:$0xf]
      %v1262 = vld [vmem:[%s1257 + $0x10] sm:$0xf]
      %v1263 = vld [vmem:[%s1257 + $0x14] sm:$0xf]
      %v1264 = vld [vmem:[%s1257 + $0x18] sm:$0xf]
      %v1265 = vld [vmem:[%s1257 + $0x1c] sm:$0xf]
      %v1274 = vunpack.c.l.b16 %v1258
      %v1275 = vunpack.c.l.b16 %v1259
      %v1276 = vunpack.c.l.b16 %v1260
      %v1277 = vunpack.c.l.b16 %v1261
      %v1278 = vunpack.c.l.b16 %v1262
      %v1279 = vunpack.c.l.b16 %v1263
      %v1280 = vunpack.c.l.b16 %v1264
      %v1281 = vunpack.c.l.b16 %v1265
      %v1282 = vpack.c.b16 %v1275, %v1274
      %v1283 = vpack.c.b16 %v1277, %v1276
      %v1284 = vpack.c.b16 %v1279, %v1278
      %v1285 = vpack.c.b16 %v1281, %v1280
      %1286 = vrot.lane.b32.xlu0 %v204, 119
      %v1287 = vpop.permute.xlu0 %1286
      %1288 = vrot.lane.b32.xlu0 %v205, 119
      %v1289 = vpop.permute.xlu0 %1288
      %vm1290 = vcmask 973824
      %v1291 = vsel %vm1290, %v1287, %v1289
      %v1294 = vsel %vm235, %v1282, 0
      %v1297 = vsel %vm235, %v1283, 0
      %v1300 = vsel %vm235, %v1284, 0
      %v1303 = vsel %vm235, %v1285, 0
      %1305 = vmatprep.subr.bf16.mxu0 0
      %1306 = vmatpush1.bf16.msra.mxu0 %v1291
      %1307 = vmatprep.subr.bf16.mxu0 0
      %1308 = vmatpush1.bf16.msra.mxu0 0
      %1309 = vmatprep.subr.bf16.mxu0 0
      %1310 = vmatpush1.bf16.msra.mxu0 0
      %1311 = vmatprep.subr.bf16.mxu0 0
      %1312 = vmatpush1.bf16.msra.mxu0 0
      %1313 = vmatprep.subr.bf16.mxu0 0
      %1314 = vmatpush1.bf16.msra.mxu0 0
      %1315 = vmatprep.subr.bf16.mxu0 0
      %1316 = vmatpush1.bf16.msra.mxu0 0
      %1317 = vmatprep.subr.bf16.mxu0 0
      %1318 = vmatpush1.bf16.msra.mxu0 0
      %1319 = vmatprep.subr.bf16.mxu0 0
      %1320 = vmatpush1.bf16.msra.mxu0 0
      %1321 = vmatprep.subr.bf16.mxu0 0
      %1322 = vmatpush1.bf16.msra.mxu0 0
      %1323 = vmatprep.subr.bf16.mxu0 0
      %1324 = vmatpush1.bf16.msra.mxu0 0
      %1325 = vmatprep.subr.bf16.mxu0 0
      %1326 = vmatpush1.bf16.msra.mxu0 0
      %1327 = vmatprep.subr.bf16.mxu0 0
      %1328 = vmatpush1.bf16.msra.mxu0 0
      %1329 = vmatprep.subr.bf16.mxu0 0
      %1330 = vmatpush1.bf16.msra.mxu0 0
      %1331 = vmatprep.subr.bf16.mxu0 0
      %1332 = vmatpush1.bf16.msra.mxu0 0
      %1333 = vmatprep.subr.bf16.mxu0 0
      %1334 = vmatpush1.bf16.msra.mxu0 0
      %1335 = vmatprep.subr.bf16.mxu0 0
      %1336 = vmatpush1.bf16.msra.mxu0 0
      %1337 = vmatprep.mubr.bf16.mxu0 0
      %1338 = vmatmul.mubr.bf16.gmra.mrb[0].mxu0 %v1294
      %v1339 = vpop.f32.mrb[0].mxu0
      %v1340 = vadd.f32 0.0, %v1339
      %v1341 = vpop.f32.mrb[0].mxu0
      %v1342 = vpop.f32.mrb[0].mxu0
      %v1343 = vadd.f32 0.0, %v1342
      %v1344 = vpop.f32.mrb[0].mxu0
      %1345 = vmatprep.mubr.bf16.mxu0 0
      %1346 = vmatmul.mubr.bf16.gmra.mrb[0].mxu0 %v1297
      %v1347 = vpop.f32.mrb[0].mxu0
      %v1348 = vadd.f32 0.0, %v1347
      %v1349 = vpop.f32.mrb[0].mxu0
      %v1350 = vpop.f32.mrb[0].mxu0
      %v1351 = vadd.f32 0.0, %v1350
      %v1352 = vpop.f32.mrb[0].mxu0
      %1353 = vmatprep.mubr.bf16.mxu0 0
      %1354 = vmatmul.mubr.bf16.gmra.mrb[0].mxu0 %v1300
      %v1355 = vpop.f32.mrb[0].mxu0
      %v1356 = vadd.f32 0.0, %v1355
      %v1357 = vpop.f32.mrb[0].mxu0
      %v1358 = vpop.f32.mrb[0].mxu0
      %v1359 = vadd.f32 0.0, %v1358
      %v1360 = vpop.f32.mrb[0].mxu0
      %1361 = vmatprep.mubr.bf16.mxu0 0
      %1362 = vmatmul.mubr.bf16.gmra.mrb[0].mxu0 %v1303
      %v1363 = vpop.f32.mrb[0].mxu0
      %v1364 = vadd.f32 0.0, %v1363
      %v1365 = vpop.f32.mrb[0].mxu0
      %v1366 = vpop.f32.mrb[0].mxu0
      %v1367 = vadd.f32 0.0, %v1366
      %v1368 = vpop.f32.mrb[0].mxu0
      %1369 = vdwg.mxu0
      %v1370 = vadd.f32 %v1249, %v1340
      %v1371 = vadd.f32 %v1250, %v1343
      %v1372 = vadd.f32 %v1251, %v1348
      %v1373 = vadd.f32 %v1252, %v1351
      %v1374 = vadd.f32 %v1253, %v1356
      %v1375 = vadd.f32 %v1254, %v1359
      %v1376 = vadd.f32 %v1255, %v1364
      %v1377 = vadd.f32 %v1256, %v1367
      %v1378 = vld [vmem:[%s2] sm:$0xff]
      %v1379 = vld [vmem:[%s2 + $0x8] sm:$0xff]
      %v1380 = vld [vmem:[%s2 + $0x10] sm:$0xff]
      %v1381 = vld [vmem:[%s2 + $0x18] sm:$0xff]
      %v1382 = vld [vmem:[%s2 + $0x20] sm:$0xff]
      %v1383 = vld [vmem:[%s2 + $0x28] sm:$0xff]
      %v1384 = vld [vmem:[%s2 + $0x30] sm:$0xff]
      %v1385 = vld [vmem:[%s2 + $0x38] sm:$0xff]
      %1387 = vset.pattern.permute.xlu0 0
      %1388 = vperm.xlu0 %1387, %v1378
      %v1389 = vpop.permute.xlu0 %1388
      %1392 = vset.pattern.permute.xlu0 0
      %1393 = vperm.xlu0 %1392, %v1379
      %v1394 = vpop.permute.xlu0 %1393
      %1397 = vset.pattern.permute.xlu0 0
      %1398 = vperm.xlu0 %1397, %v1380
      %v1399 = vpop.permute.xlu0 %1398
      %1402 = vset.pattern.permute.xlu0 0
      %1403 = vperm.xlu0 %1402, %v1381
      %v1404 = vpop.permute.xlu0 %1403
      %1407 = vset.pattern.permute.xlu0 0
      %1408 = vperm.xlu0 %1407, %v1382
      %v1409 = vpop.permute.xlu0 %1408
      %1412 = vset.pattern.permute.xlu0 0
      %1413 = vperm.xlu0 %1412, %v1383
      %v1414 = vpop.permute.xlu0 %1413
      %1417 = vset.pattern.permute.xlu0 0
      %1418 = vperm.xlu0 %1417, %v1384
      %v1419 = vpop.permute.xlu0 %1418
      %1422 = vset.pattern.permute.xlu0 0
      %1423 = vperm.xlu0 %1422, %v1385
      %v1424 = vpop.permute.xlu0 %1423
      %v1426 = vadd.f32 %v1370, %v1389
      %v1427 = vadd.f32 %v1371, %v1394
      %v1428 = vadd.f32 %v1372, %v1399
      %v1429 = vadd.f32 %v1373, %v1404
      %v1430 = vadd.f32 %v1374, %v1409
      %v1431 = vadd.f32 %v1375, %v1414
      %v1432 = vadd.f32 %v1376, %v1419
      %v1433 = vadd.f32 %v1377, %v1424
      %v1434 = vmax.f32 %v1426, 0.0
      %v1435 = vmax.f32 %v1427, 0.0
      %v1436 = vmax.f32 %v1428, 0.0
      %v1437 = vmax.f32 %v1429, 0.0
      %v1438 = vmax.f32 %v1430, 0.0
      %v1439 = vmax.f32 %v1431, 0.0
      %v1440 = vmax.f32 %v1432, 0.0
      %v1441 = vmax.f32 %v1433, 0.0
      %v1442 = vpack.c.bf16 %v1435, %v1434
      %v1443 = vpack.c.bf16 %v1437, %v1436
      %v1444 = vpack.c.bf16 %v1439, %v1438
      %v1445 = vpack.c.bf16 %v1441, %v1440
      %v1450 = vunpack.c.l.b16 %v1442
      %v1451 = vunpack.c.h.b16 %v1442
      %v1452 = vunpack.c.l.b16 %v1443
      %v1453 = vunpack.c.h.b16 %v1443
      %v1454 = vunpack.c.l.b16 %v1444
      %v1455 = vunpack.c.h.b16 %v1444
      %v1456 = vunpack.c.l.b16 %v1445
      %v1457 = vunpack.c.h.b16 %v1445
      %v1458 = vpack.c.b16 %v1450, %v1450
      %v1459 = vpack.c.b16 %v1451, %v1451
      %v1460 = vpack.c.b16 %v1452, %v1452
      %v1461 = vpack.c.b16 %v1453, %v1453
      %v1462 = vpack.c.b16 %v1454, %v1454
      %v1463 = vpack.c.b16 %v1455, %v1455
      %v1464 = vpack.c.b16 %v1456, %v1456
      %v1465 = vpack.c.b16 %v1457, %v1457
      %1474 = vst [vmem:[%s170] sm:$0xf] %v1458
      %1475 = vst [vmem:[%s170 + $0x4] sm:$0xf] %v1459
      %1476 = vst [vmem:[%s170 + $0x8] sm:$0xf] %v1460
      %1477 = vst [vmem:[%s170 + $0xc] sm:$0xf] %v1461
      %1478 = vst [vmem:[%s170 + $0x10] sm:$0xf] %v1462
      %1479 = vst [vmem:[%s170 + $0x14] sm:$0xf] %v1463
      %1480 = vst [vmem:[%s170 + $0x18] sm:$0xf] %v1464
      %1481 = vst [vmem:[%s170 + $0x1c] sm:$0xf] %v1465
      %p1482 = scmp.lt.s32.totalorder %s14, 1
      %s1483 = scalar_select %p1482, %s14, 1
      %s1484 = smul.addr %s1483, 8
      %s1485 = smul.addr %s1484, 4
      %s1486 = scalar_lea.vmem %s3, %s1485
      // Predicated region
      $region33: #{ecg_reconstructor_forward.18} parent=31 // pred_check
        %p1487 = pneg %p100
      $region34: #{ecg_reconstructor_forward.18} parent=31 // pred_check_branch
        %1489 = sbr.rel (%p1487) target = $region36
      $region35: #{ecg_reconstructor_forward.18} parent=31 // pred_region
        _
      $region36: #{ecg_reconstructor_forward.18} parent=31 // pred_fallthru
        _
    $region32: #{ecg_reconstructor_forward.18} parent=5 // pred_fallthru
      _
    %p1490 = scmp.le.s32.totalorder 2, %s9
    // Predicated region
    $region37: #{ecg_reconstructor_forward.18} parent=5 // pred_check
      %p1491 = pneg %p1490
    $region38: #{ecg_reconstructor_forward.18} parent=5 // pred_check_branch
      %1493 = sbr.rel (%p1491) target = $region40
    $region39: #{ecg_reconstructor_forward.18} parent=5 // pred_region
      %s1494 = ssub.s32 %s9, 2
      // Predicated region
      $region41: #{ecg_reconstructor_forward.18} parent=39 // pred_check
        %p1495 = pneg %p106
      $region42: #{ecg_reconstructor_forward.18} parent=39 // pred_check_branch
        %1497 = sbr.rel (%p1495) target = $region44
      $region43: #{ecg_reconstructor_forward.18} parent=39 // pred_region
        %p1498 = scmp.lt.s32.totalorder %s15, 1
        %s1499 = scalar_select %p1498, %s15, 1
        %s1500 = smul.addr %s1499, 8
        %s1501 = smul.addr %s1500, 4
        %s1502 = scalar_lea.vmem %s3, %s1501
      $region44: #{ecg_reconstructor_forward.18} parent=39 // pred_fallthru
        _
    $region40: #{ecg_reconstructor_forward.18} parent=5 // pred_fallthru
      _
  $region6: #{ecg_reconstructor_forward.18} parent=0 // loop_footer
    %s13 = sadd.s32 1, %s9
  $region7: #{ecg_reconstructor_forward.18} parent=0 // loop_footer_branch
    %8 = sbr.rel target = $region3
  $region8: #{ecg_reconstructor_forward.18} parent=0 // loop_exit
    _

// kernel: ecg_reconstructor_forward.20
$region0: #{ecg_reconstructor_forward.20}
  #allocation0 [shape = 'u32[]', space=smem, size = 0x4, offset = 0x4, fixed_abs, tag = 'smem constant byte address 0x4 - core index']
  #allocation1 [shape = 'u32[144,128]{1,0:T(1,128)}', space=vmem, size = 0x12000, scoped, tag = 'internal scratch']
  #allocation2 [shape = 'bf16[32,256]{1,0:T(16,128)(2,1)}', space=vmem, size = 0x4000, scoped, tag = 'scratch operand']
  %s0 = inlined_call_operand.vmem [shape: bf16[2,32,20], index: 0, kind: input, shape index: {}]
  %s1 = inlined_call_operand.vmem [shape: bf16[3,32,32], index: 1, kind: input, shape index: {}]
  %s2 = inlined_call_operand.vmem [shape: f32[32,1], index: 2, kind: input, shape index: {}]
  %s3 = inlined_call_operand.vmem [shape: bf16[2,32,128], index: 3, kind: output, shape index: {}]
  %s4 = sld [smem:[#allocation0]]
  $region45: #{ecg_reconstructor_forward.20} parent=0
    _
  %s6 = ssub.s32 1, %s4
  %s7 = scalar_select 0, %s6, %s4
  loop: start=0, step=1, limit=4
  $region2: #{ecg_reconstructor_forward.20} parent=0 // loop_pre_header
    _
  $region3: #{ecg_reconstructor_forward.20} parent=0 // loop_header
    %s9 = sphi 0, %s13
    %p10 = scmp.ge.s32.totalorder %s9, 4
    %s19 = sphi 0, %s21
    %s22 = sphi 0, %s19
    %s23 = sphi 0, %s22
    %s39 = sphi 0, %s23
    %s43 = sphi 0, %s43
    %s45 = sphi 0, %s43
    %s46 = sphi 0, %s45
    %s60 = sphi 0, %s46
    %s64 = sphi 0, %s64
    %s66 = sphi 0, %s64
    %s67 = sphi 0, %s66
    %s81 = sphi 0, %s67
    %s87 = sphi 0, %s89
    %s90 = sphi 0, %s87
    %s91 = sphi 0, %s90
    %s107 = sphi 0, %s91
  $region4: #{ecg_reconstructor_forward.20} parent=0 // loop_header_branch
    %12 = sbr.rel (%p10) target = $region8
  $region5: #{ecg_reconstructor_forward.20} parent=0 // loop_body
    %s14 = ssub.s32 %s9, 1
    %s15 = ssub.s32 %s9, 2
    %s16 = sadd.s32 %s9, 1
    %s17 = ssub.s32 %s9, %s16
    %p18 = scmp.eq.s32.totalorder %s17, 0
    %s20 = sadd.s32 %s19, 1
    %s21 = scalar_select %p18, %s19, %s20
    %p24 = pneg %p18
    %p25 = scmp.eq.s32.totalorder %s9, 1
    %p26 = por %p24, %p25
    %p27 = scmp.ne.s32.totalorder %s19, %s22
    %p28 = scmp.eq.s32.totalorder %s9, 0
    %p29 = por %p27, %p28
    %p30 = scmp.ne.s32.totalorder %s19, %s22
    %p31 = scmp.eq.s32.totalorder %s14, 1
    %p32 = por %p30, %p31
    %p33 = scmp.ne.s32.totalorder %s22, %s23
    %p34 = scmp.eq.s32.totalorder %s14, 0
    %p35 = por %p33, %p34
    %p36 = scmp.ne.s32.totalorder %s22, %s23
    %p37 = scmp.eq.s32.totalorder %s15, 1
    %p38 = por %p36, %p37
    %p40 = scmp.ne.s32.totalorder %s23, %s39
    %p41 = scmp.eq.s32.totalorder %s15, 0
    %p42 = por %p40, %p41
    %s44 = sadd.s32 %s43, 1
    %p47 = scmp.eq.s32.totalorder %s9, 1
    %p48 = scmp.ne.s32.totalorder %s43, %s45
    %p49 = scmp.eq.s32.totalorder %s9, 0
    %p50 = por %p48, %p49
    %p51 = scmp.ne.s32.totalorder %s43, %s45
    %p52 = scmp.eq.s32.totalorder %s14, 1
    %p53 = por %p51, %p52
    %p54 = scmp.ne.s32.totalorder %s45, %s46
    %p55 = scmp.eq.s32.totalorder %s14, 0
    %p56 = por %p54, %p55
    %p57 = scmp.ne.s32.totalorder %s45, %s46
    %p58 = scmp.eq.s32.totalorder %s15, 1
    %p59 = por %p57, %p58
    %p61 = scmp.ne.s32.totalorder %s46, %s60
    %p62 = scmp.eq.s32.totalorder %s15, 0
    %p63 = por %p61, %p62
    %s65 = sadd.s32 %s64, 1
    %p68 = scmp.eq.s32.totalorder %s9, 1
    %p69 = scmp.ne.s32.totalorder %s64, %s66
    %p70 = scmp.eq.s32.totalorder %s9, 0
    %p71 = por %p69, %p70
    %p72 = scmp.ne.s32.totalorder %s64, %s66
    %p73 = scmp.eq.s32.totalorder %s14, 1
    %p74 = por %p72, %p73
    %p75 = scmp.ne.s32.totalorder %s66, %s67
    %p76 = scmp.eq.s32.totalorder %s14, 0
    %p77 = por %p75, %p76
    %p78 = scmp.ne.s32.totalorder %s66, %s67
    %p79 = scmp.eq.s32.totalorder %s15, 1
    %p80 = por %p78, %p79
    %p82 = scmp.ne.s32.totalorder %s67, %s81
    %p83 = scmp.eq.s32.totalorder %s15, 0
    %p84 = por %p82, %p83
    %s85 = ssub.s32 %s9, %s16
    %p86 = scmp.eq.s32.totalorder %s85, 0
    %s88 = sadd.s32 %s87, 1
    %s89 = scalar_select %p86, %s87, %s88
    %p92 = pneg %p86
    %p93 = scmp.eq.s32.totalorder %s9, 1
    %p94 = por %p92, %p93
    %p95 = scmp.ne.s32.totalorder %s87, %s90
    %p96 = scmp.eq.s32.totalorder %s9, 0
    %p97 = por %p95, %p96
    %p98 = scmp.ne.s32.totalorder %s87, %s90
    %p99 = scmp.eq.s32.totalorder %s14, 1
    %p100 = por %p98, %p99
    %p101 = scmp.ne.s32.totalorder %s90, %s91
    %p102 = scmp.eq.s32.totalorder %s14, 0
    %p103 = por %p101, %p102
    %p104 = scmp.ne.s32.totalorder %s90, %s91
    %p105 = scmp.eq.s32.totalorder %s15, 1
    %p106 = por %p104, %p105
    %p108 = scmp.ne.s32.totalorder %s91, %s107
    %p109 = scmp.eq.s32.totalorder %s15, 0
    %p110 = por %p108, %p109
    %p111 = scmp.le.s32.totalorder 1, %s9
    %p112 = scmp.lt.s32.totalorder %s9, 3
    %p113 = pnand %p111, %p112
    %p114 = pneg %p113
    // Predicated region
    $region9: #{ecg_reconstructor_forward.20} parent=5 // pred_check
      _
    $region10: #{ecg_reconstructor_forward.20} parent=5 // pred_check_branch
      %116 = sbr.rel (%p113) target = $region12
    $region11: #{ecg_reconstructor_forward.20} parent=5 // pred_region
      %s117 = ssub.s32 %s9, 1
      // Predicated region
      $region13: #{ecg_reconstructor_forward.20} parent=11 // pred_check
        %p118 = pneg %p56
      $region14: #{ecg_reconstructor_forward.20} parent=11 // pred_check_branch
        %120 = sbr.rel (%p118) target = $region16
      $region15: #{ecg_reconstructor_forward.20} parent=11 // pred_region
        _
      $region16: #{ecg_reconstructor_forward.20} parent=11 // pred_fallthru
        _
      // Predicated region
      $region17: #{ecg_reconstructor_forward.20} parent=11 // pred_check
        %p121 = pneg %p77
      $region18: #{ecg_reconstructor_forward.20} parent=11 // pred_check_branch
        %123 = sbr.rel (%p121) target = $region20
      $region19: #{ecg_reconstructor_forward.20} parent=11 // pred_region
        _
      $region20: #{ecg_reconstructor_forward.20} parent=11 // pred_fallthru
        _
    $region12: #{ecg_reconstructor_forward.20} parent=5 // pred_fallthru
      _
    %p124 = scmp.lt.s32.totalorder %s9, 2
    // Predicated region
    $region21: #{ecg_reconstructor_forward.20} parent=5 // pred_check
      %p125 = pneg %p124
    $region22: #{ecg_reconstructor_forward.20} parent=5 // pred_check_branch
      %127 = sbr.rel (%p125) target = $region24
    $region23: #{ecg_reconstructor_forward.20} parent=5 // pred_region
      // Predicated region
      $region25: #{ecg_reconstructor_forward.20} parent=23 // pred_check
        %p128 = pneg %p29
      $region26: #{ecg_reconstructor_forward.20} parent=23 // pred_check_branch
        %130 = sbr.rel (%p128) target = $region28
      $region27: #{ecg_reconstructor_forward.20} parent=23 // pred_region
        %p131 = scmp.lt.s32.totalorder %s9, 1
        %s132 = scalar_select %p131, %s9, 1
        %s133 = smul.addr %s132, 4
        %s134 = smul.addr %s133, 4
        %s135 = scalar_lea.vmem %s0, %s134
      $region28: #{ecg_reconstructor_forward.20} parent=23 // pred_fallthru
        _
    $region24: #{ecg_reconstructor_forward.20} parent=5 // pred_fallthru
      _
    %p136 = scmp.le.s32.totalorder 1, %s9
    %p137 = scmp.lt.s32.totalorder %s9, 3
    %p138 = pnand %p136, %p137
    %p139 = pneg %p138
    // Predicated region
    $region29: #{ecg_reconstructor_forward.20} parent=5 // pred_check
      _
    $region30: #{ecg_reconstructor_forward.20} parent=5 // pred_check_branch
      %141 = sbr.rel (%p138) target = $region32
    $region31: #{ecg_reconstructor_forward.20} parent=5 // pred_region
      %s142 = ssub.s32 %s9, 1
      %p143 = scmp.lt.s32.totalorder %s14, 1
      %s144 = scalar_select %p143, %s14, 1
      %s145 = smul.addr %s144, 4
      %s146 = smul.addr %s145, 4
      %s147 = scalar_lea.vmem %s0, %s146
      %p148 = pneg %p35
      %p149 = pneg %p32
      %p150 = pneg %p56
      %p151 = pneg %p53
      %p152 = pneg %p77
      %p153 = pneg %p74
      %p154 = pneg %p103
      %p155 = pneg %p100
      %p156 = scmp.lt.s32.totalorder %s14, 1
      %s157 = scalar_select %p156, %s14, 1
      %s158 = smul.addr %s157, 4
      %s159 = smul.addr %s158, 4
      %s160 = scalar_lea.vmem %s3, %s159
      %p161 = scmp.lt.s32.totalorder %s14, 1
      %s162 = scalar_select %p161, %s14, 1
      %s163 = smul.addr %s162, 4
      %s164 = smul.addr %s163, 4
      %s165 = scalar_lea.vmem %s0, %s164
      %p166 = scmp.lt.s32.totalorder %s14, 1
      %s167 = scalar_select %p166, %s14, 1
      %s168 = smul.addr %s167, 4
      %s169 = smul.addr %s168, 4
      %s170 = scalar_lea.vmem %s3, %s169
      %172 = vst [vmem:[#allocation2] sm:$0xff] 0
      %173 = vst [vmem:[#allocation2 + $0x8] sm:$0xff] 0
      %174 = vst [vmem:[#allocation2 + $0x10] sm:$0xff] 0
      %175 = vst [vmem:[#allocation2 + $0x18] sm:$0xff] 0
      %v176 = vld [vmem:[%s165] sm:$0xf]
      %v177 = vld [vmem:[%s165 + $0x4] sm:$0xf]
      %v178 = vld [vmem:[%s165 + $0x8] sm:$0xf]
      %v179 = vld [vmem:[%s165 + $0xc] sm:$0xf]
      %v184 = vunpack.c.l.b16 %v176
      %v185 = vunpack.c.l.b16 %v177
      %v186 = vunpack.c.l.b16 %v178
      %v187 = vunpack.c.l.b16 %v179
      %v188 = vpack.c.b16 %v185, %v184
      %v189 = vpack.c.b16 %v187, %v186
      %190 = vrot.lane.b32.xlu0 %v188, 1
      %v191 = vpop.permute.xlu0 %190
      %192 = vrot.lane.b32.xlu0 %v189, 1
      %v193 = vpop.permute.xlu0 %192
      %vm196 = vcmask 171016
      %197 = vst.msk [vmem:[#allocation2] sm:$0xff] %vm196, %v191
      %198 = vst.msk [vmem:[#allocation2 + $0x10] sm:$0xff] %vm196, %v193
      %v199 = vld [vmem:[%s1] sm:$0xf]
      %v200 = vld [vmem:[%s1 + $0x4] sm:$0xf]
      %v201 = vld [vmem:[%s1 + $0x8] sm:$0xf]
      %v202 = vld [vmem:[%s1 + $0xc] sm:$0xf]
      %v203 = vld [vmem:[#allocation2] sm:$0xff]
      %v204 = vld [vmem:[#allocation2 + $0x10] sm:$0xff]
      %s205 = scalar_lea.vmem %s1, 16
      %v206 = vld [vmem:[%s205] sm:$0xf]
      %v207 = vld [vmem:[%s205 + $0x4] sm:$0xf]
      %v208 = vld [vmem:[%s205 + $0x8] sm:$0xf]
      %v209 = vld [vmem:[%s205 + $0xc] sm:$0xf]
      %v210 = vld [vmem:[#allocation2] sm:$0xff]
      %v211 = vld [vmem:[#allocation2 + $0x8] sm:$0xff]
      %v212 = vld [vmem:[#allocation2 + $0x10] sm:$0xff]
      %v213 = vld [vmem:[#allocation2 + $0x18] sm:$0xff]
      %v218 = vunpack.c.l.b16 %v206
      %v219 = vunpack.c.l.b16 %v207
      %v220 = vunpack.c.l.b16 %v208
      %v221 = vunpack.c.l.b16 %v209
      %v222 = vpack.c.b16 %v219, %v218
      %v223 = vpack.c.b16 %v221, %v220
      %228 = vrot.lane.b32.xlu0 %v210, 127
      %v229 = vpop.permute.xlu0 %228
      %230 = vrot.lane.b32.xlu0 %v211, 127
      %v231 = vpop.permute.xlu0 %230
      %232 = vrot.lane.b32.xlu0 %v212, 127
      %v233 = vpop.permute.xlu0 %232
      %234 = vrot.lane.b32.xlu0 %v213, 127
      %v235 = vpop.permute.xlu0 %234
      %vm236 = vcmask 1039360
      %v237 = vsel %vm236, %v229, %v231
      %v238 = vsel %vm236, %v233, %v235
      %vm241 = vcmask 261120
      %v243 = vsel %vm241, %v222, 0
      %v246 = vsel %vm241, %v223, 0
      %248 = vmatprep.subr.bf16.mxu0 0
      %249 = vmatpush1.bf16.msra.mxu0 %v237
      %250 = vmatprep.subr.bf16.mxu0 0
      %251 = vmatpush1.bf16.msra.mxu0 %v238
      %252 = vmatprep.subr.bf16.mxu0 0
      %253 = vmatpush1.bf16.msra.mxu0 0
      %254 = vmatprep.subr.bf16.mxu0 0
      %255 = vmatpush1.bf16.msra.mxu0 0
      %256 = vmatprep.subr.bf16.mxu0 0
      %257 = vmatpush1.bf16.msra.mxu0 0
      %258 = vmatprep.subr.bf16.mxu0 0
      %259 = vmatpush1.bf16.msra.mxu0 0
      %260 = vmatprep.subr.bf16.mxu0 0
      %261 = vmatpush1.bf16.msra.mxu0 0
      %262 = vmatprep.subr.bf16.mxu0 0
      %263 = vmatpush1.bf16.msra.mxu0 0
      %264 = vmatprep.subr.bf16.mxu0 0
      %265 = vmatpush1.bf16.msra.mxu0 0
      %266 = vmatprep.subr.bf16.mxu0 0
      %267 = vmatpush1.bf16.msra.mxu0 0
      %268 = vmatprep.subr.bf16.mxu0 0
      %269 = vmatpush1.bf16.msra.mxu0 0
      %270 = vmatprep.subr.bf16.mxu0 0
      %271 = vmatpush1.bf16.msra.mxu0 0
      %272 = vmatprep.subr.bf16.mxu0 0
      %273 = vmatpush1.bf16.msra.mxu0 0
      %274 = vmatprep.subr.bf16.mxu0 0
      %275 = vmatpush1.bf16.msra.mxu0 0
      %276 = vmatprep.subr.bf16.mxu0 0
      %277 = vmatpush1.bf16.msra.mxu0 0
      %278 = vmatprep.subr.bf16.mxu0 0
      %279 = vmatpush1.bf16.msra.mxu0 0
      %280 = vmatprep.mubr.bf16.mxu0 0
      %281 = vmatmul.mubr.bf16.gmra.mrb[0].mxu0 %v243
      %v282 = vpop.f32.mrb[0].mxu0
      %v283 = vadd.f32 0.0, %v282
      %v284 = vpop.f32.mrb[0].mxu0
      %v285 = vpop.f32.mrb[0].mxu0
      %v286 = vadd.f32 0.0, %v285
      %v287 = vpop.f32.mrb[0].mxu0
      %288 = vmatprep.mubr.bf16.mxu0 0
      %289 = vmatmul.mubr.bf16.gmra.mrb[0].mxu0 %v246
      %v290 = vpop.f32.mrb[0].mxu0
      %v291 = vadd.f32 0.0, %v290
      %v292 = vpop.f32.mrb[0].mxu0
      %v293 = vpop.f32.mrb[0].mxu0
      %v294 = vadd.f32 0.0, %v293
      %v295 = vpop.f32.mrb[0].mxu0
      %296 = vdwg.mxu0
      %v301 = vunpack.c.l.b16 %v199
      %v302 = vunpack.c.l.b16 %v200
      %v303 = vunpack.c.l.b16 %v201
      %v304 = vunpack.c.l.b16 %v202
      %v305 = vpack.c.b16 %v302, %v301
      %v306 = vpack.c.b16 %v304, %v303
      %v308 = vsel %vm241, %v305, 0
      %v311 = vsel %vm241, %v306, 0
      %313 = vmatprep.subr.bf16.mxu0 0
      %314 = vmatpush1.bf16.msra.mxu0 %v203
      %315 = vmatprep.subr.bf16.mxu0 0
      %316 = vmatpush1.bf16.msra.mxu0 %v204
      %317 = vmatprep.subr.bf16.mxu0 0
      %318 = vmatpush1.bf16.msra.mxu0 0
      %319 = vmatprep.subr.bf16.mxu0 0
      %320 = vmatpush1.bf16.msra.mxu0 0
      %321 = vmatprep.subr.bf16.mxu0 0
      %322 = vmatpush1.bf16.msra.mxu0 0
      %323 = vmatprep.subr.bf16.mxu0 0
      %324 = vmatpush1.bf16.msra.mxu0 0
      %325 = vmatprep.subr.bf16.mxu0 0
      %326 = vmatpush1.bf16.msra.mxu0 0
      %327 = vmatprep.subr.bf16.mxu0 0
      %328 = vmatpush1.bf16.msra.mxu0 0
      %329 = vmatprep.subr.bf16.mxu0 0
      %330 = vmatpush1.bf16.msra.mxu0 0
      %331 = vmatprep.subr.bf16.mxu0 0
      %332 = vmatpush1.bf16.msra.mxu0 0
      %333 = vmatprep.subr.bf16.mxu0 0
      %334 = vmatpush1.bf16.msra.mxu0 0
      %335 = vmatprep.subr.bf16.mxu0 0
      %336 = vmatpush1.bf16.msra.mxu0 0
      %337 = vmatprep.subr.bf16.mxu0 0
      %338 = vmatpush1.bf16.msra.mxu0 0
      %339 = vmatprep.subr.bf16.mxu0 0
      %340 = vmatpush1.bf16.msra.mxu0 0
      %341 = vmatprep.subr.bf16.mxu0 0
      %342 = vmatpush1.bf16.msra.mxu0 0
      %343 = vmatprep.subr.bf16.mxu0 0
      %344 = vmatpush1.bf16.msra.mxu0 0
      %345 = vmatprep.mubr.bf16.mxu0 0
      %346 = vmatmul.mubr.bf16.gmra.mrb[0].mxu0 %v308
      %v347 = vpop.f32.mrb[0].mxu0
      %v348 = vadd.f32 %v283, %v347
      %v349 = vpop.f32.mrb[0].mxu0
      %v350 = vpop.f32.mrb[0].mxu0
      %v351 = vadd.f32 %v286, %v350
      %v352 = vpop.f32.mrb[0].mxu0
      %353 = vmatprep.mubr.bf16.mxu0 0
      %354 = vmatmul.mubr.bf16.gmra.mrb[0].mxu0 %v311
      %v355 = vpop.f32.mrb[0].mxu0
      %v356 = vadd.f32 %v291, %v355
      %v357 = vpop.f32.mrb[0].mxu0
      %v358 = vpop.f32.mrb[0].mxu0
      %v359 = vadd.f32 %v294, %v358
      %v360 = vpop.f32.mrb[0].mxu0
      %361 = vdwg.mxu0
      %s362 = scalar_lea.vmem %s1, 32
      %v363 = vld [vmem:[%s362] sm:$0xf]
      %v364 = vld [vmem:[%s362 + $0x4] sm:$0xf]
      %v365 = vld [vmem:[%s362 + $0x8] sm:$0xf]
      %v366 = vld [vmem:[%s362 + $0xc] sm:$0xf]
      %v371 = vunpack.c.l.b16 %v363
      %v372 = vunpack.c.l.b16 %v364
      %v373 = vunpack.c.l.b16 %v365
      %v374 = vunpack.c.l.b16 %v366
      %v375 = vpack.c.b16 %v372, %v371
      %v376 = vpack.c.b16 %v374, %v373
      %377 = vrot.lane.b32.xlu0 %v210, 126
      %v378 = vpop.permute.xlu0 %377
      %379 = vrot.lane.b32.xlu0 %v211, 126
      %v380 = vpop.permute.xlu0 %379
      %381 = vrot.lane.b32.xlu0 %v212, 126
      %v382 = vpop.permute.xlu0 %381
      %383 = vrot.lane.b32.xlu0 %v213, 126
      %v384 = vpop.permute.xlu0 %383
      %vm385 = vcmask 1031168
      %v386 = vsel %vm385, %v378, %v380
      %v387 = vsel %vm385, %v382, %v384
      %v391 = vsel %vm241, %v375, 0
      %v394 = vsel %vm241, %v376, 0
      %396 = vmatprep.subr.bf16.mxu0 0
      %397 = vmatpush1.bf16.msra.mxu0 %v386
      %398 = vmatprep.subr.bf16.mxu0 0
      %399 = vmatpush1.bf16.msra.mxu0 %v387
      %400 = vmatprep.subr.bf16.mxu0 0
      %401 = vmatpush1.bf16.msra.mxu0 0
      %402 = vmatprep.subr.bf16.mxu0 0
      %403 = vmatpush1.bf16.msra.mxu0 0
      %404 = vmatprep.subr.bf16.mxu0 0
      %405 = vmatpush1.bf16.msra.mxu0 0
      %406 = vmatprep.subr.bf16.mxu0 0
      %407 = vmatpush1.bf16.msra.mxu0 0
      %408 = vmatprep.subr.bf16.mxu0 0
      %409 = vmatpush1.bf16.msra.mxu0 0
      %410 = vmatprep.subr.bf16.mxu0 0
      %411 = vmatpush1.bf16.msra.mxu0 0
      %412 = vmatprep.subr.bf16.mxu0 0
      %413 = vmatpush1.bf16.msra.mxu0 0
      %414 = vmatprep.subr.bf16.mxu0 0
      %415 = vmatpush1.bf16.msra.mxu0 0
      %416 = vmatprep.subr.bf16.mxu0 0
      %417 = vmatpush1.bf16.msra.mxu0 0
      %418 = vmatprep.subr.bf16.mxu0 0
      %419 = vmatpush1.bf16.msra.mxu0 0
      %420 = vmatprep.subr.bf16.mxu0 0
      %421 = vmatpush1.bf16.msra.mxu0 0
      %422 = vmatprep.subr.bf16.mxu0 0
      %423 = vmatpush1.bf16.msra.mxu0 0
      %424 = vmatprep.subr.bf16.mxu0 0
      %425 = vmatpush1.bf16.msra.mxu0 0
      %426 = vmatprep.subr.bf16.mxu0 0
      %427 = vmatpush1.bf16.msra.mxu0 0
      %428 = vmatprep.mubr.bf16.mxu0 0
      %429 = vmatmul.mubr.bf16.gmra.mrb[0].mxu0 %v391
      %v430 = vpop.f32.mrb[0].mxu0
      %v431 = vadd.f32 0.0, %v430
      %v432 = vpop.f32.mrb[0].mxu0
      %v433 = vpop.f32.mrb[0].mxu0
      %v434 = vadd.f32 0.0, %v433
      %v435 = vpop.f32.mrb[0].mxu0
      %436 = vmatprep.mubr.bf16.mxu0 0
      %437 = vmatmul.mubr.bf16.gmra.mrb[0].mxu0 %v394
      %v438 = vpop.f32.mrb[0].mxu0
      %v439 = vadd.f32 0.0, %v438
      %v440 = vpop.f32.mrb[0].mxu0
      %v441 = vpop.f32.mrb[0].mxu0
      %v442 = vadd.f32 0.0, %v441
      %v443 = vpop.f32.mrb[0].mxu0
      %444 = vdwg.mxu0
      %v445 = vadd.f32 %v348, %v431
      %v446 = vadd.f32 %v351, %v434
      %v447 = vadd.f32 %v356, %v439
      %v448 = vadd.f32 %v359, %v442
      %v449 = vld [vmem:[%s2] sm:$0xff]
      %v450 = vld [vmem:[%s2 + $0x8] sm:$0xff]
      %v451 = vld [vmem:[%s2 + $0x10] sm:$0xff]
      %v452 = vld [vmem:[%s2 + $0x18] sm:$0xff]
      %454 = vset.pattern.permute.xlu0 0
      %455 = vperm.xlu0 %454, %v449
      %v456 = vpop.permute.xlu0 %455
      %459 = vset.pattern.permute.xlu0 0
      %460 = vperm.xlu0 %459, %v450
      %v461 = vpop.permute.xlu0 %460
      %464 = vset.pattern.permute.xlu0 0
      %465 = vperm.xlu0 %464, %v451
      %v466 = vpop.permute.xlu0 %465
      %469 = vset.pattern.permute.xlu0 0
      %470 = vperm.xlu0 %469, %v452
      %v471 = vpop.permute.xlu0 %470
      %v473 = vadd.f32 %v445, %v456
      %v474 = vadd.f32 %v446, %v461
      %v475 = vadd.f32 %v447, %v466
      %v476 = vadd.f32 %v448, %v471
      %v477 = vmax.f32 %v473, 0.0
      %v478 = vmax.f32 %v474, 0.0
      %v479 = vmax.f32 %v475, 0.0
      %v480 = vmax.f32 %v476, 0.0
      %v481 = vpack.c.bf16 %v478, %v477
      %v482 = vpack.c.bf16 %v480, %v479
      %v485 = vunpack.c.l.b16 %v481
      %v486 = vunpack.c.h.b16 %v481
      %v487 = vunpack.c.l.b16 %v482
      %v488 = vunpack.c.h.b16 %v482
      %v489 = vpack.c.b16 %v485, %v485
      %v490 = vpack.c.b16 %v486, %v486
      %v491 = vpack.c.b16 %v487, %v487
      %v492 = vpack.c.b16 %v488, %v488
      %497 = vst [vmem:[%s170] sm:$0xf] %v489
      %498 = vst [vmem:[%s170 + $0x4] sm:$0xf] %v490
      %499 = vst [vmem:[%s170 + $0x8] sm:$0xf] %v491
      %500 = vst [vmem:[%s170 + $0xc] sm:$0xf] %v492
      %p501 = scmp.lt.s32.totalorder %s14, 1
      %s502 = scalar_select %p501, %s14, 1
      %s503 = smul.addr %s502, 4
      %s504 = smul.addr %s503, 4
      %s505 = scalar_lea.vmem %s3, %s504
      // Predicated region
      $region33: #{ecg_reconstructor_forward.20} parent=31 // pred_check
        %p506 = pneg %p100
      $region34: #{ecg_reconstructor_forward.20} parent=31 // pred_check_branch
        %508 = sbr.rel (%p506) target = $region36
      $region35: #{ecg_reconstructor_forward.20} parent=31 // pred_region
        _
      $region36: #{ecg_reconstructor_forward.20} parent=31 // pred_fallthru
        _
    $region32: #{ecg_reconstructor_forward.20} parent=5 // pred_fallthru
      _
    %p509 = scmp.le.s32.totalorder 2, %s9
    // Predicated region
    $region37: #{ecg_reconstructor_forward.20} parent=5 // pred_check
      %p510 = pneg %p509
    $region38: #{ecg_reconstructor_forward.20} parent=5 // pred_check_branch
      %512 = sbr.rel (%p510) target = $region40
    $region39: #{ecg_reconstructor_forward.20} parent=5 // pred_region
      %s513 = ssub.s32 %s9, 2
      // Predicated region
      $region41: #{ecg_reconstructor_forward.20} parent=39 // pred_check
        %p514 = pneg %p106
      $region42: #{ecg_reconstructor_forward.20} parent=39 // pred_check_branch
        %516 = sbr.rel (%p514) target = $region44
      $region43: #{ecg_reconstructor_forward.20} parent=39 // pred_region
        %p517 = scmp.lt.s32.totalorder %s15, 1
        %s518 = scalar_select %p517, %s15, 1
        %s519 = smul.addr %s518, 4
        %s520 = smul.addr %s519, 4
        %s521 = scalar_lea.vmem %s3, %s520
      $region44: #{ecg_reconstructor_forward.20} parent=39 // pred_fallthru
        _
    $region40: #{ecg_reconstructor_forward.20} parent=5 // pred_fallthru
      _
  $region6: #{ecg_reconstructor_forward.20} parent=0 // loop_footer
    %s13 = sadd.s32 1, %s9
  $region7: #{ecg_reconstructor_forward.20} parent=0 // loop_footer_branch
    %8 = sbr.rel target = $region3
  $region8: #{ecg_reconstructor_forward.20} parent=0 // loop_exit
    _

// kernel: ecg_reconstructor_forward.21
$region0: #{ecg_reconstructor_forward.21}
  #allocation0 [shape = 'u32[]', space=smem, size = 0x4, offset = 0x4, fixed_abs, tag = 'smem constant byte address 0x4 - core index']
  #allocation1 [shape = 'u32[144,128]{1,0:T(1,128)}', space=vmem, size = 0x12000, scoped, tag = 'internal scratch']
  #allocation2 [shape = 'bf16[16,256]{1,0:T(16,128)(2,1)}', space=vmem, size = 0x2000, scoped, tag = 'scratch operand']
  %s0 = inlined_call_operand.vmem [shape: bf16[2,16,40], index: 0, kind: input, shape index: {}]
  %s1 = inlined_call_operand.vmem [shape: bf16[3,16,16], index: 1, kind: input, shape index: {}]
  %s2 = inlined_call_operand.vmem [shape: f32[16,1], index: 2, kind: input, shape index: {}]
  %s3 = inlined_call_operand.vmem [shape: bf16[2,16,128], index: 3, kind: output, shape index: {}]
  %s4 = sld [smem:[#allocation0]]
  $region45: #{ecg_reconstructor_forward.21} parent=0
    _
  %s6 = ssub.s32 1, %s4
  %s7 = scalar_select 0, %s6, %s4
  loop: start=0, step=1, limit=4
  $region2: #{ecg_reconstructor_forward.21} parent=0 // loop_pre_header
    _
  $region3: #{ecg_reconstructor_forward.21} parent=0 // loop_header
    %s9 = sphi 0, %s13
    %p10 = scmp.ge.s32.totalorder %s9, 4
    %s19 = sphi 0, %s21
    %s22 = sphi 0, %s19
    %s23 = sphi 0, %s22
    %s39 = sphi 0, %s23
    %s43 = sphi 0, %s43
    %s45 = sphi 0, %s43
    %s46 = sphi 0, %s45
    %s60 = sphi 0, %s46
    %s64 = sphi 0, %s64
    %s66 = sphi 0, %s64
    %s67 = sphi 0, %s66
    %s81 = sphi 0, %s67
    %s87 = sphi 0, %s89
    %s90 = sphi 0, %s87
    %s91 = sphi 0, %s90
    %s107 = sphi 0, %s91
  $region4: #{ecg_reconstructor_forward.21} parent=0 // loop_header_branch
    %12 = sbr.rel (%p10) target = $region8
  $region5: #{ecg_reconstructor_forward.21} parent=0 // loop_body
    %s14 = ssub.s32 %s9, 1
    %s15 = ssub.s32 %s9, 2
    %s16 = sadd.s32 %s9, 1
    %s17 = ssub.s32 %s9, %s16
    %p18 = scmp.eq.s32.totalorder %s17, 0
    %s20 = sadd.s32 %s19, 1
    %s21 = scalar_select %p18, %s19, %s20
    %p24 = pneg %p18
    %p25 = scmp.eq.s32.totalorder %s9, 1
    %p26 = por %p24, %p25
    %p27 = scmp.ne.s32.totalorder %s19, %s22
    %p28 = scmp.eq.s32.totalorder %s9, 0
    %p29 = por %p27, %p28
    %p30 = scmp.ne.s32.totalorder %s19, %s22
    %p31 = scmp.eq.s32.totalorder %s14, 1
    %p32 = por %p30, %p31
    %p33 = scmp.ne.s32.totalorder %s22, %s23
    %p34 = scmp.eq.s32.totalorder %s14, 0
    %p35 = por %p33, %p34
    %p36 = scmp.ne.s32.totalorder %s22, %s23
    %p37 = scmp.eq.s32.totalorder %s15, 1
    %p38 = por %p36, %p37
    %p40 = scmp.ne.s32.totalorder %s23, %s39
    %p41 = scmp.eq.s32.totalorder %s15, 0
    %p42 = por %p40, %p41
    %s44 = sadd.s32 %s43, 1
    %p47 = scmp.eq.s32.totalorder %s9, 1
    %p48 = scmp.ne.s32.totalorder %s43, %s45
    %p49 = scmp.eq.s32.totalorder %s9, 0
    %p50 = por %p48, %p49
    %p51 = scmp.ne.s32.totalorder %s43, %s45
    %p52 = scmp.eq.s32.totalorder %s14, 1
    %p53 = por %p51, %p52
    %p54 = scmp.ne.s32.totalorder %s45, %s46
    %p55 = scmp.eq.s32.totalorder %s14, 0
    %p56 = por %p54, %p55
    %p57 = scmp.ne.s32.totalorder %s45, %s46
    %p58 = scmp.eq.s32.totalorder %s15, 1
    %p59 = por %p57, %p58
    %p61 = scmp.ne.s32.totalorder %s46, %s60
    %p62 = scmp.eq.s32.totalorder %s15, 0
    %p63 = por %p61, %p62
    %s65 = sadd.s32 %s64, 1
    %p68 = scmp.eq.s32.totalorder %s9, 1
    %p69 = scmp.ne.s32.totalorder %s64, %s66
    %p70 = scmp.eq.s32.totalorder %s9, 0
    %p71 = por %p69, %p70
    %p72 = scmp.ne.s32.totalorder %s64, %s66
    %p73 = scmp.eq.s32.totalorder %s14, 1
    %p74 = por %p72, %p73
    %p75 = scmp.ne.s32.totalorder %s66, %s67
    %p76 = scmp.eq.s32.totalorder %s14, 0
    %p77 = por %p75, %p76
    %p78 = scmp.ne.s32.totalorder %s66, %s67
    %p79 = scmp.eq.s32.totalorder %s15, 1
    %p80 = por %p78, %p79
    %p82 = scmp.ne.s32.totalorder %s67, %s81
    %p83 = scmp.eq.s32.totalorder %s15, 0
    %p84 = por %p82, %p83
    %s85 = ssub.s32 %s9, %s16
    %p86 = scmp.eq.s32.totalorder %s85, 0
    %s88 = sadd.s32 %s87, 1
    %s89 = scalar_select %p86, %s87, %s88
    %p92 = pneg %p86
    %p93 = scmp.eq.s32.totalorder %s9, 1
    %p94 = por %p92, %p93
    %p95 = scmp.ne.s32.totalorder %s87, %s90
    %p96 = scmp.eq.s32.totalorder %s9, 0
    %p97 = por %p95, %p96
    %p98 = scmp.ne.s32.totalorder %s87, %s90
    %p99 = scmp.eq.s32.totalorder %s14, 1
    %p100 = por %p98, %p99
    %p101 = scmp.ne.s32.totalorder %s90, %s91
    %p102 = scmp.eq.s32.totalorder %s14, 0
    %p103 = por %p101, %p102
    %p104 = scmp.ne.s32.totalorder %s90, %s91
    %p105 = scmp.eq.s32.totalorder %s15, 1
    %p106 = por %p104, %p105
    %p108 = scmp.ne.s32.totalorder %s91, %s107
    %p109 = scmp.eq.s32.totalorder %s15, 0
    %p110 = por %p108, %p109
    %p111 = scmp.le.s32.totalorder 1, %s9
    %p112 = scmp.lt.s32.totalorder %s9, 3
    %p113 = pnand %p111, %p112
    %p114 = pneg %p113
    // Predicated region
    $region9: #{ecg_reconstructor_forward.21} parent=5 // pred_check
      _
    $region10: #{ecg_reconstructor_forward.21} parent=5 // pred_check_branch
      %116 = sbr.rel (%p113) target = $region12
    $region11: #{ecg_reconstructor_forward.21} parent=5 // pred_region
      %s117 = ssub.s32 %s9, 1
      // Predicated region
      $region13: #{ecg_reconstructor_forward.21} parent=11 // pred_check
        %p118 = pneg %p56
      $region14: #{ecg_reconstructor_forward.21} parent=11 // pred_check_branch
        %120 = sbr.rel (%p118) target = $region16
      $region15: #{ecg_reconstructor_forward.21} parent=11 // pred_region
        _
      $region16: #{ecg_reconstructor_forward.21} parent=11 // pred_fallthru
        _
      // Predicated region
      $region17: #{ecg_reconstructor_forward.21} parent=11 // pred_check
        %p121 = pneg %p77
      $region18: #{ecg_reconstructor_forward.21} parent=11 // pred_check_branch
        %123 = sbr.rel (%p121) target = $region20
      $region19: #{ecg_reconstructor_forward.21} parent=11 // pred_region
        _
      $region20: #{ecg_reconstructor_forward.21} parent=11 // pred_fallthru
        _
    $region12: #{ecg_reconstructor_forward.21} parent=5 // pred_fallthru
      _
    %p124 = scmp.lt.s32.totalorder %s9, 2
    // Predicated region
    $region21: #{ecg_reconstructor_forward.21} parent=5 // pred_check
      %p125 = pneg %p124
    $region22: #{ecg_reconstructor_forward.21} parent=5 // pred_check_branch
      %127 = sbr.rel (%p125) target = $region24
    $region23: #{ecg_reconstructor_forward.21} parent=5 // pred_region
      // Predicated region
      $region25: #{ecg_reconstructor_forward.21} parent=23 // pred_check
        %p128 = pneg %p29
      $region26: #{ecg_reconstructor_forward.21} parent=23 // pred_check_branch
        %130 = sbr.rel (%p128) target = $region28
      $region27: #{ecg_reconstructor_forward.21} parent=23 // pred_region
        %p131 = scmp.lt.s32.totalorder %s9, 1
        %s132 = scalar_select %p131, %s9, 1
        %s133 = smul.addr %s132, 2
        %s134 = smul.addr %s133, 4
        %s135 = scalar_lea.vmem %s0, %s134
      $region28: #{ecg_reconstructor_forward.21} parent=23 // pred_fallthru
        _
    $region24: #{ecg_reconstructor_forward.21} parent=5 // pred_fallthru
      _
    %p136 = scmp.le.s32.totalorder 1, %s9
    %p137 = scmp.lt.s32.totalorder %s9, 3
    %p138 = pnand %p136, %p137
    %p139 = pneg %p138
    // Predicated region
    $region29: #{ecg_reconstructor_forward.21} parent=5 // pred_check
      _
    $region30: #{ecg_reconstructor_forward.21} parent=5 // pred_check_branch
      %141 = sbr.rel (%p138) target = $region32
    $region31: #{ecg_reconstructor_forward.21} parent=5 // pred_region
      %s142 = ssub.s32 %s9, 1
      %p143 = scmp.lt.s32.totalorder %s14, 1
      %s144 = scalar_select %p143, %s14, 1
      %s145 = smul.addr %s144, 2
      %s146 = smul.addr %s145, 4
      %s147 = scalar_lea.vmem %s0, %s146
      %p148 = pneg %p35
      %p149 = pneg %p32
      %p150 = pneg %p56
      %p151 = pneg %p53
      %p152 = pneg %p77
      %p153 = pneg %p74
      %p154 = pneg %p103
      %p155 = pneg %p100
      %p156 = scmp.lt.s32.totalorder %s14, 1
      %s157 = scalar_select %p156, %s14, 1
      %s158 = smul.addr %s157, 2
      %s159 = smul.addr %s158, 4
      %s160 = scalar_lea.vmem %s3, %s159
      %p161 = scmp.lt.s32.totalorder %s14, 1
      %s162 = scalar_select %p161, %s14, 1
      %s163 = smul.addr %s162, 2
      %s164 = smul.addr %s163, 4
      %s165 = scalar_lea.vmem %s0, %s164
      %p166 = scmp.lt.s32.totalorder %s14, 1
      %s167 = scalar_select %p166, %s14, 1
      %s168 = smul.addr %s167, 2
      %s169 = smul.addr %s168, 4
      %s170 = scalar_lea.vmem %s3, %s169
      %172 = vst [vmem:[#allocation2] sm:$0xff] 0
      %173 = vst [vmem:[#allocation2 + $0x8] sm:$0xff] 0
      %v174 = vld [vmem:[%s165] sm:$0xf]
      %v175 = vld [vmem:[%s165 + $0x4] sm:$0xf]
      %v178 = vunpack.c.l.b16 %v174
      %v179 = vunpack.c.l.b16 %v175
      %v180 = vpack.c.b16 %v179, %v178
      %181 = vrot.lane.b32.xlu0 %v180, 1
      %v182 = vpop.permute.xlu0 %181
      %vm184 = vcmask 334856
      %185 = vst.msk [vmem:[#allocation2] sm:$0xff] %vm184, %v182
      %v186 = vld [vmem:[%s1] sm:$0xf]
      %v187 = vld [vmem:[%s1 + $0x4] sm:$0xf]
      %v188 = vld [vmem:[#allocation2] sm:$0xff]
      %s189 = scalar_lea.vmem %s1, 8
      %v190 = vld [vmem:[%s189] sm:$0xf]
      %v191 = vld [vmem:[%s189 + $0x4] sm:$0xf]
      %v192 = vld [vmem:[#allocation2] sm:$0xff]
      %v193 = vld [vmem:[#allocation2 + $0x8] sm:$0xff]
      %v196 = vunpack.c.l.b16 %v190
      %v197 = vunpack.c.l.b16 %v191
      %v198 = vpack.c.b16 %v197, %v196
      %201 = vrot.lane.b32.xlu0 %v192, 127
      %v202 = vpop.permute.xlu0 %201
      %203 = vrot.lane.b32.xlu0 %v193, 127
      %v204 = vpop.permute.xlu0 %203
      %vm205 = vcmask 1039360
      %v206 = vsel %vm205, %v202, %v204
      %vm208 = vcmask 130048
      %v210 = vsel %vm208, %v198, 0
      %212 = vmatprep.subr.bf16.mxu0 0
      %213 = vmatpush1.bf16.msra.mxu0 %v206
      %214 = vmatprep.subr.bf16.mxu0 0
      %215 = vmatpush1.bf16.msra.mxu0 0
      %216 = vmatprep.subr.bf16.mxu0 0
      %217 = vmatpush1.bf16.msra.mxu0 0
      %218 = vmatprep.subr.bf16.mxu0 0
      %219 = vmatpush1.bf16.msra.mxu0 0
      %220 = vmatprep.subr.bf16.mxu0 0
      %221 = vmatpush1.bf16.msra.mxu0 0
      %222 = vmatprep.subr.bf16.mxu0 0
      %223 = vmatpush1.bf16.msra.mxu0 0
      %224 = vmatprep.subr.bf16.mxu0 0
      %225 = vmatpush1.bf16.msra.mxu0 0
      %226 = vmatprep.subr.bf16.mxu0 0
      %227 = vmatpush1.bf16.msra.mxu0 0
      %228 = vmatprep.subr.bf16.mxu0 0
      %229 = vmatpush1.bf16.msra.mxu0 0
      %230 = vmatprep.subr.bf16.mxu0 0
      %231 = vmatpush1.bf16.msra.mxu0 0
      %232 = vmatprep.subr.bf16.mxu0 0
      %233 = vmatpush1.bf16.msra.mxu0 0
      %234 = vmatprep.subr.bf16.mxu0 0
      %235 = vmatpush1.bf16.msra.mxu0 0
      %236 = vmatprep.subr.bf16.mxu0 0
      %237 = vmatpush1.bf16.msra.mxu0 0
      %238 = vmatprep.subr.bf16.mxu0 0
      %239 = vmatpush1.bf16.msra.mxu0 0
      %240 = vmatprep.subr.bf16.mxu0 0
      %241 = vmatpush1.bf16.msra.mxu0 0
      %242 = vmatprep.subr.bf16.mxu0 0
      %243 = vmatpush1.bf16.msra.mxu0 0
      %244 = vmatprep.mubr.bf16.mxu0 0
      %245 = vmatmul.mubr.bf16.gmra.mrb[0].mxu0 %v210
      %v246 = vpop.f32.mrb[0].mxu0
      %v247 = vadd.f32 0.0, %v246
      %v248 = vpop.f32.mrb[0].mxu0
      %v249 = vpop.f32.mrb[0].mxu0
      %v250 = vadd.f32 0.0, %v249
      %v251 = vpop.f32.mrb[0].mxu0
      %252 = vdwg.mxu0
      %v255 = vunpack.c.l.b16 %v186
      %v256 = vunpack.c.l.b16 %v187
      %v257 = vpack.c.b16 %v256, %v255
      %v259 = vsel %vm208, %v257, 0
      %261 = vmatprep.subr.bf16.mxu0 0
      %262 = vmatpush1.bf16.msra.mxu0 %v188
      %263 = vmatprep.subr.bf16.mxu0 0
      %264 = vmatpush1.bf16.msra.mxu0 0
      %265 = vmatprep.subr.bf16.mxu0 0
      %266 = vmatpush1.bf16.msra.mxu0 0
      %267 = vmatprep.subr.bf16.mxu0 0
      %268 = vmatpush1.bf16.msra.mxu0 0
      %269 = vmatprep.subr.bf16.mxu0 0
      %270 = vmatpush1.bf16.msra.mxu0 0
      %271 = vmatprep.subr.bf16.mxu0 0
      %272 = vmatpush1.bf16.msra.mxu0 0
      %273 = vmatprep.subr.bf16.mxu0 0
      %274 = vmatpush1.bf16.msra.mxu0 0
      %275 = vmatprep.subr.bf16.mxu0 0
      %276 = vmatpush1.bf16.msra.mxu0 0
      %277 = vmatprep.subr.bf16.mxu0 0
      %278 = vmatpush1.bf16.msra.mxu0 0
      %279 = vmatprep.subr.bf16.mxu0 0
      %280 = vmatpush1.bf16.msra.mxu0 0
      %281 = vmatprep.subr.bf16.mxu0 0
      %282 = vmatpush1.bf16.msra.mxu0 0
      %283 = vmatprep.subr.bf16.mxu0 0
      %284 = vmatpush1.bf16.msra.mxu0 0
      %285 = vmatprep.subr.bf16.mxu0 0
      %286 = vmatpush1.bf16.msra.mxu0 0
      %287 = vmatprep.subr.bf16.mxu0 0
      %288 = vmatpush1.bf16.msra.mxu0 0
      %289 = vmatprep.subr.bf16.mxu0 0
      %290 = vmatpush1.bf16.msra.mxu0 0
      %291 = vmatprep.subr.bf16.mxu0 0
      %292 = vmatpush1.bf16.msra.mxu0 0
      %293 = vmatprep.mubr.bf16.mxu0 0
      %294 = vmatmul.mubr.bf16.gmra.mrb[0].mxu0 %v259
      %v295 = vpop.f32.mrb[0].mxu0
      %v296 = vadd.f32 %v247, %v295
      %v297 = vpop.f32.mrb[0].mxu0
      %v298 = vpop.f32.mrb[0].mxu0
      %v299 = vadd.f32 %v250, %v298
      %v300 = vpop.f32.mrb[0].mxu0
      %301 = vdwg.mxu0
      %s302 = scalar_lea.vmem %s1, 16
      %v303 = vld [vmem:[%s302] sm:$0xf]
      %v304 = vld [vmem:[%s302 + $0x4] sm:$0xf]
      %v307 = vunpack.c.l.b16 %v303
      %v308 = vunpack.c.l.b16 %v304
      %v309 = vpack.c.b16 %v308, %v307
      %310 = vrot.lane.b32.xlu0 %v192, 126
      %v311 = vpop.permute.xlu0 %310
      %312 = vrot.lane.b32.xlu0 %v193, 126
      %v313 = vpop.permute.xlu0 %312
      %vm314 = vcmask 1031168
      %v315 = vsel %vm314, %v311, %v313
      %v318 = vsel %vm208, %v309, 0
      %320 = vmatprep.subr.bf16.mxu0 0
      %321 = vmatpush1.bf16.msra.mxu0 %v315
      %322 = vmatprep.subr.bf16.mxu0 0
      %323 = vmatpush1.bf16.msra.mxu0 0
      %324 = vmatprep.subr.bf16.mxu0 0
      %325 = vmatpush1.bf16.msra.mxu0 0
      %326 = vmatprep.subr.bf16.mxu0 0
      %327 = vmatpush1.bf16.msra.mxu0 0
      %328 = vmatprep.subr.bf16.mxu0 0
      %329 = vmatpush1.bf16.msra.mxu0 0
      %330 = vmatprep.subr.bf16.mxu0 0
      %331 = vmatpush1.bf16.msra.mxu0 0
      %332 = vmatprep.subr.bf16.mxu0 0
      %333 = vmatpush1.bf16.msra.mxu0 0
      %334 = vmatprep.subr.bf16.mxu0 0
      %335 = vmatpush1.bf16.msra.mxu0 0
      %336 = vmatprep.subr.bf16.mxu0 0
      %337 = vmatpush1.bf16.msra.mxu0 0
      %338 = vmatprep.subr.bf16.mxu0 0
      %339 = vmatpush1.bf16.msra.mxu0 0
      %340 = vmatprep.subr.bf16.mxu0 0
      %341 = vmatpush1.bf16.msra.mxu0 0
      %342 = vmatprep.subr.bf16.mxu0 0
      %343 = vmatpush1.bf16.msra.mxu0 0
      %344 = vmatprep.subr.bf16.mxu0 0
      %345 = vmatpush1.bf16.msra.mxu0 0
      %346 = vmatprep.subr.bf16.mxu0 0
      %347 = vmatpush1.bf16.msra.mxu0 0
      %348 = vmatprep.subr.bf16.mxu0 0
      %349 = vmatpush1.bf16.msra.mxu0 0
      %350 = vmatprep.subr.bf16.mxu0 0
      %351 = vmatpush1.bf16.msra.mxu0 0
      %352 = vmatprep.mubr.bf16.mxu0 0
      %353 = vmatmul.mubr.bf16.gmra.mrb[0].mxu0 %v318
      %v354 = vpop.f32.mrb[0].mxu0
      %v355 = vadd.f32 0.0, %v354
      %v356 = vpop.f32.mrb[0].mxu0
      %v357 = vpop.f32.mrb[0].mxu0
      %v358 = vadd.f32 0.0, %v357
      %v359 = vpop.f32.mrb[0].mxu0
      %360 = vdwg.mxu0
      %v361 = vadd.f32 %v296, %v355
      %v362 = vadd.f32 %v299, %v358
      %v363 = vld [vmem:[%s2] sm:$0xff]
      %v364 = vld [vmem:[%s2 + $0x8] sm:$0xff]
      %366 = vset.pattern.permute.xlu0 0
      %367 = vperm.xlu0 %366, %v363
      %v368 = vpop.permute.xlu0 %367
      %371 = vset.pattern.permute.xlu0 0
      %372 = vperm.xlu0 %371, %v364
      %v373 = vpop.permute.xlu0 %372
      %v375 = vadd.f32 %v361, %v368
      %v376 = vadd.f32 %v362, %v373
      %v377 = vmax.f32 %v375, 0.0
      %v378 = vmax.f32 %v376, 0.0
      %v379 = vpack.c.bf16 %v378, %v377
      %v381 = vunpack.c.l.b16 %v379
      %v382 = vunpack.c.h.b16 %v379
      %v383 = vpack.c.b16 %v381, %v381
      %v384 = vpack.c.b16 %v382, %v382
      %387 = vst [vmem:[%s170] sm:$0xf] %v383
      %388 = vst [vmem:[%s170 + $0x4] sm:$0xf] %v384
      %p389 = scmp.lt.s32.totalorder %s14, 1
      %s390 = scalar_select %p389, %s14, 1
      %s391 = smul.addr %s390, 2
      %s392 = smul.addr %s391, 4
      %s393 = scalar_lea.vmem %s3, %s392
      // Predicated region
      $region33: #{ecg_reconstructor_forward.21} parent=31 // pred_check
        %p394 = pneg %p100
      $region34: #{ecg_reconstructor_forward.21} parent=31 // pred_check_branch
        %396 = sbr.rel (%p394) target = $region36
      $region35: #{ecg_reconstructor_forward.21} parent=31 // pred_region
        _
      $region36: #{ecg_reconstructor_forward.21} parent=31 // pred_fallthru
        _
    $region32: #{ecg_reconstructor_forward.21} parent=5 // pred_fallthru
      _
    %p397 = scmp.le.s32.totalorder 2, %s9
    // Predicated region
    $region37: #{ecg_reconstructor_forward.21} parent=5 // pred_check
      %p398 = pneg %p397
    $region38: #{ecg_reconstructor_forward.21} parent=5 // pred_check_branch
      %400 = sbr.rel (%p398) target = $region40
    $region39: #{ecg_reconstructor_forward.21} parent=5 // pred_region
      %s401 = ssub.s32 %s9, 2
      // Predicated region
      $region41: #{ecg_reconstructor_forward.21} parent=39 // pred_check
        %p402 = pneg %p106
      $region42: #{ecg_reconstructor_forward.21} parent=39 // pred_check_branch
        %404 = sbr.rel (%p402) target = $region44
      $region43: #{ecg_reconstructor_forward.21} parent=39 // pred_region
        %p405 = scmp.lt.s32.totalorder %s15, 1
        %s406 = scalar_select %p405, %s15, 1
        %s407 = smul.addr %s406, 2
        %s408 = smul.addr %s407, 4
        %s409 = scalar_lea.vmem %s3, %s408
      $region44: #{ecg_reconstructor_forward.21} parent=39 // pred_fallthru
        _
    $region40: #{ecg_reconstructor_forward.21} parent=5 // pred_fallthru
      _
  $region6: #{ecg_reconstructor_forward.21} parent=0 // loop_footer
    %s13 = sadd.s32 1, %s9
  $region7: #{ecg_reconstructor_forward.21} parent=0 // loop_footer_branch
    %8 = sbr.rel target = $region3
  $region8: #{ecg_reconstructor_forward.21} parent=0 // loop_exit
    _

// kernel: ecg_reconstructor_forward.22
$region0: #{ecg_reconstructor_forward.22}
  #allocation0 [shape = 'u32[]', space=smem, size = 0x4, offset = 0x4, fixed_abs, tag = 'smem constant byte address 0x4 - core index']
  #allocation1 [shape = 'u32[144,128]{1,0:T(1,128)}', space=vmem, size = 0x12000, scoped, tag = 'internal scratch']
  #allocation2 [shape = 'bf16[16,256]{1,0:T(16,128)(2,1)}', space=vmem, size = 0x2000, scoped, tag = 'scratch operand']
  %s0 = inlined_call_operand.vmem [shape: bf16[2,16,80], index: 0, kind: input, shape index: {}]
  %s1 = inlined_call_operand.vmem [shape: bf16[3,16,16], index: 1, kind: input, shape index: {}]
  %s2 = inlined_call_operand.vmem [shape: f32[16,1], index: 2, kind: input, shape index: {}]
  %s3 = inlined_call_operand.vmem [shape: bf16[2,16,128], index: 3, kind: output, shape index: {}]
  %s4 = sld [smem:[#allocation0]]
  $region45: #{ecg_reconstructor_forward.22} parent=0
    _
  %s6 = ssub.s32 1, %s4
  %s7 = scalar_select 0, %s6, %s4
  loop: start=0, step=1, limit=4
  $region2: #{ecg_reconstructor_forward.22} parent=0 // loop_pre_header
    _
  $region3: #{ecg_reconstructor_forward.22} parent=0 // loop_header
    %s9 = sphi 0, %s13
    %p10 = scmp.ge.s32.totalorder %s9, 4
    %s19 = sphi 0, %s21
    %s22 = sphi 0, %s19
    %s23 = sphi 0, %s22
    %s39 = sphi 0, %s23
    %s43 = sphi 0, %s43
    %s45 = sphi 0, %s43
    %s46 = sphi 0, %s45
    %s60 = sphi 0, %s46
    %s64 = sphi 0, %s64
    %s66 = sphi 0, %s64
    %s67 = sphi 0, %s66
    %s81 = sphi 0, %s67
    %s87 = sphi 0, %s89
    %s90 = sphi 0, %s87
    %s91 = sphi 0, %s90
    %s107 = sphi 0, %s91
  $region4: #{ecg_reconstructor_forward.22} parent=0 // loop_header_branch
    %12 = sbr.rel (%p10) target = $region8
  $region5: #{ecg_reconstructor_forward.22} parent=0 // loop_body
    %s14 = ssub.s32 %s9, 1
    %s15 = ssub.s32 %s9, 2
    %s16 = sadd.s32 %s9, 1
    %s17 = ssub.s32 %s9, %s16
    %p18 = scmp.eq.s32.totalorder %s17, 0
    %s20 = sadd.s32 %s19, 1
    %s21 = scalar_select %p18, %s19, %s20
    %p24 = pneg %p18
    %p25 = scmp.eq.s32.totalorder %s9, 1
    %p26 = por %p24, %p25
    %p27 = scmp.ne.s32.totalorder %s19, %s22
    %p28 = scmp.eq.s32.totalorder %s9, 0
    %p29 = por %p27, %p28
    %p30 = scmp.ne.s32.totalorder %s19, %s22
    %p31 = scmp.eq.s32.totalorder %s14, 1
    %p32 = por %p30, %p31
    %p33 = scmp.ne.s32.totalorder %s22, %s23
    %p34 = scmp.eq.s32.totalorder %s14, 0
    %p35 = por %p33, %p34
    %p36 = scmp.ne.s32.totalorder %s22, %s23
    %p37 = scmp.eq.s32.totalorder %s15, 1
    %p38 = por %p36, %p37
    %p40 = scmp.ne.s32.totalorder %s23, %s39
    %p41 = scmp.eq.s32.totalorder %s15, 0
    %p42 = por %p40, %p41
    %s44 = sadd.s32 %s43, 1
    %p47 = scmp.eq.s32.totalorder %s9, 1
    %p48 = scmp.ne.s32.totalorder %s43, %s45
    %p49 = scmp.eq.s32.totalorder %s9, 0
    %p50 = por %p48, %p49
    %p51 = scmp.ne.s32.totalorder %s43, %s45
    %p52 = scmp.eq.s32.totalorder %s14, 1
    %p53 = por %p51, %p52
    %p54 = scmp.ne.s32.totalorder %s45, %s46
    %p55 = scmp.eq.s32.totalorder %s14, 0
    %p56 = por %p54, %p55
    %p57 = scmp.ne.s32.totalorder %s45, %s46
    %p58 = scmp.eq.s32.totalorder %s15, 1
    %p59 = por %p57, %p58
    %p61 = scmp.ne.s32.totalorder %s46, %s60
    %p62 = scmp.eq.s32.totalorder %s15, 0
    %p63 = por %p61, %p62
    %s65 = sadd.s32 %s64, 1
    %p68 = scmp.eq.s32.totalorder %s9, 1
    %p69 = scmp.ne.s32.totalorder %s64, %s66
    %p70 = scmp.eq.s32.totalorder %s9, 0
    %p71 = por %p69, %p70
    %p72 = scmp.ne.s32.totalorder %s64, %s66
    %p73 = scmp.eq.s32.totalorder %s14, 1
    %p74 = por %p72, %p73
    %p75 = scmp.ne.s32.totalorder %s66, %s67
    %p76 = scmp.eq.s32.totalorder %s14, 0
    %p77 = por %p75, %p76
    %p78 = scmp.ne.s32.totalorder %s66, %s67
    %p79 = scmp.eq.s32.totalorder %s15, 1
    %p80 = por %p78, %p79
    %p82 = scmp.ne.s32.totalorder %s67, %s81
    %p83 = scmp.eq.s32.totalorder %s15, 0
    %p84 = por %p82, %p83
    %s85 = ssub.s32 %s9, %s16
    %p86 = scmp.eq.s32.totalorder %s85, 0
    %s88 = sadd.s32 %s87, 1
    %s89 = scalar_select %p86, %s87, %s88
    %p92 = pneg %p86
    %p93 = scmp.eq.s32.totalorder %s9, 1
    %p94 = por %p92, %p93
    %p95 = scmp.ne.s32.totalorder %s87, %s90
    %p96 = scmp.eq.s32.totalorder %s9, 0
    %p97 = por %p95, %p96
    %p98 = scmp.ne.s32.totalorder %s87, %s90
    %p99 = scmp.eq.s32.totalorder %s14, 1
    %p100 = por %p98, %p99
    %p101 = scmp.ne.s32.totalorder %s90, %s91
    %p102 = scmp.eq.s32.totalorder %s14, 0
    %p103 = por %p101, %p102
    %p104 = scmp.ne.s32.totalorder %s90, %s91
    %p105 = scmp.eq.s32.totalorder %s15, 1
    %p106 = por %p104, %p105
    %p108 = scmp.ne.s32.totalorder %s91, %s107
    %p109 = scmp.eq.s32.totalorder %s15, 0
    %p110 = por %p108, %p109
    %p111 = scmp.le.s32.totalorder 1, %s9
    %p112 = scmp.lt.s32.totalorder %s9, 3
    %p113 = pnand %p111, %p112
    %p114 = pneg %p113
    // Predicated region
    $region9: #{ecg_reconstructor_forward.22} parent=5 // pred_check
      _
    $region10: #{ecg_reconstructor_forward.22} parent=5 // pred_check_branch
      %116 = sbr.rel (%p113) target = $region12
    $region11: #{ecg_reconstructor_forward.22} parent=5 // pred_region
      %s117 = ssub.s32 %s9, 1
      // Predicated region
      $region13: #{ecg_reconstructor_forward.22} parent=11 // pred_check
        %p118 = pneg %p56
      $region14: #{ecg_reconstructor_forward.22} parent=11 // pred_check_branch
        %120 = sbr.rel (%p118) target = $region16
      $region15: #{ecg_reconstructor_forward.22} parent=11 // pred_region
        _
      $region16: #{ecg_reconstructor_forward.22} parent=11 // pred_fallthru
        _
      // Predicated region
      $region17: #{ecg_reconstructor_forward.22} parent=11 // pred_check
        %p121 = pneg %p77
      $region18: #{ecg_reconstructor_forward.22} parent=11 // pred_check_branch
        %123 = sbr.rel (%p121) target = $region20
      $region19: #{ecg_reconstructor_forward.22} parent=11 // pred_region
        _
      $region20: #{ecg_reconstructor_forward.22} parent=11 // pred_fallthru
        _
    $region12: #{ecg_reconstructor_forward.22} parent=5 // pred_fallthru
      _
    %p124 = scmp.lt.s32.totalorder %s9, 2
    // Predicated region
    $region21: #{ecg_reconstructor_forward.22} parent=5 // pred_check
      %p125 = pneg %p124
    $region22: #{ecg_reconstructor_forward.22} parent=5 // pred_check_branch
      %127 = sbr.rel (%p125) target = $region24
    $region23: #{ecg_reconstructor_forward.22} parent=5 // pred_region
      // Predicated region
      $region25: #{ecg_reconstructor_forward.22} parent=23 // pred_check
        %p128 = pneg %p29
      $region26: #{ecg_reconstructor_forward.22} parent=23 // pred_check_branch
        %130 = sbr.rel (%p128) target = $region28
      $region27: #{ecg_reconstructor_forward.22} parent=23 // pred_region
        %p131 = scmp.lt.s32.totalorder %s9, 1
        %s132 = scalar_select %p131, %s9, 1
        %s133 = smul.addr %s132, 2
        %s134 = smul.addr %s133, 4
        %s135 = scalar_lea.vmem %s0, %s134
      $region28: #{ecg_reconstructor_forward.22} parent=23 // pred_fallthru
        _
    $region24: #{ecg_reconstructor_forward.22} parent=5 // pred_fallthru
      _
    %p136 = scmp.le.s32.totalorder 1, %s9
    %p137 = scmp.lt.s32.totalorder %s9, 3
    %p138 = pnand %p136, %p137
    %p139 = pneg %p138
    // Predicated region
    $region29: #{ecg_reconstructor_forward.22} parent=5 // pred_check
      _
    $region30: #{ecg_reconstructor_forward.22} parent=5 // pred_check_branch
      %141 = sbr.rel (%p138) target = $region32
    $region31: #{ecg_reconstructor_forward.22} parent=5 // pred_region
      %s142 = ssub.s32 %s9, 1
      %p143 = scmp.lt.s32.totalorder %s14, 1
      %s144 = scalar_select %p143, %s14, 1
      %s145 = smul.addr %s144, 2
      %s146 = smul.addr %s145, 4
      %s147 = scalar_lea.vmem %s0, %s146
      %p148 = pneg %p35
      %p149 = pneg %p32
      %p150 = pneg %p56
      %p151 = pneg %p53
      %p152 = pneg %p77
      %p153 = pneg %p74
      %p154 = pneg %p103
      %p155 = pneg %p100
      %p156 = scmp.lt.s32.totalorder %s14, 1
      %s157 = scalar_select %p156, %s14, 1
      %s158 = smul.addr %s157, 2
      %s159 = smul.addr %s158, 4
      %s160 = scalar_lea.vmem %s3, %s159
      %p161 = scmp.lt.s32.totalorder %s14, 1
      %s162 = scalar_select %p161, %s14, 1
      %s163 = smul.addr %s162, 2
      %s164 = smul.addr %s163, 4
      %s165 = scalar_lea.vmem %s0, %s164
      %p166 = scmp.lt.s32.totalorder %s14, 1
      %s167 = scalar_select %p166, %s14, 1
      %s168 = smul.addr %s167, 2
      %s169 = smul.addr %s168, 4
      %s170 = scalar_lea.vmem %s3, %s169
      %172 = vst [vmem:[#allocation2] sm:$0xff] 0
      %173 = vst [vmem:[#allocation2 + $0x8] sm:$0xff] 0
      %v174 = vld [vmem:[%s165] sm:$0xf]
      %v175 = vld [vmem:[%s165 + $0x4] sm:$0xf]
      %v178 = vunpack.c.l.b16 %v174
      %v179 = vunpack.c.l.b16 %v175
      %v180 = vpack.c.b16 %v179, %v178
      %181 = vrot.lane.b32.xlu0 %v180, 1
      %v182 = vpop.permute.xlu0 %181
      %vm184 = vcmask 662536
      %185 = vst.msk [vmem:[#allocation2] sm:$0xff] %vm184, %v182
      %v186 = vld [vmem:[%s1] sm:$0xf]
      %v187 = vld [vmem:[%s1 + $0x4] sm:$0xf]
      %v188 = vld [vmem:[#allocation2] sm:$0xff]
      %s189 = scalar_lea.vmem %s1, 8
      %v190 = vld [vmem:[%s189] sm:$0xf]
      %v191 = vld [vmem:[%s189 + $0x4] sm:$0xf]
      %v192 = vld [vmem:[#allocation2] sm:$0xff]
      %v193 = vld [vmem:[#allocation2 + $0x8] sm:$0xff]
      %v196 = vunpack.c.l.b16 %v190
      %v197 = vunpack.c.l.b16 %v191
      %v198 = vpack.c.b16 %v197, %v196
      %201 = vrot.lane.b32.xlu0 %v192, 127
      %v202 = vpop.permute.xlu0 %201
      %203 = vrot.lane.b32.xlu0 %v193, 127
      %v204 = vpop.permute.xlu0 %203
      %vm205 = vcmask 1039360
      %v206 = vsel %vm205, %v202, %v204
      %vm208 = vcmask 130048
      %v210 = vsel %vm208, %v198, 0
      %212 = vmatprep.subr.bf16.mxu0 0
      %213 = vmatpush1.bf16.msra.mxu0 %v206
      %214 = vmatprep.subr.bf16.mxu0 0
      %215 = vmatpush1.bf16.msra.mxu0 0
      %216 = vmatprep.subr.bf16.mxu0 0
      %217 = vmatpush1.bf16.msra.mxu0 0
      %218 = vmatprep.subr.bf16.mxu0 0
      %219 = vmatpush1.bf16.msra.mxu0 0
      %220 = vmatprep.subr.bf16.mxu0 0
      %221 = vmatpush1.bf16.msra.mxu0 0
      %222 = vmatprep.subr.bf16.mxu0 0
      %223 = vmatpush1.bf16.msra.mxu0 0
      %224 = vmatprep.subr.bf16.mxu0 0
      %225 = vmatpush1.bf16.msra.mxu0 0
      %226 = vmatprep.subr.bf16.mxu0 0
      %227 = vmatpush1.bf16.msra.mxu0 0
      %228 = vmatprep.subr.bf16.mxu0 0
      %229 = vmatpush1.bf16.msra.mxu0 0
      %230 = vmatprep.subr.bf16.mxu0 0
      %231 = vmatpush1.bf16.msra.mxu0 0
      %232 = vmatprep.subr.bf16.mxu0 0
      %233 = vmatpush1.bf16.msra.mxu0 0
      %234 = vmatprep.subr.bf16.mxu0 0
      %235 = vmatpush1.bf16.msra.mxu0 0
      %236 = vmatprep.subr.bf16.mxu0 0
      %237 = vmatpush1.bf16.msra.mxu0 0
      %238 = vmatprep.subr.bf16.mxu0 0
      %239 = vmatpush1.bf16.msra.mxu0 0
      %240 = vmatprep.subr.bf16.mxu0 0
      %241 = vmatpush1.bf16.msra.mxu0 0
      %242 = vmatprep.subr.bf16.mxu0 0
      %243 = vmatpush1.bf16.msra.mxu0 0
      %244 = vmatprep.mubr.bf16.mxu0 0
      %245 = vmatmul.mubr.bf16.gmra.mrb[0].mxu0 %v210
      %v246 = vpop.f32.mrb[0].mxu0
      %v247 = vadd.f32 0.0, %v246
      %v248 = vpop.f32.mrb[0].mxu0
      %v249 = vpop.f32.mrb[0].mxu0
      %v250 = vadd.f32 0.0, %v249
      %v251 = vpop.f32.mrb[0].mxu0
      %252 = vdwg.mxu0
      %v255 = vunpack.c.l.b16 %v186
      %v256 = vunpack.c.l.b16 %v187
      %v257 = vpack.c.b16 %v256, %v255
      %v259 = vsel %vm208, %v257, 0
      %261 = vmatprep.subr.bf16.mxu0 0
      %262 = vmatpush1.bf16.msra.mxu0 %v188
      %263 = vmatprep.subr.bf16.mxu0 0
      %264 = vmatpush1.bf16.msra.mxu0 0
      %265 = vmatprep.subr.bf16.mxu0 0
      %266 = vmatpush1.bf16.msra.mxu0 0
      %267 = vmatprep.subr.bf16.mxu0 0
      %268 = vmatpush1.bf16.msra.mxu0 0
      %269 = vmatprep.subr.bf16.mxu0 0
      %270 = vmatpush1.bf16.msra.mxu0 0
      %271 = vmatprep.subr.bf16.mxu0 0
      %272 = vmatpush1.bf16.msra.mxu0 0
      %273 = vmatprep.subr.bf16.mxu0 0
      %274 = vmatpush1.bf16.msra.mxu0 0
      %275 = vmatprep.subr.bf16.mxu0 0
      %276 = vmatpush1.bf16.msra.mxu0 0
      %277 = vmatprep.subr.bf16.mxu0 0
      %278 = vmatpush1.bf16.msra.mxu0 0
      %279 = vmatprep.subr.bf16.mxu0 0
      %280 = vmatpush1.bf16.msra.mxu0 0
      %281 = vmatprep.subr.bf16.mxu0 0
      %282 = vmatpush1.bf16.msra.mxu0 0
      %283 = vmatprep.subr.bf16.mxu0 0
      %284 = vmatpush1.bf16.msra.mxu0 0
      %285 = vmatprep.subr.bf16.mxu0 0
      %286 = vmatpush1.bf16.msra.mxu0 0
      %287 = vmatprep.subr.bf16.mxu0 0
      %288 = vmatpush1.bf16.msra.mxu0 0
      %289 = vmatprep.subr.bf16.mxu0 0
      %290 = vmatpush1.bf16.msra.mxu0 0
      %291 = vmatprep.subr.bf16.mxu0 0
      %292 = vmatpush1.bf16.msra.mxu0 0
      %293 = vmatprep.mubr.bf16.mxu0 0
      %294 = vmatmul.mubr.bf16.gmra.mrb[0].mxu0 %v259
      %v295 = vpop.f32.mrb[0].mxu0
      %v296 = vadd.f32 %v247, %v295
      %v297 = vpop.f32.mrb[0].mxu0
      %v298 = vpop.f32.mrb[0].mxu0
      %v299 = vadd.f32 %v250, %v298
      %v300 = vpop.f32.mrb[0].mxu0
      %301 = vdwg.mxu0
      %s302 = scalar_lea.vmem %s1, 16
      %v303 = vld [vmem:[%s302] sm:$0xf]
      %v304 = vld [vmem:[%s302 + $0x4] sm:$0xf]
      %v307 = vunpack.c.l.b16 %v303
      %v308 = vunpack.c.l.b16 %v304
      %v309 = vpack.c.b16 %v308, %v307
      %310 = vrot.lane.b32.xlu0 %v192, 126
      %v311 = vpop.permute.xlu0 %310
      %312 = vrot.lane.b32.xlu0 %v193, 126
      %v313 = vpop.permute.xlu0 %312
      %vm314 = vcmask 1031168
      %v315 = vsel %vm314, %v311, %v313
      %v318 = vsel %vm208, %v309, 0
      %320 = vmatprep.subr.bf16.mxu0 0
      %321 = vmatpush1.bf16.msra.mxu0 %v315
      %322 = vmatprep.subr.bf16.mxu0 0
      %323 = vmatpush1.bf16.msra.mxu0 0
      %324 = vmatprep.subr.bf16.mxu0 0
      %325 = vmatpush1.bf16.msra.mxu0 0
      %326 = vmatprep.subr.bf16.mxu0 0
      %327 = vmatpush1.bf16.msra.mxu0 0
      %328 = vmatprep.subr.bf16.mxu0 0
      %329 = vmatpush1.bf16.msra.mxu0 0
      %330 = vmatprep.subr.bf16.mxu0 0
      %331 = vmatpush1.bf16.msra.mxu0 0
      %332 = vmatprep.subr.bf16.mxu0 0
      %333 = vmatpush1.bf16.msra.mxu0 0
      %334 = vmatprep.subr.bf16.mxu0 0
      %335 = vmatpush1.bf16.msra.mxu0 0
      %336 = vmatprep.subr.bf16.mxu0 0
      %337 = vmatpush1.bf16.msra.mxu0 0
      %338 = vmatprep.subr.bf16.mxu0 0
      %339 = vmatpush1.bf16.msra.mxu0 0
      %340 = vmatprep.subr.bf16.mxu0 0
      %341 = vmatpush1.bf16.msra.mxu0 0
      %342 = vmatprep.subr.bf16.mxu0 0
      %343 = vmatpush1.bf16.msra.mxu0 0
      %344 = vmatprep.subr.bf16.mxu0 0
      %345 = vmatpush1.bf16.msra.mxu0 0
      %346 = vmatprep.subr.bf16.mxu0 0
      %347 = vmatpush1.bf16.msra.mxu0 0
      %348 = vmatprep.subr.bf16.mxu0 0
      %349 = vmatpush1.bf16.msra.mxu0 0
      %350 = vmatprep.subr.bf16.mxu0 0
      %351 = vmatpush1.bf16.msra.mxu0 0
      %352 = vmatprep.mubr.bf16.mxu0 0
      %353 = vmatmul.mubr.bf16.gmra.mrb[0].mxu0 %v318
      %v354 = vpop.f32.mrb[0].mxu0
      %v355 = vadd.f32 0.0, %v354
      %v356 = vpop.f32.mrb[0].mxu0
      %v357 = vpop.f32.mrb[0].mxu0
      %v358 = vadd.f32 0.0, %v357
      %v359 = vpop.f32.mrb[0].mxu0
      %360 = vdwg.mxu0
      %v361 = vadd.f32 %v296, %v355
      %v362 = vadd.f32 %v299, %v358
      %v363 = vld [vmem:[%s2] sm:$0xff]
      %v364 = vld [vmem:[%s2 + $0x8] sm:$0xff]
      %366 = vset.pattern.permute.xlu0 0
      %367 = vperm.xlu0 %366, %v363
      %v368 = vpop.permute.xlu0 %367
      %371 = vset.pattern.permute.xlu0 0
      %372 = vperm.xlu0 %371, %v364
      %v373 = vpop.permute.xlu0 %372
      %v375 = vadd.f32 %v361, %v368
      %v376 = vadd.f32 %v362, %v373
      %v377 = vmax.f32 %v375, 0.0
      %v378 = vmax.f32 %v376, 0.0
      %v379 = vpack.c.bf16 %v378, %v377
      %v381 = vunpack.c.l.b16 %v379
      %v382 = vunpack.c.h.b16 %v379
      %v383 = vpack.c.b16 %v381, %v381
      %v384 = vpack.c.b16 %v382, %v382
      %387 = vst [vmem:[%s170] sm:$0xf] %v383
      %388 = vst [vmem:[%s170 + $0x4] sm:$0xf] %v384
      %p389 = scmp.lt.s32.totalorder %s14, 1
      %s390 = scalar_select %p389, %s14, 1
      %s391 = smul.addr %s390, 2
      %s392 = smul.addr %s391, 4
      %s393 = scalar_lea.vmem %s3, %s392
      // Predicated region
      $region33: #{ecg_reconstructor_forward.22} parent=31 // pred_check
        %p394 = pneg %p100
      $region34: #{ecg_reconstructor_forward.22} parent=31 // pred_check_branch
        %396 = sbr.rel (%p394) target = $region36
      $region35: #{ecg_reconstructor_forward.22} parent=31 // pred_region
        _
      $region36: #{ecg_reconstructor_forward.22} parent=31 // pred_fallthru
        _
    $region32: #{ecg_reconstructor_forward.22} parent=5 // pred_fallthru
      _
    %p397 = scmp.le.s32.totalorder 2, %s9
    // Predicated region
    $region37: #{ecg_reconstructor_forward.22} parent=5 // pred_check
      %p398 = pneg %p397
    $region38: #{ecg_reconstructor_forward.22} parent=5 // pred_check_branch
      %400 = sbr.rel (%p398) target = $region40
    $region39: #{ecg_reconstructor_forward.22} parent=5 // pred_region
      %s401 = ssub.s32 %s9, 2
      // Predicated region
      $region41: #{ecg_reconstructor_forward.22} parent=39 // pred_check
        %p402 = pneg %p106
      $region42: #{ecg_reconstructor_forward.22} parent=39 // pred_check_branch
        %404 = sbr.rel (%p402) target = $region44
      $region43: #{ecg_reconstructor_forward.22} parent=39 // pred_region
        %p405 = scmp.lt.s32.totalorder %s15, 1
        %s406 = scalar_select %p405, %s15, 1
        %s407 = smul.addr %s406, 2
        %s408 = smul.addr %s407, 4
        %s409 = scalar_lea.vmem %s3, %s408
      $region44: #{ecg_reconstructor_forward.22} parent=39 // pred_fallthru
        _
    $region40: #{ecg_reconstructor_forward.22} parent=5 // pred_fallthru
      _
  $region6: #{ecg_reconstructor_forward.22} parent=0 // loop_footer
    %s13 = sadd.s32 1, %s9
  $region7: #{ecg_reconstructor_forward.22} parent=0 // loop_footer_branch
    %8 = sbr.rel target = $region3
  $region8: #{ecg_reconstructor_forward.22} parent=0 // loop_exit
    _

// kernel: ecg_reconstructor_forward.23
$region0: #{ecg_reconstructor_forward.23}
  #allocation0 [shape = 'u32[]', space=smem, size = 0x4, offset = 0x4, fixed_abs, tag = 'smem constant byte address 0x4 - core index']
  #allocation1 [shape = 'u32[144,128]{1,0:T(1,128)}', space=vmem, size = 0x12000, scoped, tag = 'internal scratch']
  #allocation2 [shape = 'bf16[16,384]{1,0:T(16,128)(2,1)}', space=vmem, size = 0x3000, scoped, tag = 'scratch operand']
  %s0 = inlined_call_operand.vmem [shape: bf16[2,16,160], index: 0, kind: input, shape index: {}]
  %s1 = inlined_call_operand.vmem [shape: bf16[3,16,16], index: 1, kind: input, shape index: {}]
  %s2 = inlined_call_operand.vmem [shape: f32[16,1], index: 2, kind: input, shape index: {}]
  %s3 = inlined_call_operand.vmem [shape: bf16[2,16,256], index: 3, kind: output, shape index: {}]
  %s4 = sld [smem:[#allocation0]]
  $region45: #{ecg_reconstructor_forward.23} parent=0
    _
  %s6 = ssub.s32 1, %s4
  %s7 = scalar_select 0, %s6, %s4
  loop: start=0, step=1, limit=4
  $region2: #{ecg_reconstructor_forward.23} parent=0 // loop_pre_header
    _
  $region3: #{ecg_reconstructor_forward.23} parent=0 // loop_header
    %s9 = sphi 0, %s13
    %p10 = scmp.ge.s32.totalorder %s9, 4
    %s19 = sphi 0, %s21
    %s22 = sphi 0, %s19
    %s23 = sphi 0, %s22
    %s39 = sphi 0, %s23
    %s43 = sphi 0, %s43
    %s45 = sphi 0, %s43
    %s46 = sphi 0, %s45
    %s60 = sphi 0, %s46
    %s64 = sphi 0, %s64
    %s66 = sphi 0, %s64
    %s67 = sphi 0, %s66
    %s81 = sphi 0, %s67
    %s87 = sphi 0, %s89
    %s90 = sphi 0, %s87
    %s91 = sphi 0, %s90
    %s107 = sphi 0, %s91
  $region4: #{ecg_reconstructor_forward.23} parent=0 // loop_header_branch
    %12 = sbr.rel (%p10) target = $region8
  $region5: #{ecg_reconstructor_forward.23} parent=0 // loop_body
    %s14 = ssub.s32 %s9, 1
    %s15 = ssub.s32 %s9, 2
    %s16 = sadd.s32 %s9, 1
    %s17 = ssub.s32 %s9, %s16
    %p18 = scmp.eq.s32.totalorder %s17, 0
    %s20 = sadd.s32 %s19, 1
    %s21 = scalar_select %p18, %s19, %s20
    %p24 = pneg %p18
    %p25 = scmp.eq.s32.totalorder %s9, 1
    %p26 = por %p24, %p25
    %p27 = scmp.ne.s32.totalorder %s19, %s22
    %p28 = scmp.eq.s32.totalorder %s9, 0
    %p29 = por %p27, %p28
    %p30 = scmp.ne.s32.totalorder %s19, %s22
    %p31 = scmp.eq.s32.totalorder %s14, 1
    %p32 = por %p30, %p31
    %p33 = scmp.ne.s32.totalorder %s22, %s23
    %p34 = scmp.eq.s32.totalorder %s14, 0
    %p35 = por %p33, %p34
    %p36 = scmp.ne.s32.totalorder %s22, %s23
    %p37 = scmp.eq.s32.totalorder %s15, 1
    %p38 = por %p36, %p37
    %p40 = scmp.ne.s32.totalorder %s23, %s39
    %p41 = scmp.eq.s32.totalorder %s15, 0
    %p42 = por %p40, %p41
    %s44 = sadd.s32 %s43, 1
    %p47 = scmp.eq.s32.totalorder %s9, 1
    %p48 = scmp.ne.s32.totalorder %s43, %s45
    %p49 = scmp.eq.s32.totalorder %s9, 0
    %p50 = por %p48, %p49
    %p51 = scmp.ne.s32.totalorder %s43, %s45
    %p52 = scmp.eq.s32.totalorder %s14, 1
    %p53 = por %p51, %p52
    %p54 = scmp.ne.s32.totalorder %s45, %s46
    %p55 = scmp.eq.s32.totalorder %s14, 0
    %p56 = por %p54, %p55
    %p57 = scmp.ne.s32.totalorder %s45, %s46
    %p58 = scmp.eq.s32.totalorder %s15, 1
    %p59 = por %p57, %p58
    %p61 = scmp.ne.s32.totalorder %s46, %s60
    %p62 = scmp.eq.s32.totalorder %s15, 0
    %p63 = por %p61, %p62
    %s65 = sadd.s32 %s64, 1
    %p68 = scmp.eq.s32.totalorder %s9, 1
    %p69 = scmp.ne.s32.totalorder %s64, %s66
    %p70 = scmp.eq.s32.totalorder %s9, 0
    %p71 = por %p69, %p70
    %p72 = scmp.ne.s32.totalorder %s64, %s66
    %p73 = scmp.eq.s32.totalorder %s14, 1
    %p74 = por %p72, %p73
    %p75 = scmp.ne.s32.totalorder %s66, %s67
    %p76 = scmp.eq.s32.totalorder %s14, 0
    %p77 = por %p75, %p76
    %p78 = scmp.ne.s32.totalorder %s66, %s67
    %p79 = scmp.eq.s32.totalorder %s15, 1
    %p80 = por %p78, %p79
    %p82 = scmp.ne.s32.totalorder %s67, %s81
    %p83 = scmp.eq.s32.totalorder %s15, 0
    %p84 = por %p82, %p83
    %s85 = ssub.s32 %s9, %s16
    %p86 = scmp.eq.s32.totalorder %s85, 0
    %s88 = sadd.s32 %s87, 1
    %s89 = scalar_select %p86, %s87, %s88
    %p92 = pneg %p86
    %p93 = scmp.eq.s32.totalorder %s9, 1
    %p94 = por %p92, %p93
    %p95 = scmp.ne.s32.totalorder %s87, %s90
    %p96 = scmp.eq.s32.totalorder %s9, 0
    %p97 = por %p95, %p96
    %p98 = scmp.ne.s32.totalorder %s87, %s90
    %p99 = scmp.eq.s32.totalorder %s14, 1
    %p100 = por %p98, %p99
    %p101 = scmp.ne.s32.totalorder %s90, %s91
    %p102 = scmp.eq.s32.totalorder %s14, 0
    %p103 = por %p101, %p102
    %p104 = scmp.ne.s32.totalorder %s90, %s91
    %p105 = scmp.eq.s32.totalorder %s15, 1
    %p106 = por %p104, %p105
    %p108 = scmp.ne.s32.totalorder %s91, %s107
    %p109 = scmp.eq.s32.totalorder %s15, 0
    %p110 = por %p108, %p109
    %p111 = scmp.le.s32.totalorder 1, %s9
    %p112 = scmp.lt.s32.totalorder %s9, 3
    %p113 = pnand %p111, %p112
    %p114 = pneg %p113
    // Predicated region
    $region9: #{ecg_reconstructor_forward.23} parent=5 // pred_check
      _
    $region10: #{ecg_reconstructor_forward.23} parent=5 // pred_check_branch
      %116 = sbr.rel (%p113) target = $region12
    $region11: #{ecg_reconstructor_forward.23} parent=5 // pred_region
      %s117 = ssub.s32 %s9, 1
      // Predicated region
      $region13: #{ecg_reconstructor_forward.23} parent=11 // pred_check
        %p118 = pneg %p56
      $region14: #{ecg_reconstructor_forward.23} parent=11 // pred_check_branch
        %120 = sbr.rel (%p118) target = $region16
      $region15: #{ecg_reconstructor_forward.23} parent=11 // pred_region
        _
      $region16: #{ecg_reconstructor_forward.23} parent=11 // pred_fallthru
        _
      // Predicated region
      $region17: #{ecg_reconstructor_forward.23} parent=11 // pred_check
        %p121 = pneg %p77
      $region18: #{ecg_reconstructor_forward.23} parent=11 // pred_check_branch
        %123 = sbr.rel (%p121) target = $region20
      $region19: #{ecg_reconstructor_forward.23} parent=11 // pred_region
        _
      $region20: #{ecg_reconstructor_forward.23} parent=11 // pred_fallthru
        _
    $region12: #{ecg_reconstructor_forward.23} parent=5 // pred_fallthru
      _
    %p124 = scmp.lt.s32.totalorder %s9, 2
    // Predicated region
    $region21: #{ecg_reconstructor_forward.23} parent=5 // pred_check
      %p125 = pneg %p124
    $region22: #{ecg_reconstructor_forward.23} parent=5 // pred_check_branch
      %127 = sbr.rel (%p125) target = $region24
    $region23: #{ecg_reconstructor_forward.23} parent=5 // pred_region
      // Predicated region
      $region25: #{ecg_reconstructor_forward.23} parent=23 // pred_check
        %p128 = pneg %p29
      $region26: #{ecg_reconstructor_forward.23} parent=23 // pred_check_branch
        %130 = sbr.rel (%p128) target = $region28
      $region27: #{ecg_reconstructor_forward.23} parent=23 // pred_region
        %p131 = scmp.lt.s32.totalorder %s9, 1
        %s132 = scalar_select %p131, %s9, 1
        %s133 = smul.addr %s132, 4
        %s134 = smul.addr %s133, 4
        %s135 = scalar_lea.vmem %s0, %s134
      $region28: #{ecg_reconstructor_forward.23} parent=23 // pred_fallthru
        _
    $region24: #{ecg_reconstructor_forward.23} parent=5 // pred_fallthru
      _
    %p136 = scmp.le.s32.totalorder 1, %s9
    %p137 = scmp.lt.s32.totalorder %s9, 3
    %p138 = pnand %p136, %p137
    %p139 = pneg %p138
    // Predicated region
    $region29: #{ecg_reconstructor_forward.23} parent=5 // pred_check
      _
    $region30: #{ecg_reconstructor_forward.23} parent=5 // pred_check_branch
      %141 = sbr.rel (%p138) target = $region32
    $region31: #{ecg_reconstructor_forward.23} parent=5 // pred_region
      %s142 = ssub.s32 %s9, 1
      %p143 = scmp.lt.s32.totalorder %s14, 1
      %s144 = scalar_select %p143, %s14, 1
      %s145 = smul.addr %s144, 4
      %s146 = smul.addr %s145, 4
      %s147 = scalar_lea.vmem %s0, %s146
      %p148 = pneg %p35
      %p149 = pneg %p32
      %p150 = pneg %p56
      %p151 = pneg %p53
      %p152 = pneg %p77
      %p153 = pneg %p74
      %p154 = pneg %p103
      %p155 = pneg %p100
      %p156 = scmp.lt.s32.totalorder %s14, 1
      %s157 = scalar_select %p156, %s14, 1
      %s158 = smul.addr %s157, 4
      %s159 = smul.addr %s158, 4
      %s160 = scalar_lea.vmem %s3, %s159
      %p161 = scmp.lt.s32.totalorder %s14, 1
      %s162 = scalar_select %p161, %s14, 1
      %s163 = smul.addr %s162, 4
      %s164 = smul.addr %s163, 4
      %s165 = scalar_lea.vmem %s0, %s164
      %p166 = scmp.lt.s32.totalorder %s14, 1
      %s167 = scalar_select %p166, %s14, 1
      %s168 = smul.addr %s167, 4
      %s169 = smul.addr %s168, 4
      %s170 = scalar_lea.vmem %s3, %s169
      %172 = vst [vmem:[#allocation2] sm:$0xff] 0
      %173 = vst [vmem:[#allocation2 + $0x8] sm:$0xff] 0
      %174 = vst [vmem:[#allocation2 + $0x10] sm:$0xff] 0
      %v175 = vld [vmem:[%s165] sm:$0xff]
      %v176 = vld [vmem:[%s165 + $0x8] sm:$0xff]
      %v179 = vunpack.c.l.b16 %v175
      %v180 = vunpack.c.h.b16 %v175
      %v181 = vunpack.c.l.b16 %v176
      %v182 = vunpack.c.h.b16 %v176
      %v183 = vpack.c.b16 %v181, %v179
      %v184 = vpack.c.b16 %v182, %v180
      %185 = vrot.lane.b32.xlu0 %v183, 1
      %v186 = vpop.permute.xlu0 %185
      %187 = vrot.lane.b32.xlu0 %v184, 1
      %v188 = vpop.permute.xlu0 %187
      %vm189 = vcmask 7168
      %v190 = vsel %vm189, %v186, %v188
      %vm193 = vcmask 1047560
      %194 = vst.msk [vmem:[#allocation2] sm:$0xff] %vm193, %v186
      %vm195 = vcmask 269312
      %196 = vst.msk [vmem:[#allocation2 + $0x8] sm:$0xff] %vm195, %v190
      %v197 = vld [vmem:[%s1] sm:$0xf]
      %v198 = vld [vmem:[%s1 + $0x4] sm:$0xf]
      %v199 = vld [vmem:[#allocation2] sm:$0xff]
      %v200 = vld [vmem:[#allocation2 + $0x8] sm:$0xff]
      %s201 = scalar_lea.vmem %s1, 8
      %v202 = vld [vmem:[%s201] sm:$0xf]
      %v203 = vld [vmem:[%s201 + $0x4] sm:$0xf]
      %v204 = vld [vmem:[#allocation2] sm:$0xff]
      %v205 = vld [vmem:[#allocation2 + $0x8] sm:$0xff]
      %v206 = vld [vmem:[#allocation2 + $0x10] sm:$0xff]
      %v209 = vunpack.c.l.b16 %v202
      %v210 = vunpack.c.l.b16 %v203
      %v211 = vpack.c.b16 %v210, %v209
      %215 = vrot.lane.b32.xlu0 %v204, 127
      %v216 = vpop.permute.xlu0 %215
      %217 = vrot.lane.b32.xlu0 %v205, 127
      %v218 = vpop.permute.xlu0 %217
      %219 = vrot.lane.b32.xlu0 %v206, 127
      %v220 = vpop.permute.xlu0 %219
      %vm221 = vcmask 1039360
      %v222 = vsel %vm221, %v216, %v218
      %v223 = vsel %vm221, %v218, %v220
      %vm226 = vcmask 130048
      %v228 = vsel %vm226, %v211, 0
      %230 = vmatprep.subr.bf16.mxu0 %v223
      %231 = vmatpush1.bf16.msra.mxu0 %v222
      %232 = vmatprep.subr.bf16.mxu0 0
      %233 = vmatpush1.bf16.msra.mxu0 0
      %234 = vmatprep.subr.bf16.mxu0 0
      %235 = vmatpush1.bf16.msra.mxu0 0
      %236 = vmatprep.subr.bf16.mxu0 0
      %237 = vmatpush1.bf16.msra.mxu0 0
      %238 = vmatprep.subr.bf16.mxu0 0
      %239 = vmatpush1.bf16.msra.mxu0 0
      %240 = vmatprep.subr.bf16.mxu0 0
      %241 = vmatpush1.bf16.msra.mxu0 0
      %242 = vmatprep.subr.bf16.mxu0 0
      %243 = vmatpush1.bf16.msra.mxu0 0
      %244 = vmatprep.subr.bf16.mxu0 0
      %245 = vmatpush1.bf16.msra.mxu0 0
      %246 = vmatprep.subr.bf16.mxu0 0
      %247 = vmatpush1.bf16.msra.mxu0 0
      %248 = vmatprep.subr.bf16.mxu0 0
      %249 = vmatpush1.bf16.msra.mxu0 0
      %250 = vmatprep.subr.bf16.mxu0 0
      %251 = vmatpush1.bf16.msra.mxu0 0
      %252 = vmatprep.subr.bf16.mxu0 0
      %253 = vmatpush1.bf16.msra.mxu0 0
      %254 = vmatprep.subr.bf16.mxu0 0
      %255 = vmatpush1.bf16.msra.mxu0 0
      %256 = vmatprep.subr.bf16.mxu0 0
      %257 = vmatpush1.bf16.msra.mxu0 0
      %258 = vmatprep.subr.bf16.mxu0 0
      %259 = vmatpush1.bf16.msra.mxu0 0
      %260 = vmatprep.subr.bf16.mxu0 0
      %261 = vmatpush1.bf16.msra.mxu0 0
      %262 = vmatprep.mubr.bf16.mxu0 0
      %263 = vmatmul.mubr.bf16.gmra.mrb[0].mxu0 %v228
      %v264 = vpop.f32.mrb[0].mxu0
      %v265 = vadd.f32 0.0, %v264
      %v266 = vpop.f32.mrb[0].mxu0
      %v267 = vadd.f32 0.0, %v266
      %v268 = vpop.f32.mrb[0].mxu0
      %v269 = vadd.f32 0.0, %v268
      %v270 = vpop.f32.mrb[0].mxu0
      %v271 = vadd.f32 0.0, %v270
      %272 = vdwg.mxu0
      %v275 = vunpack.c.l.b16 %v197
      %v276 = vunpack.c.l.b16 %v198
      %v277 = vpack.c.b16 %v276, %v275
      %v279 = vsel %vm226, %v277, 0
      %281 = vmatprep.subr.bf16.mxu0 %v200
      %282 = vmatpush1.bf16.msra.mxu0 %v199
      %283 = vmatprep.subr.bf16.mxu0 0
      %284 = vmatpush1.bf16.msra.mxu0 0
      %285 = vmatprep.subr.bf16.mxu0 0
      %286 = vmatpush1.bf16.msra.mxu0 0
      %287 = vmatprep.subr.bf16.mxu0 0
      %288 = vmatpush1.bf16.msra.mxu0 0
      %289 = vmatprep.subr.bf16.mxu0 0
      %290 = vmatpush1.bf16.msra.mxu0 0
      %291 = vmatprep.subr.bf16.mxu0 0
      %292 = vmatpush1.bf16.msra.mxu0 0
      %293 = vmatprep.subr.bf16.mxu0 0
      %294 = vmatpush1.bf16.msra.mxu0 0
      %295 = vmatprep.subr.bf16.mxu0 0
      %296 = vmatpush1.bf16.msra.mxu0 0
      %297 = vmatprep.subr.bf16.mxu0 0
      %298 = vmatpush1.bf16.msra.mxu0 0
      %299 = vmatprep.subr.bf16.mxu0 0
      %300 = vmatpush1.bf16.msra.mxu0 0
      %301 = vmatprep.subr.bf16.mxu0 0
      %302 = vmatpush1.bf16.msra.mxu0 0
      %303 = vmatprep.subr.bf16.mxu0 0
      %304 = vmatpush1.bf16.msra.mxu0 0
      %305 = vmatprep.subr.bf16.mxu0 0
      %306 = vmatpush1.bf16.msra.mxu0 0
      %307 = vmatprep.subr.bf16.mxu0 0
      %308 = vmatpush1.bf16.msra.mxu0 0
      %309 = vmatprep.subr.bf16.mxu0 0
      %310 = vmatpush1.bf16.msra.mxu0 0
      %311 = vmatprep.subr.bf16.mxu0 0
      %312 = vmatpush1.bf16.msra.mxu0 0
      %313 = vmatprep.mubr.bf16.mxu0 0
      %314 = vmatmul.mubr.bf16.gmra.mrb[0].mxu0 %v279
      %v315 = vpop.f32.mrb[0].mxu0
      %v316 = vadd.f32 %v265, %v315
      %v317 = vpop.f32.mrb[0].mxu0
      %v318 = vadd.f32 %v267, %v317
      %v319 = vpop.f32.mrb[0].mxu0
      %v320 = vadd.f32 %v269, %v319
      %v321 = vpop.f32.mrb[0].mxu0
      %v322 = vadd.f32 %v271, %v321
      %323 = vdwg.mxu0
      %s324 = scalar_lea.vmem %s1, 16
      %v325 = vld [vmem:[%s324] sm:$0xf]
      %v326 = vld [vmem:[%s324 + $0x4] sm:$0xf]
      %v329 = vunpack.c.l.b16 %v325
      %v330 = vunpack.c.l.b16 %v326
      %v331 = vpack.c.b16 %v330, %v329
      %332 = vrot.lane.b32.xlu0 %v204, 126
      %v333 = vpop.permute.xlu0 %332
      %334 = vrot.lane.b32.xlu0 %v205, 126
      %v335 = vpop.permute.xlu0 %334
      %336 = vrot.lane.b32.xlu0 %v206, 126
      %v337 = vpop.permute.xlu0 %336
      %vm338 = vcmask 1031168
      %v339 = vsel %vm338, %v333, %v335
      %v340 = vsel %vm338, %v335, %v337
      %v344 = vsel %vm226, %v331, 0
      %346 = vmatprep.subr.bf16.mxu0 %v340
      %347 = vmatpush1.bf16.msra.mxu0 %v339
      %348 = vmatprep.subr.bf16.mxu0 0
      %349 = vmatpush1.bf16.msra.mxu0 0
      %350 = vmatprep.subr.bf16.mxu0 0
      %351 = vmatpush1.bf16.msra.mxu0 0
      %352 = vmatprep.subr.bf16.mxu0 0
      %353 = vmatpush1.bf16.msra.mxu0 0
      %354 = vmatprep.subr.bf16.mxu0 0
      %355 = vmatpush1.bf16.msra.mxu0 0
      %356 = vmatprep.subr.bf16.mxu0 0
      %357 = vmatpush1.bf16.msra.mxu0 0
      %358 = vmatprep.subr.bf16.mxu0 0
      %359 = vmatpush1.bf16.msra.mxu0 0
      %360 = vmatprep.subr.bf16.mxu0 0
      %361 = vmatpush1.bf16.msra.mxu0 0
      %362 = vmatprep.subr.bf16.mxu0 0
      %363 = vmatpush1.bf16.msra.mxu0 0
      %364 = vmatprep.subr.bf16.mxu0 0
      %365 = vmatpush1.bf16.msra.mxu0 0
      %366 = vmatprep.subr.bf16.mxu0 0
      %367 = vmatpush1.bf16.msra.mxu0 0
      %368 = vmatprep.subr.bf16.mxu0 0
      %369 = vmatpush1.bf16.msra.mxu0 0
      %370 = vmatprep.subr.bf16.mxu0 0
      %371 = vmatpush1.bf16.msra.mxu0 0
      %372 = vmatprep.subr.bf16.mxu0 0
      %373 = vmatpush1.bf16.msra.mxu0 0
      %374 = vmatprep.subr.bf16.mxu0 0
      %375 = vmatpush1.bf16.msra.mxu0 0
      %376 = vmatprep.subr.bf16.mxu0 0
      %377 = vmatpush1.bf16.msra.mxu0 0
      %378 = vmatprep.mubr.bf16.mxu0 0
      %379 = vmatmul.mubr.bf16.gmra.mrb[0].mxu0 %v344
      %v380 = vpop.f32.mrb[0].mxu0
      %v381 = vadd.f32 0.0, %v380
      %v382 = vpop.f32.mrb[0].mxu0
      %v383 = vadd.f32 0.0, %v382
      %v384 = vpop.f32.mrb[0].mxu0
      %v385 = vadd.f32 0.0, %v384
      %v386 = vpop.f32.mrb[0].mxu0
      %v387 = vadd.f32 0.0, %v386
      %388 = vdwg.mxu0
      %v389 = vadd.f32 %v316, %v381
      %v390 = vadd.f32 %v318, %v383
      %v391 = vadd.f32 %v320, %v385
      %v392 = vadd.f32 %v322, %v387
      %v393 = vld [vmem:[%s2] sm:$0xff]
      %v394 = vld [vmem:[%s2 + $0x8] sm:$0xff]
      %396 = vset.pattern.permute.xlu0 0
      %397 = vperm.xlu0 %396, %v393
      %v398 = vpop.permute.xlu0 %397
      %401 = vset.pattern.permute.xlu0 0
      %402 = vperm.xlu0 %401, %v394
      %v403 = vpop.permute.xlu0 %402
      %v405 = vadd.f32 %v389, %v398
      %v406 = vadd.f32 %v390, %v398
      %v407 = vadd.f32 %v391, %v403
      %v408 = vadd.f32 %v392, %v403
      %v409 = vtanh.pop %v405
      %v410 = vtanh.pop %v406
      %v411 = vtanh.pop %v407
      %v412 = vtanh.pop %v408
      %v413 = vpack.c.bf16 %v411, %v409
      %v414 = vpack.c.bf16 %v412, %v410
      %v417 = vunpack.c.l.b16 %v413
      %v418 = vunpack.c.l.b16 %v414
      %v419 = vunpack.c.h.b16 %v413
      %v420 = vunpack.c.h.b16 %v414
      %v421 = vpack.c.b16 %v418, %v417
      %v422 = vpack.c.b16 %v420, %v419
      %425 = vst [vmem:[%s170] sm:$0xff] %v421
      %426 = vst [vmem:[%s170 + $0x8] sm:$0xff] %v422
      %p427 = scmp.lt.s32.totalorder %s14, 1
      %s428 = scalar_select %p427, %s14, 1
      %s429 = smul.addr %s428, 4
      %s430 = smul.addr %s429, 4
      %s431 = scalar_lea.vmem %s3, %s430
      // Predicated region
      $region33: #{ecg_reconstructor_forward.23} parent=31 // pred_check
        %p432 = pneg %p100
      $region34: #{ecg_reconstructor_forward.23} parent=31 // pred_check_branch
        %434 = sbr.rel (%p432) target = $region36
      $region35: #{ecg_reconstructor_forward.23} parent=31 // pred_region
        _
      $region36: #{ecg_reconstructor_forward.23} parent=31 // pred_fallthru
        _
    $region32: #{ecg_reconstructor_forward.23} parent=5 // pred_fallthru
      _
    %p435 = scmp.le.s32.totalorder 2, %s9
    // Predicated region
    $region37: #{ecg_reconstructor_forward.23} parent=5 // pred_check
      %p436 = pneg %p435
    $region38: #{ecg_reconstructor_forward.23} parent=5 // pred_check_branch
      %438 = sbr.rel (%p436) target = $region40
    $region39: #{ecg_reconstructor_forward.23} parent=5 // pred_region
      %s439 = ssub.s32 %s9, 2
      // Predicated region
      $region41: #{ecg_reconstructor_forward.23} parent=39 // pred_check
        %p440 = pneg %p106
      $region42: #{ecg_reconstructor_forward.23} parent=39 // pred_check_branch
        %442 = sbr.rel (%p440) target = $region44
      $region43: #{ecg_reconstructor_forward.23} parent=39 // pred_region
        %p443 = scmp.lt.s32.totalorder %s15, 1
        %s444 = scalar_select %p443, %s15, 1
        %s445 = smul.addr %s444, 4
        %s446 = smul.addr %s445, 4
        %s447 = scalar_lea.vmem %s3, %s446
      $region44: #{ecg_reconstructor_forward.23} parent=39 // pred_fallthru
        _
    $region40: #{ecg_reconstructor_forward.23} parent=5 // pred_fallthru
      _
  $region6: #{ecg_reconstructor_forward.23} parent=0 // loop_footer
    %s13 = sadd.s32 1, %s9
  $region7: #{ecg_reconstructor_forward.23} parent=0 // loop_footer_branch
    %8 = sbr.rel target = $region3
  $region8: #{ecg_reconstructor_forward.23} parent=0 // loop_exit
    _

</llo_original>
